<compile_context>
chip_gen: v7x
topology: tpu7x:2x2x1
jax: 0.10.0
libtpu: 0.0.40
codegen_flags: <defaults>
</compile_context>

<pallas_src>
import numpy as np
import jax
import jax.numpy as jnp
from jax import lax
from jax.experimental import pallas as pl
from jax.experimental.pallas import tpu as pltpu

# ------------------------- fixed module geometry ---------------------------
C_IN, H, W = 7, 8, 8
C1, C2 = 32, 32
OH1, OW1 = 8, 8                      # conv1: 3x3, stride 1, pad 1
OH2, OW2 = 6, 6                      # conv2: 3x3, stride 1, pad 0
F_IN = C_IN * H * W                  # 448
F1 = C1 * OH1 * OW1                  # 2048
F2 = C2 * OH2 * OW2                  # 1152 (= PyTorch flatten size)
F3, F4 = 64, 1


# ---------------------------------------------------------------------------
# Pallas kernel: entire forward for one batch tile, intermediates stay in VMEM
# ---------------------------------------------------------------------------
def _fused_forward_kernel(x_ref, m1_ref, b1_ref, m2_ref, b2_ref,
                          w3_ref, b3_ref, w4_ref, b4_ref, o_ref):
    # conv1 (dense matrix form), no activation
    y1 = jnp.dot(x_ref[...], m1_ref[...],
                 preferred_element_type=jnp.float32) + b1_ref[...]
    # conv2 + ReLU
    y2 = jnp.dot(y1, m2_ref[...],
                 preferred_element_type=jnp.float32) + b2_ref[...]
    y2 = jnp.maximum(y2, 0.0)
    # fc1 + ReLU  (y2 columns are already in PyTorch (C,H,W) flatten order)
    h = jnp.dot(y2, w3_ref[...],
                preferred_element_type=jnp.float32) + b3_ref[...]
    h = jnp.maximum(h, 0.0)
    # fc2 + sigmoid (exp and reciprocal both go to the EUP slot)
    z = jnp.dot(h, w4_ref[...],
                preferred_element_type=jnp.float32) + b4_ref[...]
    o_ref[...] = pl.reciprocal(1.0 + jnp.exp(-z), approx=True)


# ---------------------------------------------------------------------------
# One-time (init) weight preprocessing: conv -> dense matrix, bias expansion
# ---------------------------------------------------------------------------
def conv_weight_to_matrix(w, in_hw, pad):
    """Dense M such that x.reshape(N, Cin*H*W) @ M == conv2d(x, w, padding=pad)
    flattened in PyTorch (Cout, OH, OW) order.  Host-side, runs once at init."""
    w = np.asarray(w, dtype=np.float32)              # (Cout, Cin, KH, KW)
    cout, cin, kh, kw = w.shape
    Hi, Wi = in_hw
    OH, OW = Hi + 2 * pad - kh + 1, Wi + 2 * pad - kw + 1
    M = np.zeros((cin, Hi * Wi, cout, OH * OW), dtype=np.float32)
    for oh in range(OH):
        for ow in range(OW):
            for ki in range(kh):
                for kj in range(kw):
                    ih, iw = oh + ki - pad, ow + kj - pad
                    if 0 <= ih < Hi and 0 <= iw < Wi:
                        # (Cin, Cout) contribution at (input pos, output pos)
                        M[:, ih * Wi + iw, :, oh * OW + ow] += w[:, :, ki, kj].T
    return jnp.asarray(M.reshape(cin * Hi * Wi, cout * OH * OW))


def prepare_kernel_params(params):
    """Done once; everything here is hoisted out of the per-forward data path."""
    return {
        "m1": conv_weight_to_matrix(params["w_conv1"], (H, W), pad=1),   # (448, 2048)
        "b1": jnp.repeat(params["b_conv1"], OH1 * OW1)[None, :],         # (1, 2048)
        "m2": conv_weight_to_matrix(params["w_conv2"], (OH1, OW1), pad=0),  # (2048, 1152)
        "b2": jnp.repeat(params["b_conv2"], OH2 * OW2)[None, :],         # (1, 1152)
        "w3": params["w_fc1"].T,                                         # (1152, 64)
        "b3": params["b_fc1"][None, :],                                  # (1, 64)
        "w4": params["w_fc2"].T,                                         # (64, 1)
        "b4": params["b_fc2"][None, :],                                  # (1, 1)
    }


# ---------------------------------------------------------------------------
# Forward wrapper: one pallas_call, grid over batch tiles
# ---------------------------------------------------------------------------
def forward(kp, x_nchw):
    N = x_nchw.shape[0]
    x2d = x_nchw.reshape(N, F_IN).astype(jnp.float32)   # contiguous NCHW flatten

    TB = min(256, ((N + 7) // 8) * 8)                    # sublane-aligned row tile
    Np = ((N + TB - 1) // TB) * TB
    if Np != N:
        x2d = jnp.pad(x2d, ((0, Np - N), (0, 0)))

    flops = 2 * Np * (F_IN * F1 + F1 * F2 + F2 * F3 + F3 * F4)
    bytes_accessed = 4 * (Np * F_IN + Np * F4
                          + F_IN * F1 + F1 * F2 + F2 * F3 + F3 * F4
                          + F1 + F2 + F3 + F4)

    out = pl.pallas_call(
        _fused_forward_kernel,
        out_shape=jax.ShapeDtypeStruct((Np, 1), jnp.float32),
        grid=(Np // TB,),
        in_specs=[
            pl.BlockSpec((TB, F_IN), lambda i: (i, 0)),      # x tile (streamed)
            pl.BlockSpec((F_IN, F1), lambda i: (0, 0)),      # conv1 as matrix
            pl.BlockSpec((1, F1), lambda i: (0, 0)),         # conv1 bias (expanded)
            pl.BlockSpec((F1, F2), lambda i: (0, 0)),        # conv2 as matrix
            pl.BlockSpec((1, F2), lambda i: (0, 0)),         # conv2 bias (expanded)
            pl.BlockSpec((F2, F3), lambda i: (0, 0)),        # fc1 weight (in, out)
            pl.BlockSpec((1, F3), lambda i: (0, 0)),         # fc1 bias
            pl.BlockSpec((F3, F4), lambda i: (0, 0)),        # fc2 weight (in, out)
            pl.BlockSpec((1, F4), lambda i: (0, 0)),         # fc2 bias
        ],
        out_specs=pl.BlockSpec((TB, F4), lambda i: (i, 0)),
        compiler_params=pltpu.CompilerParams(
            dimension_semantics=("parallel",),
            vmem_limit_bytes=48 * 1024 * 1024),
        cost_estimate=pl.CostEstimate(flops=flops, transcendentals=Np,
                                      bytes_accessed=bytes_accessed),
    )(x2d, kp["m1"], kp["b1"], kp["m2"], kp["b2"],
      kp["w3"], kp["b3"], kp["w4"], kp["b4"])
    return out[:N]


# ---------------------------------------------------------------------------
# Deterministic PyTorch-style parameter init (fan-in uniform, PyTorch layouts)
# ---------------------------------------------------------------------------
def init_params(key):
    def uniform(k, shape, fan_in):
        bound = 1.0 / np.sqrt(float(fan_in))
        return jax.random.uniform(k, shape, jnp.float32, -bound, bound)

    ks = jax.random.split(key, 8)
    return {
        "w_conv1": uniform(ks[0], (C1, C_IN, 3, 3), C_IN * 9),
        "b_conv1": uniform(ks[1], (C1,), C_IN * 9),
        "w_conv2": uniform(ks[2], (C2, C1, 3, 3), C1 * 9),
        "b_conv2": uniform(ks[3], (C2,), C1 * 9),
        "w_fc1": uniform(ks[4], (F3, F2), F2),     # (out, in) PyTorch layout
        "b_fc1": uniform(ks[5], (F3,), F2),
        "w_fc2": uniform(ks[6], (F4, F3), F3),
        "b_fc2": uniform(ks[7], (F4,), F3),
    }


# ---------------------------------------------------------------------------
# Pure-JAX reference (same math as the PyTorch module) for a sanity check
# ---------------------------------------------------------------------------
def reference_forward(params, x):
    dn = ("NCHW", "OIHW", "NCHW")
    y = lax.conv_general_dilated(x, params["w_conv1"], (1, 1),
                                 ((1, 1), (1, 1)), dimension_numbers=dn)
    y = y + params["b_conv1"][None, :, None, None]
    y = lax.conv_general_dilated(y, params["w_conv2"], (1, 1),
                                 ((0, 0), (0, 0)), dimension_numbers=dn)
    y = jax.nn.relu(y + params["b_conv2"][None, :, None, None])
    y = y.reshape(x.shape[0], -1)                       # PyTorch (N, C*H*W) flatten
    h = jax.nn.relu(y @ params["w_fc1"].T + params["b_fc1"])
    z = h @ params["w_fc2"].T + params["b_fc2"]
    return jax.nn.sigmoid(z)


if __name__ == "__main__":
    key = jax.random.PRNGKey(0)
    k_param, k_x = jax.random.split(key)
    params = init_params(k_param)
    kparams = prepare_kernel_params(params)           # one-time preprocessing

    # fc1 expects 1152 = 32*6*6 features, which implies an 8x8 spatial input.
    x = jax.random.normal(k_x, (2, C_IN, H, W), dtype=jnp.float32)

    fwd = jax.jit(forward)
    out = jax.block_until_ready(fwd(kparams, x))

    assert out.shape == (2, 1), out.shape
    assert bool(jnp.all(jnp.isfinite(out)))
    assert bool(jnp.all((out > -1e-3) & (out < 1.0 + 1e-3)))

    ref = reference_forward(params, x)
    assert bool(jnp.allclose(out, ref, atol=5e-3, rtol=1e-2)), (out, ref)
    print("KERNEL_OK")
</pallas_src>

<mosaic_0001>
module attributes {stable_mosaic.version = 11 : i64} {
  func.func @_fused_forward_kernel(%arg0: i32, %arg1: memref<8x448xf32, #tpu.memory_space<vmem>>, %arg2: memref<448x2048xf32, #tpu.memory_space<vmem>>, %arg3: memref<1x2048xf32, #tpu.memory_space<vmem>>, %arg4: memref<2048x1152xf32, #tpu.memory_space<vmem>>, %arg5: memref<1x1152xf32, #tpu.memory_space<vmem>>, %arg6: memref<1152x64xf32, #tpu.memory_space<vmem>>, %arg7: memref<1x64xf32, #tpu.memory_space<vmem>>, %arg8: memref<64x1xf32, #tpu.memory_space<vmem>>, %arg9: memref<1x1xf32, #tpu.memory_space<vmem>>, %arg10: memref<8x1xf32, #tpu.memory_space<vmem>>) attributes {dimension_semantics = [#tpu.dimension_semantics<parallel>], iteration_bounds = array<i64: 1>, scalar_prefetch = 0 : i64, scratch_operands = 0 : i64, tpu.core_type = #tpu.core_type<tc>, window_params = [{transform_indices = @transform_0, window_bounds = array<i64: 8, 448>}, {pipeline_mode = #tpu.pipeline_mode<synchronous>, transform_indices = @transform_1, window_bounds = array<i64: 448, 2048>}, {pipeline_mode = #tpu.pipeline_mode<synchronous>, transform_indices = @transform_2, window_bounds = array<i64: 1, 2048>}, {pipeline_mode = #tpu.pipeline_mode<synchronous>, transform_indices = @transform_3, window_bounds = array<i64: 2048, 1152>}, {pipeline_mode = #tpu.pipeline_mode<synchronous>, transform_indices = @transform_4, window_bounds = array<i64: 1, 1152>}, {pipeline_mode = #tpu.pipeline_mode<synchronous>, transform_indices = @transform_5, window_bounds = array<i64: 1152, 64>}, {pipeline_mode = #tpu.pipeline_mode<synchronous>, transform_indices = @transform_6, window_bounds = array<i64: 1, 64>}, {pipeline_mode = #tpu.pipeline_mode<synchronous>, transform_indices = @transform_7, window_bounds = array<i64: 64, 1>}, {pipeline_mode = #tpu.pipeline_mode<synchronous>, transform_indices = @transform_8, window_bounds = array<i64: 1, 1>}, {transform_indices = @transform_9, window_bounds = array<i64: 8, 1>}]} {
    %c0 = arith.constant 0 : index
    %c0_0 = arith.constant 0 : index
    %0 = vector.load %arg1[%c0, %c0_0] : memref<8x448xf32, #tpu.memory_space<vmem>>, vector<8x448xf32>
    %c0_1 = arith.constant 0 : index
    %c0_2 = arith.constant 0 : index
    %1 = vector.load %arg2[%c0_1, %c0_2] : memref<448x2048xf32, #tpu.memory_space<vmem>>, vector<448x2048xf32>
    %cst = arith.constant dense<0.000000e+00> : vector<8x2048xf32>
    %2 = tpu.matmul %0, %1, %cst {dimension_numbers = #tpu.dot_dimension_numbers<[1], [0], [0], [1], [0, 0, 1, 1], [], []>} : vector<8x448xf32>, vector<448x2048xf32>, vector<8x2048xf32> -> vector<8x2048xf32>
    %c0_3 = arith.constant 0 : index
    %c0_4 = arith.constant 0 : index
    %3 = vector.load %arg3[%c0_3, %c0_4] : memref<1x2048xf32, #tpu.memory_space<vmem>>, vector<1x2048xf32>
    %4 = vector.broadcast %3 : vector<1x2048xf32> to vector<8x2048xf32>
    %5 = arith.addf %2, %4 : vector<8x2048xf32>
    %c0_5 = arith.constant 0 : index
    %c0_6 = arith.constant 0 : index
    %6 = vector.load %arg4[%c0_5, %c0_6] : memref<2048x1152xf32, #tpu.memory_space<vmem>>, vector<2048x1152xf32>
    %cst_7 = arith.constant dense<0.000000e+00> : vector<8x1152xf32>
    %7 = tpu.matmul %5, %6, %cst_7 {dimension_numbers = #tpu.dot_dimension_numbers<[1], [0], [0], [1], [0, 0, 1, 1], [], []>} : vector<8x2048xf32>, vector<2048x1152xf32>, vector<8x1152xf32> -> vector<8x1152xf32>
    %c0_8 = arith.constant 0 : index
    %c0_9 = arith.constant 0 : index
    %8 = vector.load %arg5[%c0_8, %c0_9] : memref<1x1152xf32, #tpu.memory_space<vmem>>, vector<1x1152xf32>
    %9 = vector.broadcast %8 : vector<1x1152xf32> to vector<8x1152xf32>
    %10 = arith.addf %7, %9 : vector<8x1152xf32>
    %cst_10 = arith.constant 0.000000e+00 : f32
    %11 = vector.broadcast %cst_10 : f32 to vector<8x1152xf32>
    %12 = arith.maximumf %10, %11 : vector<8x1152xf32>
    %c0_11 = arith.constant 0 : index
    %c0_12 = arith.constant 0 : index
    %13 = vector.load %arg6[%c0_11, %c0_12] : memref<1152x64xf32, #tpu.memory_space<vmem>>, vector<1152x64xf32>
    %cst_13 = arith.constant dense<0.000000e+00> : vector<8x64xf32>
    %14 = tpu.matmul %12, %13, %cst_13 {dimension_numbers = #tpu.dot_dimension_numbers<[1], [0], [0], [1], [0, 0, 1, 1], [], []>} : vector<8x1152xf32>, vector<1152x64xf32>, vector<8x64xf32> -> vector<8x64xf32>
    %c0_14 = arith.constant 0 : index
    %c0_15 = arith.constant 0 : index
    %15 = vector.load %arg7[%c0_14, %c0_15] : memref<1x64xf32, #tpu.memory_space<vmem>>, vector<1x64xf32>
    %16 = vector.broadcast %15 : vector<1x64xf32> to vector<8x64xf32>
    %17 = arith.addf %14, %16 : vector<8x64xf32>
    %cst_16 = arith.constant 0.000000e+00 : f32
    %18 = vector.broadcast %cst_16 : f32 to vector<8x64xf32>
    %19 = arith.maximumf %17, %18 : vector<8x64xf32>
    %c0_17 = arith.constant 0 : index
    %c0_18 = arith.constant 0 : index
    %20 = vector.load %arg8[%c0_17, %c0_18] : memref<64x1xf32, #tpu.memory_space<vmem>>, vector<64x1xf32>
    %cst_19 = arith.constant dense<0.000000e+00> : vector<8x1xf32>
    %21 = tpu.matmul %19, %20, %cst_19 {dimension_numbers = #tpu.dot_dimension_numbers<[1], [0], [0], [1], [0, 0, 1, 1], [], []>} : vector<8x64xf32>, vector<64x1xf32>, vector<8x1xf32> -> vector<8x1xf32>
    %c0_20 = arith.constant 0 : index
    %c0_21 = arith.constant 0 : index
    %22 = vector.load %arg9[%c0_20, %c0_21] : memref<1x1xf32, #tpu.memory_space<vmem>>, vector<1x1xf32>
    %23 = vector.broadcast %22 : vector<1x1xf32> to vector<8x1xf32>
    %24 = arith.addf %21, %23 : vector<8x1xf32>
    %cst_22 = arith.constant 0.000000e+00 : f32
    %25 = vector.broadcast %cst_22 : f32 to vector<8x1xf32>
    %26 = arith.subf %25, %24 : vector<8x1xf32>
    %27 = math.exp %26 : vector<8x1xf32>
    %cst_23 = arith.constant 1.000000e+00 : f32
    %28 = vector.broadcast %cst_23 : f32 to vector<8x1xf32>
    %29 = arith.addf %28, %27 : vector<8x1xf32>
    %30 = tpu.reciprocal %29 {approx = true} : vector<8x1xf32> -> vector<8x1xf32>
    %c0_24 = arith.constant 0 : index
    %c0_25 = arith.constant 0 : index
    %31 = vector.load %arg10[%c0_24, %c0_25] : memref<8x1xf32, #tpu.memory_space<vmem>>, vector<8x1xf32>
    tpu.vector_store %arg10[%c0_24, %c0_25], %30 {strides = array<i32>} : memref<8x1xf32, #tpu.memory_space<vmem>>, vector<8x1xf32>,
    return
  }
  func.func @transform_0(%arg0: i32) -> (i32, i32) {
    %c0_i32 = arith.constant 0 : i32
    %c0_i32_0 = arith.constant 0 : i32
    return %arg0, %c0_i32 : i32, i32
  }
  func.func @transform_1(%arg0: i32) -> (i32, i32) {
    %c0_i32 = arith.constant 0 : i32
    %c0_i32_0 = arith.constant 0 : i32
    %c0_i32_1 = arith.constant 0 : i32
    return %c0_i32, %c0_i32_0 : i32, i32
  }
  func.func @transform_2(%arg0: i32) -> (i32, i32) {
    %c0_i32 = arith.constant 0 : i32
    %c0_i32_0 = arith.constant 0 : i32
    %c0_i32_1 = arith.constant 0 : i32
    return %c0_i32, %c0_i32_0 : i32, i32
  }
  func.func @transform_3(%arg0: i32) -> (i32, i32) {
    %c0_i32 = arith.constant 0 : i32
    %c0_i32_0 = arith.constant 0 : i32
    %c0_i32_1 = arith.constant 0 : i32
    return %c0_i32, %c0_i32_0 : i32, i32
  }
  func.func @transform_4(%arg0: i32) -> (i32, i32) {
    %c0_i32 = arith.constant 0 : i32
    %c0_i32_0 = arith.constant 0 : i32
    %c0_i32_1 = arith.constant 0 : i32
    return %c0_i32, %c0_i32_0 : i32, i32
  }
  func.func @transform_5(%arg0: i32) -> (i32, i32) {
    %c0_i32 = arith.constant 0 : i32
    %c0_i32_0 = arith.constant 0 : i32
    %c0_i32_1 = arith.constant 0 : i32
    return %c0_i32, %c0_i32_0 : i32, i32
  }
  func.func @transform_6(%arg0: i32) -> (i32, i32) {
    %c0_i32 = arith.constant 0 : i32
    %c0_i32_0 = arith.constant 0 : i32
    %c0_i32_1 = arith.constant 0 : i32
    return %c0_i32, %c0_i32_0 : i32, i32
  }
  func.func @transform_7(%arg0: i32) -> (i32, i32) {
    %c0_i32 = arith.constant 0 : i32
    %c0_i32_0 = arith.constant 0 : i32
    %c0_i32_1 = arith.constant 0 : i32
    return %c0_i32, %c0_i32_0 : i32, i32
  }
  func.func @transform_8(%arg0: i32) -> (i32, i32) {
    %c0_i32 = arith.constant 0 : i32
    %c0_i32_0 = arith.constant 0 : i32
    %c0_i32_1 = arith.constant 0 : i32
    return %c0_i32, %c0_i32_0 : i32, i32
  }
  func.func @transform_9(%arg0: i32) -> (i32, i32) {
    %c0_i32 = arith.constant 0 : i32
    %c0_i32_0 = arith.constant 0 : i32
    return %arg0, %c0_i32 : i32, i32
  }
}

</mosaic_0001>

<llo_original>
// kernel: forward.1
$region0: #{forward.1}
  #allocation0 [shape = 'u32[]', space=smem, size = 0x4, offset = 0x4, fixed_abs, tag = 'smem constant byte address 0x4 - core index']
  #allocation1 [shape = 'u32[144,128]{1,0:T(1,128)}', space=vmem, size = 0x12000, scoped, tag = 'internal scratch']
  #allocation2 [shape = 'f32[1,1]{1,0:T(1,128)S(1)}', space=vmem, size = 0x200, scoped, tag = 'scoped memory for forward.1']
  %s0 = inlined_call_operand.vmem [shape: f32[8,448], index: 0, kind: input, shape index: {}]
  %s1 = inlined_call_operand.hbm [shape: f32[448,2048], index: 1, kind: input, shape index: {}]
  %s2 = inlined_call_operand.hbm [shape: f32[1,2048], index: 2, kind: input, shape index: {}]
  %s3 = inlined_call_operand.hbm [shape: f32[2048,1152], index: 3, kind: input, shape index: {}]
  %s4 = inlined_call_operand.hbm [shape: f32[1,1152], index: 4, kind: input, shape index: {}]
  %s5 = inlined_call_operand.vmem [shape: f32[1152,64], index: 5, kind: input, shape index: {}]
  %s6 = inlined_call_operand.hbm [shape: f32[1,64], index: 6, kind: input, shape index: {}]
  %s7 = inlined_call_operand.vmem [shape: f32[64,1], index: 7, kind: input, shape index: {}]
  %s8 = inlined_call_operand.<no memory space> [shape: f32[1,1], index: 8, kind: input, shape index: {}]
  %s9 = inlined_call_operand.vmem [shape: f32[8,1], index: 9, kind: output, shape index: {}]
  %s10 = sld [smem:[#allocation0]]
  $region66: #{forward.1} parent=0
    _
  %s12 = ssub.s32 1, %s10
  %s13 = scalar_select 0, %s12, %s10
  %v14 = vstv %s8
  %15 = vst [vmem:[#allocation2] sm:$0x1] %v14
  $region1: #{forward.1} parent=0
    #allocation3 [shape = 'u8[3670016]{0}', space=vmem, size = 0x380000, scoped, tag = 'input window, operand 1, single buffered']
    #allocation4 [shape = 's32[1]{0}', space=sflag, size = 0x4, scoped, tag = 'scoped memory for forward.1']
    #allocation5 [shape = 'u8[8192]{0}', space=vmem, size = 0x2000, scoped, tag = 'input window, operand 2, single buffered']
    #allocation6 [shape = 's32[1]{0}', space=sflag, size = 0x4, scoped, tag = 'scoped memory for forward.1']
    #allocation7 [shape = 'u8[9437184]{0}', space=vmem, size = 0x900000, scoped, tag = 'input window, operand 3, single buffered']
    #allocation8 [shape = 'u8[4608]{0}', space=vmem, size = 0x1400, scoped, tag = 'input window, operand 4, single buffered']
    #allocation9 [shape = 's32[1]{0}', space=sflag, size = 0x4, scoped, tag = 'scoped memory for forward.1']
    #allocation10 [shape = 'u8[512]{0}', space=vmem, size = 0x400, scoped, tag = 'input window, operand 6, single buffered']
    %16 = vsyncpa [#allocation4], 0
    %17 = vsyncpa [#allocation6], 0
    %18 = vsyncpa [#allocation9], 0
    // Predicated region
    $region2: #{forward.1} parent=1 // pred_check
      _
    $region3: #{forward.1} parent=1 // pred_check_branch
      %20 = sbr.rel (0) target = $region5
    $region4: #{forward.1} parent=1 // pred_region
      _
    $region5: #{forward.1} parent=1 // pred_fallthru
      _
    // Predicated region
    $region6: #{forward.1} parent=1 // pred_check
      _
    $region7: #{forward.1} parent=1 // pred_check_branch
      %22 = sbr.rel (0) target = $region9
    $region8: #{forward.1} parent=1 // pred_region
      %s24 = ssub.s32 114688, 114688
      %25 = vsyncadd [#allocation4], %s24
      %s26 = sshll.u32 [#allocation3], 4
      %s27 = int_to_ptr.vmem [resolvable:$true] %s26
      %32 = dma.hbm_to_vmem [thread:$0]  %s1, 114688, %s27, [#allocation4], 2048, 2048, 128
    $region9: #{forward.1} parent=1 // pred_fallthru
      _
    // Predicated region
    $region10: #{forward.1} parent=1 // pred_check
      _
    $region11: #{forward.1} parent=1 // pred_check_branch
      %34 = sbr.rel (0) target = $region13
    $region12: #{forward.1} parent=1 // pred_region
      %s36 = ssub.s32 256, 256
      %37 = vsyncadd [#allocation6], %s36
      %s39 = sshll.u32 [#allocation5], 4
      %s40 = int_to_ptr.vmem [resolvable:$true] %s39
      %42 = dma.hbm_to_vmem [thread:$0]  %s2, 256, %s40, [#allocation6]
    $region13: #{forward.1} parent=1 // pred_fallthru
      _
    // Predicated region
    $region14: #{forward.1} parent=1 // pred_check
      _
    $region15: #{forward.1} parent=1 // pred_check_branch
      %44 = sbr.rel (0) target = $region17
    $region16: #{forward.1} parent=1 // pred_region
      %s46 = ssub.s32 294912, 294912
      %47 = vsyncadd [#allocation6], %s46
      %s48 = sshll.u32 [#allocation7], 4
      %s49 = int_to_ptr.vmem [resolvable:$true] %s48
      %54 = dma.hbm_to_vmem [thread:$0]  %s3, 294912, %s49, [#allocation6], 1152, 1152, 72
    $region17: #{forward.1} parent=1 // pred_fallthru
      _
    // Predicated region
    $region18: #{forward.1} parent=1 // pred_check
      _
    $region19: #{forward.1} parent=1 // pred_check_branch
      %56 = sbr.rel (0) target = $region21
    $region20: #{forward.1} parent=1 // pred_region
      %s58 = ssub.s32 144, 144
      %59 = vsyncadd [#allocation9], %s58
      %s61 = sshll.u32 [#allocation8], 4
      %s62 = int_to_ptr.vmem [resolvable:$true] %s61
      %64 = dma.hbm_to_vmem [thread:$0]  %s4, 144, %s62, [#allocation9]
    $region21: #{forward.1} parent=1 // pred_fallthru
      _
    // Predicated region
    $region22: #{forward.1} parent=1 // pred_check
      _
    $region23: #{forward.1} parent=1 // pred_check_branch
      %66 = sbr.rel (0) target = $region25
    $region24: #{forward.1} parent=1 // pred_region
      _
    $region25: #{forward.1} parent=1 // pred_fallthru
      _
    // Predicated region
    $region26: #{forward.1} parent=1 // pred_check
      _
    $region27: #{forward.1} parent=1 // pred_check_branch
      %68 = sbr.rel (0) target = $region29
    $region28: #{forward.1} parent=1 // pred_region
      %s70 = ssub.s32 16, 16
      %71 = vsyncadd [#allocation9], %s70
      %s73 = sshll.u32 [#allocation10], 4
      %s74 = int_to_ptr.vmem [resolvable:$true] %s73
      %76 = dma.hbm_to_vmem [thread:$0]  %s6, 16, %s74, [#allocation9]
    $region29: #{forward.1} parent=1 // pred_fallthru
      _
    // Predicated region
    $region30: #{forward.1} parent=1 // pred_check
      _
    $region31: #{forward.1} parent=1 // pred_check_branch
      %78 = sbr.rel (0) target = $region33
    $region32: #{forward.1} parent=1 // pred_region
      _
    $region33: #{forward.1} parent=1 // pred_fallthru
      _
    // Predicated region
    $region34: #{forward.1} parent=1 // pred_check
      _
    $region35: #{forward.1} parent=1 // pred_check_branch
      %80 = sbr.rel (0) target = $region37
    $region36: #{forward.1} parent=1 // pred_region
      _
    $region37: #{forward.1} parent=1 // pred_fallthru
      _
    // Predicated region
    $region38: #{forward.1} parent=1 // pred_check
      _
    $region39: #{forward.1} parent=1 // pred_check_branch
      %82 = sbr.rel (0) target = $region41
    $region40: #{forward.1} parent=1 // pred_region
      %83 = dma.done [#allocation4], 114688
    $region41: #{forward.1} parent=1 // pred_fallthru
      _
    // Predicated region
    $region42: #{forward.1} parent=1 // pred_check
      _
    $region43: #{forward.1} parent=1 // pred_check_branch
      %85 = sbr.rel (0) target = $region45
    $region44: #{forward.1} parent=1 // pred_region
      %86 = dma.done [#allocation6], 256
    $region45: #{forward.1} parent=1 // pred_fallthru
      _
    // Predicated region
    $region46: #{forward.1} parent=1 // pred_check
      _
    $region47: #{forward.1} parent=1 // pred_check_branch
      %88 = sbr.rel (0) target = $region49
    $region48: #{forward.1} parent=1 // pred_region
      %89 = dma.done [#allocation6], 294912
    $region49: #{forward.1} parent=1 // pred_fallthru
      _
    // Predicated region
    $region50: #{forward.1} parent=1 // pred_check
      _
    $region51: #{forward.1} parent=1 // pred_check_branch
      %91 = sbr.rel (0) target = $region53
    $region52: #{forward.1} parent=1 // pred_region
      %92 = dma.done [#allocation9], 144
    $region53: #{forward.1} parent=1 // pred_fallthru
      _
    // Predicated region
    $region54: #{forward.1} parent=1 // pred_check
      _
    $region55: #{forward.1} parent=1 // pred_check_branch
      %94 = sbr.rel (0) target = $region57
    $region56: #{forward.1} parent=1 // pred_region
      %95 = dma.done [#allocation9], 16
    $region57: #{forward.1} parent=1 // pred_fallthru
      _
    %v96 = vld [vmem:[%s0] sm:$0xff]
    %v97 = vld [vmem:[%s0 + $0x8] sm:$0xff]
    %v98 = vld [vmem:[%s0 + $0x10] sm:$0xff]
    %v99 = vld [vmem:[%s0 + $0x18] sm:$0xff]
    %v100 = vld [vmem:[#allocation3] sm:$0xff]
    %v101 = vld [vmem:[#allocation3 + $0x8] sm:$0xff]
    %v102 = vld [vmem:[#allocation3 + $0x10] sm:$0xff]
    %v103 = vld [vmem:[#allocation3 + $0x18] sm:$0xff]
    %v104 = vld [vmem:[#allocation3 + $0x20] sm:$0xff]
    %v105 = vld [vmem:[#allocation3 + $0x28] sm:$0xff]
    %v106 = vld [vmem:[#allocation3 + $0x30] sm:$0xff]
    %v107 = vld [vmem:[#allocation3 + $0x38] sm:$0xff]
    %v108 = vld [vmem:[#allocation3 + $0x40] sm:$0xff]
    %v109 = vld [vmem:[#allocation3 + $0x48] sm:$0xff]
    %v110 = vld [vmem:[#allocation3 + $0x50] sm:$0xff]
    %v111 = vld [vmem:[#allocation3 + $0x58] sm:$0xff]
    %v112 = vld [vmem:[#allocation3 + $0x60] sm:$0xff]
    %v113 = vld [vmem:[#allocation3 + $0x68] sm:$0xff]
    %v114 = vld [vmem:[#allocation3 + $0x70] sm:$0xff]
    %v115 = vld [vmem:[#allocation3 + $0x78] sm:$0xff]
    %v116 = vld [vmem:[#allocation3 + $0x80] sm:$0xff]
    %v117 = vld [vmem:[#allocation3 + $0x88] sm:$0xff]
    %v118 = vld [vmem:[#allocation3 + $0x90] sm:$0xff]
    %v119 = vld [vmem:[#allocation3 + $0x98] sm:$0xff]
    %v120 = vld [vmem:[#allocation3 + $0xa0] sm:$0xff]
    %v121 = vld [vmem:[#allocation3 + $0xa8] sm:$0xff]
    %v122 = vld [vmem:[#allocation3 + $0xb0] sm:$0xff]
    %v123 = vld [vmem:[#allocation3 + $0xb8] sm:$0xff]
    %v124 = vld [vmem:[#allocation3 + $0xc0] sm:$0xff]
    %v125 = vld [vmem:[#allocation3 + $0xc8] sm:$0xff]
    %v126 = vld [vmem:[#allocation3 + $0xd0] sm:$0xff]
    %v127 = vld [vmem:[#allocation3 + $0xd8] sm:$0xff]
    %v128 = vld [vmem:[#allocation3 + $0xe0] sm:$0xff]
    %v129 = vld [vmem:[#allocation3 + $0xe8] sm:$0xff]
    %v130 = vld [vmem:[#allocation3 + $0xf0] sm:$0xff]
    %v131 = vld [vmem:[#allocation3 + $0xf8] sm:$0xff]
    %v132 = vld [vmem:[#allocation3 + $0x100] sm:$0xff]
    %v133 = vld [vmem:[#allocation3 + $0x108] sm:$0xff]
    %v134 = vld [vmem:[#allocation3 + $0x110] sm:$0xff]
    %v135 = vld [vmem:[#allocation3 + $0x118] sm:$0xff]
    %v136 = vld [vmem:[#allocation3 + $0x120] sm:$0xff]
    %v137 = vld [vmem:[#allocation3 + $0x128] sm:$0xff]
    %v138 = vld [vmem:[#allocation3 + $0x130] sm:$0xff]
    %v139 = vld [vmem:[#allocation3 + $0x138] sm:$0xff]
    %v140 = vld [vmem:[#allocation3 + $0x140] sm:$0xff]
    %v141 = vld [vmem:[#allocation3 + $0x148] sm:$0xff]
    %v142 = vld [vmem:[#allocation3 + $0x150] sm:$0xff]
    %v143 = vld [vmem:[#allocation3 + $0x158] sm:$0xff]
    %v144 = vld [vmem:[#allocation3 + $0x160] sm:$0xff]
    %v145 = vld [vmem:[#allocation3 + $0x168] sm:$0xff]
    %v146 = vld [vmem:[#allocation3 + $0x170] sm:$0xff]
    %v147 = vld [vmem:[#allocation3 + $0x178] sm:$0xff]
    %v148 = vld [vmem:[#allocation3 + $0x180] sm:$0xff]
    %v149 = vld [vmem:[#allocation3 + $0x188] sm:$0xff]
    %v150 = vld [vmem:[#allocation3 + $0x190] sm:$0xff]
    %v151 = vld [vmem:[#allocation3 + $0x198] sm:$0xff]
    %v152 = vld [vmem:[#allocation3 + $0x1a0] sm:$0xff]
    %v153 = vld [vmem:[#allocation3 + $0x1a8] sm:$0xff]
    %v154 = vld [vmem:[#allocation3 + $0x1b0] sm:$0xff]
    %v155 = vld [vmem:[#allocation3 + $0x1b8] sm:$0xff]
    %v156 = vld [vmem:[#allocation3 + $0x1c0] sm:$0xff]
    %v157 = vld [vmem:[#allocation3 + $0x1c8] sm:$0xff]
    %v158 = vld [vmem:[#allocation3 + $0x1d0] sm:$0xff]
    %v159 = vld [vmem:[#allocation3 + $0x1d8] sm:$0xff]
    %v160 = vld [vmem:[#allocation3 + $0x1e0] sm:$0xff]
    %v161 = vld [vmem:[#allocation3 + $0x1e8] sm:$0xff]
    %v162 = vld [vmem:[#allocation3 + $0x1f0] sm:$0xff]
    %v163 = vld [vmem:[#allocation3 + $0x1f8] sm:$0xff]
    %v164 = vld [vmem:[#allocation3 + $0x200] sm:$0xff]
    %v165 = vld [vmem:[#allocation3 + $0x208] sm:$0xff]
    %v166 = vld [vmem:[#allocation3 + $0x210] sm:$0xff]
    %v167 = vld [vmem:[#allocation3 + $0x218] sm:$0xff]
    %v168 = vld [vmem:[#allocation3 + $0x220] sm:$0xff]
    %v169 = vld [vmem:[#allocation3 + $0x228] sm:$0xff]
    %v170 = vld [vmem:[#allocation3 + $0x230] sm:$0xff]
    %v171 = vld [vmem:[#allocation3 + $0x238] sm:$0xff]
    %v172 = vld [vmem:[#allocation3 + $0x240] sm:$0xff]
    %v173 = vld [vmem:[#allocation3 + $0x248] sm:$0xff]
    %v174 = vld [vmem:[#allocation3 + $0x250] sm:$0xff]
    %v175 = vld [vmem:[#allocation3 + $0x258] sm:$0xff]
    %v176 = vld [vmem:[#allocation3 + $0x260] sm:$0xff]
    %v177 = vld [vmem:[#allocation3 + $0x268] sm:$0xff]
    %v178 = vld [vmem:[#allocation3 + $0x270] sm:$0xff]
    %v179 = vld [vmem:[#allocation3 + $0x278] sm:$0xff]
    %v180 = vld [vmem:[#allocation3 + $0x280] sm:$0xff]
    %v181 = vld [vmem:[#allocation3 + $0x288] sm:$0xff]
    %v182 = vld [vmem:[#allocation3 + $0x290] sm:$0xff]
    %v183 = vld [vmem:[#allocation3 + $0x298] sm:$0xff]
    %v184 = vld [vmem:[#allocation3 + $0x2a0] sm:$0xff]
    %v185 = vld [vmem:[#allocation3 + $0x2a8] sm:$0xff]
    %v186 = vld [vmem:[#allocation3 + $0x2b0] sm:$0xff]
    %v187 = vld [vmem:[#allocation3 + $0x2b8] sm:$0xff]
    %v188 = vld [vmem:[#allocation3 + $0x2c0] sm:$0xff]
    %v189 = vld [vmem:[#allocation3 + $0x2c8] sm:$0xff]
    %v190 = vld [vmem:[#allocation3 + $0x2d0] sm:$0xff]
    %v191 = vld [vmem:[#allocation3 + $0x2d8] sm:$0xff]
    %v192 = vld [vmem:[#allocation3 + $0x2e0] sm:$0xff]
    %v193 = vld [vmem:[#allocation3 + $0x2e8] sm:$0xff]
    %v194 = vld [vmem:[#allocation3 + $0x2f0] sm:$0xff]
    %v195 = vld [vmem:[#allocation3 + $0x2f8] sm:$0xff]
    %v196 = vld [vmem:[#allocation3 + $0x300] sm:$0xff]
    %v197 = vld [vmem:[#allocation3 + $0x308] sm:$0xff]
    %v198 = vld [vmem:[#allocation3 + $0x310] sm:$0xff]
    %v199 = vld [vmem:[#allocation3 + $0x318] sm:$0xff]
    %v200 = vld [vmem:[#allocation3 + $0x320] sm:$0xff]
    %v201 = vld [vmem:[#allocation3 + $0x328] sm:$0xff]
    %v202 = vld [vmem:[#allocation3 + $0x330] sm:$0xff]
    %v203 = vld [vmem:[#allocation3 + $0x338] sm:$0xff]
    %v204 = vld [vmem:[#allocation3 + $0x340] sm:$0xff]
    %v205 = vld [vmem:[#allocation3 + $0x348] sm:$0xff]
    %v206 = vld [vmem:[#allocation3 + $0x350] sm:$0xff]
    %v207 = vld [vmem:[#allocation3 + $0x358] sm:$0xff]
    %v208 = vld [vmem:[#allocation3 + $0x360] sm:$0xff]
    %v209 = vld [vmem:[#allocation3 + $0x368] sm:$0xff]
    %v210 = vld [vmem:[#allocation3 + $0x370] sm:$0xff]
    %v211 = vld [vmem:[#allocation3 + $0x378] sm:$0xff]
    %v212 = vld [vmem:[#allocation3 + $0x380] sm:$0xff]
    %v213 = vld [vmem:[#allocation3 + $0x388] sm:$0xff]
    %v214 = vld [vmem:[#allocation3 + $0x390] sm:$0xff]
    %v215 = vld [vmem:[#allocation3 + $0x398] sm:$0xff]
    %v216 = vld [vmem:[#allocation3 + $0x3a0] sm:$0xff]
    %v217 = vld [vmem:[#allocation3 + $0x3a8] sm:$0xff]
    %v218 = vld [vmem:[#allocation3 + $0x3b0] sm:$0xff]
    %v219 = vld [vmem:[#allocation3 + $0x3b8] sm:$0xff]
    %v220 = vld [vmem:[#allocation3 + $0x3c0] sm:$0xff]
    %v221 = vld [vmem:[#allocation3 + $0x3c8] sm:$0xff]
    %v222 = vld [vmem:[#allocation3 + $0x3d0] sm:$0xff]
    %v223 = vld [vmem:[#allocation3 + $0x3d8] sm:$0xff]
    %v224 = vld [vmem:[#allocation3 + $0x3e0] sm:$0xff]
    %v225 = vld [vmem:[#allocation3 + $0x3e8] sm:$0xff]
    %v226 = vld [vmem:[#allocation3 + $0x3f0] sm:$0xff]
    %v227 = vld [vmem:[#allocation3 + $0x3f8] sm:$0xff]
    %v228 = vld [vmem:[#allocation3 + $0x400] sm:$0xff]
    %v229 = vld [vmem:[#allocation3 + $0x408] sm:$0xff]
    %v230 = vld [vmem:[#allocation3 + $0x410] sm:$0xff]
    %v231 = vld [vmem:[#allocation3 + $0x418] sm:$0xff]
    %v232 = vld [vmem:[#allocation3 + $0x420] sm:$0xff]
    %v233 = vld [vmem:[#allocation3 + $0x428] sm:$0xff]
    %v234 = vld [vmem:[#allocation3 + $0x430] sm:$0xff]
    %v235 = vld [vmem:[#allocation3 + $0x438] sm:$0xff]
    %v236 = vld [vmem:[#allocation3 + $0x440] sm:$0xff]
    %v237 = vld [vmem:[#allocation3 + $0x448] sm:$0xff]
    %v238 = vld [vmem:[#allocation3 + $0x450] sm:$0xff]
    %v239 = vld [vmem:[#allocation3 + $0x458] sm:$0xff]
    %v240 = vld [vmem:[#allocation3 + $0x460] sm:$0xff]
    %v241 = vld [vmem:[#allocation3 + $0x468] sm:$0xff]
    %v242 = vld [vmem:[#allocation3 + $0x470] sm:$0xff]
    %v243 = vld [vmem:[#allocation3 + $0x478] sm:$0xff]
    %v244 = vld [vmem:[#allocation3 + $0x480] sm:$0xff]
    %v245 = vld [vmem:[#allocation3 + $0x488] sm:$0xff]
    %v246 = vld [vmem:[#allocation3 + $0x490] sm:$0xff]
    %v247 = vld [vmem:[#allocation3 + $0x498] sm:$0xff]
    %v248 = vld [vmem:[#allocation3 + $0x4a0] sm:$0xff]
    %v249 = vld [vmem:[#allocation3 + $0x4a8] sm:$0xff]
    %v250 = vld [vmem:[#allocation3 + $0x4b0] sm:$0xff]
    %v251 = vld [vmem:[#allocation3 + $0x4b8] sm:$0xff]
    %v252 = vld [vmem:[#allocation3 + $0x4c0] sm:$0xff]
    %v253 = vld [vmem:[#allocation3 + $0x4c8] sm:$0xff]
    %v254 = vld [vmem:[#allocation3 + $0x4d0] sm:$0xff]
    %v255 = vld [vmem:[#allocation3 + $0x4d8] sm:$0xff]
    %v256 = vld [vmem:[#allocation3 + $0x4e0] sm:$0xff]
    %v257 = vld [vmem:[#allocation3 + $0x4e8] sm:$0xff]
    %v258 = vld [vmem:[#allocation3 + $0x4f0] sm:$0xff]
    %v259 = vld [vmem:[#allocation3 + $0x4f8] sm:$0xff]
    %v260 = vld [vmem:[#allocation3 + $0x500] sm:$0xff]
    %v261 = vld [vmem:[#allocation3 + $0x508] sm:$0xff]
    %v262 = vld [vmem:[#allocation3 + $0x510] sm:$0xff]
    %v263 = vld [vmem:[#allocation3 + $0x518] sm:$0xff]
    %v264 = vld [vmem:[#allocation3 + $0x520] sm:$0xff]
    %v265 = vld [vmem:[#allocation3 + $0x528] sm:$0xff]
    %v266 = vld [vmem:[#allocation3 + $0x530] sm:$0xff]
    %v267 = vld [vmem:[#allocation3 + $0x538] sm:$0xff]
    %v268 = vld [vmem:[#allocation3 + $0x540] sm:$0xff]
    %v269 = vld [vmem:[#allocation3 + $0x548] sm:$0xff]
    %v270 = vld [vmem:[#allocation3 + $0x550] sm:$0xff]
    %v271 = vld [vmem:[#allocation3 + $0x558] sm:$0xff]
    %v272 = vld [vmem:[#allocation3 + $0x560] sm:$0xff]
    %v273 = vld [vmem:[#allocation3 + $0x568] sm:$0xff]
    %v274 = vld [vmem:[#allocation3 + $0x570] sm:$0xff]
    %v275 = vld [vmem:[#allocation3 + $0x578] sm:$0xff]
    %v276 = vld [vmem:[#allocation3 + $0x580] sm:$0xff]
    %v277 = vld [vmem:[#allocation3 + $0x588] sm:$0xff]
    %v278 = vld [vmem:[#allocation3 + $0x590] sm:$0xff]
    %v279 = vld [vmem:[#allocation3 + $0x598] sm:$0xff]
    %v280 = vld [vmem:[#allocation3 + $0x5a0] sm:$0xff]
    %v281 = vld [vmem:[#allocation3 + $0x5a8] sm:$0xff]
    %v282 = vld [vmem:[#allocation3 + $0x5b0] sm:$0xff]
    %v283 = vld [vmem:[#allocation3 + $0x5b8] sm:$0xff]
    %v284 = vld [vmem:[#allocation3 + $0x5c0] sm:$0xff]
    %v285 = vld [vmem:[#allocation3 + $0x5c8] sm:$0xff]
    %v286 = vld [vmem:[#allocation3 + $0x5d0] sm:$0xff]
    %v287 = vld [vmem:[#allocation3 + $0x5d8] sm:$0xff]
    %v288 = vld [vmem:[#allocation3 + $0x5e0] sm:$0xff]
    %v289 = vld [vmem:[#allocation3 + $0x5e8] sm:$0xff]
    %v290 = vld [vmem:[#allocation3 + $0x5f0] sm:$0xff]
    %v291 = vld [vmem:[#allocation3 + $0x5f8] sm:$0xff]
    %v292 = vld [vmem:[#allocation3 + $0x600] sm:$0xff]
    %v293 = vld [vmem:[#allocation3 + $0x608] sm:$0xff]
    %v294 = vld [vmem:[#allocation3 + $0x610] sm:$0xff]
    %v295 = vld [vmem:[#allocation3 + $0x618] sm:$0xff]
    %v296 = vld [vmem:[#allocation3 + $0x620] sm:$0xff]
    %v297 = vld [vmem:[#allocation3 + $0x628] sm:$0xff]
    %v298 = vld [vmem:[#allocation3 + $0x630] sm:$0xff]
    %v299 = vld [vmem:[#allocation3 + $0x638] sm:$0xff]
    %v300 = vld [vmem:[#allocation3 + $0x640] sm:$0xff]
    %v301 = vld [vmem:[#allocation3 + $0x648] sm:$0xff]
    %v302 = vld [vmem:[#allocation3 + $0x650] sm:$0xff]
    %v303 = vld [vmem:[#allocation3 + $0x658] sm:$0xff]
    %v304 = vld [vmem:[#allocation3 + $0x660] sm:$0xff]
    %v305 = vld [vmem:[#allocation3 + $0x668] sm:$0xff]
    %v306 = vld [vmem:[#allocation3 + $0x670] sm:$0xff]
    %v307 = vld [vmem:[#allocation3 + $0x678] sm:$0xff]
    %v308 = vld [vmem:[#allocation3 + $0x680] sm:$0xff]
    %v309 = vld [vmem:[#allocation3 + $0x688] sm:$0xff]
    %v310 = vld [vmem:[#allocation3 + $0x690] sm:$0xff]
    %v311 = vld [vmem:[#allocation3 + $0x698] sm:$0xff]
    %v312 = vld [vmem:[#allocation3 + $0x6a0] sm:$0xff]
    %v313 = vld [vmem:[#allocation3 + $0x6a8] sm:$0xff]
    %v314 = vld [vmem:[#allocation3 + $0x6b0] sm:$0xff]
    %v315 = vld [vmem:[#allocation3 + $0x6b8] sm:$0xff]
    %v316 = vld [vmem:[#allocation3 + $0x6c0] sm:$0xff]
    %v317 = vld [vmem:[#allocation3 + $0x6c8] sm:$0xff]
    %v318 = vld [vmem:[#allocation3 + $0x6d0] sm:$0xff]
    %v319 = vld [vmem:[#allocation3 + $0x6d8] sm:$0xff]
    %v320 = vld [vmem:[#allocation3 + $0x6e0] sm:$0xff]
    %v321 = vld [vmem:[#allocation3 + $0x6e8] sm:$0xff]
    %v322 = vld [vmem:[#allocation3 + $0x6f0] sm:$0xff]
    %v323 = vld [vmem:[#allocation3 + $0x6f8] sm:$0xff]
    %v324 = vld [vmem:[#allocation3 + $0x700] sm:$0xff]
    %v325 = vld [vmem:[#allocation3 + $0x708] sm:$0xff]
    %v326 = vld [vmem:[#allocation3 + $0x710] sm:$0xff]
    %v327 = vld [vmem:[#allocation3 + $0x718] sm:$0xff]
    %v328 = vld [vmem:[#allocation3 + $0x720] sm:$0xff]
    %v329 = vld [vmem:[#allocation3 + $0x728] sm:$0xff]
    %v330 = vld [vmem:[#allocation3 + $0x730] sm:$0xff]
    %v331 = vld [vmem:[#allocation3 + $0x738] sm:$0xff]
    %v332 = vld [vmem:[#allocation3 + $0x740] sm:$0xff]
    %v333 = vld [vmem:[#allocation3 + $0x748] sm:$0xff]
    %v334 = vld [vmem:[#allocation3 + $0x750] sm:$0xff]
    %v335 = vld [vmem:[#allocation3 + $0x758] sm:$0xff]
    %v336 = vld [vmem:[#allocation3 + $0x760] sm:$0xff]
    %v337 = vld [vmem:[#allocation3 + $0x768] sm:$0xff]
    %v338 = vld [vmem:[#allocation3 + $0x770] sm:$0xff]
    %v339 = vld [vmem:[#allocation3 + $0x778] sm:$0xff]
    %v340 = vld [vmem:[#allocation3 + $0x780] sm:$0xff]
    %v341 = vld [vmem:[#allocation3 + $0x788] sm:$0xff]
    %v342 = vld [vmem:[#allocation3 + $0x790] sm:$0xff]
    %v343 = vld [vmem:[#allocation3 + $0x798] sm:$0xff]
    %v344 = vld [vmem:[#allocation3 + $0x7a0] sm:$0xff]
    %v345 = vld [vmem:[#allocation3 + $0x7a8] sm:$0xff]
    %v346 = vld [vmem:[#allocation3 + $0x7b0] sm:$0xff]
    %v347 = vld [vmem:[#allocation3 + $0x7b8] sm:$0xff]
    %v348 = vld [vmem:[#allocation3 + $0x7c0] sm:$0xff]
    %v349 = vld [vmem:[#allocation3 + $0x7c8] sm:$0xff]
    %v350 = vld [vmem:[#allocation3 + $0x7d0] sm:$0xff]
    %v351 = vld [vmem:[#allocation3 + $0x7d8] sm:$0xff]
    %v352 = vld [vmem:[#allocation3 + $0x7e0] sm:$0xff]
    %v353 = vld [vmem:[#allocation3 + $0x7e8] sm:$0xff]
    %v354 = vld [vmem:[#allocation3 + $0x7f0] sm:$0xff]
    %v355 = vld [vmem:[#allocation3 + $0x7f8] sm:$0xff]
    %v356 = vld [vmem:[#allocation3 + $0x800] sm:$0xff]
    %v357 = vld [vmem:[#allocation3 + $0x808] sm:$0xff]
    %v358 = vld [vmem:[#allocation3 + $0x810] sm:$0xff]
    %v359 = vld [vmem:[#allocation3 + $0x818] sm:$0xff]
    %v360 = vld [vmem:[#allocation3 + $0x820] sm:$0xff]
    %v361 = vld [vmem:[#allocation3 + $0x828] sm:$0xff]
    %v362 = vld [vmem:[#allocation3 + $0x830] sm:$0xff]
    %v363 = vld [vmem:[#allocation3 + $0x838] sm:$0xff]
    %v364 = vld [vmem:[#allocation3 + $0x840] sm:$0xff]
    %v365 = vld [vmem:[#allocation3 + $0x848] sm:$0xff]
    %v366 = vld [vmem:[#allocation3 + $0x850] sm:$0xff]
    %v367 = vld [vmem:[#allocation3 + $0x858] sm:$0xff]
    %v368 = vld [vmem:[#allocation3 + $0x860] sm:$0xff]
    %v369 = vld [vmem:[#allocation3 + $0x868] sm:$0xff]
    %v370 = vld [vmem:[#allocation3 + $0x870] sm:$0xff]
    %v371 = vld [vmem:[#allocation3 + $0x878] sm:$0xff]
    %v372 = vld [vmem:[#allocation3 + $0x880] sm:$0xff]
    %v373 = vld [vmem:[#allocation3 + $0x888] sm:$0xff]
    %v374 = vld [vmem:[#allocation3 + $0x890] sm:$0xff]
    %v375 = vld [vmem:[#allocation3 + $0x898] sm:$0xff]
    %v376 = vld [vmem:[#allocation3 + $0x8a0] sm:$0xff]
    %v377 = vld [vmem:[#allocation3 + $0x8a8] sm:$0xff]
    %v378 = vld [vmem:[#allocation3 + $0x8b0] sm:$0xff]
    %v379 = vld [vmem:[#allocation3 + $0x8b8] sm:$0xff]
    %v380 = vld [vmem:[#allocation3 + $0x8c0] sm:$0xff]
    %v381 = vld [vmem:[#allocation3 + $0x8c8] sm:$0xff]
    %v382 = vld [vmem:[#allocation3 + $0x8d0] sm:$0xff]
    %v383 = vld [vmem:[#allocation3 + $0x8d8] sm:$0xff]
    %v384 = vld [vmem:[#allocation3 + $0x8e0] sm:$0xff]
    %v385 = vld [vmem:[#allocation3 + $0x8e8] sm:$0xff]
    %v386 = vld [vmem:[#allocation3 + $0x8f0] sm:$0xff]
    %v387 = vld [vmem:[#allocation3 + $0x8f8] sm:$0xff]
    %v388 = vld [vmem:[#allocation3 + $0x900] sm:$0xff]
    %v389 = vld [vmem:[#allocation3 + $0x908] sm:$0xff]
    %v390 = vld [vmem:[#allocation3 + $0x910] sm:$0xff]
    %v391 = vld [vmem:[#allocation3 + $0x918] sm:$0xff]
    %v392 = vld [vmem:[#allocation3 + $0x920] sm:$0xff]
    %v393 = vld [vmem:[#allocation3 + $0x928] sm:$0xff]
    %v394 = vld [vmem:[#allocation3 + $0x930] sm:$0xff]
    %v395 = vld [vmem:[#allocation3 + $0x938] sm:$0xff]
    %v396 = vld [vmem:[#allocation3 + $0x940] sm:$0xff]
    %v397 = vld [vmem:[#allocation3 + $0x948] sm:$0xff]
    %v398 = vld [vmem:[#allocation3 + $0x950] sm:$0xff]
    %v399 = vld [vmem:[#allocation3 + $0x958] sm:$0xff]
    %v400 = vld [vmem:[#allocation3 + $0x960] sm:$0xff]
    %v401 = vld [vmem:[#allocation3 + $0x968] sm:$0xff]
    %v402 = vld [vmem:[#allocation3 + $0x970] sm:$0xff]
    %v403 = vld [vmem:[#allocation3 + $0x978] sm:$0xff]
    %v404 = vld [vmem:[#allocation3 + $0x980] sm:$0xff]
    %v405 = vld [vmem:[#allocation3 + $0x988] sm:$0xff]
    %v406 = vld [vmem:[#allocation3 + $0x990] sm:$0xff]
    %v407 = vld [vmem:[#allocation3 + $0x998] sm:$0xff]
    %v408 = vld [vmem:[#allocation3 + $0x9a0] sm:$0xff]
    %v409 = vld [vmem:[#allocation3 + $0x9a8] sm:$0xff]
    %v410 = vld [vmem:[#allocation3 + $0x9b0] sm:$0xff]
    %v411 = vld [vmem:[#allocation3 + $0x9b8] sm:$0xff]
    %v412 = vld [vmem:[#allocation3 + $0x9c0] sm:$0xff]
    %v413 = vld [vmem:[#allocation3 + $0x9c8] sm:$0xff]
    %v414 = vld [vmem:[#allocation3 + $0x9d0] sm:$0xff]
    %v415 = vld [vmem:[#allocation3 + $0x9d8] sm:$0xff]
    %v416 = vld [vmem:[#allocation3 + $0x9e0] sm:$0xff]
    %v417 = vld [vmem:[#allocation3 + $0x9e8] sm:$0xff]
    %v418 = vld [vmem:[#allocation3 + $0x9f0] sm:$0xff]
    %v419 = vld [vmem:[#allocation3 + $0x9f8] sm:$0xff]
    %v420 = vld [vmem:[#allocation3 + $0xa00] sm:$0xff]
    %v421 = vld [vmem:[#allocation3 + $0xa08] sm:$0xff]
    %v422 = vld [vmem:[#allocation3 + $0xa10] sm:$0xff]
    %v423 = vld [vmem:[#allocation3 + $0xa18] sm:$0xff]
    %v424 = vld [vmem:[#allocation3 + $0xa20] sm:$0xff]
    %v425 = vld [vmem:[#allocation3 + $0xa28] sm:$0xff]
    %v426 = vld [vmem:[#allocation3 + $0xa30] sm:$0xff]
    %v427 = vld [vmem:[#allocation3 + $0xa38] sm:$0xff]
    %v428 = vld [vmem:[#allocation3 + $0xa40] sm:$0xff]
    %v429 = vld [vmem:[#allocation3 + $0xa48] sm:$0xff]
    %v430 = vld [vmem:[#allocation3 + $0xa50] sm:$0xff]
    %v431 = vld [vmem:[#allocation3 + $0xa58] sm:$0xff]
    %v432 = vld [vmem:[#allocation3 + $0xa60] sm:$0xff]
    %v433 = vld [vmem:[#allocation3 + $0xa68] sm:$0xff]
    %v434 = vld [vmem:[#allocation3 + $0xa70] sm:$0xff]
    %v435 = vld [vmem:[#allocation3 + $0xa78] sm:$0xff]
    %v436 = vld [vmem:[#allocation3 + $0xa80] sm:$0xff]
    %v437 = vld [vmem:[#allocation3 + $0xa88] sm:$0xff]
    %v438 = vld [vmem:[#allocation3 + $0xa90] sm:$0xff]
    %v439 = vld [vmem:[#allocation3 + $0xa98] sm:$0xff]
    %v440 = vld [vmem:[#allocation3 + $0xaa0] sm:$0xff]
    %v441 = vld [vmem:[#allocation3 + $0xaa8] sm:$0xff]
    %v442 = vld [vmem:[#allocation3 + $0xab0] sm:$0xff]
    %v443 = vld [vmem:[#allocation3 + $0xab8] sm:$0xff]
    %v444 = vld [vmem:[#allocation3 + $0xac0] sm:$0xff]
    %v445 = vld [vmem:[#allocation3 + $0xac8] sm:$0xff]
    %v446 = vld [vmem:[#allocation3 + $0xad0] sm:$0xff]
    %v447 = vld [vmem:[#allocation3 + $0xad8] sm:$0xff]
    %v448 = vld [vmem:[#allocation3 + $0xae0] sm:$0xff]
    %v449 = vld [vmem:[#allocation3 + $0xae8] sm:$0xff]
    %v450 = vld [vmem:[#allocation3 + $0xaf0] sm:$0xff]
    %v451 = vld [vmem:[#allocation3 + $0xaf8] sm:$0xff]
    %v452 = vld [vmem:[#allocation3 + $0xb00] sm:$0xff]
    %v453 = vld [vmem:[#allocation3 + $0xb08] sm:$0xff]
    %v454 = vld [vmem:[#allocation3 + $0xb10] sm:$0xff]
    %v455 = vld [vmem:[#allocation3 + $0xb18] sm:$0xff]
    %v456 = vld [vmem:[#allocation3 + $0xb20] sm:$0xff]
    %v457 = vld [vmem:[#allocation3 + $0xb28] sm:$0xff]
    %v458 = vld [vmem:[#allocation3 + $0xb30] sm:$0xff]
    %v459 = vld [vmem:[#allocation3 + $0xb38] sm:$0xff]
    %v460 = vld [vmem:[#allocation3 + $0xb40] sm:$0xff]
    %v461 = vld [vmem:[#allocation3 + $0xb48] sm:$0xff]
    %v462 = vld [vmem:[#allocation3 + $0xb50] sm:$0xff]
    %v463 = vld [vmem:[#allocation3 + $0xb58] sm:$0xff]
    %v464 = vld [vmem:[#allocation3 + $0xb60] sm:$0xff]
    %v465 = vld [vmem:[#allocation3 + $0xb68] sm:$0xff]
    %v466 = vld [vmem:[#allocation3 + $0xb70] sm:$0xff]
    %v467 = vld [vmem:[#allocation3 + $0xb78] sm:$0xff]
    %v468 = vld [vmem:[#allocation3 + $0xb80] sm:$0xff]
    %v469 = vld [vmem:[#allocation3 + $0xb88] sm:$0xff]
    %v470 = vld [vmem:[#allocation3 + $0xb90] sm:$0xff]
    %v471 = vld [vmem:[#allocation3 + $0xb98] sm:$0xff]
    %v472 = vld [vmem:[#allocation3 + $0xba0] sm:$0xff]
    %v473 = vld [vmem:[#allocation3 + $0xba8] sm:$0xff]
    %v474 = vld [vmem:[#allocation3 + $0xbb0] sm:$0xff]
    %v475 = vld [vmem:[#allocation3 + $0xbb8] sm:$0xff]
    %v476 = vld [vmem:[#allocation3 + $0xbc0] sm:$0xff]
    %v477 = vld [vmem:[#allocation3 + $0xbc8] sm:$0xff]
    %v478 = vld [vmem:[#allocation3 + $0xbd0] sm:$0xff]
    %v479 = vld [vmem:[#allocation3 + $0xbd8] sm:$0xff]
    %v480 = vld [vmem:[#allocation3 + $0xbe0] sm:$0xff]
    %v481 = vld [vmem:[#allocation3 + $0xbe8] sm:$0xff]
    %v482 = vld [vmem:[#allocation3 + $0xbf0] sm:$0xff]
    %v483 = vld [vmem:[#allocation3 + $0xbf8] sm:$0xff]
    %v484 = vld [vmem:[#allocation3 + $0xc00] sm:$0xff]
    %v485 = vld [vmem:[#allocation3 + $0xc08] sm:$0xff]
    %v486 = vld [vmem:[#allocation3 + $0xc10] sm:$0xff]
    %v487 = vld [vmem:[#allocation3 + $0xc18] sm:$0xff]
    %v488 = vld [vmem:[#allocation3 + $0xc20] sm:$0xff]
    %v489 = vld [vmem:[#allocation3 + $0xc28] sm:$0xff]
    %v490 = vld [vmem:[#allocation3 + $0xc30] sm:$0xff]
    %v491 = vld [vmem:[#allocation3 + $0xc38] sm:$0xff]
    %v492 = vld [vmem:[#allocation3 + $0xc40] sm:$0xff]
    %v493 = vld [vmem:[#allocation3 + $0xc48] sm:$0xff]
    %v494 = vld [vmem:[#allocation3 + $0xc50] sm:$0xff]
    %v495 = vld [vmem:[#allocation3 + $0xc58] sm:$0xff]
    %v496 = vld [vmem:[#allocation3 + $0xc60] sm:$0xff]
    %v497 = vld [vmem:[#allocation3 + $0xc68] sm:$0xff]
    %v498 = vld [vmem:[#allocation3 + $0xc70] sm:$0xff]
    %v499 = vld [vmem:[#allocation3 + $0xc78] sm:$0xff]
    %v500 = vld [vmem:[#allocation3 + $0xc80] sm:$0xff]
    %v501 = vld [vmem:[#allocation3 + $0xc88] sm:$0xff]
    %v502 = vld [vmem:[#allocation3 + $0xc90] sm:$0xff]
    %v503 = vld [vmem:[#allocation3 + $0xc98] sm:$0xff]
    %v504 = vld [vmem:[#allocation3 + $0xca0] sm:$0xff]
    %v505 = vld [vmem:[#allocation3 + $0xca8] sm:$0xff]
    %v506 = vld [vmem:[#allocation3 + $0xcb0] sm:$0xff]
    %v507 = vld [vmem:[#allocation3 + $0xcb8] sm:$0xff]
    %v508 = vld [vmem:[#allocation3 + $0xcc0] sm:$0xff]
    %v509 = vld [vmem:[#allocation3 + $0xcc8] sm:$0xff]
    %v510 = vld [vmem:[#allocation3 + $0xcd0] sm:$0xff]
    %v511 = vld [vmem:[#allocation3 + $0xcd8] sm:$0xff]
    %v512 = vld [vmem:[#allocation3 + $0xce0] sm:$0xff]
    %v513 = vld [vmem:[#allocation3 + $0xce8] sm:$0xff]
    %v514 = vld [vmem:[#allocation3 + $0xcf0] sm:$0xff]
    %v515 = vld [vmem:[#allocation3 + $0xcf8] sm:$0xff]
    %v516 = vld [vmem:[#allocation3 + $0xd00] sm:$0xff]
    %v517 = vld [vmem:[#allocation3 + $0xd08] sm:$0xff]
    %v518 = vld [vmem:[#allocation3 + $0xd10] sm:$0xff]
    %v519 = vld [vmem:[#allocation3 + $0xd18] sm:$0xff]
    %v520 = vld [vmem:[#allocation3 + $0xd20] sm:$0xff]
    %v521 = vld [vmem:[#allocation3 + $0xd28] sm:$0xff]
    %v522 = vld [vmem:[#allocation3 + $0xd30] sm:$0xff]
    %v523 = vld [vmem:[#allocation3 + $0xd38] sm:$0xff]
    %v524 = vld [vmem:[#allocation3 + $0xd40] sm:$0xff]
    %v525 = vld [vmem:[#allocation3 + $0xd48] sm:$0xff]
    %v526 = vld [vmem:[#allocation3 + $0xd50] sm:$0xff]
    %v527 = vld [vmem:[#allocation3 + $0xd58] sm:$0xff]
    %v528 = vld [vmem:[#allocation3 + $0xd60] sm:$0xff]
    %v529 = vld [vmem:[#allocation3 + $0xd68] sm:$0xff]
    %v530 = vld [vmem:[#allocation3 + $0xd70] sm:$0xff]
    %v531 = vld [vmem:[#allocation3 + $0xd78] sm:$0xff]
    %v532 = vld [vmem:[#allocation3 + $0xd80] sm:$0xff]
    %v533 = vld [vmem:[#allocation3 + $0xd88] sm:$0xff]
    %v534 = vld [vmem:[#allocation3 + $0xd90] sm:$0xff]
    %v535 = vld [vmem:[#allocation3 + $0xd98] sm:$0xff]
    %v536 = vld [vmem:[#allocation3 + $0xda0] sm:$0xff]
    %v537 = vld [vmem:[#allocation3 + $0xda8] sm:$0xff]
    %v538 = vld [vmem:[#allocation3 + $0xdb0] sm:$0xff]
    %v539 = vld [vmem:[#allocation3 + $0xdb8] sm:$0xff]
    %v540 = vld [vmem:[#allocation3 + $0xdc0] sm:$0xff]
    %v541 = vld [vmem:[#allocation3 + $0xdc8] sm:$0xff]
    %v542 = vld [vmem:[#allocation3 + $0xdd0] sm:$0xff]
    %v543 = vld [vmem:[#allocation3 + $0xdd8] sm:$0xff]
    %v544 = vld [vmem:[#allocation3 + $0xde0] sm:$0xff]
    %v545 = vld [vmem:[#allocation3 + $0xde8] sm:$0xff]
    %v546 = vld [vmem:[#allocation3 + $0xdf0] sm:$0xff]
    %v547 = vld [vmem:[#allocation3 + $0xdf8] sm:$0xff]
    %v548 = vld [vmem:[#allocation3 + $0xe00] sm:$0xff]
    %v549 = vld [vmem:[#allocation3 + $0xe08] sm:$0xff]
    %v550 = vld [vmem:[#allocation3 + $0xe10] sm:$0xff]
    %v551 = vld [vmem:[#allocation3 + $0xe18] sm:$0xff]
    %v552 = vld [vmem:[#allocation3 + $0xe20] sm:$0xff]
    %v553 = vld [vmem:[#allocation3 + $0xe28] sm:$0xff]
    %v554 = vld [vmem:[#allocation3 + $0xe30] sm:$0xff]
    %v555 = vld [vmem:[#allocation3 + $0xe38] sm:$0xff]
    %v556 = vld [vmem:[#allocation3 + $0xe40] sm:$0xff]
    %v557 = vld [vmem:[#allocation3 + $0xe48] sm:$0xff]
    %v558 = vld [vmem:[#allocation3 + $0xe50] sm:$0xff]
    %v559 = vld [vmem:[#allocation3 + $0xe58] sm:$0xff]
    %v560 = vld [vmem:[#allocation3 + $0xe60] sm:$0xff]
    %v561 = vld [vmem:[#allocation3 + $0xe68] sm:$0xff]
    %v562 = vld [vmem:[#allocation3 + $0xe70] sm:$0xff]
    %v563 = vld [vmem:[#allocation3 + $0xe78] sm:$0xff]
    %v564 = vld [vmem:[#allocation3 + $0xe80] sm:$0xff]
    %v565 = vld [vmem:[#allocation3 + $0xe88] sm:$0xff]
    %v566 = vld [vmem:[#allocation3 + $0xe90] sm:$0xff]
    %v567 = vld [vmem:[#allocation3 + $0xe98] sm:$0xff]
    %v568 = vld [vmem:[#allocation3 + $0xea0] sm:$0xff]
    %v569 = vld [vmem:[#allocation3 + $0xea8] sm:$0xff]
    %v570 = vld [vmem:[#allocation3 + $0xeb0] sm:$0xff]
    %v571 = vld [vmem:[#allocation3 + $0xeb8] sm:$0xff]
    %v572 = vld [vmem:[#allocation3 + $0xec0] sm:$0xff]
    %v573 = vld [vmem:[#allocation3 + $0xec8] sm:$0xff]
    %v574 = vld [vmem:[#allocation3 + $0xed0] sm:$0xff]
    %v575 = vld [vmem:[#allocation3 + $0xed8] sm:$0xff]
    %v576 = vld [vmem:[#allocation3 + $0xee0] sm:$0xff]
    %v577 = vld [vmem:[#allocation3 + $0xee8] sm:$0xff]
    %v578 = vld [vmem:[#allocation3 + $0xef0] sm:$0xff]
    %v579 = vld [vmem:[#allocation3 + $0xef8] sm:$0xff]
    %v580 = vld [vmem:[#allocation3 + $0xf00] sm:$0xff]
    %v581 = vld [vmem:[#allocation3 + $0xf08] sm:$0xff]
    %v582 = vld [vmem:[#allocation3 + $0xf10] sm:$0xff]
    %v583 = vld [vmem:[#allocation3 + $0xf18] sm:$0xff]
    %v584 = vld [vmem:[#allocation3 + $0xf20] sm:$0xff]
    %v585 = vld [vmem:[#allocation3 + $0xf28] sm:$0xff]
    %v586 = vld [vmem:[#allocation3 + $0xf30] sm:$0xff]
    %v587 = vld [vmem:[#allocation3 + $0xf38] sm:$0xff]
    %v588 = vld [vmem:[#allocation3 + $0xf40] sm:$0xff]
    %v589 = vld [vmem:[#allocation3 + $0xf48] sm:$0xff]
    %v590 = vld [vmem:[#allocation3 + $0xf50] sm:$0xff]
    %v591 = vld [vmem:[#allocation3 + $0xf58] sm:$0xff]
    %v592 = vld [vmem:[#allocation3 + $0xf60] sm:$0xff]
    %v593 = vld [vmem:[#allocation3 + $0xf68] sm:$0xff]
    %v594 = vld [vmem:[#allocation3 + $0xf70] sm:$0xff]
    %v595 = vld [vmem:[#allocation3 + $0xf78] sm:$0xff]
    %v596 = vld [vmem:[#allocation3 + $0xf80] sm:$0xff]
    %v597 = vld [vmem:[#allocation3 + $0xf88] sm:$0xff]
    %v598 = vld [vmem:[#allocation3 + $0xf90] sm:$0xff]
    %v599 = vld [vmem:[#allocation3 + $0xf98] sm:$0xff]
    %v600 = vld [vmem:[#allocation3 + $0xfa0] sm:$0xff]
    %v601 = vld [vmem:[#allocation3 + $0xfa8] sm:$0xff]
    %v602 = vld [vmem:[#allocation3 + $0xfb0] sm:$0xff]
    %v603 = vld [vmem:[#allocation3 + $0xfb8] sm:$0xff]
    %v604 = vld [vmem:[#allocation3 + $0xfc0] sm:$0xff]
    %v605 = vld [vmem:[#allocation3 + $0xfc8] sm:$0xff]
    %v606 = vld [vmem:[#allocation3 + $0xfd0] sm:$0xff]
    %v607 = vld [vmem:[#allocation3 + $0xfd8] sm:$0xff]
    %v608 = vld [vmem:[#allocation3 + $0xfe0] sm:$0xff]
    %v609 = vld [vmem:[#allocation3 + $0xfe8] sm:$0xff]
    %v610 = vld [vmem:[#allocation3 + $0xff0] sm:$0xff]
    %v611 = vld [vmem:[#allocation3 + $0xff8] sm:$0xff]
    %v612 = vld [vmem:[#allocation3 + $0x1000] sm:$0xff]
    %v613 = vld [vmem:[#allocation3 + $0x1008] sm:$0xff]
    %v614 = vld [vmem:[#allocation3 + $0x1010] sm:$0xff]
    %v615 = vld [vmem:[#allocation3 + $0x1018] sm:$0xff]
    %v616 = vld [vmem:[#allocation3 + $0x1020] sm:$0xff]
    %v617 = vld [vmem:[#allocation3 + $0x1028] sm:$0xff]
    %v618 = vld [vmem:[#allocation3 + $0x1030] sm:$0xff]
    %v619 = vld [vmem:[#allocation3 + $0x1038] sm:$0xff]
    %v620 = vld [vmem:[#allocation3 + $0x1040] sm:$0xff]
    %v621 = vld [vmem:[#allocation3 + $0x1048] sm:$0xff]
    %v622 = vld [vmem:[#allocation3 + $0x1050] sm:$0xff]
    %v623 = vld [vmem:[#allocation3 + $0x1058] sm:$0xff]
    %v624 = vld [vmem:[#allocation3 + $0x1060] sm:$0xff]
    %v625 = vld [vmem:[#allocation3 + $0x1068] sm:$0xff]
    %v626 = vld [vmem:[#allocation3 + $0x1070] sm:$0xff]
    %v627 = vld [vmem:[#allocation3 + $0x1078] sm:$0xff]
    %v628 = vld [vmem:[#allocation3 + $0x1080] sm:$0xff]
    %v629 = vld [vmem:[#allocation3 + $0x1088] sm:$0xff]
    %v630 = vld [vmem:[#allocation3 + $0x1090] sm:$0xff]
    %v631 = vld [vmem:[#allocation3 + $0x1098] sm:$0xff]
    %v632 = vld [vmem:[#allocation3 + $0x10a0] sm:$0xff]
    %v633 = vld [vmem:[#allocation3 + $0x10a8] sm:$0xff]
    %v634 = vld [vmem:[#allocation3 + $0x10b0] sm:$0xff]
    %v635 = vld [vmem:[#allocation3 + $0x10b8] sm:$0xff]
    %v636 = vld [vmem:[#allocation3 + $0x10c0] sm:$0xff]
    %v637 = vld [vmem:[#allocation3 + $0x10c8] sm:$0xff]
    %v638 = vld [vmem:[#allocation3 + $0x10d0] sm:$0xff]
    %v639 = vld [vmem:[#allocation3 + $0x10d8] sm:$0xff]
    %v640 = vld [vmem:[#allocation3 + $0x10e0] sm:$0xff]
    %v641 = vld [vmem:[#allocation3 + $0x10e8] sm:$0xff]
    %v642 = vld [vmem:[#allocation3 + $0x10f0] sm:$0xff]
    %v643 = vld [vmem:[#allocation3 + $0x10f8] sm:$0xff]
    %v644 = vld [vmem:[#allocation3 + $0x1100] sm:$0xff]
    %v645 = vld [vmem:[#allocation3 + $0x1108] sm:$0xff]
    %v646 = vld [vmem:[#allocation3 + $0x1110] sm:$0xff]
    %v647 = vld [vmem:[#allocation3 + $0x1118] sm:$0xff]
    %v648 = vld [vmem:[#allocation3 + $0x1120] sm:$0xff]
    %v649 = vld [vmem:[#allocation3 + $0x1128] sm:$0xff]
    %v650 = vld [vmem:[#allocation3 + $0x1130] sm:$0xff]
    %v651 = vld [vmem:[#allocation3 + $0x1138] sm:$0xff]
    %v652 = vld [vmem:[#allocation3 + $0x1140] sm:$0xff]
    %v653 = vld [vmem:[#allocation3 + $0x1148] sm:$0xff]
    %v654 = vld [vmem:[#allocation3 + $0x1150] sm:$0xff]
    %v655 = vld [vmem:[#allocation3 + $0x1158] sm:$0xff]
    %v656 = vld [vmem:[#allocation3 + $0x1160] sm:$0xff]
    %v657 = vld [vmem:[#allocation3 + $0x1168] sm:$0xff]
    %v658 = vld [vmem:[#allocation3 + $0x1170] sm:$0xff]
    %v659 = vld [vmem:[#allocation3 + $0x1178] sm:$0xff]
    %v660 = vld [vmem:[#allocation3 + $0x1180] sm:$0xff]
    %v661 = vld [vmem:[#allocation3 + $0x1188] sm:$0xff]
    %v662 = vld [vmem:[#allocation3 + $0x1190] sm:$0xff]
    %v663 = vld [vmem:[#allocation3 + $0x1198] sm:$0xff]
    %v664 = vld [vmem:[#allocation3 + $0x11a0] sm:$0xff]
    %v665 = vld [vmem:[#allocation3 + $0x11a8] sm:$0xff]
    %v666 = vld [vmem:[#allocation3 + $0x11b0] sm:$0xff]
    %v667 = vld [vmem:[#allocation3 + $0x11b8] sm:$0xff]
    %v668 = vld [vmem:[#allocation3 + $0x11c0] sm:$0xff]
    %v669 = vld [vmem:[#allocation3 + $0x11c8] sm:$0xff]
    %v670 = vld [vmem:[#allocation3 + $0x11d0] sm:$0xff]
    %v671 = vld [vmem:[#allocation3 + $0x11d8] sm:$0xff]
    %v672 = vld [vmem:[#allocation3 + $0x11e0] sm:$0xff]
    %v673 = vld [vmem:[#allocation3 + $0x11e8] sm:$0xff]
    %v674 = vld [vmem:[#allocation3 + $0x11f0] sm:$0xff]
    %v675 = vld [vmem:[#allocation3 + $0x11f8] sm:$0xff]
    %v676 = vld [vmem:[#allocation3 + $0x1200] sm:$0xff]
    %v677 = vld [vmem:[#allocation3 + $0x1208] sm:$0xff]
    %v678 = vld [vmem:[#allocation3 + $0x1210] sm:$0xff]
    %v679 = vld [vmem:[#allocation3 + $0x1218] sm:$0xff]
    %v680 = vld [vmem:[#allocation3 + $0x1220] sm:$0xff]
    %v681 = vld [vmem:[#allocation3 + $0x1228] sm:$0xff]
    %v682 = vld [vmem:[#allocation3 + $0x1230] sm:$0xff]
    %v683 = vld [vmem:[#allocation3 + $0x1238] sm:$0xff]
    %v684 = vld [vmem:[#allocation3 + $0x1240] sm:$0xff]
    %v685 = vld [vmem:[#allocation3 + $0x1248] sm:$0xff]
    %v686 = vld [vmem:[#allocation3 + $0x1250] sm:$0xff]
    %v687 = vld [vmem:[#allocation3 + $0x1258] sm:$0xff]
    %v688 = vld [vmem:[#allocation3 + $0x1260] sm:$0xff]
    %v689 = vld [vmem:[#allocation3 + $0x1268] sm:$0xff]
    %v690 = vld [vmem:[#allocation3 + $0x1270] sm:$0xff]
    %v691 = vld [vmem:[#allocation3 + $0x1278] sm:$0xff]
    %v692 = vld [vmem:[#allocation3 + $0x1280] sm:$0xff]
    %v693 = vld [vmem:[#allocation3 + $0x1288] sm:$0xff]
    %v694 = vld [vmem:[#allocation3 + $0x1290] sm:$0xff]
    %v695 = vld [vmem:[#allocation3 + $0x1298] sm:$0xff]
    %v696 = vld [vmem:[#allocation3 + $0x12a0] sm:$0xff]
    %v697 = vld [vmem:[#allocation3 + $0x12a8] sm:$0xff]
    %v698 = vld [vmem:[#allocation3 + $0x12b0] sm:$0xff]
    %v699 = vld [vmem:[#allocation3 + $0x12b8] sm:$0xff]
    %v700 = vld [vmem:[#allocation3 + $0x12c0] sm:$0xff]
    %v701 = vld [vmem:[#allocation3 + $0x12c8] sm:$0xff]
    %v702 = vld [vmem:[#allocation3 + $0x12d0] sm:$0xff]
    %v703 = vld [vmem:[#allocation3 + $0x12d8] sm:$0xff]
    %v704 = vld [vmem:[#allocation3 + $0x12e0] sm:$0xff]
    %v705 = vld [vmem:[#allocation3 + $0x12e8] sm:$0xff]
    %v706 = vld [vmem:[#allocation3 + $0x12f0] sm:$0xff]
    %v707 = vld [vmem:[#allocation3 + $0x12f8] sm:$0xff]
    %v708 = vld [vmem:[#allocation3 + $0x1300] sm:$0xff]
    %v709 = vld [vmem:[#allocation3 + $0x1308] sm:$0xff]
    %v710 = vld [vmem:[#allocation3 + $0x1310] sm:$0xff]
    %v711 = vld [vmem:[#allocation3 + $0x1318] sm:$0xff]
    %v712 = vld [vmem:[#allocation3 + $0x1320] sm:$0xff]
    %v713 = vld [vmem:[#allocation3 + $0x1328] sm:$0xff]
    %v714 = vld [vmem:[#allocation3 + $0x1330] sm:$0xff]
    %v715 = vld [vmem:[#allocation3 + $0x1338] sm:$0xff]
    %v716 = vld [vmem:[#allocation3 + $0x1340] sm:$0xff]
    %v717 = vld [vmem:[#allocation3 + $0x1348] sm:$0xff]
    %v718 = vld [vmem:[#allocation3 + $0x1350] sm:$0xff]
    %v719 = vld [vmem:[#allocation3 + $0x1358] sm:$0xff]
    %v720 = vld [vmem:[#allocation3 + $0x1360] sm:$0xff]
    %v721 = vld [vmem:[#allocation3 + $0x1368] sm:$0xff]
    %v722 = vld [vmem:[#allocation3 + $0x1370] sm:$0xff]
    %v723 = vld [vmem:[#allocation3 + $0x1378] sm:$0xff]
    %v724 = vld [vmem:[#allocation3 + $0x1380] sm:$0xff]
    %v725 = vld [vmem:[#allocation3 + $0x1388] sm:$0xff]
    %v726 = vld [vmem:[#allocation3 + $0x1390] sm:$0xff]
    %v727 = vld [vmem:[#allocation3 + $0x1398] sm:$0xff]
    %v728 = vld [vmem:[#allocation3 + $0x13a0] sm:$0xff]
    %v729 = vld [vmem:[#allocation3 + $0x13a8] sm:$0xff]
    %v730 = vld [vmem:[#allocation3 + $0x13b0] sm:$0xff]
    %v731 = vld [vmem:[#allocation3 + $0x13b8] sm:$0xff]
    %v732 = vld [vmem:[#allocation3 + $0x13c0] sm:$0xff]
    %v733 = vld [vmem:[#allocation3 + $0x13c8] sm:$0xff]
    %v734 = vld [vmem:[#allocation3 + $0x13d0] sm:$0xff]
    %v735 = vld [vmem:[#allocation3 + $0x13d8] sm:$0xff]
    %v736 = vld [vmem:[#allocation3 + $0x13e0] sm:$0xff]
    %v737 = vld [vmem:[#allocation3 + $0x13e8] sm:$0xff]
    %v738 = vld [vmem:[#allocation3 + $0x13f0] sm:$0xff]
    %v739 = vld [vmem:[#allocation3 + $0x13f8] sm:$0xff]
    %v740 = vld [vmem:[#allocation3 + $0x1400] sm:$0xff]
    %v741 = vld [vmem:[#allocation3 + $0x1408] sm:$0xff]
    %v742 = vld [vmem:[#allocation3 + $0x1410] sm:$0xff]
    %v743 = vld [vmem:[#allocation3 + $0x1418] sm:$0xff]
    %v744 = vld [vmem:[#allocation3 + $0x1420] sm:$0xff]
    %v745 = vld [vmem:[#allocation3 + $0x1428] sm:$0xff]
    %v746 = vld [vmem:[#allocation3 + $0x1430] sm:$0xff]
    %v747 = vld [vmem:[#allocation3 + $0x1438] sm:$0xff]
    %v748 = vld [vmem:[#allocation3 + $0x1440] sm:$0xff]
    %v749 = vld [vmem:[#allocation3 + $0x1448] sm:$0xff]
    %v750 = vld [vmem:[#allocation3 + $0x1450] sm:$0xff]
    %v751 = vld [vmem:[#allocation3 + $0x1458] sm:$0xff]
    %v752 = vld [vmem:[#allocation3 + $0x1460] sm:$0xff]
    %v753 = vld [vmem:[#allocation3 + $0x1468] sm:$0xff]
    %v754 = vld [vmem:[#allocation3 + $0x1470] sm:$0xff]
    %v755 = vld [vmem:[#allocation3 + $0x1478] sm:$0xff]
    %v756 = vld [vmem:[#allocation3 + $0x1480] sm:$0xff]
    %v757 = vld [vmem:[#allocation3 + $0x1488] sm:$0xff]
    %v758 = vld [vmem:[#allocation3 + $0x1490] sm:$0xff]
    %v759 = vld [vmem:[#allocation3 + $0x1498] sm:$0xff]
    %v760 = vld [vmem:[#allocation3 + $0x14a0] sm:$0xff]
    %v761 = vld [vmem:[#allocation3 + $0x14a8] sm:$0xff]
    %v762 = vld [vmem:[#allocation3 + $0x14b0] sm:$0xff]
    %v763 = vld [vmem:[#allocation3 + $0x14b8] sm:$0xff]
    %v764 = vld [vmem:[#allocation3 + $0x14c0] sm:$0xff]
    %v765 = vld [vmem:[#allocation3 + $0x14c8] sm:$0xff]
    %v766 = vld [vmem:[#allocation3 + $0x14d0] sm:$0xff]
    %v767 = vld [vmem:[#allocation3 + $0x14d8] sm:$0xff]
    %v768 = vld [vmem:[#allocation3 + $0x14e0] sm:$0xff]
    %v769 = vld [vmem:[#allocation3 + $0x14e8] sm:$0xff]
    %v770 = vld [vmem:[#allocation3 + $0x14f0] sm:$0xff]
    %v771 = vld [vmem:[#allocation3 + $0x14f8] sm:$0xff]
    %v772 = vld [vmem:[#allocation3 + $0x1500] sm:$0xff]
    %v773 = vld [vmem:[#allocation3 + $0x1508] sm:$0xff]
    %v774 = vld [vmem:[#allocation3 + $0x1510] sm:$0xff]
    %v775 = vld [vmem:[#allocation3 + $0x1518] sm:$0xff]
    %v776 = vld [vmem:[#allocation3 + $0x1520] sm:$0xff]
    %v777 = vld [vmem:[#allocation3 + $0x1528] sm:$0xff]
    %v778 = vld [vmem:[#allocation3 + $0x1530] sm:$0xff]
    %v779 = vld [vmem:[#allocation3 + $0x1538] sm:$0xff]
    %v780 = vld [vmem:[#allocation3 + $0x1540] sm:$0xff]
    %v781 = vld [vmem:[#allocation3 + $0x1548] sm:$0xff]
    %v782 = vld [vmem:[#allocation3 + $0x1550] sm:$0xff]
    %v783 = vld [vmem:[#allocation3 + $0x1558] sm:$0xff]
    %v784 = vld [vmem:[#allocation3 + $0x1560] sm:$0xff]
    %v785 = vld [vmem:[#allocation3 + $0x1568] sm:$0xff]
    %v786 = vld [vmem:[#allocation3 + $0x1570] sm:$0xff]
    %v787 = vld [vmem:[#allocation3 + $0x1578] sm:$0xff]
    %v788 = vld [vmem:[#allocation3 + $0x1580] sm:$0xff]
    %v789 = vld [vmem:[#allocation3 + $0x1588] sm:$0xff]
    %v790 = vld [vmem:[#allocation3 + $0x1590] sm:$0xff]
    %v791 = vld [vmem:[#allocation3 + $0x1598] sm:$0xff]
    %v792 = vld [vmem:[#allocation3 + $0x15a0] sm:$0xff]
    %v793 = vld [vmem:[#allocation3 + $0x15a8] sm:$0xff]
    %v794 = vld [vmem:[#allocation3 + $0x15b0] sm:$0xff]
    %v795 = vld [vmem:[#allocation3 + $0x15b8] sm:$0xff]
    %v796 = vld [vmem:[#allocation3 + $0x15c0] sm:$0xff]
    %v797 = vld [vmem:[#allocation3 + $0x15c8] sm:$0xff]
    %v798 = vld [vmem:[#allocation3 + $0x15d0] sm:$0xff]
    %v799 = vld [vmem:[#allocation3 + $0x15d8] sm:$0xff]
    %v800 = vld [vmem:[#allocation3 + $0x15e0] sm:$0xff]
    %v801 = vld [vmem:[#allocation3 + $0x15e8] sm:$0xff]
    %v802 = vld [vmem:[#allocation3 + $0x15f0] sm:$0xff]
    %v803 = vld [vmem:[#allocation3 + $0x15f8] sm:$0xff]
    %v804 = vld [vmem:[#allocation3 + $0x1600] sm:$0xff]
    %v805 = vld [vmem:[#allocation3 + $0x1608] sm:$0xff]
    %v806 = vld [vmem:[#allocation3 + $0x1610] sm:$0xff]
    %v807 = vld [vmem:[#allocation3 + $0x1618] sm:$0xff]
    %v808 = vld [vmem:[#allocation3 + $0x1620] sm:$0xff]
    %v809 = vld [vmem:[#allocation3 + $0x1628] sm:$0xff]
    %v810 = vld [vmem:[#allocation3 + $0x1630] sm:$0xff]
    %v811 = vld [vmem:[#allocation3 + $0x1638] sm:$0xff]
    %v812 = vld [vmem:[#allocation3 + $0x1640] sm:$0xff]
    %v813 = vld [vmem:[#allocation3 + $0x1648] sm:$0xff]
    %v814 = vld [vmem:[#allocation3 + $0x1650] sm:$0xff]
    %v815 = vld [vmem:[#allocation3 + $0x1658] sm:$0xff]
    %v816 = vld [vmem:[#allocation3 + $0x1660] sm:$0xff]
    %v817 = vld [vmem:[#allocation3 + $0x1668] sm:$0xff]
    %v818 = vld [vmem:[#allocation3 + $0x1670] sm:$0xff]
    %v819 = vld [vmem:[#allocation3 + $0x1678] sm:$0xff]
    %v820 = vld [vmem:[#allocation3 + $0x1680] sm:$0xff]
    %v821 = vld [vmem:[#allocation3 + $0x1688] sm:$0xff]
    %v822 = vld [vmem:[#allocation3 + $0x1690] sm:$0xff]
    %v823 = vld [vmem:[#allocation3 + $0x1698] sm:$0xff]
    %v824 = vld [vmem:[#allocation3 + $0x16a0] sm:$0xff]
    %v825 = vld [vmem:[#allocation3 + $0x16a8] sm:$0xff]
    %v826 = vld [vmem:[#allocation3 + $0x16b0] sm:$0xff]
    %v827 = vld [vmem:[#allocation3 + $0x16b8] sm:$0xff]
    %v828 = vld [vmem:[#allocation3 + $0x16c0] sm:$0xff]
    %v829 = vld [vmem:[#allocation3 + $0x16c8] sm:$0xff]
    %v830 = vld [vmem:[#allocation3 + $0x16d0] sm:$0xff]
    %v831 = vld [vmem:[#allocation3 + $0x16d8] sm:$0xff]
    %v832 = vld [vmem:[#allocation3 + $0x16e0] sm:$0xff]
    %v833 = vld [vmem:[#allocation3 + $0x16e8] sm:$0xff]
    %v834 = vld [vmem:[#allocation3 + $0x16f0] sm:$0xff]
    %v835 = vld [vmem:[#allocation3 + $0x16f8] sm:$0xff]
    %v836 = vld [vmem:[#allocation3 + $0x1700] sm:$0xff]
    %v837 = vld [vmem:[#allocation3 + $0x1708] sm:$0xff]
    %v838 = vld [vmem:[#allocation3 + $0x1710] sm:$0xff]
    %v839 = vld [vmem:[#allocation3 + $0x1718] sm:$0xff]
    %v840 = vld [vmem:[#allocation3 + $0x1720] sm:$0xff]
    %v841 = vld [vmem:[#allocation3 + $0x1728] sm:$0xff]
    %v842 = vld [vmem:[#allocation3 + $0x1730] sm:$0xff]
    %v843 = vld [vmem:[#allocation3 + $0x1738] sm:$0xff]
    %v844 = vld [vmem:[#allocation3 + $0x1740] sm:$0xff]
    %v845 = vld [vmem:[#allocation3 + $0x1748] sm:$0xff]
    %v846 = vld [vmem:[#allocation3 + $0x1750] sm:$0xff]
    %v847 = vld [vmem:[#allocation3 + $0x1758] sm:$0xff]
    %v848 = vld [vmem:[#allocation3 + $0x1760] sm:$0xff]
    %v849 = vld [vmem:[#allocation3 + $0x1768] sm:$0xff]
    %v850 = vld [vmem:[#allocation3 + $0x1770] sm:$0xff]
    %v851 = vld [vmem:[#allocation3 + $0x1778] sm:$0xff]
    %v852 = vld [vmem:[#allocation3 + $0x1780] sm:$0xff]
    %v853 = vld [vmem:[#allocation3 + $0x1788] sm:$0xff]
    %v854 = vld [vmem:[#allocation3 + $0x1790] sm:$0xff]
    %v855 = vld [vmem:[#allocation3 + $0x1798] sm:$0xff]
    %v856 = vld [vmem:[#allocation3 + $0x17a0] sm:$0xff]
    %v857 = vld [vmem:[#allocation3 + $0x17a8] sm:$0xff]
    %v858 = vld [vmem:[#allocation3 + $0x17b0] sm:$0xff]
    %v859 = vld [vmem:[#allocation3 + $0x17b8] sm:$0xff]
    %v860 = vld [vmem:[#allocation3 + $0x17c0] sm:$0xff]
    %v861 = vld [vmem:[#allocation3 + $0x17c8] sm:$0xff]
    %v862 = vld [vmem:[#allocation3 + $0x17d0] sm:$0xff]
    %v863 = vld [vmem:[#allocation3 + $0x17d8] sm:$0xff]
    %v864 = vld [vmem:[#allocation3 + $0x17e0] sm:$0xff]
    %v865 = vld [vmem:[#allocation3 + $0x17e8] sm:$0xff]
    %v866 = vld [vmem:[#allocation3 + $0x17f0] sm:$0xff]
    %v867 = vld [vmem:[#allocation3 + $0x17f8] sm:$0xff]
    %v868 = vld [vmem:[#allocation3 + $0x1800] sm:$0xff]
    %v869 = vld [vmem:[#allocation3 + $0x1808] sm:$0xff]
    %v870 = vld [vmem:[#allocation3 + $0x1810] sm:$0xff]
    %v871 = vld [vmem:[#allocation3 + $0x1818] sm:$0xff]
    %v872 = vld [vmem:[#allocation3 + $0x1820] sm:$0xff]
    %v873 = vld [vmem:[#allocation3 + $0x1828] sm:$0xff]
    %v874 = vld [vmem:[#allocation3 + $0x1830] sm:$0xff]
    %v875 = vld [vmem:[#allocation3 + $0x1838] sm:$0xff]
    %v876 = vld [vmem:[#allocation3 + $0x1840] sm:$0xff]
    %v877 = vld [vmem:[#allocation3 + $0x1848] sm:$0xff]
    %v878 = vld [vmem:[#allocation3 + $0x1850] sm:$0xff]
    %v879 = vld [vmem:[#allocation3 + $0x1858] sm:$0xff]
    %v880 = vld [vmem:[#allocation3 + $0x1860] sm:$0xff]
    %v881 = vld [vmem:[#allocation3 + $0x1868] sm:$0xff]
    %v882 = vld [vmem:[#allocation3 + $0x1870] sm:$0xff]
    %v883 = vld [vmem:[#allocation3 + $0x1878] sm:$0xff]
    %v884 = vld [vmem:[#allocation3 + $0x1880] sm:$0xff]
    %v885 = vld [vmem:[#allocation3 + $0x1888] sm:$0xff]
    %v886 = vld [vmem:[#allocation3 + $0x1890] sm:$0xff]
    %v887 = vld [vmem:[#allocation3 + $0x1898] sm:$0xff]
    %v888 = vld [vmem:[#allocation3 + $0x18a0] sm:$0xff]
    %v889 = vld [vmem:[#allocation3 + $0x18a8] sm:$0xff]
    %v890 = vld [vmem:[#allocation3 + $0x18b0] sm:$0xff]
    %v891 = vld [vmem:[#allocation3 + $0x18b8] sm:$0xff]
    %v892 = vld [vmem:[#allocation3 + $0x18c0] sm:$0xff]
    %v893 = vld [vmem:[#allocation3 + $0x18c8] sm:$0xff]
    %v894 = vld [vmem:[#allocation3 + $0x18d0] sm:$0xff]
    %v895 = vld [vmem:[#allocation3 + $0x18d8] sm:$0xff]
    %v896 = vld [vmem:[#allocation3 + $0x18e0] sm:$0xff]
    %v897 = vld [vmem:[#allocation3 + $0x18e8] sm:$0xff]
    %v898 = vld [vmem:[#allocation3 + $0x18f0] sm:$0xff]
    %v899 = vld [vmem:[#allocation3 + $0x18f8] sm:$0xff]
    %v900 = vld [vmem:[#allocation3 + $0x1900] sm:$0xff]
    %v901 = vld [vmem:[#allocation3 + $0x1908] sm:$0xff]
    %v902 = vld [vmem:[#allocation3 + $0x1910] sm:$0xff]
    %v903 = vld [vmem:[#allocation3 + $0x1918] sm:$0xff]
    %v904 = vld [vmem:[#allocation3 + $0x1920] sm:$0xff]
    %v905 = vld [vmem:[#allocation3 + $0x1928] sm:$0xff]
    %v906 = vld [vmem:[#allocation3 + $0x1930] sm:$0xff]
    %v907 = vld [vmem:[#allocation3 + $0x1938] sm:$0xff]
    %v908 = vld [vmem:[#allocation3 + $0x1940] sm:$0xff]
    %v909 = vld [vmem:[#allocation3 + $0x1948] sm:$0xff]
    %v910 = vld [vmem:[#allocation3 + $0x1950] sm:$0xff]
    %v911 = vld [vmem:[#allocation3 + $0x1958] sm:$0xff]
    %v912 = vld [vmem:[#allocation3 + $0x1960] sm:$0xff]
    %v913 = vld [vmem:[#allocation3 + $0x1968] sm:$0xff]
    %v914 = vld [vmem:[#allocation3 + $0x1970] sm:$0xff]
    %v915 = vld [vmem:[#allocation3 + $0x1978] sm:$0xff]
    %v916 = vld [vmem:[#allocation3 + $0x1980] sm:$0xff]
    %v917 = vld [vmem:[#allocation3 + $0x1988] sm:$0xff]
    %v918 = vld [vmem:[#allocation3 + $0x1990] sm:$0xff]
    %v919 = vld [vmem:[#allocation3 + $0x1998] sm:$0xff]
    %v920 = vld [vmem:[#allocation3 + $0x19a0] sm:$0xff]
    %v921 = vld [vmem:[#allocation3 + $0x19a8] sm:$0xff]
    %v922 = vld [vmem:[#allocation3 + $0x19b0] sm:$0xff]
    %v923 = vld [vmem:[#allocation3 + $0x19b8] sm:$0xff]
    %v924 = vld [vmem:[#allocation3 + $0x19c0] sm:$0xff]
    %v925 = vld [vmem:[#allocation3 + $0x19c8] sm:$0xff]
    %v926 = vld [vmem:[#allocation3 + $0x19d0] sm:$0xff]
    %v927 = vld [vmem:[#allocation3 + $0x19d8] sm:$0xff]
    %v928 = vld [vmem:[#allocation3 + $0x19e0] sm:$0xff]
    %v929 = vld [vmem:[#allocation3 + $0x19e8] sm:$0xff]
    %v930 = vld [vmem:[#allocation3 + $0x19f0] sm:$0xff]
    %v931 = vld [vmem:[#allocation3 + $0x19f8] sm:$0xff]
    %v932 = vld [vmem:[#allocation3 + $0x1a00] sm:$0xff]
    %v933 = vld [vmem:[#allocation3 + $0x1a08] sm:$0xff]
    %v934 = vld [vmem:[#allocation3 + $0x1a10] sm:$0xff]
    %v935 = vld [vmem:[#allocation3 + $0x1a18] sm:$0xff]
    %v936 = vld [vmem:[#allocation3 + $0x1a20] sm:$0xff]
    %v937 = vld [vmem:[#allocation3 + $0x1a28] sm:$0xff]
    %v938 = vld [vmem:[#allocation3 + $0x1a30] sm:$0xff]
    %v939 = vld [vmem:[#allocation3 + $0x1a38] sm:$0xff]
    %v940 = vld [vmem:[#allocation3 + $0x1a40] sm:$0xff]
    %v941 = vld [vmem:[#allocation3 + $0x1a48] sm:$0xff]
    %v942 = vld [vmem:[#allocation3 + $0x1a50] sm:$0xff]
    %v943 = vld [vmem:[#allocation3 + $0x1a58] sm:$0xff]
    %v944 = vld [vmem:[#allocation3 + $0x1a60] sm:$0xff]
    %v945 = vld [vmem:[#allocation3 + $0x1a68] sm:$0xff]
    %v946 = vld [vmem:[#allocation3 + $0x1a70] sm:$0xff]
    %v947 = vld [vmem:[#allocation3 + $0x1a78] sm:$0xff]
    %v948 = vld [vmem:[#allocation3 + $0x1a80] sm:$0xff]
    %v949 = vld [vmem:[#allocation3 + $0x1a88] sm:$0xff]
    %v950 = vld [vmem:[#allocation3 + $0x1a90] sm:$0xff]
    %v951 = vld [vmem:[#allocation3 + $0x1a98] sm:$0xff]
    %v952 = vld [vmem:[#allocation3 + $0x1aa0] sm:$0xff]
    %v953 = vld [vmem:[#allocation3 + $0x1aa8] sm:$0xff]
    %v954 = vld [vmem:[#allocation3 + $0x1ab0] sm:$0xff]
    %v955 = vld [vmem:[#allocation3 + $0x1ab8] sm:$0xff]
    %v956 = vld [vmem:[#allocation3 + $0x1ac0] sm:$0xff]
    %v957 = vld [vmem:[#allocation3 + $0x1ac8] sm:$0xff]
    %v958 = vld [vmem:[#allocation3 + $0x1ad0] sm:$0xff]
    %v959 = vld [vmem:[#allocation3 + $0x1ad8] sm:$0xff]
    %v960 = vld [vmem:[#allocation3 + $0x1ae0] sm:$0xff]
    %v961 = vld [vmem:[#allocation3 + $0x1ae8] sm:$0xff]
    %v962 = vld [vmem:[#allocation3 + $0x1af0] sm:$0xff]
    %v963 = vld [vmem:[#allocation3 + $0x1af8] sm:$0xff]
    %v964 = vld [vmem:[#allocation3 + $0x1b00] sm:$0xff]
    %v965 = vld [vmem:[#allocation3 + $0x1b08] sm:$0xff]
    %v966 = vld [vmem:[#allocation3 + $0x1b10] sm:$0xff]
    %v967 = vld [vmem:[#allocation3 + $0x1b18] sm:$0xff]
    %v968 = vld [vmem:[#allocation3 + $0x1b20] sm:$0xff]
    %v969 = vld [vmem:[#allocation3 + $0x1b28] sm:$0xff]
    %v970 = vld [vmem:[#allocation3 + $0x1b30] sm:$0xff]
    %v971 = vld [vmem:[#allocation3 + $0x1b38] sm:$0xff]
    %v972 = vld [vmem:[#allocation3 + $0x1b40] sm:$0xff]
    %v973 = vld [vmem:[#allocation3 + $0x1b48] sm:$0xff]
    %v974 = vld [vmem:[#allocation3 + $0x1b50] sm:$0xff]
    %v975 = vld [vmem:[#allocation3 + $0x1b58] sm:$0xff]
    %v976 = vld [vmem:[#allocation3 + $0x1b60] sm:$0xff]
    %v977 = vld [vmem:[#allocation3 + $0x1b68] sm:$0xff]
    %v978 = vld [vmem:[#allocation3 + $0x1b70] sm:$0xff]
    %v979 = vld [vmem:[#allocation3 + $0x1b78] sm:$0xff]
    %v980 = vld [vmem:[#allocation3 + $0x1b80] sm:$0xff]
    %v981 = vld [vmem:[#allocation3 + $0x1b88] sm:$0xff]
    %v982 = vld [vmem:[#allocation3 + $0x1b90] sm:$0xff]
    %v983 = vld [vmem:[#allocation3 + $0x1b98] sm:$0xff]
    %v984 = vld [vmem:[#allocation3 + $0x1ba0] sm:$0xff]
    %v985 = vld [vmem:[#allocation3 + $0x1ba8] sm:$0xff]
    %v986 = vld [vmem:[#allocation3 + $0x1bb0] sm:$0xff]
    %v987 = vld [vmem:[#allocation3 + $0x1bb8] sm:$0xff]
    %v988 = vld [vmem:[#allocation3 + $0x1bc0] sm:$0xff]
    %v989 = vld [vmem:[#allocation3 + $0x1bc8] sm:$0xff]
    %v990 = vld [vmem:[#allocation3 + $0x1bd0] sm:$0xff]
    %v991 = vld [vmem:[#allocation3 + $0x1bd8] sm:$0xff]
    %v992 = vld [vmem:[#allocation3 + $0x1be0] sm:$0xff]
    %v993 = vld [vmem:[#allocation3 + $0x1be8] sm:$0xff]
    %v994 = vld [vmem:[#allocation3 + $0x1bf0] sm:$0xff]
    %v995 = vld [vmem:[#allocation3 + $0x1bf8] sm:$0xff]
    %v996 = vld [vmem:[#allocation5] sm:$0xff]
    %v997 = vld [vmem:[#allocation5 + $0x8] sm:$0xff]
    %v1000 = vlaneseq
    %v1001 = vshrl.u32 %v1000, 7
    %v1002 = vsub.s32 0, %v1001
    %v1003 = vrot.slane %v996, %v1002
    %v1004 = vlaneseq
    %v1005 = vshrl.u32 %v1004, 7
    %v1006 = vsub.s32 1, %v1005
    %v1007 = vrot.slane %v996, %v1006
    %v1008 = vlaneseq
    %v1009 = vshrl.u32 %v1008, 7
    %v1010 = vsub.s32 2, %v1009
    %v1011 = vrot.slane %v996, %v1010
    %v1012 = vlaneseq
    %v1013 = vshrl.u32 %v1012, 7
    %v1014 = vsub.s32 3, %v1013
    %v1015 = vrot.slane %v996, %v1014
    %v1016 = vlaneseq
    %v1017 = vshrl.u32 %v1016, 7
    %v1018 = vsub.s32 4, %v1017
    %v1019 = vrot.slane %v996, %v1018
    %v1020 = vlaneseq
    %v1021 = vshrl.u32 %v1020, 7
    %v1022 = vsub.s32 5, %v1021
    %v1023 = vrot.slane %v996, %v1022
    %v1024 = vlaneseq
    %v1025 = vshrl.u32 %v1024, 7
    %v1026 = vsub.s32 6, %v1025
    %v1027 = vrot.slane %v996, %v1026
    %v1028 = vlaneseq
    %v1029 = vshrl.u32 %v1028, 7
    %v1030 = vsub.s32 7, %v1029
    %v1031 = vrot.slane %v996, %v1030
    %v1032 = vlaneseq
    %v1033 = vshrl.u32 %v1032, 7
    %v1034 = vsub.s32 0, %v1033
    %v1035 = vrot.slane %v997, %v1034
    %v1036 = vlaneseq
    %v1037 = vshrl.u32 %v1036, 7
    %v1038 = vsub.s32 1, %v1037
    %v1039 = vrot.slane %v997, %v1038
    %v1040 = vlaneseq
    %v1041 = vshrl.u32 %v1040, 7
    %v1042 = vsub.s32 2, %v1041
    %v1043 = vrot.slane %v997, %v1042
    %v1044 = vlaneseq
    %v1045 = vshrl.u32 %v1044, 7
    %v1046 = vsub.s32 3, %v1045
    %v1047 = vrot.slane %v997, %v1046
    %v1048 = vlaneseq
    %v1049 = vshrl.u32 %v1048, 7
    %v1050 = vsub.s32 4, %v1049
    %v1051 = vrot.slane %v997, %v1050
    %v1052 = vlaneseq
    %v1053 = vshrl.u32 %v1052, 7
    %v1054 = vsub.s32 5, %v1053
    %v1055 = vrot.slane %v997, %v1054
    %v1056 = vlaneseq
    %v1057 = vshrl.u32 %v1056, 7
    %v1058 = vsub.s32 6, %v1057
    %v1059 = vrot.slane %v997, %v1058
    %v1060 = vlaneseq
    %v1061 = vshrl.u32 %v1060, 7
    %v1062 = vsub.s32 7, %v1061
    %v1063 = vrot.slane %v997, %v1062
    %vm1080 = vcmask 523264
    %v1082 = vsel %vm1080, %v99, 0
    %1084 = vmatprep.subr.mxu0 %v101
    %1085 = vmatpush1.msra.mxu0 %v100
    %1086 = vmatprep.subr.mxu0 %v117
    %1087 = vmatpush1.msra.mxu0 %v116
    %1088 = vmatprep.subr.mxu0 %v133
    %1089 = vmatpush1.msra.mxu0 %v132
    %1090 = vmatprep.subr.mxu0 %v149
    %1091 = vmatpush1.msra.mxu0 %v148
    %1092 = vmatprep.subr.mxu0 %v165
    %1093 = vmatpush1.msra.mxu0 %v164
    %1094 = vmatprep.subr.mxu0 %v181
    %1095 = vmatpush1.msra.mxu0 %v180
    %1096 = vmatprep.subr.mxu0 %v197
    %1097 = vmatpush1.msra.mxu0 %v196
    %1098 = vmatprep.subr.mxu0 %v213
    %1099 = vmatpush1.msra.mxu0 %v212
    %1100 = vmatprep.subr.mxu0 %v229
    %1101 = vmatpush1.msra.mxu0 %v228
    %1102 = vmatprep.subr.mxu0 %v245
    %1103 = vmatpush1.msra.mxu0 %v244
    %1104 = vmatprep.subr.mxu0 %v261
    %1105 = vmatpush1.msra.mxu0 %v260
    %1106 = vmatprep.subr.mxu0 %v277
    %1107 = vmatpush1.msra.mxu0 %v276
    %1108 = vmatprep.subr.mxu0 %v293
    %1109 = vmatpush1.msra.mxu0 %v292
    %1110 = vmatprep.subr.mxu0 %v309
    %1111 = vmatpush1.msra.mxu0 %v308
    %1112 = vmatprep.subr.mxu0 %v325
    %1113 = vmatpush1.msra.mxu0 %v324
    %1114 = vmatprep.subr.mxu0 %v341
    %1115 = vmatpush1.msra.mxu0 %v340
    %1116 = vmatprep.subr.mxu0 %v357
    %1117 = vmatpush1.msra.mxu0 %v356
    %1118 = vmatprep.subr.mxu0 %v373
    %1119 = vmatpush1.msra.mxu0 %v372
    %1120 = vmatprep.subr.mxu0 %v389
    %1121 = vmatpush1.msra.mxu0 %v388
    %1122 = vmatprep.subr.mxu0 %v405
    %1123 = vmatpush1.msra.mxu0 %v404
    %1124 = vmatprep.subr.mxu0 %v421
    %1125 = vmatpush1.msra.mxu0 %v420
    %1126 = vmatprep.subr.mxu0 %v437
    %1127 = vmatpush1.msra.mxu0 %v436
    %1128 = vmatprep.subr.mxu0 %v453
    %1129 = vmatpush1.msra.mxu0 %v452
    %1130 = vmatprep.subr.mxu0 %v469
    %1131 = vmatpush1.msra.mxu0 %v468
    %1132 = vmatprep.subr.mxu0 %v485
    %1133 = vmatpush1.msra.mxu0 %v484
    %1134 = vmatprep.subr.mxu0 %v501
    %1135 = vmatpush1.msra.mxu0 %v500
    %1136 = vmatprep.subr.mxu0 %v517
    %1137 = vmatpush1.msra.mxu0 %v516
    %1138 = vmatprep.subr.mxu0 %v533
    %1139 = vmatpush1.msra.mxu0 %v532
    %1140 = vmatprep.subr.mxu0 %v549
    %1141 = vmatpush1.msra.mxu0 %v548
    %1142 = vmatprep.subr.mxu0 %v565
    %1143 = vmatpush1.msra.mxu0 %v564
    %1144 = vmatprep.subr.mxu0 %v581
    %1145 = vmatpush1.msra.mxu0 %v580
    %1146 = vmatprep.subr.mxu0 %v597
    %1147 = vmatpush1.msra.mxu0 %v596
    %1148 = vmatprep.mubr.f32.mxu0 %v97
    %1149 = vmatmul.mubr.f32.gmra.mrb[0].mxu0 %v96
    %v1150 = vpop.f32.mrb[0].mxu0
    %v1151 = vadd.f32 %v1003, %v1150
    %v1152 = vpop.f32.mrb[0].mxu0
    %v1153 = vadd.f32 %v1007, %v1152
    %1154 = vdwg.mxu0
    %1155 = vmatprep.subr.mxu0 %v613
    %1156 = vmatpush1.msra.mxu0 %v612
    %1157 = vmatprep.subr.mxu0 %v629
    %1158 = vmatpush1.msra.mxu0 %v628
    %1159 = vmatprep.subr.mxu0 %v645
    %1160 = vmatpush1.msra.mxu0 %v644
    %1161 = vmatprep.subr.mxu0 %v661
    %1162 = vmatpush1.msra.mxu0 %v660
    %1163 = vmatprep.subr.mxu0 %v677
    %1164 = vmatpush1.msra.mxu0 %v676
    %1165 = vmatprep.subr.mxu0 %v693
    %1166 = vmatpush1.msra.mxu0 %v692
    %1167 = vmatprep.subr.mxu0 %v709
    %1168 = vmatpush1.msra.mxu0 %v708
    %1169 = vmatprep.subr.mxu0 %v725
    %1170 = vmatpush1.msra.mxu0 %v724
    %1171 = vmatprep.subr.mxu0 %v741
    %1172 = vmatpush1.msra.mxu0 %v740
    %1173 = vmatprep.subr.mxu0 %v757
    %1174 = vmatpush1.msra.mxu0 %v756
    %1175 = vmatprep.subr.mxu0 %v773
    %1176 = vmatpush1.msra.mxu0 %v772
    %1177 = vmatprep.subr.mxu0 %v789
    %1178 = vmatpush1.msra.mxu0 %v788
    %1179 = vmatprep.subr.mxu0 %v805
    %1180 = vmatpush1.msra.mxu0 %v804
    %1181 = vmatprep.subr.mxu0 %v821
    %1182 = vmatpush1.msra.mxu0 %v820
    %1183 = vmatprep.subr.mxu0 %v837
    %1184 = vmatpush1.msra.mxu0 %v836
    %1185 = vmatprep.subr.mxu0 %v853
    %1186 = vmatpush1.msra.mxu0 %v852
    %1187 = vmatprep.subr.mxu0 %v869
    %1188 = vmatpush1.msra.mxu0 %v868
    %1189 = vmatprep.subr.mxu0 %v885
    %1190 = vmatpush1.msra.mxu0 %v884
    %1191 = vmatprep.subr.mxu0 %v901
    %1192 = vmatpush1.msra.mxu0 %v900
    %1193 = vmatprep.subr.mxu0 %v917
    %1194 = vmatpush1.msra.mxu0 %v916
    %1195 = vmatprep.subr.mxu0 %v933
    %1196 = vmatpush1.msra.mxu0 %v932
    %1197 = vmatprep.subr.mxu0 %v949
    %1198 = vmatpush1.msra.mxu0 %v948
    %1199 = vmatprep.subr.mxu0 %v965
    %1200 = vmatpush1.msra.mxu0 %v964
    %1201 = vmatprep.subr.mxu0 %v981
    %1202 = vmatpush1.msra.mxu0 %v980
    %1203 = vmatprep.subr.mxu0 0.0
    %1204 = vmatpush1.msra.mxu0 0.0
    %1205 = vmatprep.subr.mxu0 0.0
    %1206 = vmatpush1.msra.mxu0 0.0
    %1207 = vmatprep.subr.mxu0 0.0
    %1208 = vmatpush1.msra.mxu0 0.0
    %1209 = vmatprep.subr.mxu0 0.0
    %1210 = vmatpush1.msra.mxu0 0.0
    %1211 = vmatprep.subr.mxu0 0.0
    %1212 = vmatpush1.msra.mxu0 0.0
    %1213 = vmatprep.subr.mxu0 0.0
    %1214 = vmatpush1.msra.mxu0 0.0
    %1215 = vmatprep.subr.mxu0 0.0
    %1216 = vmatpush1.msra.mxu0 0.0
    %1217 = vmatprep.subr.mxu0 0.0
    %1218 = vmatpush1.msra.mxu0 0.0
    %1219 = vmatprep.mubr.f32.mxu0 %v1082
    %1220 = vmatmul.mubr.f32.gmra.mrb[0].mxu0 %v98
    %v1221 = vpop.f32.mrb[0].mxu0
    %v1222 = vadd.f32 %v1151, %v1221
    %v1223 = vpop.f32.mrb[0].mxu0
    %v1224 = vadd.f32 %v1153, %v1223
    %1225 = vdwg.mxu0
    %1226 = vmatprep.subr.mxu0 %v103
    %1227 = vmatpush1.msra.mxu0 %v102
    %1228 = vmatprep.subr.mxu0 %v119
    %1229 = vmatpush1.msra.mxu0 %v118
    %1230 = vmatprep.subr.mxu0 %v135
    %1231 = vmatpush1.msra.mxu0 %v134
    %1232 = vmatprep.subr.mxu0 %v151
    %1233 = vmatpush1.msra.mxu0 %v150
    %1234 = vmatprep.subr.mxu0 %v167
    %1235 = vmatpush1.msra.mxu0 %v166
    %1236 = vmatprep.subr.mxu0 %v183
    %1237 = vmatpush1.msra.mxu0 %v182
    %1238 = vmatprep.subr.mxu0 %v199
    %1239 = vmatpush1.msra.mxu0 %v198
    %1240 = vmatprep.subr.mxu0 %v215
    %1241 = vmatpush1.msra.mxu0 %v214
    %1242 = vmatprep.subr.mxu0 %v231
    %1243 = vmatpush1.msra.mxu0 %v230
    %1244 = vmatprep.subr.mxu0 %v247
    %1245 = vmatpush1.msra.mxu0 %v246
    %1246 = vmatprep.subr.mxu0 %v263
    %1247 = vmatpush1.msra.mxu0 %v262
    %1248 = vmatprep.subr.mxu0 %v279
    %1249 = vmatpush1.msra.mxu0 %v278
    %1250 = vmatprep.subr.mxu0 %v295
    %1251 = vmatpush1.msra.mxu0 %v294
    %1252 = vmatprep.subr.mxu0 %v311
    %1253 = vmatpush1.msra.mxu0 %v310
    %1254 = vmatprep.subr.mxu0 %v327
    %1255 = vmatpush1.msra.mxu0 %v326
    %1256 = vmatprep.subr.mxu0 %v343
    %1257 = vmatpush1.msra.mxu0 %v342
    %1258 = vmatprep.subr.mxu0 %v359
    %1259 = vmatpush1.msra.mxu0 %v358
    %1260 = vmatprep.subr.mxu0 %v375
    %1261 = vmatpush1.msra.mxu0 %v374
    %1262 = vmatprep.subr.mxu0 %v391
    %1263 = vmatpush1.msra.mxu0 %v390
    %1264 = vmatprep.subr.mxu0 %v407
    %1265 = vmatpush1.msra.mxu0 %v406
    %1266 = vmatprep.subr.mxu0 %v423
    %1267 = vmatpush1.msra.mxu0 %v422
    %1268 = vmatprep.subr.mxu0 %v439
    %1269 = vmatpush1.msra.mxu0 %v438
    %1270 = vmatprep.subr.mxu0 %v455
    %1271 = vmatpush1.msra.mxu0 %v454
    %1272 = vmatprep.subr.mxu0 %v471
    %1273 = vmatpush1.msra.mxu0 %v470
    %1274 = vmatprep.subr.mxu0 %v487
    %1275 = vmatpush1.msra.mxu0 %v486
    %1276 = vmatprep.subr.mxu0 %v503
    %1277 = vmatpush1.msra.mxu0 %v502
    %1278 = vmatprep.subr.mxu0 %v519
    %1279 = vmatpush1.msra.mxu0 %v518
    %1280 = vmatprep.subr.mxu0 %v535
    %1281 = vmatpush1.msra.mxu0 %v534
    %1282 = vmatprep.subr.mxu0 %v551
    %1283 = vmatpush1.msra.mxu0 %v550
    %1284 = vmatprep.subr.mxu0 %v567
    %1285 = vmatpush1.msra.mxu0 %v566
    %1286 = vmatprep.subr.mxu0 %v583
    %1287 = vmatpush1.msra.mxu0 %v582
    %1288 = vmatprep.subr.mxu0 %v599
    %1289 = vmatpush1.msra.mxu0 %v598
    %1290 = vmatprep.mubr.f32.mxu0 %v97
    %1291 = vmatmul.mubr.f32.gmra.mrb[0].mxu0 %v96
    %v1292 = vpop.f32.mrb[0].mxu0
    %v1293 = vadd.f32 %v1011, %v1292
    %v1294 = vpop.f32.mrb[0].mxu0
    %v1295 = vadd.f32 %v1015, %v1294
    %1296 = vdwg.mxu0
    %1297 = vmatprep.subr.mxu0 %v615
    %1298 = vmatpush1.msra.mxu0 %v614
    %1299 = vmatprep.subr.mxu0 %v631
    %1300 = vmatpush1.msra.mxu0 %v630
    %1301 = vmatprep.subr.mxu0 %v647
    %1302 = vmatpush1.msra.mxu0 %v646
    %1303 = vmatprep.subr.mxu0 %v663
    %1304 = vmatpush1.msra.mxu0 %v662
    %1305 = vmatprep.subr.mxu0 %v679
    %1306 = vmatpush1.msra.mxu0 %v678
    %1307 = vmatprep.subr.mxu0 %v695
    %1308 = vmatpush1.msra.mxu0 %v694
    %1309 = vmatprep.subr.mxu0 %v711
    %1310 = vmatpush1.msra.mxu0 %v710
    %1311 = vmatprep.subr.mxu0 %v727
    %1312 = vmatpush1.msra.mxu0 %v726
    %1313 = vmatprep.subr.mxu0 %v743
    %1314 = vmatpush1.msra.mxu0 %v742
    %1315 = vmatprep.subr.mxu0 %v759
    %1316 = vmatpush1.msra.mxu0 %v758
    %1317 = vmatprep.subr.mxu0 %v775
    %1318 = vmatpush1.msra.mxu0 %v774
    %1319 = vmatprep.subr.mxu0 %v791
    %1320 = vmatpush1.msra.mxu0 %v790
    %1321 = vmatprep.subr.mxu0 %v807
    %1322 = vmatpush1.msra.mxu0 %v806
    %1323 = vmatprep.subr.mxu0 %v823
    %1324 = vmatpush1.msra.mxu0 %v822
    %1325 = vmatprep.subr.mxu0 %v839
    %1326 = vmatpush1.msra.mxu0 %v838
    %1327 = vmatprep.subr.mxu0 %v855
    %1328 = vmatpush1.msra.mxu0 %v854
    %1329 = vmatprep.subr.mxu0 %v871
    %1330 = vmatpush1.msra.mxu0 %v870
    %1331 = vmatprep.subr.mxu0 %v887
    %1332 = vmatpush1.msra.mxu0 %v886
    %1333 = vmatprep.subr.mxu0 %v903
    %1334 = vmatpush1.msra.mxu0 %v902
    %1335 = vmatprep.subr.mxu0 %v919
    %1336 = vmatpush1.msra.mxu0 %v918
    %1337 = vmatprep.subr.mxu0 %v935
    %1338 = vmatpush1.msra.mxu0 %v934
    %1339 = vmatprep.subr.mxu0 %v951
    %1340 = vmatpush1.msra.mxu0 %v950
    %1341 = vmatprep.subr.mxu0 %v967
    %1342 = vmatpush1.msra.mxu0 %v966
    %1343 = vmatprep.subr.mxu0 %v983
    %1344 = vmatpush1.msra.mxu0 %v982
    %1345 = vmatprep.subr.mxu0 0.0
    %1346 = vmatpush1.msra.mxu0 0.0
    %1347 = vmatprep.subr.mxu0 0.0
    %1348 = vmatpush1.msra.mxu0 0.0
    %1349 = vmatprep.subr.mxu0 0.0
    %1350 = vmatpush1.msra.mxu0 0.0
    %1351 = vmatprep.subr.mxu0 0.0
    %1352 = vmatpush1.msra.mxu0 0.0
    %1353 = vmatprep.subr.mxu0 0.0
    %1354 = vmatpush1.msra.mxu0 0.0
    %1355 = vmatprep.subr.mxu0 0.0
    %1356 = vmatpush1.msra.mxu0 0.0
    %1357 = vmatprep.subr.mxu0 0.0
    %1358 = vmatpush1.msra.mxu0 0.0
    %1359 = vmatprep.subr.mxu0 0.0
    %1360 = vmatpush1.msra.mxu0 0.0
    %1361 = vmatprep.mubr.f32.mxu0 %v1082
    %1362 = vmatmul.mubr.f32.gmra.mrb[0].mxu0 %v98
    %v1363 = vpop.f32.mrb[0].mxu0
    %v1364 = vadd.f32 %v1293, %v1363
    %v1365 = vpop.f32.mrb[0].mxu0
    %v1366 = vadd.f32 %v1295, %v1365
    %1367 = vdwg.mxu0
    %1368 = vmatprep.subr.mxu0 %v105
    %1369 = vmatpush1.msra.mxu0 %v104
    %1370 = vmatprep.subr.mxu0 %v121
    %1371 = vmatpush1.msra.mxu0 %v120
    %1372 = vmatprep.subr.mxu0 %v137
    %1373 = vmatpush1.msra.mxu0 %v136
    %1374 = vmatprep.subr.mxu0 %v153
    %1375 = vmatpush1.msra.mxu0 %v152
    %1376 = vmatprep.subr.mxu0 %v169
    %1377 = vmatpush1.msra.mxu0 %v168
    %1378 = vmatprep.subr.mxu0 %v185
    %1379 = vmatpush1.msra.mxu0 %v184
    %1380 = vmatprep.subr.mxu0 %v201
    %1381 = vmatpush1.msra.mxu0 %v200
    %1382 = vmatprep.subr.mxu0 %v217
    %1383 = vmatpush1.msra.mxu0 %v216
    %1384 = vmatprep.subr.mxu0 %v233
    %1385 = vmatpush1.msra.mxu0 %v232
    %1386 = vmatprep.subr.mxu0 %v249
    %1387 = vmatpush1.msra.mxu0 %v248
    %1388 = vmatprep.subr.mxu0 %v265
    %1389 = vmatpush1.msra.mxu0 %v264
    %1390 = vmatprep.subr.mxu0 %v281
    %1391 = vmatpush1.msra.mxu0 %v280
    %1392 = vmatprep.subr.mxu0 %v297
    %1393 = vmatpush1.msra.mxu0 %v296
    %1394 = vmatprep.subr.mxu0 %v313
    %1395 = vmatpush1.msra.mxu0 %v312
    %1396 = vmatprep.subr.mxu0 %v329
    %1397 = vmatpush1.msra.mxu0 %v328
    %1398 = vmatprep.subr.mxu0 %v345
    %1399 = vmatpush1.msra.mxu0 %v344
    %1400 = vmatprep.subr.mxu0 %v361
    %1401 = vmatpush1.msra.mxu0 %v360
    %1402 = vmatprep.subr.mxu0 %v377
    %1403 = vmatpush1.msra.mxu0 %v376
    %1404 = vmatprep.subr.mxu0 %v393
    %1405 = vmatpush1.msra.mxu0 %v392
    %1406 = vmatprep.subr.mxu0 %v409
    %1407 = vmatpush1.msra.mxu0 %v408
    %1408 = vmatprep.subr.mxu0 %v425
    %1409 = vmatpush1.msra.mxu0 %v424
    %1410 = vmatprep.subr.mxu0 %v441
    %1411 = vmatpush1.msra.mxu0 %v440
    %1412 = vmatprep.subr.mxu0 %v457
    %1413 = vmatpush1.msra.mxu0 %v456
    %1414 = vmatprep.subr.mxu0 %v473
    %1415 = vmatpush1.msra.mxu0 %v472
    %1416 = vmatprep.subr.mxu0 %v489
    %1417 = vmatpush1.msra.mxu0 %v488
    %1418 = vmatprep.subr.mxu0 %v505
    %1419 = vmatpush1.msra.mxu0 %v504
    %1420 = vmatprep.subr.mxu0 %v521
    %1421 = vmatpush1.msra.mxu0 %v520
    %1422 = vmatprep.subr.mxu0 %v537
    %1423 = vmatpush1.msra.mxu0 %v536
    %1424 = vmatprep.subr.mxu0 %v553
    %1425 = vmatpush1.msra.mxu0 %v552
    %1426 = vmatprep.subr.mxu0 %v569
    %1427 = vmatpush1.msra.mxu0 %v568
    %1428 = vmatprep.subr.mxu0 %v585
    %1429 = vmatpush1.msra.mxu0 %v584
    %1430 = vmatprep.subr.mxu0 %v601
    %1431 = vmatpush1.msra.mxu0 %v600
    %1432 = vmatprep.mubr.f32.mxu0 %v97
    %1433 = vmatmul.mubr.f32.gmra.mrb[0].mxu0 %v96
    %v1434 = vpop.f32.mrb[0].mxu0
    %v1435 = vadd.f32 %v1019, %v1434
    %v1436 = vpop.f32.mrb[0].mxu0
    %v1437 = vadd.f32 %v1023, %v1436
    %1438 = vdwg.mxu0
    %1439 = vmatprep.subr.mxu0 %v617
    %1440 = vmatpush1.msra.mxu0 %v616
    %1441 = vmatprep.subr.mxu0 %v633
    %1442 = vmatpush1.msra.mxu0 %v632
    %1443 = vmatprep.subr.mxu0 %v649
    %1444 = vmatpush1.msra.mxu0 %v648
    %1445 = vmatprep.subr.mxu0 %v665
    %1446 = vmatpush1.msra.mxu0 %v664
    %1447 = vmatprep.subr.mxu0 %v681
    %1448 = vmatpush1.msra.mxu0 %v680
    %1449 = vmatprep.subr.mxu0 %v697
    %1450 = vmatpush1.msra.mxu0 %v696
    %1451 = vmatprep.subr.mxu0 %v713
    %1452 = vmatpush1.msra.mxu0 %v712
    %1453 = vmatprep.subr.mxu0 %v729
    %1454 = vmatpush1.msra.mxu0 %v728
    %1455 = vmatprep.subr.mxu0 %v745
    %1456 = vmatpush1.msra.mxu0 %v744
    %1457 = vmatprep.subr.mxu0 %v761
    %1458 = vmatpush1.msra.mxu0 %v760
    %1459 = vmatprep.subr.mxu0 %v777
    %1460 = vmatpush1.msra.mxu0 %v776
    %1461 = vmatprep.subr.mxu0 %v793
    %1462 = vmatpush1.msra.mxu0 %v792
    %1463 = vmatprep.subr.mxu0 %v809
    %1464 = vmatpush1.msra.mxu0 %v808
    %1465 = vmatprep.subr.mxu0 %v825
    %1466 = vmatpush1.msra.mxu0 %v824
    %1467 = vmatprep.subr.mxu0 %v841
    %1468 = vmatpush1.msra.mxu0 %v840
    %1469 = vmatprep.subr.mxu0 %v857
    %1470 = vmatpush1.msra.mxu0 %v856
    %1471 = vmatprep.subr.mxu0 %v873
    %1472 = vmatpush1.msra.mxu0 %v872
    %1473 = vmatprep.subr.mxu0 %v889
    %1474 = vmatpush1.msra.mxu0 %v888
    %1475 = vmatprep.subr.mxu0 %v905
    %1476 = vmatpush1.msra.mxu0 %v904
    %1477 = vmatprep.subr.mxu0 %v921
    %1478 = vmatpush1.msra.mxu0 %v920
    %1479 = vmatprep.subr.mxu0 %v937
    %1480 = vmatpush1.msra.mxu0 %v936
    %1481 = vmatprep.subr.mxu0 %v953
    %1482 = vmatpush1.msra.mxu0 %v952
    %1483 = vmatprep.subr.mxu0 %v969
    %1484 = vmatpush1.msra.mxu0 %v968
    %1485 = vmatprep.subr.mxu0 %v985
    %1486 = vmatpush1.msra.mxu0 %v984
    %1487 = vmatprep.subr.mxu0 0.0
    %1488 = vmatpush1.msra.mxu0 0.0
    %1489 = vmatprep.subr.mxu0 0.0
    %1490 = vmatpush1.msra.mxu0 0.0
    %1491 = vmatprep.subr.mxu0 0.0
    %1492 = vmatpush1.msra.mxu0 0.0
    %1493 = vmatprep.subr.mxu0 0.0
    %1494 = vmatpush1.msra.mxu0 0.0
    %1495 = vmatprep.subr.mxu0 0.0
    %1496 = vmatpush1.msra.mxu0 0.0
    %1497 = vmatprep.subr.mxu0 0.0
    %1498 = vmatpush1.msra.mxu0 0.0
    %1499 = vmatprep.subr.mxu0 0.0
    %1500 = vmatpush1.msra.mxu0 0.0
    %1501 = vmatprep.subr.mxu0 0.0
    %1502 = vmatpush1.msra.mxu0 0.0
    %1503 = vmatprep.mubr.f32.mxu0 %v1082
    %1504 = vmatmul.mubr.f32.gmra.mrb[0].mxu0 %v98
    %v1505 = vpop.f32.mrb[0].mxu0
    %v1506 = vadd.f32 %v1435, %v1505
    %v1507 = vpop.f32.mrb[0].mxu0
    %v1508 = vadd.f32 %v1437, %v1507
    %1509 = vdwg.mxu0
    %1510 = vmatprep.subr.mxu0 %v107
    %1511 = vmatpush1.msra.mxu0 %v106
    %1512 = vmatprep.subr.mxu0 %v123
    %1513 = vmatpush1.msra.mxu0 %v122
    %1514 = vmatprep.subr.mxu0 %v139
    %1515 = vmatpush1.msra.mxu0 %v138
    %1516 = vmatprep.subr.mxu0 %v155
    %1517 = vmatpush1.msra.mxu0 %v154
    %1518 = vmatprep.subr.mxu0 %v171
    %1519 = vmatpush1.msra.mxu0 %v170
    %1520 = vmatprep.subr.mxu0 %v187
    %1521 = vmatpush1.msra.mxu0 %v186
    %1522 = vmatprep.subr.mxu0 %v203
    %1523 = vmatpush1.msra.mxu0 %v202
    %1524 = vmatprep.subr.mxu0 %v219
    %1525 = vmatpush1.msra.mxu0 %v218
    %1526 = vmatprep.subr.mxu0 %v235
    %1527 = vmatpush1.msra.mxu0 %v234
    %1528 = vmatprep.subr.mxu0 %v251
    %1529 = vmatpush1.msra.mxu0 %v250
    %1530 = vmatprep.subr.mxu0 %v267
    %1531 = vmatpush1.msra.mxu0 %v266
    %1532 = vmatprep.subr.mxu0 %v283
    %1533 = vmatpush1.msra.mxu0 %v282
    %1534 = vmatprep.subr.mxu0 %v299
    %1535 = vmatpush1.msra.mxu0 %v298
    %1536 = vmatprep.subr.mxu0 %v315
    %1537 = vmatpush1.msra.mxu0 %v314
    %1538 = vmatprep.subr.mxu0 %v331
    %1539 = vmatpush1.msra.mxu0 %v330
    %1540 = vmatprep.subr.mxu0 %v347
    %1541 = vmatpush1.msra.mxu0 %v346
    %1542 = vmatprep.subr.mxu0 %v363
    %1543 = vmatpush1.msra.mxu0 %v362
    %1544 = vmatprep.subr.mxu0 %v379
    %1545 = vmatpush1.msra.mxu0 %v378
    %1546 = vmatprep.subr.mxu0 %v395
    %1547 = vmatpush1.msra.mxu0 %v394
    %1548 = vmatprep.subr.mxu0 %v411
    %1549 = vmatpush1.msra.mxu0 %v410
    %1550 = vmatprep.subr.mxu0 %v427
    %1551 = vmatpush1.msra.mxu0 %v426
    %1552 = vmatprep.subr.mxu0 %v443
    %1553 = vmatpush1.msra.mxu0 %v442
    %1554 = vmatprep.subr.mxu0 %v459
    %1555 = vmatpush1.msra.mxu0 %v458
    %1556 = vmatprep.subr.mxu0 %v475
    %1557 = vmatpush1.msra.mxu0 %v474
    %1558 = vmatprep.subr.mxu0 %v491
    %1559 = vmatpush1.msra.mxu0 %v490
    %1560 = vmatprep.subr.mxu0 %v507
    %1561 = vmatpush1.msra.mxu0 %v506
    %1562 = vmatprep.subr.mxu0 %v523
    %1563 = vmatpush1.msra.mxu0 %v522
    %1564 = vmatprep.subr.mxu0 %v539
    %1565 = vmatpush1.msra.mxu0 %v538
    %1566 = vmatprep.subr.mxu0 %v555
    %1567 = vmatpush1.msra.mxu0 %v554
    %1568 = vmatprep.subr.mxu0 %v571
    %1569 = vmatpush1.msra.mxu0 %v570
    %1570 = vmatprep.subr.mxu0 %v587
    %1571 = vmatpush1.msra.mxu0 %v586
    %1572 = vmatprep.subr.mxu0 %v603
    %1573 = vmatpush1.msra.mxu0 %v602
    %1574 = vmatprep.mubr.f32.mxu0 %v97
    %1575 = vmatmul.mubr.f32.gmra.mrb[0].mxu0 %v96
    %v1576 = vpop.f32.mrb[0].mxu0
    %v1577 = vadd.f32 %v1027, %v1576
    %v1578 = vpop.f32.mrb[0].mxu0
    %v1579 = vadd.f32 %v1031, %v1578
    %1580 = vdwg.mxu0
    %1581 = vmatprep.subr.mxu0 %v619
    %1582 = vmatpush1.msra.mxu0 %v618
    %1583 = vmatprep.subr.mxu0 %v635
    %1584 = vmatpush1.msra.mxu0 %v634
    %1585 = vmatprep.subr.mxu0 %v651
    %1586 = vmatpush1.msra.mxu0 %v650
    %1587 = vmatprep.subr.mxu0 %v667
    %1588 = vmatpush1.msra.mxu0 %v666
    %1589 = vmatprep.subr.mxu0 %v683
    %1590 = vmatpush1.msra.mxu0 %v682
    %1591 = vmatprep.subr.mxu0 %v699
    %1592 = vmatpush1.msra.mxu0 %v698
    %1593 = vmatprep.subr.mxu0 %v715
    %1594 = vmatpush1.msra.mxu0 %v714
    %1595 = vmatprep.subr.mxu0 %v731
    %1596 = vmatpush1.msra.mxu0 %v730
    %1597 = vmatprep.subr.mxu0 %v747
    %1598 = vmatpush1.msra.mxu0 %v746
    %1599 = vmatprep.subr.mxu0 %v763
    %1600 = vmatpush1.msra.mxu0 %v762
    %1601 = vmatprep.subr.mxu0 %v779
    %1602 = vmatpush1.msra.mxu0 %v778
    %1603 = vmatprep.subr.mxu0 %v795
    %1604 = vmatpush1.msra.mxu0 %v794
    %1605 = vmatprep.subr.mxu0 %v811
    %1606 = vmatpush1.msra.mxu0 %v810
    %1607 = vmatprep.subr.mxu0 %v827
    %1608 = vmatpush1.msra.mxu0 %v826
    %1609 = vmatprep.subr.mxu0 %v843
    %1610 = vmatpush1.msra.mxu0 %v842
    %1611 = vmatprep.subr.mxu0 %v859
    %1612 = vmatpush1.msra.mxu0 %v858
    %1613 = vmatprep.subr.mxu0 %v875
    %1614 = vmatpush1.msra.mxu0 %v874
    %1615 = vmatprep.subr.mxu0 %v891
    %1616 = vmatpush1.msra.mxu0 %v890
    %1617 = vmatprep.subr.mxu0 %v907
    %1618 = vmatpush1.msra.mxu0 %v906
    %1619 = vmatprep.subr.mxu0 %v923
    %1620 = vmatpush1.msra.mxu0 %v922
    %1621 = vmatprep.subr.mxu0 %v939
    %1622 = vmatpush1.msra.mxu0 %v938
    %1623 = vmatprep.subr.mxu0 %v955
    %1624 = vmatpush1.msra.mxu0 %v954
    %1625 = vmatprep.subr.mxu0 %v971
    %1626 = vmatpush1.msra.mxu0 %v970
    %1627 = vmatprep.subr.mxu0 %v987
    %1628 = vmatpush1.msra.mxu0 %v986
    %1629 = vmatprep.subr.mxu0 0.0
    %1630 = vmatpush1.msra.mxu0 0.0
    %1631 = vmatprep.subr.mxu0 0.0
    %1632 = vmatpush1.msra.mxu0 0.0
    %1633 = vmatprep.subr.mxu0 0.0
    %1634 = vmatpush1.msra.mxu0 0.0
    %1635 = vmatprep.subr.mxu0 0.0
    %1636 = vmatpush1.msra.mxu0 0.0
    %1637 = vmatprep.subr.mxu0 0.0
    %1638 = vmatpush1.msra.mxu0 0.0
    %1639 = vmatprep.subr.mxu0 0.0
    %1640 = vmatpush1.msra.mxu0 0.0
    %1641 = vmatprep.subr.mxu0 0.0
    %1642 = vmatpush1.msra.mxu0 0.0
    %1643 = vmatprep.subr.mxu0 0.0
    %1644 = vmatpush1.msra.mxu0 0.0
    %1645 = vmatprep.mubr.f32.mxu0 %v1082
    %1646 = vmatmul.mubr.f32.gmra.mrb[0].mxu0 %v98
    %v1647 = vpop.f32.mrb[0].mxu0
    %v1648 = vadd.f32 %v1577, %v1647
    %v1649 = vpop.f32.mrb[0].mxu0
    %v1650 = vadd.f32 %v1579, %v1649
    %1651 = vdwg.mxu0
    %1652 = vmatprep.subr.mxu0 %v109
    %1653 = vmatpush1.msra.mxu0 %v108
    %1654 = vmatprep.subr.mxu0 %v125
    %1655 = vmatpush1.msra.mxu0 %v124
    %1656 = vmatprep.subr.mxu0 %v141
    %1657 = vmatpush1.msra.mxu0 %v140
    %1658 = vmatprep.subr.mxu0 %v157
    %1659 = vmatpush1.msra.mxu0 %v156
    %1660 = vmatprep.subr.mxu0 %v173
    %1661 = vmatpush1.msra.mxu0 %v172
    %1662 = vmatprep.subr.mxu0 %v189
    %1663 = vmatpush1.msra.mxu0 %v188
    %1664 = vmatprep.subr.mxu0 %v205
    %1665 = vmatpush1.msra.mxu0 %v204
    %1666 = vmatprep.subr.mxu0 %v221
    %1667 = vmatpush1.msra.mxu0 %v220
    %1668 = vmatprep.subr.mxu0 %v237
    %1669 = vmatpush1.msra.mxu0 %v236
    %1670 = vmatprep.subr.mxu0 %v253
    %1671 = vmatpush1.msra.mxu0 %v252
    %1672 = vmatprep.subr.mxu0 %v269
    %1673 = vmatpush1.msra.mxu0 %v268
    %1674 = vmatprep.subr.mxu0 %v285
    %1675 = vmatpush1.msra.mxu0 %v284
    %1676 = vmatprep.subr.mxu0 %v301
    %1677 = vmatpush1.msra.mxu0 %v300
    %1678 = vmatprep.subr.mxu0 %v317
    %1679 = vmatpush1.msra.mxu0 %v316
    %1680 = vmatprep.subr.mxu0 %v333
    %1681 = vmatpush1.msra.mxu0 %v332
    %1682 = vmatprep.subr.mxu0 %v349
    %1683 = vmatpush1.msra.mxu0 %v348
    %1684 = vmatprep.subr.mxu0 %v365
    %1685 = vmatpush1.msra.mxu0 %v364
    %1686 = vmatprep.subr.mxu0 %v381
    %1687 = vmatpush1.msra.mxu0 %v380
    %1688 = vmatprep.subr.mxu0 %v397
    %1689 = vmatpush1.msra.mxu0 %v396
    %1690 = vmatprep.subr.mxu0 %v413
    %1691 = vmatpush1.msra.mxu0 %v412
    %1692 = vmatprep.subr.mxu0 %v429
    %1693 = vmatpush1.msra.mxu0 %v428
    %1694 = vmatprep.subr.mxu0 %v445
    %1695 = vmatpush1.msra.mxu0 %v444
    %1696 = vmatprep.subr.mxu0 %v461
    %1697 = vmatpush1.msra.mxu0 %v460
    %1698 = vmatprep.subr.mxu0 %v477
    %1699 = vmatpush1.msra.mxu0 %v476
    %1700 = vmatprep.subr.mxu0 %v493
    %1701 = vmatpush1.msra.mxu0 %v492
    %1702 = vmatprep.subr.mxu0 %v509
    %1703 = vmatpush1.msra.mxu0 %v508
    %1704 = vmatprep.subr.mxu0 %v525
    %1705 = vmatpush1.msra.mxu0 %v524
    %1706 = vmatprep.subr.mxu0 %v541
    %1707 = vmatpush1.msra.mxu0 %v540
    %1708 = vmatprep.subr.mxu0 %v557
    %1709 = vmatpush1.msra.mxu0 %v556
    %1710 = vmatprep.subr.mxu0 %v573
    %1711 = vmatpush1.msra.mxu0 %v572
    %1712 = vmatprep.subr.mxu0 %v589
    %1713 = vmatpush1.msra.mxu0 %v588
    %1714 = vmatprep.subr.mxu0 %v605
    %1715 = vmatpush1.msra.mxu0 %v604
    %1716 = vmatprep.mubr.f32.mxu0 %v97
    %1717 = vmatmul.mubr.f32.gmra.mrb[0].mxu0 %v96
    %v1718 = vpop.f32.mrb[0].mxu0
    %v1719 = vadd.f32 %v1035, %v1718
    %v1720 = vpop.f32.mrb[0].mxu0
    %v1721 = vadd.f32 %v1039, %v1720
    %1722 = vdwg.mxu0
    %1723 = vmatprep.subr.mxu0 %v621
    %1724 = vmatpush1.msra.mxu0 %v620
    %1725 = vmatprep.subr.mxu0 %v637
    %1726 = vmatpush1.msra.mxu0 %v636
    %1727 = vmatprep.subr.mxu0 %v653
    %1728 = vmatpush1.msra.mxu0 %v652
    %1729 = vmatprep.subr.mxu0 %v669
    %1730 = vmatpush1.msra.mxu0 %v668
    %1731 = vmatprep.subr.mxu0 %v685
    %1732 = vmatpush1.msra.mxu0 %v684
    %1733 = vmatprep.subr.mxu0 %v701
    %1734 = vmatpush1.msra.mxu0 %v700
    %1735 = vmatprep.subr.mxu0 %v717
    %1736 = vmatpush1.msra.mxu0 %v716
    %1737 = vmatprep.subr.mxu0 %v733
    %1738 = vmatpush1.msra.mxu0 %v732
    %1739 = vmatprep.subr.mxu0 %v749
    %1740 = vmatpush1.msra.mxu0 %v748
    %1741 = vmatprep.subr.mxu0 %v765
    %1742 = vmatpush1.msra.mxu0 %v764
    %1743 = vmatprep.subr.mxu0 %v781
    %1744 = vmatpush1.msra.mxu0 %v780
    %1745 = vmatprep.subr.mxu0 %v797
    %1746 = vmatpush1.msra.mxu0 %v796
    %1747 = vmatprep.subr.mxu0 %v813
    %1748 = vmatpush1.msra.mxu0 %v812
    %1749 = vmatprep.subr.mxu0 %v829
    %1750 = vmatpush1.msra.mxu0 %v828
    %1751 = vmatprep.subr.mxu0 %v845
    %1752 = vmatpush1.msra.mxu0 %v844
    %1753 = vmatprep.subr.mxu0 %v861
    %1754 = vmatpush1.msra.mxu0 %v860
    %1755 = vmatprep.subr.mxu0 %v877
    %1756 = vmatpush1.msra.mxu0 %v876
    %1757 = vmatprep.subr.mxu0 %v893
    %1758 = vmatpush1.msra.mxu0 %v892
    %1759 = vmatprep.subr.mxu0 %v909
    %1760 = vmatpush1.msra.mxu0 %v908
    %1761 = vmatprep.subr.mxu0 %v925
    %1762 = vmatpush1.msra.mxu0 %v924
    %1763 = vmatprep.subr.mxu0 %v941
    %1764 = vmatpush1.msra.mxu0 %v940
    %1765 = vmatprep.subr.mxu0 %v957
    %1766 = vmatpush1.msra.mxu0 %v956
    %1767 = vmatprep.subr.mxu0 %v973
    %1768 = vmatpush1.msra.mxu0 %v972
    %1769 = vmatprep.subr.mxu0 %v989
    %1770 = vmatpush1.msra.mxu0 %v988
    %1771 = vmatprep.subr.mxu0 0.0
    %1772 = vmatpush1.msra.mxu0 0.0
    %1773 = vmatprep.subr.mxu0 0.0
    %1774 = vmatpush1.msra.mxu0 0.0
    %1775 = vmatprep.subr.mxu0 0.0
    %1776 = vmatpush1.msra.mxu0 0.0
    %1777 = vmatprep.subr.mxu0 0.0
    %1778 = vmatpush1.msra.mxu0 0.0
    %1779 = vmatprep.subr.mxu0 0.0
    %1780 = vmatpush1.msra.mxu0 0.0
    %1781 = vmatprep.subr.mxu0 0.0
    %1782 = vmatpush1.msra.mxu0 0.0
    %1783 = vmatprep.subr.mxu0 0.0
    %1784 = vmatpush1.msra.mxu0 0.0
    %1785 = vmatprep.subr.mxu0 0.0
    %1786 = vmatpush1.msra.mxu0 0.0
    %1787 = vmatprep.mubr.f32.mxu0 %v1082
    %1788 = vmatmul.mubr.f32.gmra.mrb[0].mxu0 %v98
    %v1789 = vpop.f32.mrb[0].mxu0
    %v1790 = vadd.f32 %v1719, %v1789
    %v1791 = vpop.f32.mrb[0].mxu0
    %v1792 = vadd.f32 %v1721, %v1791
    %1793 = vdwg.mxu0
    %1794 = vmatprep.subr.mxu0 %v111
    %1795 = vmatpush1.msra.mxu0 %v110
    %1796 = vmatprep.subr.mxu0 %v127
    %1797 = vmatpush1.msra.mxu0 %v126
    %1798 = vmatprep.subr.mxu0 %v143
    %1799 = vmatpush1.msra.mxu0 %v142
    %1800 = vmatprep.subr.mxu0 %v159
    %1801 = vmatpush1.msra.mxu0 %v158
    %1802 = vmatprep.subr.mxu0 %v175
    %1803 = vmatpush1.msra.mxu0 %v174
    %1804 = vmatprep.subr.mxu0 %v191
    %1805 = vmatpush1.msra.mxu0 %v190
    %1806 = vmatprep.subr.mxu0 %v207
    %1807 = vmatpush1.msra.mxu0 %v206
    %1808 = vmatprep.subr.mxu0 %v223
    %1809 = vmatpush1.msra.mxu0 %v222
    %1810 = vmatprep.subr.mxu0 %v239
    %1811 = vmatpush1.msra.mxu0 %v238
    %1812 = vmatprep.subr.mxu0 %v255
    %1813 = vmatpush1.msra.mxu0 %v254
    %1814 = vmatprep.subr.mxu0 %v271
    %1815 = vmatpush1.msra.mxu0 %v270
    %1816 = vmatprep.subr.mxu0 %v287
    %1817 = vmatpush1.msra.mxu0 %v286
    %1818 = vmatprep.subr.mxu0 %v303
    %1819 = vmatpush1.msra.mxu0 %v302
    %1820 = vmatprep.subr.mxu0 %v319
    %1821 = vmatpush1.msra.mxu0 %v318
    %1822 = vmatprep.subr.mxu0 %v335
    %1823 = vmatpush1.msra.mxu0 %v334
    %1824 = vmatprep.subr.mxu0 %v351
    %1825 = vmatpush1.msra.mxu0 %v350
    %1826 = vmatprep.subr.mxu0 %v367
    %1827 = vmatpush1.msra.mxu0 %v366
    %1828 = vmatprep.subr.mxu0 %v383
    %1829 = vmatpush1.msra.mxu0 %v382
    %1830 = vmatprep.subr.mxu0 %v399
    %1831 = vmatpush1.msra.mxu0 %v398
    %1832 = vmatprep.subr.mxu0 %v415
    %1833 = vmatpush1.msra.mxu0 %v414
    %1834 = vmatprep.subr.mxu0 %v431
    %1835 = vmatpush1.msra.mxu0 %v430
    %1836 = vmatprep.subr.mxu0 %v447
    %1837 = vmatpush1.msra.mxu0 %v446
    %1838 = vmatprep.subr.mxu0 %v463
    %1839 = vmatpush1.msra.mxu0 %v462
    %1840 = vmatprep.subr.mxu0 %v479
    %1841 = vmatpush1.msra.mxu0 %v478
    %1842 = vmatprep.subr.mxu0 %v495
    %1843 = vmatpush1.msra.mxu0 %v494
    %1844 = vmatprep.subr.mxu0 %v511
    %1845 = vmatpush1.msra.mxu0 %v510
    %1846 = vmatprep.subr.mxu0 %v527
    %1847 = vmatpush1.msra.mxu0 %v526
    %1848 = vmatprep.subr.mxu0 %v543
    %1849 = vmatpush1.msra.mxu0 %v542
    %1850 = vmatprep.subr.mxu0 %v559
    %1851 = vmatpush1.msra.mxu0 %v558
    %1852 = vmatprep.subr.mxu0 %v575
    %1853 = vmatpush1.msra.mxu0 %v574
    %1854 = vmatprep.subr.mxu0 %v591
    %1855 = vmatpush1.msra.mxu0 %v590
    %1856 = vmatprep.subr.mxu0 %v607
    %1857 = vmatpush1.msra.mxu0 %v606
    %1858 = vmatprep.mubr.f32.mxu0 %v97
    %1859 = vmatmul.mubr.f32.gmra.mrb[0].mxu0 %v96
    %v1860 = vpop.f32.mrb[0].mxu0
    %v1861 = vadd.f32 %v1043, %v1860
    %v1862 = vpop.f32.mrb[0].mxu0
    %v1863 = vadd.f32 %v1047, %v1862
    %1864 = vdwg.mxu0
    %1865 = vmatprep.subr.mxu0 %v623
    %1866 = vmatpush1.msra.mxu0 %v622
    %1867 = vmatprep.subr.mxu0 %v639
    %1868 = vmatpush1.msra.mxu0 %v638
    %1869 = vmatprep.subr.mxu0 %v655
    %1870 = vmatpush1.msra.mxu0 %v654
    %1871 = vmatprep.subr.mxu0 %v671
    %1872 = vmatpush1.msra.mxu0 %v670
    %1873 = vmatprep.subr.mxu0 %v687
    %1874 = vmatpush1.msra.mxu0 %v686
    %1875 = vmatprep.subr.mxu0 %v703
    %1876 = vmatpush1.msra.mxu0 %v702
    %1877 = vmatprep.subr.mxu0 %v719
    %1878 = vmatpush1.msra.mxu0 %v718
    %1879 = vmatprep.subr.mxu0 %v735
    %1880 = vmatpush1.msra.mxu0 %v734
    %1881 = vmatprep.subr.mxu0 %v751
    %1882 = vmatpush1.msra.mxu0 %v750
    %1883 = vmatprep.subr.mxu0 %v767
    %1884 = vmatpush1.msra.mxu0 %v766
    %1885 = vmatprep.subr.mxu0 %v783
    %1886 = vmatpush1.msra.mxu0 %v782
    %1887 = vmatprep.subr.mxu0 %v799
    %1888 = vmatpush1.msra.mxu0 %v798
    %1889 = vmatprep.subr.mxu0 %v815
    %1890 = vmatpush1.msra.mxu0 %v814
    %1891 = vmatprep.subr.mxu0 %v831
    %1892 = vmatpush1.msra.mxu0 %v830
    %1893 = vmatprep.subr.mxu0 %v847
    %1894 = vmatpush1.msra.mxu0 %v846
    %1895 = vmatprep.subr.mxu0 %v863
    %1896 = vmatpush1.msra.mxu0 %v862
    %1897 = vmatprep.subr.mxu0 %v879
    %1898 = vmatpush1.msra.mxu0 %v878
    %1899 = vmatprep.subr.mxu0 %v895
    %1900 = vmatpush1.msra.mxu0 %v894
    %1901 = vmatprep.subr.mxu0 %v911
    %1902 = vmatpush1.msra.mxu0 %v910
    %1903 = vmatprep.subr.mxu0 %v927
    %1904 = vmatpush1.msra.mxu0 %v926
    %1905 = vmatprep.subr.mxu0 %v943
    %1906 = vmatpush1.msra.mxu0 %v942
    %1907 = vmatprep.subr.mxu0 %v959
    %1908 = vmatpush1.msra.mxu0 %v958
    %1909 = vmatprep.subr.mxu0 %v975
    %1910 = vmatpush1.msra.mxu0 %v974
    %1911 = vmatprep.subr.mxu0 %v991
    %1912 = vmatpush1.msra.mxu0 %v990
    %1913 = vmatprep.subr.mxu0 0.0
    %1914 = vmatpush1.msra.mxu0 0.0
    %1915 = vmatprep.subr.mxu0 0.0
    %1916 = vmatpush1.msra.mxu0 0.0
    %1917 = vmatprep.subr.mxu0 0.0
    %1918 = vmatpush1.msra.mxu0 0.0
    %1919 = vmatprep.subr.mxu0 0.0
    %1920 = vmatpush1.msra.mxu0 0.0
    %1921 = vmatprep.subr.mxu0 0.0
    %1922 = vmatpush1.msra.mxu0 0.0
    %1923 = vmatprep.subr.mxu0 0.0
    %1924 = vmatpush1.msra.mxu0 0.0
    %1925 = vmatprep.subr.mxu0 0.0
    %1926 = vmatpush1.msra.mxu0 0.0
    %1927 = vmatprep.subr.mxu0 0.0
    %1928 = vmatpush1.msra.mxu0 0.0
    %1929 = vmatprep.mubr.f32.mxu0 %v1082
    %1930 = vmatmul.mubr.f32.gmra.mrb[0].mxu0 %v98
    %v1931 = vpop.f32.mrb[0].mxu0
    %v1932 = vadd.f32 %v1861, %v1931
    %v1933 = vpop.f32.mrb[0].mxu0
    %v1934 = vadd.f32 %v1863, %v1933
    %1935 = vdwg.mxu0
    %1936 = vmatprep.subr.mxu0 %v113
    %1937 = vmatpush1.msra.mxu0 %v112
    %1938 = vmatprep.subr.mxu0 %v129
    %1939 = vmatpush1.msra.mxu0 %v128
    %1940 = vmatprep.subr.mxu0 %v145
    %1941 = vmatpush1.msra.mxu0 %v144
    %1942 = vmatprep.subr.mxu0 %v161
    %1943 = vmatpush1.msra.mxu0 %v160
    %1944 = vmatprep.subr.mxu0 %v177
    %1945 = vmatpush1.msra.mxu0 %v176
    %1946 = vmatprep.subr.mxu0 %v193
    %1947 = vmatpush1.msra.mxu0 %v192
    %1948 = vmatprep.subr.mxu0 %v209
    %1949 = vmatpush1.msra.mxu0 %v208
    %1950 = vmatprep.subr.mxu0 %v225
    %1951 = vmatpush1.msra.mxu0 %v224
    %1952 = vmatprep.subr.mxu0 %v241
    %1953 = vmatpush1.msra.mxu0 %v240
    %1954 = vmatprep.subr.mxu0 %v257
    %1955 = vmatpush1.msra.mxu0 %v256
    %1956 = vmatprep.subr.mxu0 %v273
    %1957 = vmatpush1.msra.mxu0 %v272
    %1958 = vmatprep.subr.mxu0 %v289
    %1959 = vmatpush1.msra.mxu0 %v288
    %1960 = vmatprep.subr.mxu0 %v305
    %1961 = vmatpush1.msra.mxu0 %v304
    %1962 = vmatprep.subr.mxu0 %v321
    %1963 = vmatpush1.msra.mxu0 %v320
    %1964 = vmatprep.subr.mxu0 %v337
    %1965 = vmatpush1.msra.mxu0 %v336
    %1966 = vmatprep.subr.mxu0 %v353
    %1967 = vmatpush1.msra.mxu0 %v352
    %1968 = vmatprep.subr.mxu0 %v369
    %1969 = vmatpush1.msra.mxu0 %v368
    %1970 = vmatprep.subr.mxu0 %v385
    %1971 = vmatpush1.msra.mxu0 %v384
    %1972 = vmatprep.subr.mxu0 %v401
    %1973 = vmatpush1.msra.mxu0 %v400
    %1974 = vmatprep.subr.mxu0 %v417
    %1975 = vmatpush1.msra.mxu0 %v416
    %1976 = vmatprep.subr.mxu0 %v433
    %1977 = vmatpush1.msra.mxu0 %v432
    %1978 = vmatprep.subr.mxu0 %v449
    %1979 = vmatpush1.msra.mxu0 %v448
    %1980 = vmatprep.subr.mxu0 %v465
    %1981 = vmatpush1.msra.mxu0 %v464
    %1982 = vmatprep.subr.mxu0 %v481
    %1983 = vmatpush1.msra.mxu0 %v480
    %1984 = vmatprep.subr.mxu0 %v497
    %1985 = vmatpush1.msra.mxu0 %v496
    %1986 = vmatprep.subr.mxu0 %v513
    %1987 = vmatpush1.msra.mxu0 %v512
    %1988 = vmatprep.subr.mxu0 %v529
    %1989 = vmatpush1.msra.mxu0 %v528
    %1990 = vmatprep.subr.mxu0 %v545
    %1991 = vmatpush1.msra.mxu0 %v544
    %1992 = vmatprep.subr.mxu0 %v561
    %1993 = vmatpush1.msra.mxu0 %v560
    %1994 = vmatprep.subr.mxu0 %v577
    %1995 = vmatpush1.msra.mxu0 %v576
    %1996 = vmatprep.subr.mxu0 %v593
    %1997 = vmatpush1.msra.mxu0 %v592
    %1998 = vmatprep.subr.mxu0 %v609
    %1999 = vmatpush1.msra.mxu0 %v608
    %2000 = vmatprep.mubr.f32.mxu0 %v97
    %2001 = vmatmul.mubr.f32.gmra.mrb[0].mxu0 %v96
    %v2002 = vpop.f32.mrb[0].mxu0
    %v2003 = vadd.f32 %v1051, %v2002
    %v2004 = vpop.f32.mrb[0].mxu0
    %v2005 = vadd.f32 %v1055, %v2004
    %2006 = vdwg.mxu0
    %2007 = vmatprep.subr.mxu0 %v625
    %2008 = vmatpush1.msra.mxu0 %v624
    %2009 = vmatprep.subr.mxu0 %v641
    %2010 = vmatpush1.msra.mxu0 %v640
    %2011 = vmatprep.subr.mxu0 %v657
    %2012 = vmatpush1.msra.mxu0 %v656
    %2013 = vmatprep.subr.mxu0 %v673
    %2014 = vmatpush1.msra.mxu0 %v672
    %2015 = vmatprep.subr.mxu0 %v689
    %2016 = vmatpush1.msra.mxu0 %v688
    %2017 = vmatprep.subr.mxu0 %v705
    %2018 = vmatpush1.msra.mxu0 %v704
    %2019 = vmatprep.subr.mxu0 %v721
    %2020 = vmatpush1.msra.mxu0 %v720
    %2021 = vmatprep.subr.mxu0 %v737
    %2022 = vmatpush1.msra.mxu0 %v736
    %2023 = vmatprep.subr.mxu0 %v753
    %2024 = vmatpush1.msra.mxu0 %v752
    %2025 = vmatprep.subr.mxu0 %v769
    %2026 = vmatpush1.msra.mxu0 %v768
    %2027 = vmatprep.subr.mxu0 %v785
    %2028 = vmatpush1.msra.mxu0 %v784
    %2029 = vmatprep.subr.mxu0 %v801
    %2030 = vmatpush1.msra.mxu0 %v800
    %2031 = vmatprep.subr.mxu0 %v817
    %2032 = vmatpush1.msra.mxu0 %v816
    %2033 = vmatprep.subr.mxu0 %v833
    %2034 = vmatpush1.msra.mxu0 %v832
    %2035 = vmatprep.subr.mxu0 %v849
    %2036 = vmatpush1.msra.mxu0 %v848
    %2037 = vmatprep.subr.mxu0 %v865
    %2038 = vmatpush1.msra.mxu0 %v864
    %2039 = vmatprep.subr.mxu0 %v881
    %2040 = vmatpush1.msra.mxu0 %v880
    %2041 = vmatprep.subr.mxu0 %v897
    %2042 = vmatpush1.msra.mxu0 %v896
    %2043 = vmatprep.subr.mxu0 %v913
    %2044 = vmatpush1.msra.mxu0 %v912
    %2045 = vmatprep.subr.mxu0 %v929
    %2046 = vmatpush1.msra.mxu0 %v928
    %2047 = vmatprep.subr.mxu0 %v945
    %2048 = vmatpush1.msra.mxu0 %v944
    %2049 = vmatprep.subr.mxu0 %v961
    %2050 = vmatpush1.msra.mxu0 %v960
    %2051 = vmatprep.subr.mxu0 %v977
    %2052 = vmatpush1.msra.mxu0 %v976
    %2053 = vmatprep.subr.mxu0 %v993
    %2054 = vmatpush1.msra.mxu0 %v992
    %2055 = vmatprep.subr.mxu0 0.0
    %2056 = vmatpush1.msra.mxu0 0.0
    %2057 = vmatprep.subr.mxu0 0.0
    %2058 = vmatpush1.msra.mxu0 0.0
    %2059 = vmatprep.subr.mxu0 0.0
    %2060 = vmatpush1.msra.mxu0 0.0
    %2061 = vmatprep.subr.mxu0 0.0
    %2062 = vmatpush1.msra.mxu0 0.0
    %2063 = vmatprep.subr.mxu0 0.0
    %2064 = vmatpush1.msra.mxu0 0.0
    %2065 = vmatprep.subr.mxu0 0.0
    %2066 = vmatpush1.msra.mxu0 0.0
    %2067 = vmatprep.subr.mxu0 0.0
    %2068 = vmatpush1.msra.mxu0 0.0
    %2069 = vmatprep.subr.mxu0 0.0
    %2070 = vmatpush1.msra.mxu0 0.0
    %2071 = vmatprep.mubr.f32.mxu0 %v1082
    %2072 = vmatmul.mubr.f32.gmra.mrb[0].mxu0 %v98
    %v2073 = vpop.f32.mrb[0].mxu0
    %v2074 = vadd.f32 %v2003, %v2073
    %v2075 = vpop.f32.mrb[0].mxu0
    %v2076 = vadd.f32 %v2005, %v2075
    %2077 = vdwg.mxu0
    %2078 = vmatprep.subr.mxu0 %v115
    %2079 = vmatpush1.msra.mxu0 %v114
    %2080 = vmatprep.subr.mxu0 %v131
    %2081 = vmatpush1.msra.mxu0 %v130
    %2082 = vmatprep.subr.mxu0 %v147
    %2083 = vmatpush1.msra.mxu0 %v146
    %2084 = vmatprep.subr.mxu0 %v163
    %2085 = vmatpush1.msra.mxu0 %v162
    %2086 = vmatprep.subr.mxu0 %v179
    %2087 = vmatpush1.msra.mxu0 %v178
    %2088 = vmatprep.subr.mxu0 %v195
    %2089 = vmatpush1.msra.mxu0 %v194
    %2090 = vmatprep.subr.mxu0 %v211
    %2091 = vmatpush1.msra.mxu0 %v210
    %2092 = vmatprep.subr.mxu0 %v227
    %2093 = vmatpush1.msra.mxu0 %v226
    %2094 = vmatprep.subr.mxu0 %v243
    %2095 = vmatpush1.msra.mxu0 %v242
    %2096 = vmatprep.subr.mxu0 %v259
    %2097 = vmatpush1.msra.mxu0 %v258
    %2098 = vmatprep.subr.mxu0 %v275
    %2099 = vmatpush1.msra.mxu0 %v274
    %2100 = vmatprep.subr.mxu0 %v291
    %2101 = vmatpush1.msra.mxu0 %v290
    %2102 = vmatprep.subr.mxu0 %v307
    %2103 = vmatpush1.msra.mxu0 %v306
    %2104 = vmatprep.subr.mxu0 %v323
    %2105 = vmatpush1.msra.mxu0 %v322
    %2106 = vmatprep.subr.mxu0 %v339
    %2107 = vmatpush1.msra.mxu0 %v338
    %2108 = vmatprep.subr.mxu0 %v355
    %2109 = vmatpush1.msra.mxu0 %v354
    %2110 = vmatprep.subr.mxu0 %v371
    %2111 = vmatpush1.msra.mxu0 %v370
    %2112 = vmatprep.subr.mxu0 %v387
    %2113 = vmatpush1.msra.mxu0 %v386
    %2114 = vmatprep.subr.mxu0 %v403
    %2115 = vmatpush1.msra.mxu0 %v402
    %2116 = vmatprep.subr.mxu0 %v419
    %2117 = vmatpush1.msra.mxu0 %v418
    %2118 = vmatprep.subr.mxu0 %v435
    %2119 = vmatpush1.msra.mxu0 %v434
    %2120 = vmatprep.subr.mxu0 %v451
    %2121 = vmatpush1.msra.mxu0 %v450
    %2122 = vmatprep.subr.mxu0 %v467
    %2123 = vmatpush1.msra.mxu0 %v466
    %2124 = vmatprep.subr.mxu0 %v483
    %2125 = vmatpush1.msra.mxu0 %v482
    %2126 = vmatprep.subr.mxu0 %v499
    %2127 = vmatpush1.msra.mxu0 %v498
    %2128 = vmatprep.subr.mxu0 %v515
    %2129 = vmatpush1.msra.mxu0 %v514
    %2130 = vmatprep.subr.mxu0 %v531
    %2131 = vmatpush1.msra.mxu0 %v530
    %2132 = vmatprep.subr.mxu0 %v547
    %2133 = vmatpush1.msra.mxu0 %v546
    %2134 = vmatprep.subr.mxu0 %v563
    %2135 = vmatpush1.msra.mxu0 %v562
    %2136 = vmatprep.subr.mxu0 %v579
    %2137 = vmatpush1.msra.mxu0 %v578
    %2138 = vmatprep.subr.mxu0 %v595
    %2139 = vmatpush1.msra.mxu0 %v594
    %2140 = vmatprep.subr.mxu0 %v611
    %2141 = vmatpush1.msra.mxu0 %v610
    %2142 = vmatprep.mubr.f32.mxu0 %v97
    %2143 = vmatmul.mubr.f32.gmra.mrb[0].mxu0 %v96
    %v2144 = vpop.f32.mrb[0].mxu0
    %v2145 = vadd.f32 %v1059, %v2144
    %v2146 = vpop.f32.mrb[0].mxu0
    %v2147 = vadd.f32 %v1063, %v2146
    %2148 = vdwg.mxu0
    %2149 = vmatprep.subr.mxu0 %v627
    %2150 = vmatpush1.msra.mxu0 %v626
    %2151 = vmatprep.subr.mxu0 %v643
    %2152 = vmatpush1.msra.mxu0 %v642
    %2153 = vmatprep.subr.mxu0 %v659
    %2154 = vmatpush1.msra.mxu0 %v658
    %2155 = vmatprep.subr.mxu0 %v675
    %2156 = vmatpush1.msra.mxu0 %v674
    %2157 = vmatprep.subr.mxu0 %v691
    %2158 = vmatpush1.msra.mxu0 %v690
    %2159 = vmatprep.subr.mxu0 %v707
    %2160 = vmatpush1.msra.mxu0 %v706
    %2161 = vmatprep.subr.mxu0 %v723
    %2162 = vmatpush1.msra.mxu0 %v722
    %2163 = vmatprep.subr.mxu0 %v739
    %2164 = vmatpush1.msra.mxu0 %v738
    %2165 = vmatprep.subr.mxu0 %v755
    %2166 = vmatpush1.msra.mxu0 %v754
    %2167 = vmatprep.subr.mxu0 %v771
    %2168 = vmatpush1.msra.mxu0 %v770
    %2169 = vmatprep.subr.mxu0 %v787
    %2170 = vmatpush1.msra.mxu0 %v786
    %2171 = vmatprep.subr.mxu0 %v803
    %2172 = vmatpush1.msra.mxu0 %v802
    %2173 = vmatprep.subr.mxu0 %v819
    %2174 = vmatpush1.msra.mxu0 %v818
    %2175 = vmatprep.subr.mxu0 %v835
    %2176 = vmatpush1.msra.mxu0 %v834
    %2177 = vmatprep.subr.mxu0 %v851
    %2178 = vmatpush1.msra.mxu0 %v850
    %2179 = vmatprep.subr.mxu0 %v867
    %2180 = vmatpush1.msra.mxu0 %v866
    %2181 = vmatprep.subr.mxu0 %v883
    %2182 = vmatpush1.msra.mxu0 %v882
    %2183 = vmatprep.subr.mxu0 %v899
    %2184 = vmatpush1.msra.mxu0 %v898
    %2185 = vmatprep.subr.mxu0 %v915
    %2186 = vmatpush1.msra.mxu0 %v914
    %2187 = vmatprep.subr.mxu0 %v931
    %2188 = vmatpush1.msra.mxu0 %v930
    %2189 = vmatprep.subr.mxu0 %v947
    %2190 = vmatpush1.msra.mxu0 %v946
    %2191 = vmatprep.subr.mxu0 %v963
    %2192 = vmatpush1.msra.mxu0 %v962
    %2193 = vmatprep.subr.mxu0 %v979
    %2194 = vmatpush1.msra.mxu0 %v978
    %2195 = vmatprep.subr.mxu0 %v995
    %2196 = vmatpush1.msra.mxu0 %v994
    %2197 = vmatprep.subr.mxu0 0.0
    %2198 = vmatpush1.msra.mxu0 0.0
    %2199 = vmatprep.subr.mxu0 0.0
    %2200 = vmatpush1.msra.mxu0 0.0
    %2201 = vmatprep.subr.mxu0 0.0
    %2202 = vmatpush1.msra.mxu0 0.0
    %2203 = vmatprep.subr.mxu0 0.0
    %2204 = vmatpush1.msra.mxu0 0.0
    %2205 = vmatprep.subr.mxu0 0.0
    %2206 = vmatpush1.msra.mxu0 0.0
    %2207 = vmatprep.subr.mxu0 0.0
    %2208 = vmatpush1.msra.mxu0 0.0
    %2209 = vmatprep.subr.mxu0 0.0
    %2210 = vmatpush1.msra.mxu0 0.0
    %2211 = vmatprep.subr.mxu0 0.0
    %2212 = vmatpush1.msra.mxu0 0.0
    %2213 = vmatprep.mubr.f32.mxu0 %v1082
    %2214 = vmatmul.mubr.f32.gmra.mrb[0].mxu0 %v98
    %v2215 = vpop.f32.mrb[0].mxu0
    %v2216 = vadd.f32 %v2145, %v2215
    %v2217 = vpop.f32.mrb[0].mxu0
    %v2218 = vadd.f32 %v2147, %v2217
    %2219 = vdwg.mxu0
    %v2220 = vld [vmem:[#allocation7] sm:$0xff]
    %v2221 = vld [vmem:[#allocation7 + $0x8] sm:$0xff]
    %v2222 = vld [vmem:[#allocation7 + $0x10] sm:$0xff]
    %v2223 = vld [vmem:[#allocation7 + $0x18] sm:$0xff]
    %v2224 = vld [vmem:[#allocation7 + $0x20] sm:$0xff]
    %v2225 = vld [vmem:[#allocation7 + $0x28] sm:$0xff]
    %v2226 = vld [vmem:[#allocation7 + $0x30] sm:$0xff]
    %v2227 = vld [vmem:[#allocation7 + $0x38] sm:$0xff]
    %v2228 = vld [vmem:[#allocation7 + $0x40] sm:$0xff]
    %v2229 = vld [vmem:[#allocation7 + $0x48] sm:$0xff]
    %v2230 = vld [vmem:[#allocation7 + $0x50] sm:$0xff]
    %v2231 = vld [vmem:[#allocation7 + $0x58] sm:$0xff]
    %v2232 = vld [vmem:[#allocation7 + $0x60] sm:$0xff]
    %v2233 = vld [vmem:[#allocation7 + $0x68] sm:$0xff]
    %v2234 = vld [vmem:[#allocation7 + $0x70] sm:$0xff]
    %v2235 = vld [vmem:[#allocation7 + $0x78] sm:$0xff]
    %v2236 = vld [vmem:[#allocation7 + $0x80] sm:$0xff]
    %v2237 = vld [vmem:[#allocation7 + $0x88] sm:$0xff]
    %v2238 = vld [vmem:[#allocation7 + $0x90] sm:$0xff]
    %v2239 = vld [vmem:[#allocation7 + $0x98] sm:$0xff]
    %v2240 = vld [vmem:[#allocation7 + $0xa0] sm:$0xff]
    %v2241 = vld [vmem:[#allocation7 + $0xa8] sm:$0xff]
    %v2242 = vld [vmem:[#allocation7 + $0xb0] sm:$0xff]
    %v2243 = vld [vmem:[#allocation7 + $0xb8] sm:$0xff]
    %v2244 = vld [vmem:[#allocation7 + $0xc0] sm:$0xff]
    %v2245 = vld [vmem:[#allocation7 + $0xc8] sm:$0xff]
    %v2246 = vld [vmem:[#allocation7 + $0xd0] sm:$0xff]
    %v2247 = vld [vmem:[#allocation7 + $0xd8] sm:$0xff]
    %v2248 = vld [vmem:[#allocation7 + $0xe0] sm:$0xff]
    %v2249 = vld [vmem:[#allocation7 + $0xe8] sm:$0xff]
    %v2250 = vld [vmem:[#allocation7 + $0xf0] sm:$0xff]
    %v2251 = vld [vmem:[#allocation7 + $0xf8] sm:$0xff]
    %v2252 = vld [vmem:[#allocation7 + $0x100] sm:$0xff]
    %v2253 = vld [vmem:[#allocation7 + $0x108] sm:$0xff]
    %v2254 = vld [vmem:[#allocation7 + $0x110] sm:$0xff]
    %v2255 = vld [vmem:[#allocation7 + $0x118] sm:$0xff]
    %v2256 = vld [vmem:[#allocation7 + $0x120] sm:$0xff]
    %v2257 = vld [vmem:[#allocation7 + $0x128] sm:$0xff]
    %v2258 = vld [vmem:[#allocation7 + $0x130] sm:$0xff]
    %v2259 = vld [vmem:[#allocation7 + $0x138] sm:$0xff]
    %v2260 = vld [vmem:[#allocation7 + $0x140] sm:$0xff]
    %v2261 = vld [vmem:[#allocation7 + $0x148] sm:$0xff]
    %v2262 = vld [vmem:[#allocation7 + $0x150] sm:$0xff]
    %v2263 = vld [vmem:[#allocation7 + $0x158] sm:$0xff]
    %v2264 = vld [vmem:[#allocation7 + $0x160] sm:$0xff]
    %v2265 = vld [vmem:[#allocation7 + $0x168] sm:$0xff]
    %v2266 = vld [vmem:[#allocation7 + $0x170] sm:$0xff]
    %v2267 = vld [vmem:[#allocation7 + $0x178] sm:$0xff]
    %v2268 = vld [vmem:[#allocation7 + $0x180] sm:$0xff]
    %v2269 = vld [vmem:[#allocation7 + $0x188] sm:$0xff]
    %v2270 = vld [vmem:[#allocation7 + $0x190] sm:$0xff]
    %v2271 = vld [vmem:[#allocation7 + $0x198] sm:$0xff]
    %v2272 = vld [vmem:[#allocation7 + $0x1a0] sm:$0xff]
    %v2273 = vld [vmem:[#allocation7 + $0x1a8] sm:$0xff]
    %v2274 = vld [vmem:[#allocation7 + $0x1b0] sm:$0xff]
    %v2275 = vld [vmem:[#allocation7 + $0x1b8] sm:$0xff]
    %v2276 = vld [vmem:[#allocation7 + $0x1c0] sm:$0xff]
    %v2277 = vld [vmem:[#allocation7 + $0x1c8] sm:$0xff]
    %v2278 = vld [vmem:[#allocation7 + $0x1d0] sm:$0xff]
    %v2279 = vld [vmem:[#allocation7 + $0x1d8] sm:$0xff]
    %v2280 = vld [vmem:[#allocation7 + $0x1e0] sm:$0xff]
    %v2281 = vld [vmem:[#allocation7 + $0x1e8] sm:$0xff]
    %v2282 = vld [vmem:[#allocation7 + $0x1f0] sm:$0xff]
    %v2283 = vld [vmem:[#allocation7 + $0x1f8] sm:$0xff]
    %v2284 = vld [vmem:[#allocation7 + $0x200] sm:$0xff]
    %v2285 = vld [vmem:[#allocation7 + $0x208] sm:$0xff]
    %v2286 = vld [vmem:[#allocation7 + $0x210] sm:$0xff]
    %v2287 = vld [vmem:[#allocation7 + $0x218] sm:$0xff]
    %v2288 = vld [vmem:[#allocation7 + $0x220] sm:$0xff]
    %v2289 = vld [vmem:[#allocation7 + $0x228] sm:$0xff]
    %v2290 = vld [vmem:[#allocation7 + $0x230] sm:$0xff]
    %v2291 = vld [vmem:[#allocation7 + $0x238] sm:$0xff]
    %v2292 = vld [vmem:[#allocation7 + $0x240] sm:$0xff]
    %v2293 = vld [vmem:[#allocation7 + $0x248] sm:$0xff]
    %v2294 = vld [vmem:[#allocation7 + $0x250] sm:$0xff]
    %v2295 = vld [vmem:[#allocation7 + $0x258] sm:$0xff]
    %v2296 = vld [vmem:[#allocation7 + $0x260] sm:$0xff]
    %v2297 = vld [vmem:[#allocation7 + $0x268] sm:$0xff]
    %v2298 = vld [vmem:[#allocation7 + $0x270] sm:$0xff]
    %v2299 = vld [vmem:[#allocation7 + $0x278] sm:$0xff]
    %v2300 = vld [vmem:[#allocation7 + $0x280] sm:$0xff]
    %v2301 = vld [vmem:[#allocation7 + $0x288] sm:$0xff]
    %v2302 = vld [vmem:[#allocation7 + $0x290] sm:$0xff]
    %v2303 = vld [vmem:[#allocation7 + $0x298] sm:$0xff]
    %v2304 = vld [vmem:[#allocation7 + $0x2a0] sm:$0xff]
    %v2305 = vld [vmem:[#allocation7 + $0x2a8] sm:$0xff]
    %v2306 = vld [vmem:[#allocation7 + $0x2b0] sm:$0xff]
    %v2307 = vld [vmem:[#allocation7 + $0x2b8] sm:$0xff]
    %v2308 = vld [vmem:[#allocation7 + $0x2c0] sm:$0xff]
    %v2309 = vld [vmem:[#allocation7 + $0x2c8] sm:$0xff]
    %v2310 = vld [vmem:[#allocation7 + $0x2d0] sm:$0xff]
    %v2311 = vld [vmem:[#allocation7 + $0x2d8] sm:$0xff]
    %v2312 = vld [vmem:[#allocation7 + $0x2e0] sm:$0xff]
    %v2313 = vld [vmem:[#allocation7 + $0x2e8] sm:$0xff]
    %v2314 = vld [vmem:[#allocation7 + $0x2f0] sm:$0xff]
    %v2315 = vld [vmem:[#allocation7 + $0x2f8] sm:$0xff]
    %v2316 = vld [vmem:[#allocation7 + $0x300] sm:$0xff]
    %v2317 = vld [vmem:[#allocation7 + $0x308] sm:$0xff]
    %v2318 = vld [vmem:[#allocation7 + $0x310] sm:$0xff]
    %v2319 = vld [vmem:[#allocation7 + $0x318] sm:$0xff]
    %v2320 = vld [vmem:[#allocation7 + $0x320] sm:$0xff]
    %v2321 = vld [vmem:[#allocation7 + $0x328] sm:$0xff]
    %v2322 = vld [vmem:[#allocation7 + $0x330] sm:$0xff]
    %v2323 = vld [vmem:[#allocation7 + $0x338] sm:$0xff]
    %v2324 = vld [vmem:[#allocation7 + $0x340] sm:$0xff]
    %v2325 = vld [vmem:[#allocation7 + $0x348] sm:$0xff]
    %v2326 = vld [vmem:[#allocation7 + $0x350] sm:$0xff]
    %v2327 = vld [vmem:[#allocation7 + $0x358] sm:$0xff]
    %v2328 = vld [vmem:[#allocation7 + $0x360] sm:$0xff]
    %v2329 = vld [vmem:[#allocation7 + $0x368] sm:$0xff]
    %v2330 = vld [vmem:[#allocation7 + $0x370] sm:$0xff]
    %v2331 = vld [vmem:[#allocation7 + $0x378] sm:$0xff]
    %v2332 = vld [vmem:[#allocation7 + $0x380] sm:$0xff]
    %v2333 = vld [vmem:[#allocation7 + $0x388] sm:$0xff]
    %v2334 = vld [vmem:[#allocation7 + $0x390] sm:$0xff]
    %v2335 = vld [vmem:[#allocation7 + $0x398] sm:$0xff]
    %v2336 = vld [vmem:[#allocation7 + $0x3a0] sm:$0xff]
    %v2337 = vld [vmem:[#allocation7 + $0x3a8] sm:$0xff]
    %v2338 = vld [vmem:[#allocation7 + $0x3b0] sm:$0xff]
    %v2339 = vld [vmem:[#allocation7 + $0x3b8] sm:$0xff]
    %v2340 = vld [vmem:[#allocation7 + $0x3c0] sm:$0xff]
    %v2341 = vld [vmem:[#allocation7 + $0x3c8] sm:$0xff]
    %v2342 = vld [vmem:[#allocation7 + $0x3d0] sm:$0xff]
    %v2343 = vld [vmem:[#allocation7 + $0x3d8] sm:$0xff]
    %v2344 = vld [vmem:[#allocation7 + $0x3e0] sm:$0xff]
    %v2345 = vld [vmem:[#allocation7 + $0x3e8] sm:$0xff]
    %v2346 = vld [vmem:[#allocation7 + $0x3f0] sm:$0xff]
    %v2347 = vld [vmem:[#allocation7 + $0x3f8] sm:$0xff]
    %v2348 = vld [vmem:[#allocation7 + $0x400] sm:$0xff]
    %v2349 = vld [vmem:[#allocation7 + $0x408] sm:$0xff]
    %v2350 = vld [vmem:[#allocation7 + $0x410] sm:$0xff]
    %v2351 = vld [vmem:[#allocation7 + $0x418] sm:$0xff]
    %v2352 = vld [vmem:[#allocation7 + $0x420] sm:$0xff]
    %v2353 = vld [vmem:[#allocation7 + $0x428] sm:$0xff]
    %v2354 = vld [vmem:[#allocation7 + $0x430] sm:$0xff]
    %v2355 = vld [vmem:[#allocation7 + $0x438] sm:$0xff]
    %v2356 = vld [vmem:[#allocation7 + $0x440] sm:$0xff]
    %v2357 = vld [vmem:[#allocation7 + $0x448] sm:$0xff]
    %v2358 = vld [vmem:[#allocation7 + $0x450] sm:$0xff]
    %v2359 = vld [vmem:[#allocation7 + $0x458] sm:$0xff]
    %v2360 = vld [vmem:[#allocation7 + $0x460] sm:$0xff]
    %v2361 = vld [vmem:[#allocation7 + $0x468] sm:$0xff]
    %v2362 = vld [vmem:[#allocation7 + $0x470] sm:$0xff]
    %v2363 = vld [vmem:[#allocation7 + $0x478] sm:$0xff]
    %v2364 = vld [vmem:[#allocation7 + $0x480] sm:$0xff]
    %v2365 = vld [vmem:[#allocation7 + $0x488] sm:$0xff]
    %v2366 = vld [vmem:[#allocation7 + $0x490] sm:$0xff]
    %v2367 = vld [vmem:[#allocation7 + $0x498] sm:$0xff]
    %v2368 = vld [vmem:[#allocation7 + $0x4a0] sm:$0xff]
    %v2369 = vld [vmem:[#allocation7 + $0x4a8] sm:$0xff]
    %v2370 = vld [vmem:[#allocation7 + $0x4b0] sm:$0xff]
    %v2371 = vld [vmem:[#allocation7 + $0x4b8] sm:$0xff]
    %v2372 = vld [vmem:[#allocation7 + $0x4c0] sm:$0xff]
    %v2373 = vld [vmem:[#allocation7 + $0x4c8] sm:$0xff]
    %v2374 = vld [vmem:[#allocation7 + $0x4d0] sm:$0xff]
    %v2375 = vld [vmem:[#allocation7 + $0x4d8] sm:$0xff]
    %v2376 = vld [vmem:[#allocation7 + $0x4e0] sm:$0xff]
    %v2377 = vld [vmem:[#allocation7 + $0x4e8] sm:$0xff]
    %v2378 = vld [vmem:[#allocation7 + $0x4f0] sm:$0xff]
    %v2379 = vld [vmem:[#allocation7 + $0x4f8] sm:$0xff]
    %v2380 = vld [vmem:[#allocation7 + $0x500] sm:$0xff]
    %v2381 = vld [vmem:[#allocation7 + $0x508] sm:$0xff]
    %v2382 = vld [vmem:[#allocation7 + $0x510] sm:$0xff]
    %v2383 = vld [vmem:[#allocation7 + $0x518] sm:$0xff]
    %v2384 = vld [vmem:[#allocation7 + $0x520] sm:$0xff]
    %v2385 = vld [vmem:[#allocation7 + $0x528] sm:$0xff]
    %v2386 = vld [vmem:[#allocation7 + $0x530] sm:$0xff]
    %v2387 = vld [vmem:[#allocation7 + $0x538] sm:$0xff]
    %v2388 = vld [vmem:[#allocation7 + $0x540] sm:$0xff]
    %v2389 = vld [vmem:[#allocation7 + $0x548] sm:$0xff]
    %v2390 = vld [vmem:[#allocation7 + $0x550] sm:$0xff]
    %v2391 = vld [vmem:[#allocation7 + $0x558] sm:$0xff]
    %v2392 = vld [vmem:[#allocation7 + $0x560] sm:$0xff]
    %v2393 = vld [vmem:[#allocation7 + $0x568] sm:$0xff]
    %v2394 = vld [vmem:[#allocation7 + $0x570] sm:$0xff]
    %v2395 = vld [vmem:[#allocation7 + $0x578] sm:$0xff]
    %v2396 = vld [vmem:[#allocation7 + $0x580] sm:$0xff]
    %v2397 = vld [vmem:[#allocation7 + $0x588] sm:$0xff]
    %v2398 = vld [vmem:[#allocation7 + $0x590] sm:$0xff]
    %v2399 = vld [vmem:[#allocation7 + $0x598] sm:$0xff]
    %v2400 = vld [vmem:[#allocation7 + $0x5a0] sm:$0xff]
    %v2401 = vld [vmem:[#allocation7 + $0x5a8] sm:$0xff]
    %v2402 = vld [vmem:[#allocation7 + $0x5b0] sm:$0xff]
    %v2403 = vld [vmem:[#allocation7 + $0x5b8] sm:$0xff]
    %v2404 = vld [vmem:[#allocation7 + $0x5c0] sm:$0xff]
    %v2405 = vld [vmem:[#allocation7 + $0x5c8] sm:$0xff]
    %v2406 = vld [vmem:[#allocation7 + $0x5d0] sm:$0xff]
    %v2407 = vld [vmem:[#allocation7 + $0x5d8] sm:$0xff]
    %v2408 = vld [vmem:[#allocation7 + $0x5e0] sm:$0xff]
    %v2409 = vld [vmem:[#allocation7 + $0x5e8] sm:$0xff]
    %v2410 = vld [vmem:[#allocation7 + $0x5f0] sm:$0xff]
    %v2411 = vld [vmem:[#allocation7 + $0x5f8] sm:$0xff]
    %v2412 = vld [vmem:[#allocation7 + $0x600] sm:$0xff]
    %v2413 = vld [vmem:[#allocation7 + $0x608] sm:$0xff]
    %v2414 = vld [vmem:[#allocation7 + $0x610] sm:$0xff]
    %v2415 = vld [vmem:[#allocation7 + $0x618] sm:$0xff]
    %v2416 = vld [vmem:[#allocation7 + $0x620] sm:$0xff]
    %v2417 = vld [vmem:[#allocation7 + $0x628] sm:$0xff]
    %v2418 = vld [vmem:[#allocation7 + $0x630] sm:$0xff]
    %v2419 = vld [vmem:[#allocation7 + $0x638] sm:$0xff]
    %v2420 = vld [vmem:[#allocation7 + $0x640] sm:$0xff]
    %v2421 = vld [vmem:[#allocation7 + $0x648] sm:$0xff]
    %v2422 = vld [vmem:[#allocation7 + $0x650] sm:$0xff]
    %v2423 = vld [vmem:[#allocation7 + $0x658] sm:$0xff]
    %v2424 = vld [vmem:[#allocation7 + $0x660] sm:$0xff]
    %v2425 = vld [vmem:[#allocation7 + $0x668] sm:$0xff]
    %v2426 = vld [vmem:[#allocation7 + $0x670] sm:$0xff]
    %v2427 = vld [vmem:[#allocation7 + $0x678] sm:$0xff]
    %v2428 = vld [vmem:[#allocation7 + $0x680] sm:$0xff]
    %v2429 = vld [vmem:[#allocation7 + $0x688] sm:$0xff]
    %v2430 = vld [vmem:[#allocation7 + $0x690] sm:$0xff]
    %v2431 = vld [vmem:[#allocation7 + $0x698] sm:$0xff]
    %v2432 = vld [vmem:[#allocation7 + $0x6a0] sm:$0xff]
    %v2433 = vld [vmem:[#allocation7 + $0x6a8] sm:$0xff]
    %v2434 = vld [vmem:[#allocation7 + $0x6b0] sm:$0xff]
    %v2435 = vld [vmem:[#allocation7 + $0x6b8] sm:$0xff]
    %v2436 = vld [vmem:[#allocation7 + $0x6c0] sm:$0xff]
    %v2437 = vld [vmem:[#allocation7 + $0x6c8] sm:$0xff]
    %v2438 = vld [vmem:[#allocation7 + $0x6d0] sm:$0xff]
    %v2439 = vld [vmem:[#allocation7 + $0x6d8] sm:$0xff]
    %v2440 = vld [vmem:[#allocation7 + $0x6e0] sm:$0xff]
    %v2441 = vld [vmem:[#allocation7 + $0x6e8] sm:$0xff]
    %v2442 = vld [vmem:[#allocation7 + $0x6f0] sm:$0xff]
    %v2443 = vld [vmem:[#allocation7 + $0x6f8] sm:$0xff]
    %v2444 = vld [vmem:[#allocation7 + $0x700] sm:$0xff]
    %v2445 = vld [vmem:[#allocation7 + $0x708] sm:$0xff]
    %v2446 = vld [vmem:[#allocation7 + $0x710] sm:$0xff]
    %v2447 = vld [vmem:[#allocation7 + $0x718] sm:$0xff]
    %v2448 = vld [vmem:[#allocation7 + $0x720] sm:$0xff]
    %v2449 = vld [vmem:[#allocation7 + $0x728] sm:$0xff]
    %v2450 = vld [vmem:[#allocation7 + $0x730] sm:$0xff]
    %v2451 = vld [vmem:[#allocation7 + $0x738] sm:$0xff]
    %v2452 = vld [vmem:[#allocation7 + $0x740] sm:$0xff]
    %v2453 = vld [vmem:[#allocation7 + $0x748] sm:$0xff]
    %v2454 = vld [vmem:[#allocation7 + $0x750] sm:$0xff]
    %v2455 = vld [vmem:[#allocation7 + $0x758] sm:$0xff]
    %v2456 = vld [vmem:[#allocation7 + $0x760] sm:$0xff]
    %v2457 = vld [vmem:[#allocation7 + $0x768] sm:$0xff]
    %v2458 = vld [vmem:[#allocation7 + $0x770] sm:$0xff]
    %v2459 = vld [vmem:[#allocation7 + $0x778] sm:$0xff]
    %v2460 = vld [vmem:[#allocation7 + $0x780] sm:$0xff]
    %v2461 = vld [vmem:[#allocation7 + $0x788] sm:$0xff]
    %v2462 = vld [vmem:[#allocation7 + $0x790] sm:$0xff]
    %v2463 = vld [vmem:[#allocation7 + $0x798] sm:$0xff]
    %v2464 = vld [vmem:[#allocation7 + $0x7a0] sm:$0xff]
    %v2465 = vld [vmem:[#allocation7 + $0x7a8] sm:$0xff]
    %v2466 = vld [vmem:[#allocation7 + $0x7b0] sm:$0xff]
    %v2467 = vld [vmem:[#allocation7 + $0x7b8] sm:$0xff]
    %v2468 = vld [vmem:[#allocation7 + $0x7c0] sm:$0xff]
    %v2469 = vld [vmem:[#allocation7 + $0x7c8] sm:$0xff]
    %v2470 = vld [vmem:[#allocation7 + $0x7d0] sm:$0xff]
    %v2471 = vld [vmem:[#allocation7 + $0x7d8] sm:$0xff]
    %v2472 = vld [vmem:[#allocation7 + $0x7e0] sm:$0xff]
    %v2473 = vld [vmem:[#allocation7 + $0x7e8] sm:$0xff]
    %v2474 = vld [vmem:[#allocation7 + $0x7f0] sm:$0xff]
    %v2475 = vld [vmem:[#allocation7 + $0x7f8] sm:$0xff]
    %v2476 = vld [vmem:[#allocation7 + $0x800] sm:$0xff]
    %v2477 = vld [vmem:[#allocation7 + $0x808] sm:$0xff]
    %v2478 = vld [vmem:[#allocation7 + $0x810] sm:$0xff]
    %v2479 = vld [vmem:[#allocation7 + $0x818] sm:$0xff]
    %v2480 = vld [vmem:[#allocation7 + $0x820] sm:$0xff]
    %v2481 = vld [vmem:[#allocation7 + $0x828] sm:$0xff]
    %v2482 = vld [vmem:[#allocation7 + $0x830] sm:$0xff]
    %v2483 = vld [vmem:[#allocation7 + $0x838] sm:$0xff]
    %v2484 = vld [vmem:[#allocation7 + $0x840] sm:$0xff]
    %v2485 = vld [vmem:[#allocation7 + $0x848] sm:$0xff]
    %v2486 = vld [vmem:[#allocation7 + $0x850] sm:$0xff]
    %v2487 = vld [vmem:[#allocation7 + $0x858] sm:$0xff]
    %v2488 = vld [vmem:[#allocation7 + $0x860] sm:$0xff]
    %v2489 = vld [vmem:[#allocation7 + $0x868] sm:$0xff]
    %v2490 = vld [vmem:[#allocation7 + $0x870] sm:$0xff]
    %v2491 = vld [vmem:[#allocation7 + $0x878] sm:$0xff]
    %v2492 = vld [vmem:[#allocation7 + $0x880] sm:$0xff]
    %v2493 = vld [vmem:[#allocation7 + $0x888] sm:$0xff]
    %v2494 = vld [vmem:[#allocation7 + $0x890] sm:$0xff]
    %v2495 = vld [vmem:[#allocation7 + $0x898] sm:$0xff]
    %v2496 = vld [vmem:[#allocation7 + $0x8a0] sm:$0xff]
    %v2497 = vld [vmem:[#allocation7 + $0x8a8] sm:$0xff]
    %v2498 = vld [vmem:[#allocation7 + $0x8b0] sm:$0xff]
    %v2499 = vld [vmem:[#allocation7 + $0x8b8] sm:$0xff]
    %v2500 = vld [vmem:[#allocation7 + $0x8c0] sm:$0xff]
    %v2501 = vld [vmem:[#allocation7 + $0x8c8] sm:$0xff]
    %v2502 = vld [vmem:[#allocation7 + $0x8d0] sm:$0xff]
    %v2503 = vld [vmem:[#allocation7 + $0x8d8] sm:$0xff]
    %v2504 = vld [vmem:[#allocation7 + $0x8e0] sm:$0xff]
    %v2505 = vld [vmem:[#allocation7 + $0x8e8] sm:$0xff]
    %v2506 = vld [vmem:[#allocation7 + $0x8f0] sm:$0xff]
    %v2507 = vld [vmem:[#allocation7 + $0x8f8] sm:$0xff]
    %v2508 = vld [vmem:[#allocation7 + $0x900] sm:$0xff]
    %v2509 = vld [vmem:[#allocation7 + $0x908] sm:$0xff]
    %v2510 = vld [vmem:[#allocation7 + $0x910] sm:$0xff]
    %v2511 = vld [vmem:[#allocation7 + $0x918] sm:$0xff]
    %v2512 = vld [vmem:[#allocation7 + $0x920] sm:$0xff]
    %v2513 = vld [vmem:[#allocation7 + $0x928] sm:$0xff]
    %v2514 = vld [vmem:[#allocation7 + $0x930] sm:$0xff]
    %v2515 = vld [vmem:[#allocation7 + $0x938] sm:$0xff]
    %v2516 = vld [vmem:[#allocation7 + $0x940] sm:$0xff]
    %v2517 = vld [vmem:[#allocation7 + $0x948] sm:$0xff]
    %v2518 = vld [vmem:[#allocation7 + $0x950] sm:$0xff]
    %v2519 = vld [vmem:[#allocation7 + $0x958] sm:$0xff]
    %v2520 = vld [vmem:[#allocation7 + $0x960] sm:$0xff]
    %v2521 = vld [vmem:[#allocation7 + $0x968] sm:$0xff]
    %v2522 = vld [vmem:[#allocation7 + $0x970] sm:$0xff]
    %v2523 = vld [vmem:[#allocation7 + $0x978] sm:$0xff]
    %v2524 = vld [vmem:[#allocation7 + $0x980] sm:$0xff]
    %v2525 = vld [vmem:[#allocation7 + $0x988] sm:$0xff]
    %v2526 = vld [vmem:[#allocation7 + $0x990] sm:$0xff]
    %v2527 = vld [vmem:[#allocation7 + $0x998] sm:$0xff]
    %v2528 = vld [vmem:[#allocation7 + $0x9a0] sm:$0xff]
    %v2529 = vld [vmem:[#allocation7 + $0x9a8] sm:$0xff]
    %v2530 = vld [vmem:[#allocation7 + $0x9b0] sm:$0xff]
    %v2531 = vld [vmem:[#allocation7 + $0x9b8] sm:$0xff]
    %v2532 = vld [vmem:[#allocation7 + $0x9c0] sm:$0xff]
    %v2533 = vld [vmem:[#allocation7 + $0x9c8] sm:$0xff]
    %v2534 = vld [vmem:[#allocation7 + $0x9d0] sm:$0xff]
    %v2535 = vld [vmem:[#allocation7 + $0x9d8] sm:$0xff]
    %v2536 = vld [vmem:[#allocation7 + $0x9e0] sm:$0xff]
    %v2537 = vld [vmem:[#allocation7 + $0x9e8] sm:$0xff]
    %v2538 = vld [vmem:[#allocation7 + $0x9f0] sm:$0xff]
    %v2539 = vld [vmem:[#allocation7 + $0x9f8] sm:$0xff]
    %v2540 = vld [vmem:[#allocation7 + $0xa00] sm:$0xff]
    %v2541 = vld [vmem:[#allocation7 + $0xa08] sm:$0xff]
    %v2542 = vld [vmem:[#allocation7 + $0xa10] sm:$0xff]
    %v2543 = vld [vmem:[#allocation7 + $0xa18] sm:$0xff]
    %v2544 = vld [vmem:[#allocation7 + $0xa20] sm:$0xff]
    %v2545 = vld [vmem:[#allocation7 + $0xa28] sm:$0xff]
    %v2546 = vld [vmem:[#allocation7 + $0xa30] sm:$0xff]
    %v2547 = vld [vmem:[#allocation7 + $0xa38] sm:$0xff]
    %v2548 = vld [vmem:[#allocation7 + $0xa40] sm:$0xff]
    %v2549 = vld [vmem:[#allocation7 + $0xa48] sm:$0xff]
    %v2550 = vld [vmem:[#allocation7 + $0xa50] sm:$0xff]
    %v2551 = vld [vmem:[#allocation7 + $0xa58] sm:$0xff]
    %v2552 = vld [vmem:[#allocation7 + $0xa60] sm:$0xff]
    %v2553 = vld [vmem:[#allocation7 + $0xa68] sm:$0xff]
    %v2554 = vld [vmem:[#allocation7 + $0xa70] sm:$0xff]
    %v2555 = vld [vmem:[#allocation7 + $0xa78] sm:$0xff]
    %v2556 = vld [vmem:[#allocation7 + $0xa80] sm:$0xff]
    %v2557 = vld [vmem:[#allocation7 + $0xa88] sm:$0xff]
    %v2558 = vld [vmem:[#allocation7 + $0xa90] sm:$0xff]
    %v2559 = vld [vmem:[#allocation7 + $0xa98] sm:$0xff]
    %v2560 = vld [vmem:[#allocation7 + $0xaa0] sm:$0xff]
    %v2561 = vld [vmem:[#allocation7 + $0xaa8] sm:$0xff]
    %v2562 = vld [vmem:[#allocation7 + $0xab0] sm:$0xff]
    %v2563 = vld [vmem:[#allocation7 + $0xab8] sm:$0xff]
    %v2564 = vld [vmem:[#allocation7 + $0xac0] sm:$0xff]
    %v2565 = vld [vmem:[#allocation7 + $0xac8] sm:$0xff]
    %v2566 = vld [vmem:[#allocation7 + $0xad0] sm:$0xff]
    %v2567 = vld [vmem:[#allocation7 + $0xad8] sm:$0xff]
    %v2568 = vld [vmem:[#allocation7 + $0xae0] sm:$0xff]
    %v2569 = vld [vmem:[#allocation7 + $0xae8] sm:$0xff]
    %v2570 = vld [vmem:[#allocation7 + $0xaf0] sm:$0xff]
    %v2571 = vld [vmem:[#allocation7 + $0xaf8] sm:$0xff]
    %v2572 = vld [vmem:[#allocation7 + $0xb00] sm:$0xff]
    %v2573 = vld [vmem:[#allocation7 + $0xb08] sm:$0xff]
    %v2574 = vld [vmem:[#allocation7 + $0xb10] sm:$0xff]
    %v2575 = vld [vmem:[#allocation7 + $0xb18] sm:$0xff]
    %v2576 = vld [vmem:[#allocation7 + $0xb20] sm:$0xff]
    %v2577 = vld [vmem:[#allocation7 + $0xb28] sm:$0xff]
    %v2578 = vld [vmem:[#allocation7 + $0xb30] sm:$0xff]
    %v2579 = vld [vmem:[#allocation7 + $0xb38] sm:$0xff]
    %v2580 = vld [vmem:[#allocation7 + $0xb40] sm:$0xff]
    %v2581 = vld [vmem:[#allocation7 + $0xb48] sm:$0xff]
    %v2582 = vld [vmem:[#allocation7 + $0xb50] sm:$0xff]
    %v2583 = vld [vmem:[#allocation7 + $0xb58] sm:$0xff]
    %v2584 = vld [vmem:[#allocation7 + $0xb60] sm:$0xff]
    %v2585 = vld [vmem:[#allocation7 + $0xb68] sm:$0xff]
    %v2586 = vld [vmem:[#allocation7 + $0xb70] sm:$0xff]
    %v2587 = vld [vmem:[#allocation7 + $0xb78] sm:$0xff]
    %v2588 = vld [vmem:[#allocation7 + $0xb80] sm:$0xff]
    %v2589 = vld [vmem:[#allocation7 + $0xb88] sm:$0xff]
    %v2590 = vld [vmem:[#allocation7 + $0xb90] sm:$0xff]
    %v2591 = vld [vmem:[#allocation7 + $0xb98] sm:$0xff]
    %v2592 = vld [vmem:[#allocation7 + $0xba0] sm:$0xff]
    %v2593 = vld [vmem:[#allocation7 + $0xba8] sm:$0xff]
    %v2594 = vld [vmem:[#allocation7 + $0xbb0] sm:$0xff]
    %v2595 = vld [vmem:[#allocation7 + $0xbb8] sm:$0xff]
    %v2596 = vld [vmem:[#allocation7 + $0xbc0] sm:$0xff]
    %v2597 = vld [vmem:[#allocation7 + $0xbc8] sm:$0xff]
    %v2598 = vld [vmem:[#allocation7 + $0xbd0] sm:$0xff]
    %v2599 = vld [vmem:[#allocation7 + $0xbd8] sm:$0xff]
    %v2600 = vld [vmem:[#allocation7 + $0xbe0] sm:$0xff]
    %v2601 = vld [vmem:[#allocation7 + $0xbe8] sm:$0xff]
    %v2602 = vld [vmem:[#allocation7 + $0xbf0] sm:$0xff]
    %v2603 = vld [vmem:[#allocation7 + $0xbf8] sm:$0xff]
    %v2604 = vld [vmem:[#allocation7 + $0xc00] sm:$0xff]
    %v2605 = vld [vmem:[#allocation7 + $0xc08] sm:$0xff]
    %v2606 = vld [vmem:[#allocation7 + $0xc10] sm:$0xff]
    %v2607 = vld [vmem:[#allocation7 + $0xc18] sm:$0xff]
    %v2608 = vld [vmem:[#allocation7 + $0xc20] sm:$0xff]
    %v2609 = vld [vmem:[#allocation7 + $0xc28] sm:$0xff]
    %v2610 = vld [vmem:[#allocation7 + $0xc30] sm:$0xff]
    %v2611 = vld [vmem:[#allocation7 + $0xc38] sm:$0xff]
    %v2612 = vld [vmem:[#allocation7 + $0xc40] sm:$0xff]
    %v2613 = vld [vmem:[#allocation7 + $0xc48] sm:$0xff]
    %v2614 = vld [vmem:[#allocation7 + $0xc50] sm:$0xff]
    %v2615 = vld [vmem:[#allocation7 + $0xc58] sm:$0xff]
    %v2616 = vld [vmem:[#allocation7 + $0xc60] sm:$0xff]
    %v2617 = vld [vmem:[#allocation7 + $0xc68] sm:$0xff]
    %v2618 = vld [vmem:[#allocation7 + $0xc70] sm:$0xff]
    %v2619 = vld [vmem:[#allocation7 + $0xc78] sm:$0xff]
    %v2620 = vld [vmem:[#allocation7 + $0xc80] sm:$0xff]
    %v2621 = vld [vmem:[#allocation7 + $0xc88] sm:$0xff]
    %v2622 = vld [vmem:[#allocation7 + $0xc90] sm:$0xff]
    %v2623 = vld [vmem:[#allocation7 + $0xc98] sm:$0xff]
    %v2624 = vld [vmem:[#allocation7 + $0xca0] sm:$0xff]
    %v2625 = vld [vmem:[#allocation7 + $0xca8] sm:$0xff]
    %v2626 = vld [vmem:[#allocation7 + $0xcb0] sm:$0xff]
    %v2627 = vld [vmem:[#allocation7 + $0xcb8] sm:$0xff]
    %v2628 = vld [vmem:[#allocation7 + $0xcc0] sm:$0xff]
    %v2629 = vld [vmem:[#allocation7 + $0xcc8] sm:$0xff]
    %v2630 = vld [vmem:[#allocation7 + $0xcd0] sm:$0xff]
    %v2631 = vld [vmem:[#allocation7 + $0xcd8] sm:$0xff]
    %v2632 = vld [vmem:[#allocation7 + $0xce0] sm:$0xff]
    %v2633 = vld [vmem:[#allocation7 + $0xce8] sm:$0xff]
    %v2634 = vld [vmem:[#allocation7 + $0xcf0] sm:$0xff]
    %v2635 = vld [vmem:[#allocation7 + $0xcf8] sm:$0xff]
    %v2636 = vld [vmem:[#allocation7 + $0xd00] sm:$0xff]
    %v2637 = vld [vmem:[#allocation7 + $0xd08] sm:$0xff]
    %v2638 = vld [vmem:[#allocation7 + $0xd10] sm:$0xff]
    %v2639 = vld [vmem:[#allocation7 + $0xd18] sm:$0xff]
    %v2640 = vld [vmem:[#allocation7 + $0xd20] sm:$0xff]
    %v2641 = vld [vmem:[#allocation7 + $0xd28] sm:$0xff]
    %v2642 = vld [vmem:[#allocation7 + $0xd30] sm:$0xff]
    %v2643 = vld [vmem:[#allocation7 + $0xd38] sm:$0xff]
    %v2644 = vld [vmem:[#allocation7 + $0xd40] sm:$0xff]
    %v2645 = vld [vmem:[#allocation7 + $0xd48] sm:$0xff]
    %v2646 = vld [vmem:[#allocation7 + $0xd50] sm:$0xff]
    %v2647 = vld [vmem:[#allocation7 + $0xd58] sm:$0xff]
    %v2648 = vld [vmem:[#allocation7 + $0xd60] sm:$0xff]
    %v2649 = vld [vmem:[#allocation7 + $0xd68] sm:$0xff]
    %v2650 = vld [vmem:[#allocation7 + $0xd70] sm:$0xff]
    %v2651 = vld [vmem:[#allocation7 + $0xd78] sm:$0xff]
    %v2652 = vld [vmem:[#allocation7 + $0xd80] sm:$0xff]
    %v2653 = vld [vmem:[#allocation7 + $0xd88] sm:$0xff]
    %v2654 = vld [vmem:[#allocation7 + $0xd90] sm:$0xff]
    %v2655 = vld [vmem:[#allocation7 + $0xd98] sm:$0xff]
    %v2656 = vld [vmem:[#allocation7 + $0xda0] sm:$0xff]
    %v2657 = vld [vmem:[#allocation7 + $0xda8] sm:$0xff]
    %v2658 = vld [vmem:[#allocation7 + $0xdb0] sm:$0xff]
    %v2659 = vld [vmem:[#allocation7 + $0xdb8] sm:$0xff]
    %v2660 = vld [vmem:[#allocation7 + $0xdc0] sm:$0xff]
    %v2661 = vld [vmem:[#allocation7 + $0xdc8] sm:$0xff]
    %v2662 = vld [vmem:[#allocation7 + $0xdd0] sm:$0xff]
    %v2663 = vld [vmem:[#allocation7 + $0xdd8] sm:$0xff]
    %v2664 = vld [vmem:[#allocation7 + $0xde0] sm:$0xff]
    %v2665 = vld [vmem:[#allocation7 + $0xde8] sm:$0xff]
    %v2666 = vld [vmem:[#allocation7 + $0xdf0] sm:$0xff]
    %v2667 = vld [vmem:[#allocation7 + $0xdf8] sm:$0xff]
    %v2668 = vld [vmem:[#allocation7 + $0xe00] sm:$0xff]
    %v2669 = vld [vmem:[#allocation7 + $0xe08] sm:$0xff]
    %v2670 = vld [vmem:[#allocation7 + $0xe10] sm:$0xff]
    %v2671 = vld [vmem:[#allocation7 + $0xe18] sm:$0xff]
    %v2672 = vld [vmem:[#allocation7 + $0xe20] sm:$0xff]
    %v2673 = vld [vmem:[#allocation7 + $0xe28] sm:$0xff]
    %v2674 = vld [vmem:[#allocation7 + $0xe30] sm:$0xff]
    %v2675 = vld [vmem:[#allocation7 + $0xe38] sm:$0xff]
    %v2676 = vld [vmem:[#allocation7 + $0xe40] sm:$0xff]
    %v2677 = vld [vmem:[#allocation7 + $0xe48] sm:$0xff]
    %v2678 = vld [vmem:[#allocation7 + $0xe50] sm:$0xff]
    %v2679 = vld [vmem:[#allocation7 + $0xe58] sm:$0xff]
    %v2680 = vld [vmem:[#allocation7 + $0xe60] sm:$0xff]
    %v2681 = vld [vmem:[#allocation7 + $0xe68] sm:$0xff]
    %v2682 = vld [vmem:[#allocation7 + $0xe70] sm:$0xff]
    %v2683 = vld [vmem:[#allocation7 + $0xe78] sm:$0xff]
    %v2684 = vld [vmem:[#allocation7 + $0xe80] sm:$0xff]
    %v2685 = vld [vmem:[#allocation7 + $0xe88] sm:$0xff]
    %v2686 = vld [vmem:[#allocation7 + $0xe90] sm:$0xff]
    %v2687 = vld [vmem:[#allocation7 + $0xe98] sm:$0xff]
    %v2688 = vld [vmem:[#allocation7 + $0xea0] sm:$0xff]
    %v2689 = vld [vmem:[#allocation7 + $0xea8] sm:$0xff]
    %v2690 = vld [vmem:[#allocation7 + $0xeb0] sm:$0xff]
    %v2691 = vld [vmem:[#allocation7 + $0xeb8] sm:$0xff]
    %v2692 = vld [vmem:[#allocation7 + $0xec0] sm:$0xff]
    %v2693 = vld [vmem:[#allocation7 + $0xec8] sm:$0xff]
    %v2694 = vld [vmem:[#allocation7 + $0xed0] sm:$0xff]
    %v2695 = vld [vmem:[#allocation7 + $0xed8] sm:$0xff]
    %v2696 = vld [vmem:[#allocation7 + $0xee0] sm:$0xff]
    %v2697 = vld [vmem:[#allocation7 + $0xee8] sm:$0xff]
    %v2698 = vld [vmem:[#allocation7 + $0xef0] sm:$0xff]
    %v2699 = vld [vmem:[#allocation7 + $0xef8] sm:$0xff]
    %v2700 = vld [vmem:[#allocation7 + $0xf00] sm:$0xff]
    %v2701 = vld [vmem:[#allocation7 + $0xf08] sm:$0xff]
    %v2702 = vld [vmem:[#allocation7 + $0xf10] sm:$0xff]
    %v2703 = vld [vmem:[#allocation7 + $0xf18] sm:$0xff]
    %v2704 = vld [vmem:[#allocation7 + $0xf20] sm:$0xff]
    %v2705 = vld [vmem:[#allocation7 + $0xf28] sm:$0xff]
    %v2706 = vld [vmem:[#allocation7 + $0xf30] sm:$0xff]
    %v2707 = vld [vmem:[#allocation7 + $0xf38] sm:$0xff]
    %v2708 = vld [vmem:[#allocation7 + $0xf40] sm:$0xff]
    %v2709 = vld [vmem:[#allocation7 + $0xf48] sm:$0xff]
    %v2710 = vld [vmem:[#allocation7 + $0xf50] sm:$0xff]
    %v2711 = vld [vmem:[#allocation7 + $0xf58] sm:$0xff]
    %v2712 = vld [vmem:[#allocation7 + $0xf60] sm:$0xff]
    %v2713 = vld [vmem:[#allocation7 + $0xf68] sm:$0xff]
    %v2714 = vld [vmem:[#allocation7 + $0xf70] sm:$0xff]
    %v2715 = vld [vmem:[#allocation7 + $0xf78] sm:$0xff]
    %v2716 = vld [vmem:[#allocation7 + $0xf80] sm:$0xff]
    %v2717 = vld [vmem:[#allocation7 + $0xf88] sm:$0xff]
    %v2718 = vld [vmem:[#allocation7 + $0xf90] sm:$0xff]
    %v2719 = vld [vmem:[#allocation7 + $0xf98] sm:$0xff]
    %v2720 = vld [vmem:[#allocation7 + $0xfa0] sm:$0xff]
    %v2721 = vld [vmem:[#allocation7 + $0xfa8] sm:$0xff]
    %v2722 = vld [vmem:[#allocation7 + $0xfb0] sm:$0xff]
    %v2723 = vld [vmem:[#allocation7 + $0xfb8] sm:$0xff]
    %v2724 = vld [vmem:[#allocation7 + $0xfc0] sm:$0xff]
    %v2725 = vld [vmem:[#allocation7 + $0xfc8] sm:$0xff]
    %v2726 = vld [vmem:[#allocation7 + $0xfd0] sm:$0xff]
    %v2727 = vld [vmem:[#allocation7 + $0xfd8] sm:$0xff]
    %v2728 = vld [vmem:[#allocation7 + $0xfe0] sm:$0xff]
    %v2729 = vld [vmem:[#allocation7 + $0xfe8] sm:$0xff]
    %v2730 = vld [vmem:[#allocation7 + $0xff0] sm:$0xff]
    %v2731 = vld [vmem:[#allocation7 + $0xff8] sm:$0xff]
    %v2732 = vld [vmem:[#allocation7 + $0x1000] sm:$0xff]
    %v2733 = vld [vmem:[#allocation7 + $0x1008] sm:$0xff]
    %v2734 = vld [vmem:[#allocation7 + $0x1010] sm:$0xff]
    %v2735 = vld [vmem:[#allocation7 + $0x1018] sm:$0xff]
    %v2736 = vld [vmem:[#allocation7 + $0x1020] sm:$0xff]
    %v2737 = vld [vmem:[#allocation7 + $0x1028] sm:$0xff]
    %v2738 = vld [vmem:[#allocation7 + $0x1030] sm:$0xff]
    %v2739 = vld [vmem:[#allocation7 + $0x1038] sm:$0xff]
    %v2740 = vld [vmem:[#allocation7 + $0x1040] sm:$0xff]
    %v2741 = vld [vmem:[#allocation7 + $0x1048] sm:$0xff]
    %v2742 = vld [vmem:[#allocation7 + $0x1050] sm:$0xff]
    %v2743 = vld [vmem:[#allocation7 + $0x1058] sm:$0xff]
    %v2744 = vld [vmem:[#allocation7 + $0x1060] sm:$0xff]
    %v2745 = vld [vmem:[#allocation7 + $0x1068] sm:$0xff]
    %v2746 = vld [vmem:[#allocation7 + $0x1070] sm:$0xff]
    %v2747 = vld [vmem:[#allocation7 + $0x1078] sm:$0xff]
    %v2748 = vld [vmem:[#allocation7 + $0x1080] sm:$0xff]
    %v2749 = vld [vmem:[#allocation7 + $0x1088] sm:$0xff]
    %v2750 = vld [vmem:[#allocation7 + $0x1090] sm:$0xff]
    %v2751 = vld [vmem:[#allocation7 + $0x1098] sm:$0xff]
    %v2752 = vld [vmem:[#allocation7 + $0x10a0] sm:$0xff]
    %v2753 = vld [vmem:[#allocation7 + $0x10a8] sm:$0xff]
    %v2754 = vld [vmem:[#allocation7 + $0x10b0] sm:$0xff]
    %v2755 = vld [vmem:[#allocation7 + $0x10b8] sm:$0xff]
    %v2756 = vld [vmem:[#allocation7 + $0x10c0] sm:$0xff]
    %v2757 = vld [vmem:[#allocation7 + $0x10c8] sm:$0xff]
    %v2758 = vld [vmem:[#allocation7 + $0x10d0] sm:$0xff]
    %v2759 = vld [vmem:[#allocation7 + $0x10d8] sm:$0xff]
    %v2760 = vld [vmem:[#allocation7 + $0x10e0] sm:$0xff]
    %v2761 = vld [vmem:[#allocation7 + $0x10e8] sm:$0xff]
    %v2762 = vld [vmem:[#allocation7 + $0x10f0] sm:$0xff]
    %v2763 = vld [vmem:[#allocation7 + $0x10f8] sm:$0xff]
    %v2764 = vld [vmem:[#allocation7 + $0x1100] sm:$0xff]
    %v2765 = vld [vmem:[#allocation7 + $0x1108] sm:$0xff]
    %v2766 = vld [vmem:[#allocation7 + $0x1110] sm:$0xff]
    %v2767 = vld [vmem:[#allocation7 + $0x1118] sm:$0xff]
    %v2768 = vld [vmem:[#allocation7 + $0x1120] sm:$0xff]
    %v2769 = vld [vmem:[#allocation7 + $0x1128] sm:$0xff]
    %v2770 = vld [vmem:[#allocation7 + $0x1130] sm:$0xff]
    %v2771 = vld [vmem:[#allocation7 + $0x1138] sm:$0xff]
    %v2772 = vld [vmem:[#allocation7 + $0x1140] sm:$0xff]
    %v2773 = vld [vmem:[#allocation7 + $0x1148] sm:$0xff]
    %v2774 = vld [vmem:[#allocation7 + $0x1150] sm:$0xff]
    %v2775 = vld [vmem:[#allocation7 + $0x1158] sm:$0xff]
    %v2776 = vld [vmem:[#allocation7 + $0x1160] sm:$0xff]
    %v2777 = vld [vmem:[#allocation7 + $0x1168] sm:$0xff]
    %v2778 = vld [vmem:[#allocation7 + $0x1170] sm:$0xff]
    %v2779 = vld [vmem:[#allocation7 + $0x1178] sm:$0xff]
    %v2780 = vld [vmem:[#allocation7 + $0x1180] sm:$0xff]
    %v2781 = vld [vmem:[#allocation7 + $0x1188] sm:$0xff]
    %v2782 = vld [vmem:[#allocation7 + $0x1190] sm:$0xff]
    %v2783 = vld [vmem:[#allocation7 + $0x1198] sm:$0xff]
    %v2784 = vld [vmem:[#allocation7 + $0x11a0] sm:$0xff]
    %v2785 = vld [vmem:[#allocation7 + $0x11a8] sm:$0xff]
    %v2786 = vld [vmem:[#allocation7 + $0x11b0] sm:$0xff]
    %v2787 = vld [vmem:[#allocation7 + $0x11b8] sm:$0xff]
    %v2788 = vld [vmem:[#allocation7 + $0x11c0] sm:$0xff]
    %v2789 = vld [vmem:[#allocation7 + $0x11c8] sm:$0xff]
    %v2790 = vld [vmem:[#allocation7 + $0x11d0] sm:$0xff]
    %v2791 = vld [vmem:[#allocation7 + $0x11d8] sm:$0xff]
    %v2792 = vld [vmem:[#allocation7 + $0x11e0] sm:$0xff]
    %v2793 = vld [vmem:[#allocation7 + $0x11e8] sm:$0xff]
    %v2794 = vld [vmem:[#allocation7 + $0x11f0] sm:$0xff]
    %v2795 = vld [vmem:[#allocation7 + $0x11f8] sm:$0xff]
    %v2796 = vld [vmem:[#allocation7 + $0x1200] sm:$0xff]
    %v2797 = vld [vmem:[#allocation7 + $0x1208] sm:$0xff]
    %v2798 = vld [vmem:[#allocation7 + $0x1210] sm:$0xff]
    %v2799 = vld [vmem:[#allocation7 + $0x1218] sm:$0xff]
    %v2800 = vld [vmem:[#allocation7 + $0x1220] sm:$0xff]
    %v2801 = vld [vmem:[#allocation7 + $0x1228] sm:$0xff]
    %v2802 = vld [vmem:[#allocation7 + $0x1230] sm:$0xff]
    %v2803 = vld [vmem:[#allocation7 + $0x1238] sm:$0xff]
    %v2804 = vld [vmem:[#allocation7 + $0x1240] sm:$0xff]
    %v2805 = vld [vmem:[#allocation7 + $0x1248] sm:$0xff]
    %v2806 = vld [vmem:[#allocation7 + $0x1250] sm:$0xff]
    %v2807 = vld [vmem:[#allocation7 + $0x1258] sm:$0xff]
    %v2808 = vld [vmem:[#allocation7 + $0x1260] sm:$0xff]
    %v2809 = vld [vmem:[#allocation7 + $0x1268] sm:$0xff]
    %v2810 = vld [vmem:[#allocation7 + $0x1270] sm:$0xff]
    %v2811 = vld [vmem:[#allocation7 + $0x1278] sm:$0xff]
    %v2812 = vld [vmem:[#allocation7 + $0x1280] sm:$0xff]
    %v2813 = vld [vmem:[#allocation7 + $0x1288] sm:$0xff]
    %v2814 = vld [vmem:[#allocation7 + $0x1290] sm:$0xff]
    %v2815 = vld [vmem:[#allocation7 + $0x1298] sm:$0xff]
    %v2816 = vld [vmem:[#allocation7 + $0x12a0] sm:$0xff]
    %v2817 = vld [vmem:[#allocation7 + $0x12a8] sm:$0xff]
    %v2818 = vld [vmem:[#allocation7 + $0x12b0] sm:$0xff]
    %v2819 = vld [vmem:[#allocation7 + $0x12b8] sm:$0xff]
    %v2820 = vld [vmem:[#allocation7 + $0x12c0] sm:$0xff]
    %v2821 = vld [vmem:[#allocation7 + $0x12c8] sm:$0xff]
    %v2822 = vld [vmem:[#allocation7 + $0x12d0] sm:$0xff]
    %v2823 = vld [vmem:[#allocation7 + $0x12d8] sm:$0xff]
    %v2824 = vld [vmem:[#allocation7 + $0x12e0] sm:$0xff]
    %v2825 = vld [vmem:[#allocation7 + $0x12e8] sm:$0xff]
    %v2826 = vld [vmem:[#allocation7 + $0x12f0] sm:$0xff]
    %v2827 = vld [vmem:[#allocation7 + $0x12f8] sm:$0xff]
    %v2828 = vld [vmem:[#allocation7 + $0x1300] sm:$0xff]
    %v2829 = vld [vmem:[#allocation7 + $0x1308] sm:$0xff]
    %v2830 = vld [vmem:[#allocation7 + $0x1310] sm:$0xff]
    %v2831 = vld [vmem:[#allocation7 + $0x1318] sm:$0xff]
    %v2832 = vld [vmem:[#allocation7 + $0x1320] sm:$0xff]
    %v2833 = vld [vmem:[#allocation7 + $0x1328] sm:$0xff]
    %v2834 = vld [vmem:[#allocation7 + $0x1330] sm:$0xff]
    %v2835 = vld [vmem:[#allocation7 + $0x1338] sm:$0xff]
    %v2836 = vld [vmem:[#allocation7 + $0x1340] sm:$0xff]
    %v2837 = vld [vmem:[#allocation7 + $0x1348] sm:$0xff]
    %v2838 = vld [vmem:[#allocation7 + $0x1350] sm:$0xff]
    %v2839 = vld [vmem:[#allocation7 + $0x1358] sm:$0xff]
    %v2840 = vld [vmem:[#allocation7 + $0x1360] sm:$0xff]
    %v2841 = vld [vmem:[#allocation7 + $0x1368] sm:$0xff]
    %v2842 = vld [vmem:[#allocation7 + $0x1370] sm:$0xff]
    %v2843 = vld [vmem:[#allocation7 + $0x1378] sm:$0xff]
    %v2844 = vld [vmem:[#allocation7 + $0x1380] sm:$0xff]
    %v2845 = vld [vmem:[#allocation7 + $0x1388] sm:$0xff]
    %v2846 = vld [vmem:[#allocation7 + $0x1390] sm:$0xff]
    %v2847 = vld [vmem:[#allocation7 + $0x1398] sm:$0xff]
    %v2848 = vld [vmem:[#allocation7 + $0x13a0] sm:$0xff]
    %v2849 = vld [vmem:[#allocation7 + $0x13a8] sm:$0xff]
    %v2850 = vld [vmem:[#allocation7 + $0x13b0] sm:$0xff]
    %v2851 = vld [vmem:[#allocation7 + $0x13b8] sm:$0xff]
    %v2852 = vld [vmem:[#allocation7 + $0x13c0] sm:$0xff]
    %v2853 = vld [vmem:[#allocation7 + $0x13c8] sm:$0xff]
    %v2854 = vld [vmem:[#allocation7 + $0x13d0] sm:$0xff]
    %v2855 = vld [vmem:[#allocation7 + $0x13d8] sm:$0xff]
    %v2856 = vld [vmem:[#allocation7 + $0x13e0] sm:$0xff]
    %v2857 = vld [vmem:[#allocation7 + $0x13e8] sm:$0xff]
    %v2858 = vld [vmem:[#allocation7 + $0x13f0] sm:$0xff]
    %v2859 = vld [vmem:[#allocation7 + $0x13f8] sm:$0xff]
    %v2860 = vld [vmem:[#allocation7 + $0x1400] sm:$0xff]
    %v2861 = vld [vmem:[#allocation7 + $0x1408] sm:$0xff]
    %v2862 = vld [vmem:[#allocation7 + $0x1410] sm:$0xff]
    %v2863 = vld [vmem:[#allocation7 + $0x1418] sm:$0xff]
    %v2864 = vld [vmem:[#allocation7 + $0x1420] sm:$0xff]
    %v2865 = vld [vmem:[#allocation7 + $0x1428] sm:$0xff]
    %v2866 = vld [vmem:[#allocation7 + $0x1430] sm:$0xff]
    %v2867 = vld [vmem:[#allocation7 + $0x1438] sm:$0xff]
    %v2868 = vld [vmem:[#allocation7 + $0x1440] sm:$0xff]
    %v2869 = vld [vmem:[#allocation7 + $0x1448] sm:$0xff]
    %v2870 = vld [vmem:[#allocation7 + $0x1450] sm:$0xff]
    %v2871 = vld [vmem:[#allocation7 + $0x1458] sm:$0xff]
    %v2872 = vld [vmem:[#allocation7 + $0x1460] sm:$0xff]
    %v2873 = vld [vmem:[#allocation7 + $0x1468] sm:$0xff]
    %v2874 = vld [vmem:[#allocation7 + $0x1470] sm:$0xff]
    %v2875 = vld [vmem:[#allocation7 + $0x1478] sm:$0xff]
    %v2876 = vld [vmem:[#allocation7 + $0x1480] sm:$0xff]
    %v2877 = vld [vmem:[#allocation7 + $0x1488] sm:$0xff]
    %v2878 = vld [vmem:[#allocation7 + $0x1490] sm:$0xff]
    %v2879 = vld [vmem:[#allocation7 + $0x1498] sm:$0xff]
    %v2880 = vld [vmem:[#allocation7 + $0x14a0] sm:$0xff]
    %v2881 = vld [vmem:[#allocation7 + $0x14a8] sm:$0xff]
    %v2882 = vld [vmem:[#allocation7 + $0x14b0] sm:$0xff]
    %v2883 = vld [vmem:[#allocation7 + $0x14b8] sm:$0xff]
    %v2884 = vld [vmem:[#allocation7 + $0x14c0] sm:$0xff]
    %v2885 = vld [vmem:[#allocation7 + $0x14c8] sm:$0xff]
    %v2886 = vld [vmem:[#allocation7 + $0x14d0] sm:$0xff]
    %v2887 = vld [vmem:[#allocation7 + $0x14d8] sm:$0xff]
    %v2888 = vld [vmem:[#allocation7 + $0x14e0] sm:$0xff]
    %v2889 = vld [vmem:[#allocation7 + $0x14e8] sm:$0xff]
    %v2890 = vld [vmem:[#allocation7 + $0x14f0] sm:$0xff]
    %v2891 = vld [vmem:[#allocation7 + $0x14f8] sm:$0xff]
    %v2892 = vld [vmem:[#allocation7 + $0x1500] sm:$0xff]
    %v2893 = vld [vmem:[#allocation7 + $0x1508] sm:$0xff]
    %v2894 = vld [vmem:[#allocation7 + $0x1510] sm:$0xff]
    %v2895 = vld [vmem:[#allocation7 + $0x1518] sm:$0xff]
    %v2896 = vld [vmem:[#allocation7 + $0x1520] sm:$0xff]
    %v2897 = vld [vmem:[#allocation7 + $0x1528] sm:$0xff]
    %v2898 = vld [vmem:[#allocation7 + $0x1530] sm:$0xff]
    %v2899 = vld [vmem:[#allocation7 + $0x1538] sm:$0xff]
    %v2900 = vld [vmem:[#allocation7 + $0x1540] sm:$0xff]
    %v2901 = vld [vmem:[#allocation7 + $0x1548] sm:$0xff]
    %v2902 = vld [vmem:[#allocation7 + $0x1550] sm:$0xff]
    %v2903 = vld [vmem:[#allocation7 + $0x1558] sm:$0xff]
    %v2904 = vld [vmem:[#allocation7 + $0x1560] sm:$0xff]
    %v2905 = vld [vmem:[#allocation7 + $0x1568] sm:$0xff]
    %v2906 = vld [vmem:[#allocation7 + $0x1570] sm:$0xff]
    %v2907 = vld [vmem:[#allocation7 + $0x1578] sm:$0xff]
    %v2908 = vld [vmem:[#allocation7 + $0x1580] sm:$0xff]
    %v2909 = vld [vmem:[#allocation7 + $0x1588] sm:$0xff]
    %v2910 = vld [vmem:[#allocation7 + $0x1590] sm:$0xff]
    %v2911 = vld [vmem:[#allocation7 + $0x1598] sm:$0xff]
    %v2912 = vld [vmem:[#allocation7 + $0x15a0] sm:$0xff]
    %v2913 = vld [vmem:[#allocation7 + $0x15a8] sm:$0xff]
    %v2914 = vld [vmem:[#allocation7 + $0x15b0] sm:$0xff]
    %v2915 = vld [vmem:[#allocation7 + $0x15b8] sm:$0xff]
    %v2916 = vld [vmem:[#allocation7 + $0x15c0] sm:$0xff]
    %v2917 = vld [vmem:[#allocation7 + $0x15c8] sm:$0xff]
    %v2918 = vld [vmem:[#allocation7 + $0x15d0] sm:$0xff]
    %v2919 = vld [vmem:[#allocation7 + $0x15d8] sm:$0xff]
    %v2920 = vld [vmem:[#allocation7 + $0x15e0] sm:$0xff]
    %v2921 = vld [vmem:[#allocation7 + $0x15e8] sm:$0xff]
    %v2922 = vld [vmem:[#allocation7 + $0x15f0] sm:$0xff]
    %v2923 = vld [vmem:[#allocation7 + $0x15f8] sm:$0xff]
    %v2924 = vld [vmem:[#allocation7 + $0x1600] sm:$0xff]
    %v2925 = vld [vmem:[#allocation7 + $0x1608] sm:$0xff]
    %v2926 = vld [vmem:[#allocation7 + $0x1610] sm:$0xff]
    %v2927 = vld [vmem:[#allocation7 + $0x1618] sm:$0xff]
    %v2928 = vld [vmem:[#allocation7 + $0x1620] sm:$0xff]
    %v2929 = vld [vmem:[#allocation7 + $0x1628] sm:$0xff]
    %v2930 = vld [vmem:[#allocation7 + $0x1630] sm:$0xff]
    %v2931 = vld [vmem:[#allocation7 + $0x1638] sm:$0xff]
    %v2932 = vld [vmem:[#allocation7 + $0x1640] sm:$0xff]
    %v2933 = vld [vmem:[#allocation7 + $0x1648] sm:$0xff]
    %v2934 = vld [vmem:[#allocation7 + $0x1650] sm:$0xff]
    %v2935 = vld [vmem:[#allocation7 + $0x1658] sm:$0xff]
    %v2936 = vld [vmem:[#allocation7 + $0x1660] sm:$0xff]
    %v2937 = vld [vmem:[#allocation7 + $0x1668] sm:$0xff]
    %v2938 = vld [vmem:[#allocation7 + $0x1670] sm:$0xff]
    %v2939 = vld [vmem:[#allocation7 + $0x1678] sm:$0xff]
    %v2940 = vld [vmem:[#allocation7 + $0x1680] sm:$0xff]
    %v2941 = vld [vmem:[#allocation7 + $0x1688] sm:$0xff]
    %v2942 = vld [vmem:[#allocation7 + $0x1690] sm:$0xff]
    %v2943 = vld [vmem:[#allocation7 + $0x1698] sm:$0xff]
    %v2944 = vld [vmem:[#allocation7 + $0x16a0] sm:$0xff]
    %v2945 = vld [vmem:[#allocation7 + $0x16a8] sm:$0xff]
    %v2946 = vld [vmem:[#allocation7 + $0x16b0] sm:$0xff]
    %v2947 = vld [vmem:[#allocation7 + $0x16b8] sm:$0xff]
    %v2948 = vld [vmem:[#allocation7 + $0x16c0] sm:$0xff]
    %v2949 = vld [vmem:[#allocation7 + $0x16c8] sm:$0xff]
    %v2950 = vld [vmem:[#allocation7 + $0x16d0] sm:$0xff]
    %v2951 = vld [vmem:[#allocation7 + $0x16d8] sm:$0xff]
    %v2952 = vld [vmem:[#allocation7 + $0x16e0] sm:$0xff]
    %v2953 = vld [vmem:[#allocation7 + $0x16e8] sm:$0xff]
    %v2954 = vld [vmem:[#allocation7 + $0x16f0] sm:$0xff]
    %v2955 = vld [vmem:[#allocation7 + $0x16f8] sm:$0xff]
    %v2956 = vld [vmem:[#allocation7 + $0x1700] sm:$0xff]
    %v2957 = vld [vmem:[#allocation7 + $0x1708] sm:$0xff]
    %v2958 = vld [vmem:[#allocation7 + $0x1710] sm:$0xff]
    %v2959 = vld [vmem:[#allocation7 + $0x1718] sm:$0xff]
    %v2960 = vld [vmem:[#allocation7 + $0x1720] sm:$0xff]
    %v2961 = vld [vmem:[#allocation7 + $0x1728] sm:$0xff]
    %v2962 = vld [vmem:[#allocation7 + $0x1730] sm:$0xff]
    %v2963 = vld [vmem:[#allocation7 + $0x1738] sm:$0xff]
    %v2964 = vld [vmem:[#allocation7 + $0x1740] sm:$0xff]
    %v2965 = vld [vmem:[#allocation7 + $0x1748] sm:$0xff]
    %v2966 = vld [vmem:[#allocation7 + $0x1750] sm:$0xff]
    %v2967 = vld [vmem:[#allocation7 + $0x1758] sm:$0xff]
    %v2968 = vld [vmem:[#allocation7 + $0x1760] sm:$0xff]
    %v2969 = vld [vmem:[#allocation7 + $0x1768] sm:$0xff]
    %v2970 = vld [vmem:[#allocation7 + $0x1770] sm:$0xff]
    %v2971 = vld [vmem:[#allocation7 + $0x1778] sm:$0xff]
    %v2972 = vld [vmem:[#allocation7 + $0x1780] sm:$0xff]
    %v2973 = vld [vmem:[#allocation7 + $0x1788] sm:$0xff]
    %v2974 = vld [vmem:[#allocation7 + $0x1790] sm:$0xff]
    %v2975 = vld [vmem:[#allocation7 + $0x1798] sm:$0xff]
    %v2976 = vld [vmem:[#allocation7 + $0x17a0] sm:$0xff]
    %v2977 = vld [vmem:[#allocation7 + $0x17a8] sm:$0xff]
    %v2978 = vld [vmem:[#allocation7 + $0x17b0] sm:$0xff]
    %v2979 = vld [vmem:[#allocation7 + $0x17b8] sm:$0xff]
    %v2980 = vld [vmem:[#allocation7 + $0x17c0] sm:$0xff]
    %v2981 = vld [vmem:[#allocation7 + $0x17c8] sm:$0xff]
    %v2982 = vld [vmem:[#allocation7 + $0x17d0] sm:$0xff]
    %v2983 = vld [vmem:[#allocation7 + $0x17d8] sm:$0xff]
    %v2984 = vld [vmem:[#allocation7 + $0x17e0] sm:$0xff]
    %v2985 = vld [vmem:[#allocation7 + $0x17e8] sm:$0xff]
    %v2986 = vld [vmem:[#allocation7 + $0x17f0] sm:$0xff]
    %v2987 = vld [vmem:[#allocation7 + $0x17f8] sm:$0xff]
    %v2988 = vld [vmem:[#allocation7 + $0x1800] sm:$0xff]
    %v2989 = vld [vmem:[#allocation7 + $0x1808] sm:$0xff]
    %v2990 = vld [vmem:[#allocation7 + $0x1810] sm:$0xff]
    %v2991 = vld [vmem:[#allocation7 + $0x1818] sm:$0xff]
    %v2992 = vld [vmem:[#allocation7 + $0x1820] sm:$0xff]
    %v2993 = vld [vmem:[#allocation7 + $0x1828] sm:$0xff]
    %v2994 = vld [vmem:[#allocation7 + $0x1830] sm:$0xff]
    %v2995 = vld [vmem:[#allocation7 + $0x1838] sm:$0xff]
    %v2996 = vld [vmem:[#allocation7 + $0x1840] sm:$0xff]
    %v2997 = vld [vmem:[#allocation7 + $0x1848] sm:$0xff]
    %v2998 = vld [vmem:[#allocation7 + $0x1850] sm:$0xff]
    %v2999 = vld [vmem:[#allocation7 + $0x1858] sm:$0xff]
    %v3000 = vld [vmem:[#allocation7 + $0x1860] sm:$0xff]
    %v3001 = vld [vmem:[#allocation7 + $0x1868] sm:$0xff]
    %v3002 = vld [vmem:[#allocation7 + $0x1870] sm:$0xff]
    %v3003 = vld [vmem:[#allocation7 + $0x1878] sm:$0xff]
    %v3004 = vld [vmem:[#allocation7 + $0x1880] sm:$0xff]
    %v3005 = vld [vmem:[#allocation7 + $0x1888] sm:$0xff]
    %v3006 = vld [vmem:[#allocation7 + $0x1890] sm:$0xff]
    %v3007 = vld [vmem:[#allocation7 + $0x1898] sm:$0xff]
    %v3008 = vld [vmem:[#allocation7 + $0x18a0] sm:$0xff]
    %v3009 = vld [vmem:[#allocation7 + $0x18a8] sm:$0xff]
    %v3010 = vld [vmem:[#allocation7 + $0x18b0] sm:$0xff]
    %v3011 = vld [vmem:[#allocation7 + $0x18b8] sm:$0xff]
    %v3012 = vld [vmem:[#allocation7 + $0x18c0] sm:$0xff]
    %v3013 = vld [vmem:[#allocation7 + $0x18c8] sm:$0xff]
    %v3014 = vld [vmem:[#allocation7 + $0x18d0] sm:$0xff]
    %v3015 = vld [vmem:[#allocation7 + $0x18d8] sm:$0xff]
    %v3016 = vld [vmem:[#allocation7 + $0x18e0] sm:$0xff]
    %v3017 = vld [vmem:[#allocation7 + $0x18e8] sm:$0xff]
    %v3018 = vld [vmem:[#allocation7 + $0x18f0] sm:$0xff]
    %v3019 = vld [vmem:[#allocation7 + $0x18f8] sm:$0xff]
    %v3020 = vld [vmem:[#allocation7 + $0x1900] sm:$0xff]
    %v3021 = vld [vmem:[#allocation7 + $0x1908] sm:$0xff]
    %v3022 = vld [vmem:[#allocation7 + $0x1910] sm:$0xff]
    %v3023 = vld [vmem:[#allocation7 + $0x1918] sm:$0xff]
    %v3024 = vld [vmem:[#allocation7 + $0x1920] sm:$0xff]
    %v3025 = vld [vmem:[#allocation7 + $0x1928] sm:$0xff]
    %v3026 = vld [vmem:[#allocation7 + $0x1930] sm:$0xff]
    %v3027 = vld [vmem:[#allocation7 + $0x1938] sm:$0xff]
    %v3028 = vld [vmem:[#allocation7 + $0x1940] sm:$0xff]
    %v3029 = vld [vmem:[#allocation7 + $0x1948] sm:$0xff]
    %v3030 = vld [vmem:[#allocation7 + $0x1950] sm:$0xff]
    %v3031 = vld [vmem:[#allocation7 + $0x1958] sm:$0xff]
    %v3032 = vld [vmem:[#allocation7 + $0x1960] sm:$0xff]
    %v3033 = vld [vmem:[#allocation7 + $0x1968] sm:$0xff]
    %v3034 = vld [vmem:[#allocation7 + $0x1970] sm:$0xff]
    %v3035 = vld [vmem:[#allocation7 + $0x1978] sm:$0xff]
    %v3036 = vld [vmem:[#allocation7 + $0x1980] sm:$0xff]
    %v3037 = vld [vmem:[#allocation7 + $0x1988] sm:$0xff]
    %v3038 = vld [vmem:[#allocation7 + $0x1990] sm:$0xff]
    %v3039 = vld [vmem:[#allocation7 + $0x1998] sm:$0xff]
    %v3040 = vld [vmem:[#allocation7 + $0x19a0] sm:$0xff]
    %v3041 = vld [vmem:[#allocation7 + $0x19a8] sm:$0xff]
    %v3042 = vld [vmem:[#allocation7 + $0x19b0] sm:$0xff]
    %v3043 = vld [vmem:[#allocation7 + $0x19b8] sm:$0xff]
    %v3044 = vld [vmem:[#allocation7 + $0x19c0] sm:$0xff]
    %v3045 = vld [vmem:[#allocation7 + $0x19c8] sm:$0xff]
    %v3046 = vld [vmem:[#allocation7 + $0x19d0] sm:$0xff]
    %v3047 = vld [vmem:[#allocation7 + $0x19d8] sm:$0xff]
    %v3048 = vld [vmem:[#allocation7 + $0x19e0] sm:$0xff]
    %v3049 = vld [vmem:[#allocation7 + $0x19e8] sm:$0xff]
    %v3050 = vld [vmem:[#allocation7 + $0x19f0] sm:$0xff]
    %v3051 = vld [vmem:[#allocation7 + $0x19f8] sm:$0xff]
    %v3052 = vld [vmem:[#allocation7 + $0x1a00] sm:$0xff]
    %v3053 = vld [vmem:[#allocation7 + $0x1a08] sm:$0xff]
    %v3054 = vld [vmem:[#allocation7 + $0x1a10] sm:$0xff]
    %v3055 = vld [vmem:[#allocation7 + $0x1a18] sm:$0xff]
    %v3056 = vld [vmem:[#allocation7 + $0x1a20] sm:$0xff]
    %v3057 = vld [vmem:[#allocation7 + $0x1a28] sm:$0xff]
    %v3058 = vld [vmem:[#allocation7 + $0x1a30] sm:$0xff]
    %v3059 = vld [vmem:[#allocation7 + $0x1a38] sm:$0xff]
    %v3060 = vld [vmem:[#allocation7 + $0x1a40] sm:$0xff]
    %v3061 = vld [vmem:[#allocation7 + $0x1a48] sm:$0xff]
    %v3062 = vld [vmem:[#allocation7 + $0x1a50] sm:$0xff]
    %v3063 = vld [vmem:[#allocation7 + $0x1a58] sm:$0xff]
    %v3064 = vld [vmem:[#allocation7 + $0x1a60] sm:$0xff]
    %v3065 = vld [vmem:[#allocation7 + $0x1a68] sm:$0xff]
    %v3066 = vld [vmem:[#allocation7 + $0x1a70] sm:$0xff]
    %v3067 = vld [vmem:[#allocation7 + $0x1a78] sm:$0xff]
    %v3068 = vld [vmem:[#allocation7 + $0x1a80] sm:$0xff]
    %v3069 = vld [vmem:[#allocation7 + $0x1a88] sm:$0xff]
    %v3070 = vld [vmem:[#allocation7 + $0x1a90] sm:$0xff]
    %v3071 = vld [vmem:[#allocation7 + $0x1a98] sm:$0xff]
    %v3072 = vld [vmem:[#allocation7 + $0x1aa0] sm:$0xff]
    %v3073 = vld [vmem:[#allocation7 + $0x1aa8] sm:$0xff]
    %v3074 = vld [vmem:[#allocation7 + $0x1ab0] sm:$0xff]
    %v3075 = vld [vmem:[#allocation7 + $0x1ab8] sm:$0xff]
    %v3076 = vld [vmem:[#allocation7 + $0x1ac0] sm:$0xff]
    %v3077 = vld [vmem:[#allocation7 + $0x1ac8] sm:$0xff]
    %v3078 = vld [vmem:[#allocation7 + $0x1ad0] sm:$0xff]
    %v3079 = vld [vmem:[#allocation7 + $0x1ad8] sm:$0xff]
    %v3080 = vld [vmem:[#allocation7 + $0x1ae0] sm:$0xff]
    %v3081 = vld [vmem:[#allocation7 + $0x1ae8] sm:$0xff]
    %v3082 = vld [vmem:[#allocation7 + $0x1af0] sm:$0xff]
    %v3083 = vld [vmem:[#allocation7 + $0x1af8] sm:$0xff]
    %v3084 = vld [vmem:[#allocation7 + $0x1b00] sm:$0xff]
    %v3085 = vld [vmem:[#allocation7 + $0x1b08] sm:$0xff]
    %v3086 = vld [vmem:[#allocation7 + $0x1b10] sm:$0xff]
    %v3087 = vld [vmem:[#allocation7 + $0x1b18] sm:$0xff]
    %v3088 = vld [vmem:[#allocation7 + $0x1b20] sm:$0xff]
    %v3089 = vld [vmem:[#allocation7 + $0x1b28] sm:$0xff]
    %v3090 = vld [vmem:[#allocation7 + $0x1b30] sm:$0xff]
    %v3091 = vld [vmem:[#allocation7 + $0x1b38] sm:$0xff]
    %v3092 = vld [vmem:[#allocation7 + $0x1b40] sm:$0xff]
    %v3093 = vld [vmem:[#allocation7 + $0x1b48] sm:$0xff]
    %v3094 = vld [vmem:[#allocation7 + $0x1b50] sm:$0xff]
    %v3095 = vld [vmem:[#allocation7 + $0x1b58] sm:$0xff]
    %v3096 = vld [vmem:[#allocation7 + $0x1b60] sm:$0xff]
    %v3097 = vld [vmem:[#allocation7 + $0x1b68] sm:$0xff]
    %v3098 = vld [vmem:[#allocation7 + $0x1b70] sm:$0xff]
    %v3099 = vld [vmem:[#allocation7 + $0x1b78] sm:$0xff]
    %v3100 = vld [vmem:[#allocation7 + $0x1b80] sm:$0xff]
    %v3101 = vld [vmem:[#allocation7 + $0x1b88] sm:$0xff]
    %v3102 = vld [vmem:[#allocation7 + $0x1b90] sm:$0xff]
    %v3103 = vld [vmem:[#allocation7 + $0x1b98] sm:$0xff]
    %v3104 = vld [vmem:[#allocation7 + $0x1ba0] sm:$0xff]
    %v3105 = vld [vmem:[#allocation7 + $0x1ba8] sm:$0xff]
    %v3106 = vld [vmem:[#allocation7 + $0x1bb0] sm:$0xff]
    %v3107 = vld [vmem:[#allocation7 + $0x1bb8] sm:$0xff]
    %v3108 = vld [vmem:[#allocation7 + $0x1bc0] sm:$0xff]
    %v3109 = vld [vmem:[#allocation7 + $0x1bc8] sm:$0xff]
    %v3110 = vld [vmem:[#allocation7 + $0x1bd0] sm:$0xff]
    %v3111 = vld [vmem:[#allocation7 + $0x1bd8] sm:$0xff]
    %v3112 = vld [vmem:[#allocation7 + $0x1be0] sm:$0xff]
    %v3113 = vld [vmem:[#allocation7 + $0x1be8] sm:$0xff]
    %v3114 = vld [vmem:[#allocation7 + $0x1bf0] sm:$0xff]
    %v3115 = vld [vmem:[#allocation7 + $0x1bf8] sm:$0xff]
    %v3116 = vld [vmem:[#allocation7 + $0x1c00] sm:$0xff]
    %v3117 = vld [vmem:[#allocation7 + $0x1c08] sm:$0xff]
    %v3118 = vld [vmem:[#allocation7 + $0x1c10] sm:$0xff]
    %v3119 = vld [vmem:[#allocation7 + $0x1c18] sm:$0xff]
    %v3120 = vld [vmem:[#allocation7 + $0x1c20] sm:$0xff]
    %v3121 = vld [vmem:[#allocation7 + $0x1c28] sm:$0xff]
    %v3122 = vld [vmem:[#allocation7 + $0x1c30] sm:$0xff]
    %v3123 = vld [vmem:[#allocation7 + $0x1c38] sm:$0xff]
    %v3124 = vld [vmem:[#allocation7 + $0x1c40] sm:$0xff]
    %v3125 = vld [vmem:[#allocation7 + $0x1c48] sm:$0xff]
    %v3126 = vld [vmem:[#allocation7 + $0x1c50] sm:$0xff]
    %v3127 = vld [vmem:[#allocation7 + $0x1c58] sm:$0xff]
    %v3128 = vld [vmem:[#allocation7 + $0x1c60] sm:$0xff]
    %v3129 = vld [vmem:[#allocation7 + $0x1c68] sm:$0xff]
    %v3130 = vld [vmem:[#allocation7 + $0x1c70] sm:$0xff]
    %v3131 = vld [vmem:[#allocation7 + $0x1c78] sm:$0xff]
    %v3132 = vld [vmem:[#allocation7 + $0x1c80] sm:$0xff]
    %v3133 = vld [vmem:[#allocation7 + $0x1c88] sm:$0xff]
    %v3134 = vld [vmem:[#allocation7 + $0x1c90] sm:$0xff]
    %v3135 = vld [vmem:[#allocation7 + $0x1c98] sm:$0xff]
    %v3136 = vld [vmem:[#allocation7 + $0x1ca0] sm:$0xff]
    %v3137 = vld [vmem:[#allocation7 + $0x1ca8] sm:$0xff]
    %v3138 = vld [vmem:[#allocation7 + $0x1cb0] sm:$0xff]
    %v3139 = vld [vmem:[#allocation7 + $0x1cb8] sm:$0xff]
    %v3140 = vld [vmem:[#allocation7 + $0x1cc0] sm:$0xff]
    %v3141 = vld [vmem:[#allocation7 + $0x1cc8] sm:$0xff]
    %v3142 = vld [vmem:[#allocation7 + $0x1cd0] sm:$0xff]
    %v3143 = vld [vmem:[#allocation7 + $0x1cd8] sm:$0xff]
    %v3144 = vld [vmem:[#allocation7 + $0x1ce0] sm:$0xff]
    %v3145 = vld [vmem:[#allocation7 + $0x1ce8] sm:$0xff]
    %v3146 = vld [vmem:[#allocation7 + $0x1cf0] sm:$0xff]
    %v3147 = vld [vmem:[#allocation7 + $0x1cf8] sm:$0xff]
    %v3148 = vld [vmem:[#allocation7 + $0x1d00] sm:$0xff]
    %v3149 = vld [vmem:[#allocation7 + $0x1d08] sm:$0xff]
    %v3150 = vld [vmem:[#allocation7 + $0x1d10] sm:$0xff]
    %v3151 = vld [vmem:[#allocation7 + $0x1d18] sm:$0xff]
    %v3152 = vld [vmem:[#allocation7 + $0x1d20] sm:$0xff]
    %v3153 = vld [vmem:[#allocation7 + $0x1d28] sm:$0xff]
    %v3154 = vld [vmem:[#allocation7 + $0x1d30] sm:$0xff]
    %v3155 = vld [vmem:[#allocation7 + $0x1d38] sm:$0xff]
    %v3156 = vld [vmem:[#allocation7 + $0x1d40] sm:$0xff]
    %v3157 = vld [vmem:[#allocation7 + $0x1d48] sm:$0xff]
    %v3158 = vld [vmem:[#allocation7 + $0x1d50] sm:$0xff]
    %v3159 = vld [vmem:[#allocation7 + $0x1d58] sm:$0xff]
    %v3160 = vld [vmem:[#allocation7 + $0x1d60] sm:$0xff]
    %v3161 = vld [vmem:[#allocation7 + $0x1d68] sm:$0xff]
    %v3162 = vld [vmem:[#allocation7 + $0x1d70] sm:$0xff]
    %v3163 = vld [vmem:[#allocation7 + $0x1d78] sm:$0xff]
    %v3164 = vld [vmem:[#allocation7 + $0x1d80] sm:$0xff]
    %v3165 = vld [vmem:[#allocation7 + $0x1d88] sm:$0xff]
    %v3166 = vld [vmem:[#allocation7 + $0x1d90] sm:$0xff]
    %v3167 = vld [vmem:[#allocation7 + $0x1d98] sm:$0xff]
    %v3168 = vld [vmem:[#allocation7 + $0x1da0] sm:$0xff]
    %v3169 = vld [vmem:[#allocation7 + $0x1da8] sm:$0xff]
    %v3170 = vld [vmem:[#allocation7 + $0x1db0] sm:$0xff]
    %v3171 = vld [vmem:[#allocation7 + $0x1db8] sm:$0xff]
    %v3172 = vld [vmem:[#allocation7 + $0x1dc0] sm:$0xff]
    %v3173 = vld [vmem:[#allocation7 + $0x1dc8] sm:$0xff]
    %v3174 = vld [vmem:[#allocation7 + $0x1dd0] sm:$0xff]
    %v3175 = vld [vmem:[#allocation7 + $0x1dd8] sm:$0xff]
    %v3176 = vld [vmem:[#allocation7 + $0x1de0] sm:$0xff]
    %v3177 = vld [vmem:[#allocation7 + $0x1de8] sm:$0xff]
    %v3178 = vld [vmem:[#allocation7 + $0x1df0] sm:$0xff]
    %v3179 = vld [vmem:[#allocation7 + $0x1df8] sm:$0xff]
    %v3180 = vld [vmem:[#allocation7 + $0x1e00] sm:$0xff]
    %v3181 = vld [vmem:[#allocation7 + $0x1e08] sm:$0xff]
    %v3182 = vld [vmem:[#allocation7 + $0x1e10] sm:$0xff]
    %v3183 = vld [vmem:[#allocation7 + $0x1e18] sm:$0xff]
    %v3184 = vld [vmem:[#allocation7 + $0x1e20] sm:$0xff]
    %v3185 = vld [vmem:[#allocation7 + $0x1e28] sm:$0xff]
    %v3186 = vld [vmem:[#allocation7 + $0x1e30] sm:$0xff]
    %v3187 = vld [vmem:[#allocation7 + $0x1e38] sm:$0xff]
    %v3188 = vld [vmem:[#allocation7 + $0x1e40] sm:$0xff]
    %v3189 = vld [vmem:[#allocation7 + $0x1e48] sm:$0xff]
    %v3190 = vld [vmem:[#allocation7 + $0x1e50] sm:$0xff]
    %v3191 = vld [vmem:[#allocation7 + $0x1e58] sm:$0xff]
    %v3192 = vld [vmem:[#allocation7 + $0x1e60] sm:$0xff]
    %v3193 = vld [vmem:[#allocation7 + $0x1e68] sm:$0xff]
    %v3194 = vld [vmem:[#allocation7 + $0x1e70] sm:$0xff]
    %v3195 = vld [vmem:[#allocation7 + $0x1e78] sm:$0xff]
    %v3196 = vld [vmem:[#allocation7 + $0x1e80] sm:$0xff]
    %v3197 = vld [vmem:[#allocation7 + $0x1e88] sm:$0xff]
    %v3198 = vld [vmem:[#allocation7 + $0x1e90] sm:$0xff]
    %v3199 = vld [vmem:[#allocation7 + $0x1e98] sm:$0xff]
    %v3200 = vld [vmem:[#allocation7 + $0x1ea0] sm:$0xff]
    %v3201 = vld [vmem:[#allocation7 + $0x1ea8] sm:$0xff]
    %v3202 = vld [vmem:[#allocation7 + $0x1eb0] sm:$0xff]
    %v3203 = vld [vmem:[#allocation7 + $0x1eb8] sm:$0xff]
    %v3204 = vld [vmem:[#allocation7 + $0x1ec0] sm:$0xff]
    %v3205 = vld [vmem:[#allocation7 + $0x1ec8] sm:$0xff]
    %v3206 = vld [vmem:[#allocation7 + $0x1ed0] sm:$0xff]
    %v3207 = vld [vmem:[#allocation7 + $0x1ed8] sm:$0xff]
    %v3208 = vld [vmem:[#allocation7 + $0x1ee0] sm:$0xff]
    %v3209 = vld [vmem:[#allocation7 + $0x1ee8] sm:$0xff]
    %v3210 = vld [vmem:[#allocation7 + $0x1ef0] sm:$0xff]
    %v3211 = vld [vmem:[#allocation7 + $0x1ef8] sm:$0xff]
    %v3212 = vld [vmem:[#allocation7 + $0x1f00] sm:$0xff]
    %v3213 = vld [vmem:[#allocation7 + $0x1f08] sm:$0xff]
    %v3214 = vld [vmem:[#allocation7 + $0x1f10] sm:$0xff]
    %v3215 = vld [vmem:[#allocation7 + $0x1f18] sm:$0xff]
    %v3216 = vld [vmem:[#allocation7 + $0x1f20] sm:$0xff]
    %v3217 = vld [vmem:[#allocation7 + $0x1f28] sm:$0xff]
    %v3218 = vld [vmem:[#allocation7 + $0x1f30] sm:$0xff]
    %v3219 = vld [vmem:[#allocation7 + $0x1f38] sm:$0xff]
    %v3220 = vld [vmem:[#allocation7 + $0x1f40] sm:$0xff]
    %v3221 = vld [vmem:[#allocation7 + $0x1f48] sm:$0xff]
    %v3222 = vld [vmem:[#allocation7 + $0x1f50] sm:$0xff]
    %v3223 = vld [vmem:[#allocation7 + $0x1f58] sm:$0xff]
    %v3224 = vld [vmem:[#allocation7 + $0x1f60] sm:$0xff]
    %v3225 = vld [vmem:[#allocation7 + $0x1f68] sm:$0xff]
    %v3226 = vld [vmem:[#allocation7 + $0x1f70] sm:$0xff]
    %v3227 = vld [vmem:[#allocation7 + $0x1f78] sm:$0xff]
    %v3228 = vld [vmem:[#allocation7 + $0x1f80] sm:$0xff]
    %v3229 = vld [vmem:[#allocation7 + $0x1f88] sm:$0xff]
    %v3230 = vld [vmem:[#allocation7 + $0x1f90] sm:$0xff]
    %v3231 = vld [vmem:[#allocation7 + $0x1f98] sm:$0xff]
    %v3232 = vld [vmem:[#allocation7 + $0x1fa0] sm:$0xff]
    %v3233 = vld [vmem:[#allocation7 + $0x1fa8] sm:$0xff]
    %v3234 = vld [vmem:[#allocation7 + $0x1fb0] sm:$0xff]
    %v3235 = vld [vmem:[#allocation7 + $0x1fb8] sm:$0xff]
    %v3236 = vld [vmem:[#allocation7 + $0x1fc0] sm:$0xff]
    %v3237 = vld [vmem:[#allocation7 + $0x1fc8] sm:$0xff]
    %v3238 = vld [vmem:[#allocation7 + $0x1fd0] sm:$0xff]
    %v3239 = vld [vmem:[#allocation7 + $0x1fd8] sm:$0xff]
    %v3240 = vld [vmem:[#allocation7 + $0x1fe0] sm:$0xff]
    %v3241 = vld [vmem:[#allocation7 + $0x1fe8] sm:$0xff]
    %v3242 = vld [vmem:[#allocation7 + $0x1ff0] sm:$0xff]
    %v3243 = vld [vmem:[#allocation7 + $0x1ff8] sm:$0xff]
    %v3244 = vld [vmem:[#allocation7 + $0x2000] sm:$0xff]
    %v3245 = vld [vmem:[#allocation7 + $0x2008] sm:$0xff]
    %v3246 = vld [vmem:[#allocation7 + $0x2010] sm:$0xff]
    %v3247 = vld [vmem:[#allocation7 + $0x2018] sm:$0xff]
    %v3248 = vld [vmem:[#allocation7 + $0x2020] sm:$0xff]
    %v3249 = vld [vmem:[#allocation7 + $0x2028] sm:$0xff]
    %v3250 = vld [vmem:[#allocation7 + $0x2030] sm:$0xff]
    %v3251 = vld [vmem:[#allocation7 + $0x2038] sm:$0xff]
    %v3252 = vld [vmem:[#allocation7 + $0x2040] sm:$0xff]
    %v3253 = vld [vmem:[#allocation7 + $0x2048] sm:$0xff]
    %v3254 = vld [vmem:[#allocation7 + $0x2050] sm:$0xff]
    %v3255 = vld [vmem:[#allocation7 + $0x2058] sm:$0xff]
    %v3256 = vld [vmem:[#allocation7 + $0x2060] sm:$0xff]
    %v3257 = vld [vmem:[#allocation7 + $0x2068] sm:$0xff]
    %v3258 = vld [vmem:[#allocation7 + $0x2070] sm:$0xff]
    %v3259 = vld [vmem:[#allocation7 + $0x2078] sm:$0xff]
    %v3260 = vld [vmem:[#allocation7 + $0x2080] sm:$0xff]
    %v3261 = vld [vmem:[#allocation7 + $0x2088] sm:$0xff]
    %v3262 = vld [vmem:[#allocation7 + $0x2090] sm:$0xff]
    %v3263 = vld [vmem:[#allocation7 + $0x2098] sm:$0xff]
    %v3264 = vld [vmem:[#allocation7 + $0x20a0] sm:$0xff]
    %v3265 = vld [vmem:[#allocation7 + $0x20a8] sm:$0xff]
    %v3266 = vld [vmem:[#allocation7 + $0x20b0] sm:$0xff]
    %v3267 = vld [vmem:[#allocation7 + $0x20b8] sm:$0xff]
    %v3268 = vld [vmem:[#allocation7 + $0x20c0] sm:$0xff]
    %v3269 = vld [vmem:[#allocation7 + $0x20c8] sm:$0xff]
    %v3270 = vld [vmem:[#allocation7 + $0x20d0] sm:$0xff]
    %v3271 = vld [vmem:[#allocation7 + $0x20d8] sm:$0xff]
    %v3272 = vld [vmem:[#allocation7 + $0x20e0] sm:$0xff]
    %v3273 = vld [vmem:[#allocation7 + $0x20e8] sm:$0xff]
    %v3274 = vld [vmem:[#allocation7 + $0x20f0] sm:$0xff]
    %v3275 = vld [vmem:[#allocation7 + $0x20f8] sm:$0xff]
    %v3276 = vld [vmem:[#allocation7 + $0x2100] sm:$0xff]
    %v3277 = vld [vmem:[#allocation7 + $0x2108] sm:$0xff]
    %v3278 = vld [vmem:[#allocation7 + $0x2110] sm:$0xff]
    %v3279 = vld [vmem:[#allocation7 + $0x2118] sm:$0xff]
    %v3280 = vld [vmem:[#allocation7 + $0x2120] sm:$0xff]
    %v3281 = vld [vmem:[#allocation7 + $0x2128] sm:$0xff]
    %v3282 = vld [vmem:[#allocation7 + $0x2130] sm:$0xff]
    %v3283 = vld [vmem:[#allocation7 + $0x2138] sm:$0xff]
    %v3284 = vld [vmem:[#allocation7 + $0x2140] sm:$0xff]
    %v3285 = vld [vmem:[#allocation7 + $0x2148] sm:$0xff]
    %v3286 = vld [vmem:[#allocation7 + $0x2150] sm:$0xff]
    %v3287 = vld [vmem:[#allocation7 + $0x2158] sm:$0xff]
    %v3288 = vld [vmem:[#allocation7 + $0x2160] sm:$0xff]
    %v3289 = vld [vmem:[#allocation7 + $0x2168] sm:$0xff]
    %v3290 = vld [vmem:[#allocation7 + $0x2170] sm:$0xff]
    %v3291 = vld [vmem:[#allocation7 + $0x2178] sm:$0xff]
    %v3292 = vld [vmem:[#allocation7 + $0x2180] sm:$0xff]
    %v3293 = vld [vmem:[#allocation7 + $0x2188] sm:$0xff]
    %v3294 = vld [vmem:[#allocation7 + $0x2190] sm:$0xff]
    %v3295 = vld [vmem:[#allocation7 + $0x2198] sm:$0xff]
    %v3296 = vld [vmem:[#allocation7 + $0x21a0] sm:$0xff]
    %v3297 = vld [vmem:[#allocation7 + $0x21a8] sm:$0xff]
    %v3298 = vld [vmem:[#allocation7 + $0x21b0] sm:$0xff]
    %v3299 = vld [vmem:[#allocation7 + $0x21b8] sm:$0xff]
    %v3300 = vld [vmem:[#allocation7 + $0x21c0] sm:$0xff]
    %v3301 = vld [vmem:[#allocation7 + $0x21c8] sm:$0xff]
    %v3302 = vld [vmem:[#allocation7 + $0x21d0] sm:$0xff]
    %v3303 = vld [vmem:[#allocation7 + $0x21d8] sm:$0xff]
    %v3304 = vld [vmem:[#allocation7 + $0x21e0] sm:$0xff]
    %v3305 = vld [vmem:[#allocation7 + $0x21e8] sm:$0xff]
    %v3306 = vld [vmem:[#allocation7 + $0x21f0] sm:$0xff]
    %v3307 = vld [vmem:[#allocation7 + $0x21f8] sm:$0xff]
    %v3308 = vld [vmem:[#allocation7 + $0x2200] sm:$0xff]
    %v3309 = vld [vmem:[#allocation7 + $0x2208] sm:$0xff]
    %v3310 = vld [vmem:[#allocation7 + $0x2210] sm:$0xff]
    %v3311 = vld [vmem:[#allocation7 + $0x2218] sm:$0xff]
    %v3312 = vld [vmem:[#allocation7 + $0x2220] sm:$0xff]
    %v3313 = vld [vmem:[#allocation7 + $0x2228] sm:$0xff]
    %v3314 = vld [vmem:[#allocation7 + $0x2230] sm:$0xff]
    %v3315 = vld [vmem:[#allocation7 + $0x2238] sm:$0xff]
    %v3316 = vld [vmem:[#allocation7 + $0x2240] sm:$0xff]
    %v3317 = vld [vmem:[#allocation7 + $0x2248] sm:$0xff]
    %v3318 = vld [vmem:[#allocation7 + $0x2250] sm:$0xff]
    %v3319 = vld [vmem:[#allocation7 + $0x2258] sm:$0xff]
    %v3320 = vld [vmem:[#allocation7 + $0x2260] sm:$0xff]
    %v3321 = vld [vmem:[#allocation7 + $0x2268] sm:$0xff]
    %v3322 = vld [vmem:[#allocation7 + $0x2270] sm:$0xff]
    %v3323 = vld [vmem:[#allocation7 + $0x2278] sm:$0xff]
    %v3324 = vld [vmem:[#allocation7 + $0x2280] sm:$0xff]
    %v3325 = vld [vmem:[#allocation7 + $0x2288] sm:$0xff]
    %v3326 = vld [vmem:[#allocation7 + $0x2290] sm:$0xff]
    %v3327 = vld [vmem:[#allocation7 + $0x2298] sm:$0xff]
    %v3328 = vld [vmem:[#allocation7 + $0x22a0] sm:$0xff]
    %v3329 = vld [vmem:[#allocation7 + $0x22a8] sm:$0xff]
    %v3330 = vld [vmem:[#allocation7 + $0x22b0] sm:$0xff]
    %v3331 = vld [vmem:[#allocation7 + $0x22b8] sm:$0xff]
    %v3332 = vld [vmem:[#allocation7 + $0x22c0] sm:$0xff]
    %v3333 = vld [vmem:[#allocation7 + $0x22c8] sm:$0xff]
    %v3334 = vld [vmem:[#allocation7 + $0x22d0] sm:$0xff]
    %v3335 = vld [vmem:[#allocation7 + $0x22d8] sm:$0xff]
    %v3336 = vld [vmem:[#allocation7 + $0x22e0] sm:$0xff]
    %v3337 = vld [vmem:[#allocation7 + $0x22e8] sm:$0xff]
    %v3338 = vld [vmem:[#allocation7 + $0x22f0] sm:$0xff]
    %v3339 = vld [vmem:[#allocation7 + $0x22f8] sm:$0xff]
    %v3340 = vld [vmem:[#allocation7 + $0x2300] sm:$0xff]
    %v3341 = vld [vmem:[#allocation7 + $0x2308] sm:$0xff]
    %v3342 = vld [vmem:[#allocation7 + $0x2310] sm:$0xff]
    %v3343 = vld [vmem:[#allocation7 + $0x2318] sm:$0xff]
    %v3344 = vld [vmem:[#allocation7 + $0x2320] sm:$0xff]
    %v3345 = vld [vmem:[#allocation7 + $0x2328] sm:$0xff]
    %v3346 = vld [vmem:[#allocation7 + $0x2330] sm:$0xff]
    %v3347 = vld [vmem:[#allocation7 + $0x2338] sm:$0xff]
    %v3348 = vld [vmem:[#allocation7 + $0x2340] sm:$0xff]
    %v3349 = vld [vmem:[#allocation7 + $0x2348] sm:$0xff]
    %v3350 = vld [vmem:[#allocation7 + $0x2350] sm:$0xff]
    %v3351 = vld [vmem:[#allocation7 + $0x2358] sm:$0xff]
    %v3352 = vld [vmem:[#allocation7 + $0x2360] sm:$0xff]
    %v3353 = vld [vmem:[#allocation7 + $0x2368] sm:$0xff]
    %v3354 = vld [vmem:[#allocation7 + $0x2370] sm:$0xff]
    %v3355 = vld [vmem:[#allocation7 + $0x2378] sm:$0xff]
    %v3356 = vld [vmem:[#allocation7 + $0x2380] sm:$0xff]
    %v3357 = vld [vmem:[#allocation7 + $0x2388] sm:$0xff]
    %v3358 = vld [vmem:[#allocation7 + $0x2390] sm:$0xff]
    %v3359 = vld [vmem:[#allocation7 + $0x2398] sm:$0xff]
    %v3360 = vld [vmem:[#allocation7 + $0x23a0] sm:$0xff]
    %v3361 = vld [vmem:[#allocation7 + $0x23a8] sm:$0xff]
    %v3362 = vld [vmem:[#allocation7 + $0x23b0] sm:$0xff]
    %v3363 = vld [vmem:[#allocation7 + $0x23b8] sm:$0xff]
    %v3364 = vld [vmem:[#allocation7 + $0x23c0] sm:$0xff]
    %v3365 = vld [vmem:[#allocation7 + $0x23c8] sm:$0xff]
    %v3366 = vld [vmem:[#allocation7 + $0x23d0] sm:$0xff]
    %v3367 = vld [vmem:[#allocation7 + $0x23d8] sm:$0xff]
    %v3368 = vld [vmem:[#allocation7 + $0x23e0] sm:$0xff]
    %v3369 = vld [vmem:[#allocation7 + $0x23e8] sm:$0xff]
    %v3370 = vld [vmem:[#allocation7 + $0x23f0] sm:$0xff]
    %v3371 = vld [vmem:[#allocation7 + $0x23f8] sm:$0xff]
    %v3372 = vld [vmem:[#allocation7 + $0x2400] sm:$0xff]
    %v3373 = vld [vmem:[#allocation7 + $0x2408] sm:$0xff]
    %v3374 = vld [vmem:[#allocation7 + $0x2410] sm:$0xff]
    %v3375 = vld [vmem:[#allocation7 + $0x2418] sm:$0xff]
    %v3376 = vld [vmem:[#allocation7 + $0x2420] sm:$0xff]
    %v3377 = vld [vmem:[#allocation7 + $0x2428] sm:$0xff]
    %v3378 = vld [vmem:[#allocation7 + $0x2430] sm:$0xff]
    %v3379 = vld [vmem:[#allocation7 + $0x2438] sm:$0xff]
    %v3380 = vld [vmem:[#allocation7 + $0x2440] sm:$0xff]
    %v3381 = vld [vmem:[#allocation7 + $0x2448] sm:$0xff]
    %v3382 = vld [vmem:[#allocation7 + $0x2450] sm:$0xff]
    %v3383 = vld [vmem:[#allocation7 + $0x2458] sm:$0xff]
    %v3384 = vld [vmem:[#allocation7 + $0x2460] sm:$0xff]
    %v3385 = vld [vmem:[#allocation7 + $0x2468] sm:$0xff]
    %v3386 = vld [vmem:[#allocation7 + $0x2470] sm:$0xff]
    %v3387 = vld [vmem:[#allocation7 + $0x2478] sm:$0xff]
    %v3388 = vld [vmem:[#allocation7 + $0x2480] sm:$0xff]
    %v3389 = vld [vmem:[#allocation7 + $0x2488] sm:$0xff]
    %v3390 = vld [vmem:[#allocation7 + $0x2490] sm:$0xff]
    %v3391 = vld [vmem:[#allocation7 + $0x2498] sm:$0xff]
    %v3392 = vld [vmem:[#allocation7 + $0x24a0] sm:$0xff]
    %v3393 = vld [vmem:[#allocation7 + $0x24a8] sm:$0xff]
    %v3394 = vld [vmem:[#allocation7 + $0x24b0] sm:$0xff]
    %v3395 = vld [vmem:[#allocation7 + $0x24b8] sm:$0xff]
    %v3396 = vld [vmem:[#allocation7 + $0x24c0] sm:$0xff]
    %v3397 = vld [vmem:[#allocation7 + $0x24c8] sm:$0xff]
    %v3398 = vld [vmem:[#allocation7 + $0x24d0] sm:$0xff]
    %v3399 = vld [vmem:[#allocation7 + $0x24d8] sm:$0xff]
    %v3400 = vld [vmem:[#allocation7 + $0x24e0] sm:$0xff]
    %v3401 = vld [vmem:[#allocation7 + $0x24e8] sm:$0xff]
    %v3402 = vld [vmem:[#allocation7 + $0x24f0] sm:$0xff]
    %v3403 = vld [vmem:[#allocation7 + $0x24f8] sm:$0xff]
    %v3404 = vld [vmem:[#allocation7 + $0x2500] sm:$0xff]
    %v3405 = vld [vmem:[#allocation7 + $0x2508] sm:$0xff]
    %v3406 = vld [vmem:[#allocation7 + $0x2510] sm:$0xff]
    %v3407 = vld [vmem:[#allocation7 + $0x2518] sm:$0xff]
    %v3408 = vld [vmem:[#allocation7 + $0x2520] sm:$0xff]
    %v3409 = vld [vmem:[#allocation7 + $0x2528] sm:$0xff]
    %v3410 = vld [vmem:[#allocation7 + $0x2530] sm:$0xff]
    %v3411 = vld [vmem:[#allocation7 + $0x2538] sm:$0xff]
    %v3412 = vld [vmem:[#allocation7 + $0x2540] sm:$0xff]
    %v3413 = vld [vmem:[#allocation7 + $0x2548] sm:$0xff]
    %v3414 = vld [vmem:[#allocation7 + $0x2550] sm:$0xff]
    %v3415 = vld [vmem:[#allocation7 + $0x2558] sm:$0xff]
    %v3416 = vld [vmem:[#allocation7 + $0x2560] sm:$0xff]
    %v3417 = vld [vmem:[#allocation7 + $0x2568] sm:$0xff]
    %v3418 = vld [vmem:[#allocation7 + $0x2570] sm:$0xff]
    %v3419 = vld [vmem:[#allocation7 + $0x2578] sm:$0xff]
    %v3420 = vld [vmem:[#allocation7 + $0x2580] sm:$0xff]
    %v3421 = vld [vmem:[#allocation7 + $0x2588] sm:$0xff]
    %v3422 = vld [vmem:[#allocation7 + $0x2590] sm:$0xff]
    %v3423 = vld [vmem:[#allocation7 + $0x2598] sm:$0xff]
    %v3424 = vld [vmem:[#allocation7 + $0x25a0] sm:$0xff]
    %v3425 = vld [vmem:[#allocation7 + $0x25a8] sm:$0xff]
    %v3426 = vld [vmem:[#allocation7 + $0x25b0] sm:$0xff]
    %v3427 = vld [vmem:[#allocation7 + $0x25b8] sm:$0xff]
    %v3428 = vld [vmem:[#allocation7 + $0x25c0] sm:$0xff]
    %v3429 = vld [vmem:[#allocation7 + $0x25c8] sm:$0xff]
    %v3430 = vld [vmem:[#allocation7 + $0x25d0] sm:$0xff]
    %v3431 = vld [vmem:[#allocation7 + $0x25d8] sm:$0xff]
    %v3432 = vld [vmem:[#allocation7 + $0x25e0] sm:$0xff]
    %v3433 = vld [vmem:[#allocation7 + $0x25e8] sm:$0xff]
    %v3434 = vld [vmem:[#allocation7 + $0x25f0] sm:$0xff]
    %v3435 = vld [vmem:[#allocation7 + $0x25f8] sm:$0xff]
    %v3436 = vld [vmem:[#allocation7 + $0x2600] sm:$0xff]
    %v3437 = vld [vmem:[#allocation7 + $0x2608] sm:$0xff]
    %v3438 = vld [vmem:[#allocation7 + $0x2610] sm:$0xff]
    %v3439 = vld [vmem:[#allocation7 + $0x2618] sm:$0xff]
    %v3440 = vld [vmem:[#allocation7 + $0x2620] sm:$0xff]
    %v3441 = vld [vmem:[#allocation7 + $0x2628] sm:$0xff]
    %v3442 = vld [vmem:[#allocation7 + $0x2630] sm:$0xff]
    %v3443 = vld [vmem:[#allocation7 + $0x2638] sm:$0xff]
    %v3444 = vld [vmem:[#allocation7 + $0x2640] sm:$0xff]
    %v3445 = vld [vmem:[#allocation7 + $0x2648] sm:$0xff]
    %v3446 = vld [vmem:[#allocation7 + $0x2650] sm:$0xff]
    %v3447 = vld [vmem:[#allocation7 + $0x2658] sm:$0xff]
    %v3448 = vld [vmem:[#allocation7 + $0x2660] sm:$0xff]
    %v3449 = vld [vmem:[#allocation7 + $0x2668] sm:$0xff]
    %v3450 = vld [vmem:[#allocation7 + $0x2670] sm:$0xff]
    %v3451 = vld [vmem:[#allocation7 + $0x2678] sm:$0xff]
    %v3452 = vld [vmem:[#allocation7 + $0x2680] sm:$0xff]
    %v3453 = vld [vmem:[#allocation7 + $0x2688] sm:$0xff]
    %v3454 = vld [vmem:[#allocation7 + $0x2690] sm:$0xff]
    %v3455 = vld [vmem:[#allocation7 + $0x2698] sm:$0xff]
    %v3456 = vld [vmem:[#allocation7 + $0x26a0] sm:$0xff]
    %v3457 = vld [vmem:[#allocation7 + $0x26a8] sm:$0xff]
    %v3458 = vld [vmem:[#allocation7 + $0x26b0] sm:$0xff]
    %v3459 = vld [vmem:[#allocation7 + $0x26b8] sm:$0xff]
    %v3460 = vld [vmem:[#allocation7 + $0x26c0] sm:$0xff]
    %v3461 = vld [vmem:[#allocation7 + $0x26c8] sm:$0xff]
    %v3462 = vld [vmem:[#allocation7 + $0x26d0] sm:$0xff]
    %v3463 = vld [vmem:[#allocation7 + $0x26d8] sm:$0xff]
    %v3464 = vld [vmem:[#allocation7 + $0x26e0] sm:$0xff]
    %v3465 = vld [vmem:[#allocation7 + $0x26e8] sm:$0xff]
    %v3466 = vld [vmem:[#allocation7 + $0x26f0] sm:$0xff]
    %v3467 = vld [vmem:[#allocation7 + $0x26f8] sm:$0xff]
    %v3468 = vld [vmem:[#allocation7 + $0x2700] sm:$0xff]
    %v3469 = vld [vmem:[#allocation7 + $0x2708] sm:$0xff]
    %v3470 = vld [vmem:[#allocation7 + $0x2710] sm:$0xff]
    %v3471 = vld [vmem:[#allocation7 + $0x2718] sm:$0xff]
    %v3472 = vld [vmem:[#allocation7 + $0x2720] sm:$0xff]
    %v3473 = vld [vmem:[#allocation7 + $0x2728] sm:$0xff]
    %v3474 = vld [vmem:[#allocation7 + $0x2730] sm:$0xff]
    %v3475 = vld [vmem:[#allocation7 + $0x2738] sm:$0xff]
    %v3476 = vld [vmem:[#allocation7 + $0x2740] sm:$0xff]
    %v3477 = vld [vmem:[#allocation7 + $0x2748] sm:$0xff]
    %v3478 = vld [vmem:[#allocation7 + $0x2750] sm:$0xff]
    %v3479 = vld [vmem:[#allocation7 + $0x2758] sm:$0xff]
    %v3480 = vld [vmem:[#allocation7 + $0x2760] sm:$0xff]
    %v3481 = vld [vmem:[#allocation7 + $0x2768] sm:$0xff]
    %v3482 = vld [vmem:[#allocation7 + $0x2770] sm:$0xff]
    %v3483 = vld [vmem:[#allocation7 + $0x2778] sm:$0xff]
    %v3484 = vld [vmem:[#allocation7 + $0x2780] sm:$0xff]
    %v3485 = vld [vmem:[#allocation7 + $0x2788] sm:$0xff]
    %v3486 = vld [vmem:[#allocation7 + $0x2790] sm:$0xff]
    %v3487 = vld [vmem:[#allocation7 + $0x2798] sm:$0xff]
    %v3488 = vld [vmem:[#allocation7 + $0x27a0] sm:$0xff]
    %v3489 = vld [vmem:[#allocation7 + $0x27a8] sm:$0xff]
    %v3490 = vld [vmem:[#allocation7 + $0x27b0] sm:$0xff]
    %v3491 = vld [vmem:[#allocation7 + $0x27b8] sm:$0xff]
    %v3492 = vld [vmem:[#allocation7 + $0x27c0] sm:$0xff]
    %v3493 = vld [vmem:[#allocation7 + $0x27c8] sm:$0xff]
    %v3494 = vld [vmem:[#allocation7 + $0x27d0] sm:$0xff]
    %v3495 = vld [vmem:[#allocation7 + $0x27d8] sm:$0xff]
    %v3496 = vld [vmem:[#allocation7 + $0x27e0] sm:$0xff]
    %v3497 = vld [vmem:[#allocation7 + $0x27e8] sm:$0xff]
    %v3498 = vld [vmem:[#allocation7 + $0x27f0] sm:$0xff]
    %v3499 = vld [vmem:[#allocation7 + $0x27f8] sm:$0xff]
    %v3500 = vld [vmem:[#allocation7 + $0x2800] sm:$0xff]
    %v3501 = vld [vmem:[#allocation7 + $0x2808] sm:$0xff]
    %v3502 = vld [vmem:[#allocation7 + $0x2810] sm:$0xff]
    %v3503 = vld [vmem:[#allocation7 + $0x2818] sm:$0xff]
    %v3504 = vld [vmem:[#allocation7 + $0x2820] sm:$0xff]
    %v3505 = vld [vmem:[#allocation7 + $0x2828] sm:$0xff]
    %v3506 = vld [vmem:[#allocation7 + $0x2830] sm:$0xff]
    %v3507 = vld [vmem:[#allocation7 + $0x2838] sm:$0xff]
    %v3508 = vld [vmem:[#allocation7 + $0x2840] sm:$0xff]
    %v3509 = vld [vmem:[#allocation7 + $0x2848] sm:$0xff]
    %v3510 = vld [vmem:[#allocation7 + $0x2850] sm:$0xff]
    %v3511 = vld [vmem:[#allocation7 + $0x2858] sm:$0xff]
    %v3512 = vld [vmem:[#allocation7 + $0x2860] sm:$0xff]
    %v3513 = vld [vmem:[#allocation7 + $0x2868] sm:$0xff]
    %v3514 = vld [vmem:[#allocation7 + $0x2870] sm:$0xff]
    %v3515 = vld [vmem:[#allocation7 + $0x2878] sm:$0xff]
    %v3516 = vld [vmem:[#allocation7 + $0x2880] sm:$0xff]
    %v3517 = vld [vmem:[#allocation7 + $0x2888] sm:$0xff]
    %v3518 = vld [vmem:[#allocation7 + $0x2890] sm:$0xff]
    %v3519 = vld [vmem:[#allocation7 + $0x2898] sm:$0xff]
    %v3520 = vld [vmem:[#allocation7 + $0x28a0] sm:$0xff]
    %v3521 = vld [vmem:[#allocation7 + $0x28a8] sm:$0xff]
    %v3522 = vld [vmem:[#allocation7 + $0x28b0] sm:$0xff]
    %v3523 = vld [vmem:[#allocation7 + $0x28b8] sm:$0xff]
    %v3524 = vld [vmem:[#allocation7 + $0x28c0] sm:$0xff]
    %v3525 = vld [vmem:[#allocation7 + $0x28c8] sm:$0xff]
    %v3526 = vld [vmem:[#allocation7 + $0x28d0] sm:$0xff]
    %v3527 = vld [vmem:[#allocation7 + $0x28d8] sm:$0xff]
    %v3528 = vld [vmem:[#allocation7 + $0x28e0] sm:$0xff]
    %v3529 = vld [vmem:[#allocation7 + $0x28e8] sm:$0xff]
    %v3530 = vld [vmem:[#allocation7 + $0x28f0] sm:$0xff]
    %v3531 = vld [vmem:[#allocation7 + $0x28f8] sm:$0xff]
    %v3532 = vld [vmem:[#allocation7 + $0x2900] sm:$0xff]
    %v3533 = vld [vmem:[#allocation7 + $0x2908] sm:$0xff]
    %v3534 = vld [vmem:[#allocation7 + $0x2910] sm:$0xff]
    %v3535 = vld [vmem:[#allocation7 + $0x2918] sm:$0xff]
    %v3536 = vld [vmem:[#allocation7 + $0x2920] sm:$0xff]
    %v3537 = vld [vmem:[#allocation7 + $0x2928] sm:$0xff]
    %v3538 = vld [vmem:[#allocation7 + $0x2930] sm:$0xff]
    %v3539 = vld [vmem:[#allocation7 + $0x2938] sm:$0xff]
    %v3540 = vld [vmem:[#allocation7 + $0x2940] sm:$0xff]
    %v3541 = vld [vmem:[#allocation7 + $0x2948] sm:$0xff]
    %v3542 = vld [vmem:[#allocation7 + $0x2950] sm:$0xff]
    %v3543 = vld [vmem:[#allocation7 + $0x2958] sm:$0xff]
    %v3544 = vld [vmem:[#allocation7 + $0x2960] sm:$0xff]
    %v3545 = vld [vmem:[#allocation7 + $0x2968] sm:$0xff]
    %v3546 = vld [vmem:[#allocation7 + $0x2970] sm:$0xff]
    %v3547 = vld [vmem:[#allocation7 + $0x2978] sm:$0xff]
    %v3548 = vld [vmem:[#allocation7 + $0x2980] sm:$0xff]
    %v3549 = vld [vmem:[#allocation7 + $0x2988] sm:$0xff]
    %v3550 = vld [vmem:[#allocation7 + $0x2990] sm:$0xff]
    %v3551 = vld [vmem:[#allocation7 + $0x2998] sm:$0xff]
    %v3552 = vld [vmem:[#allocation7 + $0x29a0] sm:$0xff]
    %v3553 = vld [vmem:[#allocation7 + $0x29a8] sm:$0xff]
    %v3554 = vld [vmem:[#allocation7 + $0x29b0] sm:$0xff]
    %v3555 = vld [vmem:[#allocation7 + $0x29b8] sm:$0xff]
    %v3556 = vld [vmem:[#allocation7 + $0x29c0] sm:$0xff]
    %v3557 = vld [vmem:[#allocation7 + $0x29c8] sm:$0xff]
    %v3558 = vld [vmem:[#allocation7 + $0x29d0] sm:$0xff]
    %v3559 = vld [vmem:[#allocation7 + $0x29d8] sm:$0xff]
    %v3560 = vld [vmem:[#allocation7 + $0x29e0] sm:$0xff]
    %v3561 = vld [vmem:[#allocation7 + $0x29e8] sm:$0xff]
    %v3562 = vld [vmem:[#allocation7 + $0x29f0] sm:$0xff]
    %v3563 = vld [vmem:[#allocation7 + $0x29f8] sm:$0xff]
    %v3564 = vld [vmem:[#allocation7 + $0x2a00] sm:$0xff]
    %v3565 = vld [vmem:[#allocation7 + $0x2a08] sm:$0xff]
    %v3566 = vld [vmem:[#allocation7 + $0x2a10] sm:$0xff]
    %v3567 = vld [vmem:[#allocation7 + $0x2a18] sm:$0xff]
    %v3568 = vld [vmem:[#allocation7 + $0x2a20] sm:$0xff]
    %v3569 = vld [vmem:[#allocation7 + $0x2a28] sm:$0xff]
    %v3570 = vld [vmem:[#allocation7 + $0x2a30] sm:$0xff]
    %v3571 = vld [vmem:[#allocation7 + $0x2a38] sm:$0xff]
    %v3572 = vld [vmem:[#allocation7 + $0x2a40] sm:$0xff]
    %v3573 = vld [vmem:[#allocation7 + $0x2a48] sm:$0xff]
    %v3574 = vld [vmem:[#allocation7 + $0x2a50] sm:$0xff]
    %v3575 = vld [vmem:[#allocation7 + $0x2a58] sm:$0xff]
    %v3576 = vld [vmem:[#allocation7 + $0x2a60] sm:$0xff]
    %v3577 = vld [vmem:[#allocation7 + $0x2a68] sm:$0xff]
    %v3578 = vld [vmem:[#allocation7 + $0x2a70] sm:$0xff]
    %v3579 = vld [vmem:[#allocation7 + $0x2a78] sm:$0xff]
    %v3580 = vld [vmem:[#allocation7 + $0x2a80] sm:$0xff]
    %v3581 = vld [vmem:[#allocation7 + $0x2a88] sm:$0xff]
    %v3582 = vld [vmem:[#allocation7 + $0x2a90] sm:$0xff]
    %v3583 = vld [vmem:[#allocation7 + $0x2a98] sm:$0xff]
    %v3584 = vld [vmem:[#allocation7 + $0x2aa0] sm:$0xff]
    %v3585 = vld [vmem:[#allocation7 + $0x2aa8] sm:$0xff]
    %v3586 = vld [vmem:[#allocation7 + $0x2ab0] sm:$0xff]
    %v3587 = vld [vmem:[#allocation7 + $0x2ab8] sm:$0xff]
    %v3588 = vld [vmem:[#allocation7 + $0x2ac0] sm:$0xff]
    %v3589 = vld [vmem:[#allocation7 + $0x2ac8] sm:$0xff]
    %v3590 = vld [vmem:[#allocation7 + $0x2ad0] sm:$0xff]
    %v3591 = vld [vmem:[#allocation7 + $0x2ad8] sm:$0xff]
    %v3592 = vld [vmem:[#allocation7 + $0x2ae0] sm:$0xff]
    %v3593 = vld [vmem:[#allocation7 + $0x2ae8] sm:$0xff]
    %v3594 = vld [vmem:[#allocation7 + $0x2af0] sm:$0xff]
    %v3595 = vld [vmem:[#allocation7 + $0x2af8] sm:$0xff]
    %v3596 = vld [vmem:[#allocation7 + $0x2b00] sm:$0xff]
    %v3597 = vld [vmem:[#allocation7 + $0x2b08] sm:$0xff]
    %v3598 = vld [vmem:[#allocation7 + $0x2b10] sm:$0xff]
    %v3599 = vld [vmem:[#allocation7 + $0x2b18] sm:$0xff]
    %v3600 = vld [vmem:[#allocation7 + $0x2b20] sm:$0xff]
    %v3601 = vld [vmem:[#allocation7 + $0x2b28] sm:$0xff]
    %v3602 = vld [vmem:[#allocation7 + $0x2b30] sm:$0xff]
    %v3603 = vld [vmem:[#allocation7 + $0x2b38] sm:$0xff]
    %v3604 = vld [vmem:[#allocation7 + $0x2b40] sm:$0xff]
    %v3605 = vld [vmem:[#allocation7 + $0x2b48] sm:$0xff]
    %v3606 = vld [vmem:[#allocation7 + $0x2b50] sm:$0xff]
    %v3607 = vld [vmem:[#allocation7 + $0x2b58] sm:$0xff]
    %v3608 = vld [vmem:[#allocation7 + $0x2b60] sm:$0xff]
    %v3609 = vld [vmem:[#allocation7 + $0x2b68] sm:$0xff]
    %v3610 = vld [vmem:[#allocation7 + $0x2b70] sm:$0xff]
    %v3611 = vld [vmem:[#allocation7 + $0x2b78] sm:$0xff]
    %v3612 = vld [vmem:[#allocation7 + $0x2b80] sm:$0xff]
    %v3613 = vld [vmem:[#allocation7 + $0x2b88] sm:$0xff]
    %v3614 = vld [vmem:[#allocation7 + $0x2b90] sm:$0xff]
    %v3615 = vld [vmem:[#allocation7 + $0x2b98] sm:$0xff]
    %v3616 = vld [vmem:[#allocation7 + $0x2ba0] sm:$0xff]
    %v3617 = vld [vmem:[#allocation7 + $0x2ba8] sm:$0xff]
    %v3618 = vld [vmem:[#allocation7 + $0x2bb0] sm:$0xff]
    %v3619 = vld [vmem:[#allocation7 + $0x2bb8] sm:$0xff]
    %v3620 = vld [vmem:[#allocation7 + $0x2bc0] sm:$0xff]
    %v3621 = vld [vmem:[#allocation7 + $0x2bc8] sm:$0xff]
    %v3622 = vld [vmem:[#allocation7 + $0x2bd0] sm:$0xff]
    %v3623 = vld [vmem:[#allocation7 + $0x2bd8] sm:$0xff]
    %v3624 = vld [vmem:[#allocation7 + $0x2be0] sm:$0xff]
    %v3625 = vld [vmem:[#allocation7 + $0x2be8] sm:$0xff]
    %v3626 = vld [vmem:[#allocation7 + $0x2bf0] sm:$0xff]
    %v3627 = vld [vmem:[#allocation7 + $0x2bf8] sm:$0xff]
    %v3628 = vld [vmem:[#allocation7 + $0x2c00] sm:$0xff]
    %v3629 = vld [vmem:[#allocation7 + $0x2c08] sm:$0xff]
    %v3630 = vld [vmem:[#allocation7 + $0x2c10] sm:$0xff]
    %v3631 = vld [vmem:[#allocation7 + $0x2c18] sm:$0xff]
    %v3632 = vld [vmem:[#allocation7 + $0x2c20] sm:$0xff]
    %v3633 = vld [vmem:[#allocation7 + $0x2c28] sm:$0xff]
    %v3634 = vld [vmem:[#allocation7 + $0x2c30] sm:$0xff]
    %v3635 = vld [vmem:[#allocation7 + $0x2c38] sm:$0xff]
    %v3636 = vld [vmem:[#allocation7 + $0x2c40] sm:$0xff]
    %v3637 = vld [vmem:[#allocation7 + $0x2c48] sm:$0xff]
    %v3638 = vld [vmem:[#allocation7 + $0x2c50] sm:$0xff]
    %v3639 = vld [vmem:[#allocation7 + $0x2c58] sm:$0xff]
    %v3640 = vld [vmem:[#allocation7 + $0x2c60] sm:$0xff]
    %v3641 = vld [vmem:[#allocation7 + $0x2c68] sm:$0xff]
    %v3642 = vld [vmem:[#allocation7 + $0x2c70] sm:$0xff]
    %v3643 = vld [vmem:[#allocation7 + $0x2c78] sm:$0xff]
    %v3644 = vld [vmem:[#allocation7 + $0x2c80] sm:$0xff]
    %v3645 = vld [vmem:[#allocation7 + $0x2c88] sm:$0xff]
    %v3646 = vld [vmem:[#allocation7 + $0x2c90] sm:$0xff]
    %v3647 = vld [vmem:[#allocation7 + $0x2c98] sm:$0xff]
    %v3648 = vld [vmem:[#allocation7 + $0x2ca0] sm:$0xff]
    %v3649 = vld [vmem:[#allocation7 + $0x2ca8] sm:$0xff]
    %v3650 = vld [vmem:[#allocation7 + $0x2cb0] sm:$0xff]
    %v3651 = vld [vmem:[#allocation7 + $0x2cb8] sm:$0xff]
    %v3652 = vld [vmem:[#allocation7 + $0x2cc0] sm:$0xff]
    %v3653 = vld [vmem:[#allocation7 + $0x2cc8] sm:$0xff]
    %v3654 = vld [vmem:[#allocation7 + $0x2cd0] sm:$0xff]
    %v3655 = vld [vmem:[#allocation7 + $0x2cd8] sm:$0xff]
    %v3656 = vld [vmem:[#allocation7 + $0x2ce0] sm:$0xff]
    %v3657 = vld [vmem:[#allocation7 + $0x2ce8] sm:$0xff]
    %v3658 = vld [vmem:[#allocation7 + $0x2cf0] sm:$0xff]
    %v3659 = vld [vmem:[#allocation7 + $0x2cf8] sm:$0xff]
    %v3660 = vld [vmem:[#allocation7 + $0x2d00] sm:$0xff]
    %v3661 = vld [vmem:[#allocation7 + $0x2d08] sm:$0xff]
    %v3662 = vld [vmem:[#allocation7 + $0x2d10] sm:$0xff]
    %v3663 = vld [vmem:[#allocation7 + $0x2d18] sm:$0xff]
    %v3664 = vld [vmem:[#allocation7 + $0x2d20] sm:$0xff]
    %v3665 = vld [vmem:[#allocation7 + $0x2d28] sm:$0xff]
    %v3666 = vld [vmem:[#allocation7 + $0x2d30] sm:$0xff]
    %v3667 = vld [vmem:[#allocation7 + $0x2d38] sm:$0xff]
    %v3668 = vld [vmem:[#allocation7 + $0x2d40] sm:$0xff]
    %v3669 = vld [vmem:[#allocation7 + $0x2d48] sm:$0xff]
    %v3670 = vld [vmem:[#allocation7 + $0x2d50] sm:$0xff]
    %v3671 = vld [vmem:[#allocation7 + $0x2d58] sm:$0xff]
    %v3672 = vld [vmem:[#allocation7 + $0x2d60] sm:$0xff]
    %v3673 = vld [vmem:[#allocation7 + $0x2d68] sm:$0xff]
    %v3674 = vld [vmem:[#allocation7 + $0x2d70] sm:$0xff]
    %v3675 = vld [vmem:[#allocation7 + $0x2d78] sm:$0xff]
    %v3676 = vld [vmem:[#allocation7 + $0x2d80] sm:$0xff]
    %v3677 = vld [vmem:[#allocation7 + $0x2d88] sm:$0xff]
    %v3678 = vld [vmem:[#allocation7 + $0x2d90] sm:$0xff]
    %v3679 = vld [vmem:[#allocation7 + $0x2d98] sm:$0xff]
    %v3680 = vld [vmem:[#allocation7 + $0x2da0] sm:$0xff]
    %v3681 = vld [vmem:[#allocation7 + $0x2da8] sm:$0xff]
    %v3682 = vld [vmem:[#allocation7 + $0x2db0] sm:$0xff]
    %v3683 = vld [vmem:[#allocation7 + $0x2db8] sm:$0xff]
    %v3684 = vld [vmem:[#allocation7 + $0x2dc0] sm:$0xff]
    %v3685 = vld [vmem:[#allocation7 + $0x2dc8] sm:$0xff]
    %v3686 = vld [vmem:[#allocation7 + $0x2dd0] sm:$0xff]
    %v3687 = vld [vmem:[#allocation7 + $0x2dd8] sm:$0xff]
    %v3688 = vld [vmem:[#allocation7 + $0x2de0] sm:$0xff]
    %v3689 = vld [vmem:[#allocation7 + $0x2de8] sm:$0xff]
    %v3690 = vld [vmem:[#allocation7 + $0x2df0] sm:$0xff]
    %v3691 = vld [vmem:[#allocation7 + $0x2df8] sm:$0xff]
    %v3692 = vld [vmem:[#allocation7 + $0x2e00] sm:$0xff]
    %v3693 = vld [vmem:[#allocation7 + $0x2e08] sm:$0xff]
    %v3694 = vld [vmem:[#allocation7 + $0x2e10] sm:$0xff]
    %v3695 = vld [vmem:[#allocation7 + $0x2e18] sm:$0xff]
    %v3696 = vld [vmem:[#allocation7 + $0x2e20] sm:$0xff]
    %v3697 = vld [vmem:[#allocation7 + $0x2e28] sm:$0xff]
    %v3698 = vld [vmem:[#allocation7 + $0x2e30] sm:$0xff]
    %v3699 = vld [vmem:[#allocation7 + $0x2e38] sm:$0xff]
    %v3700 = vld [vmem:[#allocation7 + $0x2e40] sm:$0xff]
    %v3701 = vld [vmem:[#allocation7 + $0x2e48] sm:$0xff]
    %v3702 = vld [vmem:[#allocation7 + $0x2e50] sm:$0xff]
    %v3703 = vld [vmem:[#allocation7 + $0x2e58] sm:$0xff]
    %v3704 = vld [vmem:[#allocation7 + $0x2e60] sm:$0xff]
    %v3705 = vld [vmem:[#allocation7 + $0x2e68] sm:$0xff]
    %v3706 = vld [vmem:[#allocation7 + $0x2e70] sm:$0xff]
    %v3707 = vld [vmem:[#allocation7 + $0x2e78] sm:$0xff]
    %v3708 = vld [vmem:[#allocation7 + $0x2e80] sm:$0xff]
    %v3709 = vld [vmem:[#allocation7 + $0x2e88] sm:$0xff]
    %v3710 = vld [vmem:[#allocation7 + $0x2e90] sm:$0xff]
    %v3711 = vld [vmem:[#allocation7 + $0x2e98] sm:$0xff]
    %v3712 = vld [vmem:[#allocation7 + $0x2ea0] sm:$0xff]
    %v3713 = vld [vmem:[#allocation7 + $0x2ea8] sm:$0xff]
    %v3714 = vld [vmem:[#allocation7 + $0x2eb0] sm:$0xff]
    %v3715 = vld [vmem:[#allocation7 + $0x2eb8] sm:$0xff]
    %v3716 = vld [vmem:[#allocation7 + $0x2ec0] sm:$0xff]
    %v3717 = vld [vmem:[#allocation7 + $0x2ec8] sm:$0xff]
    %v3718 = vld [vmem:[#allocation7 + $0x2ed0] sm:$0xff]
    %v3719 = vld [vmem:[#allocation7 + $0x2ed8] sm:$0xff]
    %v3720 = vld [vmem:[#allocation7 + $0x2ee0] sm:$0xff]
    %v3721 = vld [vmem:[#allocation7 + $0x2ee8] sm:$0xff]
    %v3722 = vld [vmem:[#allocation7 + $0x2ef0] sm:$0xff]
    %v3723 = vld [vmem:[#allocation7 + $0x2ef8] sm:$0xff]
    %v3724 = vld [vmem:[#allocation7 + $0x2f00] sm:$0xff]
    %v3725 = vld [vmem:[#allocation7 + $0x2f08] sm:$0xff]
    %v3726 = vld [vmem:[#allocation7 + $0x2f10] sm:$0xff]
    %v3727 = vld [vmem:[#allocation7 + $0x2f18] sm:$0xff]
    %v3728 = vld [vmem:[#allocation7 + $0x2f20] sm:$0xff]
    %v3729 = vld [vmem:[#allocation7 + $0x2f28] sm:$0xff]
    %v3730 = vld [vmem:[#allocation7 + $0x2f30] sm:$0xff]
    %v3731 = vld [vmem:[#allocation7 + $0x2f38] sm:$0xff]
    %v3732 = vld [vmem:[#allocation7 + $0x2f40] sm:$0xff]
    %v3733 = vld [vmem:[#allocation7 + $0x2f48] sm:$0xff]
    %v3734 = vld [vmem:[#allocation7 + $0x2f50] sm:$0xff]
    %v3735 = vld [vmem:[#allocation7 + $0x2f58] sm:$0xff]
    %v3736 = vld [vmem:[#allocation7 + $0x2f60] sm:$0xff]
    %v3737 = vld [vmem:[#allocation7 + $0x2f68] sm:$0xff]
    %v3738 = vld [vmem:[#allocation7 + $0x2f70] sm:$0xff]
    %v3739 = vld [vmem:[#allocation7 + $0x2f78] sm:$0xff]
    %v3740 = vld [vmem:[#allocation7 + $0x2f80] sm:$0xff]
    %v3741 = vld [vmem:[#allocation7 + $0x2f88] sm:$0xff]
    %v3742 = vld [vmem:[#allocation7 + $0x2f90] sm:$0xff]
    %v3743 = vld [vmem:[#allocation7 + $0x2f98] sm:$0xff]
    %v3744 = vld [vmem:[#allocation7 + $0x2fa0] sm:$0xff]
    %v3745 = vld [vmem:[#allocation7 + $0x2fa8] sm:$0xff]
    %v3746 = vld [vmem:[#allocation7 + $0x2fb0] sm:$0xff]
    %v3747 = vld [vmem:[#allocation7 + $0x2fb8] sm:$0xff]
    %v3748 = vld [vmem:[#allocation7 + $0x2fc0] sm:$0xff]
    %v3749 = vld [vmem:[#allocation7 + $0x2fc8] sm:$0xff]
    %v3750 = vld [vmem:[#allocation7 + $0x2fd0] sm:$0xff]
    %v3751 = vld [vmem:[#allocation7 + $0x2fd8] sm:$0xff]
    %v3752 = vld [vmem:[#allocation7 + $0x2fe0] sm:$0xff]
    %v3753 = vld [vmem:[#allocation7 + $0x2fe8] sm:$0xff]
    %v3754 = vld [vmem:[#allocation7 + $0x2ff0] sm:$0xff]
    %v3755 = vld [vmem:[#allocation7 + $0x2ff8] sm:$0xff]
    %v3756 = vld [vmem:[#allocation7 + $0x3000] sm:$0xff]
    %v3757 = vld [vmem:[#allocation7 + $0x3008] sm:$0xff]
    %v3758 = vld [vmem:[#allocation7 + $0x3010] sm:$0xff]
    %v3759 = vld [vmem:[#allocation7 + $0x3018] sm:$0xff]
    %v3760 = vld [vmem:[#allocation7 + $0x3020] sm:$0xff]
    %v3761 = vld [vmem:[#allocation7 + $0x3028] sm:$0xff]
    %v3762 = vld [vmem:[#allocation7 + $0x3030] sm:$0xff]
    %v3763 = vld [vmem:[#allocation7 + $0x3038] sm:$0xff]
    %v3764 = vld [vmem:[#allocation7 + $0x3040] sm:$0xff]
    %v3765 = vld [vmem:[#allocation7 + $0x3048] sm:$0xff]
    %v3766 = vld [vmem:[#allocation7 + $0x3050] sm:$0xff]
    %v3767 = vld [vmem:[#allocation7 + $0x3058] sm:$0xff]
    %v3768 = vld [vmem:[#allocation7 + $0x3060] sm:$0xff]
    %v3769 = vld [vmem:[#allocation7 + $0x3068] sm:$0xff]
    %v3770 = vld [vmem:[#allocation7 + $0x3070] sm:$0xff]
    %v3771 = vld [vmem:[#allocation7 + $0x3078] sm:$0xff]
    %v3772 = vld [vmem:[#allocation7 + $0x3080] sm:$0xff]
    %v3773 = vld [vmem:[#allocation7 + $0x3088] sm:$0xff]
    %v3774 = vld [vmem:[#allocation7 + $0x3090] sm:$0xff]
    %v3775 = vld [vmem:[#allocation7 + $0x3098] sm:$0xff]
    %v3776 = vld [vmem:[#allocation7 + $0x30a0] sm:$0xff]
    %v3777 = vld [vmem:[#allocation7 + $0x30a8] sm:$0xff]
    %v3778 = vld [vmem:[#allocation7 + $0x30b0] sm:$0xff]
    %v3779 = vld [vmem:[#allocation7 + $0x30b8] sm:$0xff]
    %v3780 = vld [vmem:[#allocation7 + $0x30c0] sm:$0xff]
    %v3781 = vld [vmem:[#allocation7 + $0x30c8] sm:$0xff]
    %v3782 = vld [vmem:[#allocation7 + $0x30d0] sm:$0xff]
    %v3783 = vld [vmem:[#allocation7 + $0x30d8] sm:$0xff]
    %v3784 = vld [vmem:[#allocation7 + $0x30e0] sm:$0xff]
    %v3785 = vld [vmem:[#allocation7 + $0x30e8] sm:$0xff]
    %v3786 = vld [vmem:[#allocation7 + $0x30f0] sm:$0xff]
    %v3787 = vld [vmem:[#allocation7 + $0x30f8] sm:$0xff]
    %v3788 = vld [vmem:[#allocation7 + $0x3100] sm:$0xff]
    %v3789 = vld [vmem:[#allocation7 + $0x3108] sm:$0xff]
    %v3790 = vld [vmem:[#allocation7 + $0x3110] sm:$0xff]
    %v3791 = vld [vmem:[#allocation7 + $0x3118] sm:$0xff]
    %v3792 = vld [vmem:[#allocation7 + $0x3120] sm:$0xff]
    %v3793 = vld [vmem:[#allocation7 + $0x3128] sm:$0xff]
    %v3794 = vld [vmem:[#allocation7 + $0x3130] sm:$0xff]
    %v3795 = vld [vmem:[#allocation7 + $0x3138] sm:$0xff]
    %v3796 = vld [vmem:[#allocation7 + $0x3140] sm:$0xff]
    %v3797 = vld [vmem:[#allocation7 + $0x3148] sm:$0xff]
    %v3798 = vld [vmem:[#allocation7 + $0x3150] sm:$0xff]
    %v3799 = vld [vmem:[#allocation7 + $0x3158] sm:$0xff]
    %v3800 = vld [vmem:[#allocation7 + $0x3160] sm:$0xff]
    %v3801 = vld [vmem:[#allocation7 + $0x3168] sm:$0xff]
    %v3802 = vld [vmem:[#allocation7 + $0x3170] sm:$0xff]
    %v3803 = vld [vmem:[#allocation7 + $0x3178] sm:$0xff]
    %v3804 = vld [vmem:[#allocation7 + $0x3180] sm:$0xff]
    %v3805 = vld [vmem:[#allocation7 + $0x3188] sm:$0xff]
    %v3806 = vld [vmem:[#allocation7 + $0x3190] sm:$0xff]
    %v3807 = vld [vmem:[#allocation7 + $0x3198] sm:$0xff]
    %v3808 = vld [vmem:[#allocation7 + $0x31a0] sm:$0xff]
    %v3809 = vld [vmem:[#allocation7 + $0x31a8] sm:$0xff]
    %v3810 = vld [vmem:[#allocation7 + $0x31b0] sm:$0xff]
    %v3811 = vld [vmem:[#allocation7 + $0x31b8] sm:$0xff]
    %v3812 = vld [vmem:[#allocation7 + $0x31c0] sm:$0xff]
    %v3813 = vld [vmem:[#allocation7 + $0x31c8] sm:$0xff]
    %v3814 = vld [vmem:[#allocation7 + $0x31d0] sm:$0xff]
    %v3815 = vld [vmem:[#allocation7 + $0x31d8] sm:$0xff]
    %v3816 = vld [vmem:[#allocation7 + $0x31e0] sm:$0xff]
    %v3817 = vld [vmem:[#allocation7 + $0x31e8] sm:$0xff]
    %v3818 = vld [vmem:[#allocation7 + $0x31f0] sm:$0xff]
    %v3819 = vld [vmem:[#allocation7 + $0x31f8] sm:$0xff]
    %v3820 = vld [vmem:[#allocation7 + $0x3200] sm:$0xff]
    %v3821 = vld [vmem:[#allocation7 + $0x3208] sm:$0xff]
    %v3822 = vld [vmem:[#allocation7 + $0x3210] sm:$0xff]
    %v3823 = vld [vmem:[#allocation7 + $0x3218] sm:$0xff]
    %v3824 = vld [vmem:[#allocation7 + $0x3220] sm:$0xff]
    %v3825 = vld [vmem:[#allocation7 + $0x3228] sm:$0xff]
    %v3826 = vld [vmem:[#allocation7 + $0x3230] sm:$0xff]
    %v3827 = vld [vmem:[#allocation7 + $0x3238] sm:$0xff]
    %v3828 = vld [vmem:[#allocation7 + $0x3240] sm:$0xff]
    %v3829 = vld [vmem:[#allocation7 + $0x3248] sm:$0xff]
    %v3830 = vld [vmem:[#allocation7 + $0x3250] sm:$0xff]
    %v3831 = vld [vmem:[#allocation7 + $0x3258] sm:$0xff]
    %v3832 = vld [vmem:[#allocation7 + $0x3260] sm:$0xff]
    %v3833 = vld [vmem:[#allocation7 + $0x3268] sm:$0xff]
    %v3834 = vld [vmem:[#allocation7 + $0x3270] sm:$0xff]
    %v3835 = vld [vmem:[#allocation7 + $0x3278] sm:$0xff]
    %v3836 = vld [vmem:[#allocation7 + $0x3280] sm:$0xff]
    %v3837 = vld [vmem:[#allocation7 + $0x3288] sm:$0xff]
    %v3838 = vld [vmem:[#allocation7 + $0x3290] sm:$0xff]
    %v3839 = vld [vmem:[#allocation7 + $0x3298] sm:$0xff]
    %v3840 = vld [vmem:[#allocation7 + $0x32a0] sm:$0xff]
    %v3841 = vld [vmem:[#allocation7 + $0x32a8] sm:$0xff]
    %v3842 = vld [vmem:[#allocation7 + $0x32b0] sm:$0xff]
    %v3843 = vld [vmem:[#allocation7 + $0x32b8] sm:$0xff]
    %v3844 = vld [vmem:[#allocation7 + $0x32c0] sm:$0xff]
    %v3845 = vld [vmem:[#allocation7 + $0x32c8] sm:$0xff]
    %v3846 = vld [vmem:[#allocation7 + $0x32d0] sm:$0xff]
    %v3847 = vld [vmem:[#allocation7 + $0x32d8] sm:$0xff]
    %v3848 = vld [vmem:[#allocation7 + $0x32e0] sm:$0xff]
    %v3849 = vld [vmem:[#allocation7 + $0x32e8] sm:$0xff]
    %v3850 = vld [vmem:[#allocation7 + $0x32f0] sm:$0xff]
    %v3851 = vld [vmem:[#allocation7 + $0x32f8] sm:$0xff]
    %v3852 = vld [vmem:[#allocation7 + $0x3300] sm:$0xff]
    %v3853 = vld [vmem:[#allocation7 + $0x3308] sm:$0xff]
    %v3854 = vld [vmem:[#allocation7 + $0x3310] sm:$0xff]
    %v3855 = vld [vmem:[#allocation7 + $0x3318] sm:$0xff]
    %v3856 = vld [vmem:[#allocation7 + $0x3320] sm:$0xff]
    %v3857 = vld [vmem:[#allocation7 + $0x3328] sm:$0xff]
    %v3858 = vld [vmem:[#allocation7 + $0x3330] sm:$0xff]
    %v3859 = vld [vmem:[#allocation7 + $0x3338] sm:$0xff]
    %v3860 = vld [vmem:[#allocation7 + $0x3340] sm:$0xff]
    %v3861 = vld [vmem:[#allocation7 + $0x3348] sm:$0xff]
    %v3862 = vld [vmem:[#allocation7 + $0x3350] sm:$0xff]
    %v3863 = vld [vmem:[#allocation7 + $0x3358] sm:$0xff]
    %v3864 = vld [vmem:[#allocation7 + $0x3360] sm:$0xff]
    %v3865 = vld [vmem:[#allocation7 + $0x3368] sm:$0xff]
    %v3866 = vld [vmem:[#allocation7 + $0x3370] sm:$0xff]
    %v3867 = vld [vmem:[#allocation7 + $0x3378] sm:$0xff]
    %v3868 = vld [vmem:[#allocation7 + $0x3380] sm:$0xff]
    %v3869 = vld [vmem:[#allocation7 + $0x3388] sm:$0xff]
    %v3870 = vld [vmem:[#allocation7 + $0x3390] sm:$0xff]
    %v3871 = vld [vmem:[#allocation7 + $0x3398] sm:$0xff]
    %v3872 = vld [vmem:[#allocation7 + $0x33a0] sm:$0xff]
    %v3873 = vld [vmem:[#allocation7 + $0x33a8] sm:$0xff]
    %v3874 = vld [vmem:[#allocation7 + $0x33b0] sm:$0xff]
    %v3875 = vld [vmem:[#allocation7 + $0x33b8] sm:$0xff]
    %v3876 = vld [vmem:[#allocation7 + $0x33c0] sm:$0xff]
    %v3877 = vld [vmem:[#allocation7 + $0x33c8] sm:$0xff]
    %v3878 = vld [vmem:[#allocation7 + $0x33d0] sm:$0xff]
    %v3879 = vld [vmem:[#allocation7 + $0x33d8] sm:$0xff]
    %v3880 = vld [vmem:[#allocation7 + $0x33e0] sm:$0xff]
    %v3881 = vld [vmem:[#allocation7 + $0x33e8] sm:$0xff]
    %v3882 = vld [vmem:[#allocation7 + $0x33f0] sm:$0xff]
    %v3883 = vld [vmem:[#allocation7 + $0x33f8] sm:$0xff]
    %v3884 = vld [vmem:[#allocation7 + $0x3400] sm:$0xff]
    %v3885 = vld [vmem:[#allocation7 + $0x3408] sm:$0xff]
    %v3886 = vld [vmem:[#allocation7 + $0x3410] sm:$0xff]
    %v3887 = vld [vmem:[#allocation7 + $0x3418] sm:$0xff]
    %v3888 = vld [vmem:[#allocation7 + $0x3420] sm:$0xff]
    %v3889 = vld [vmem:[#allocation7 + $0x3428] sm:$0xff]
    %v3890 = vld [vmem:[#allocation7 + $0x3430] sm:$0xff]
    %v3891 = vld [vmem:[#allocation7 + $0x3438] sm:$0xff]
    %v3892 = vld [vmem:[#allocation7 + $0x3440] sm:$0xff]
    %v3893 = vld [vmem:[#allocation7 + $0x3448] sm:$0xff]
    %v3894 = vld [vmem:[#allocation7 + $0x3450] sm:$0xff]
    %v3895 = vld [vmem:[#allocation7 + $0x3458] sm:$0xff]
    %v3896 = vld [vmem:[#allocation7 + $0x3460] sm:$0xff]
    %v3897 = vld [vmem:[#allocation7 + $0x3468] sm:$0xff]
    %v3898 = vld [vmem:[#allocation7 + $0x3470] sm:$0xff]
    %v3899 = vld [vmem:[#allocation7 + $0x3478] sm:$0xff]
    %v3900 = vld [vmem:[#allocation7 + $0x3480] sm:$0xff]
    %v3901 = vld [vmem:[#allocation7 + $0x3488] sm:$0xff]
    %v3902 = vld [vmem:[#allocation7 + $0x3490] sm:$0xff]
    %v3903 = vld [vmem:[#allocation7 + $0x3498] sm:$0xff]
    %v3904 = vld [vmem:[#allocation7 + $0x34a0] sm:$0xff]
    %v3905 = vld [vmem:[#allocation7 + $0x34a8] sm:$0xff]
    %v3906 = vld [vmem:[#allocation7 + $0x34b0] sm:$0xff]
    %v3907 = vld [vmem:[#allocation7 + $0x34b8] sm:$0xff]
    %v3908 = vld [vmem:[#allocation7 + $0x34c0] sm:$0xff]
    %v3909 = vld [vmem:[#allocation7 + $0x34c8] sm:$0xff]
    %v3910 = vld [vmem:[#allocation7 + $0x34d0] sm:$0xff]
    %v3911 = vld [vmem:[#allocation7 + $0x34d8] sm:$0xff]
    %v3912 = vld [vmem:[#allocation7 + $0x34e0] sm:$0xff]
    %v3913 = vld [vmem:[#allocation7 + $0x34e8] sm:$0xff]
    %v3914 = vld [vmem:[#allocation7 + $0x34f0] sm:$0xff]
    %v3915 = vld [vmem:[#allocation7 + $0x34f8] sm:$0xff]
    %v3916 = vld [vmem:[#allocation7 + $0x3500] sm:$0xff]
    %v3917 = vld [vmem:[#allocation7 + $0x3508] sm:$0xff]
    %v3918 = vld [vmem:[#allocation7 + $0x3510] sm:$0xff]
    %v3919 = vld [vmem:[#allocation7 + $0x3518] sm:$0xff]
    %v3920 = vld [vmem:[#allocation7 + $0x3520] sm:$0xff]
    %v3921 = vld [vmem:[#allocation7 + $0x3528] sm:$0xff]
    %v3922 = vld [vmem:[#allocation7 + $0x3530] sm:$0xff]
    %v3923 = vld [vmem:[#allocation7 + $0x3538] sm:$0xff]
    %v3924 = vld [vmem:[#allocation7 + $0x3540] sm:$0xff]
    %v3925 = vld [vmem:[#allocation7 + $0x3548] sm:$0xff]
    %v3926 = vld [vmem:[#allocation7 + $0x3550] sm:$0xff]
    %v3927 = vld [vmem:[#allocation7 + $0x3558] sm:$0xff]
    %v3928 = vld [vmem:[#allocation7 + $0x3560] sm:$0xff]
    %v3929 = vld [vmem:[#allocation7 + $0x3568] sm:$0xff]
    %v3930 = vld [vmem:[#allocation7 + $0x3570] sm:$0xff]
    %v3931 = vld [vmem:[#allocation7 + $0x3578] sm:$0xff]
    %v3932 = vld [vmem:[#allocation7 + $0x3580] sm:$0xff]
    %v3933 = vld [vmem:[#allocation7 + $0x3588] sm:$0xff]
    %v3934 = vld [vmem:[#allocation7 + $0x3590] sm:$0xff]
    %v3935 = vld [vmem:[#allocation7 + $0x3598] sm:$0xff]
    %v3936 = vld [vmem:[#allocation7 + $0x35a0] sm:$0xff]
    %v3937 = vld [vmem:[#allocation7 + $0x35a8] sm:$0xff]
    %v3938 = vld [vmem:[#allocation7 + $0x35b0] sm:$0xff]
    %v3939 = vld [vmem:[#allocation7 + $0x35b8] sm:$0xff]
    %v3940 = vld [vmem:[#allocation7 + $0x35c0] sm:$0xff]
    %v3941 = vld [vmem:[#allocation7 + $0x35c8] sm:$0xff]
    %v3942 = vld [vmem:[#allocation7 + $0x35d0] sm:$0xff]
    %v3943 = vld [vmem:[#allocation7 + $0x35d8] sm:$0xff]
    %v3944 = vld [vmem:[#allocation7 + $0x35e0] sm:$0xff]
    %v3945 = vld [vmem:[#allocation7 + $0x35e8] sm:$0xff]
    %v3946 = vld [vmem:[#allocation7 + $0x35f0] sm:$0xff]
    %v3947 = vld [vmem:[#allocation7 + $0x35f8] sm:$0xff]
    %v3948 = vld [vmem:[#allocation7 + $0x3600] sm:$0xff]
    %v3949 = vld [vmem:[#allocation7 + $0x3608] sm:$0xff]
    %v3950 = vld [vmem:[#allocation7 + $0x3610] sm:$0xff]
    %v3951 = vld [vmem:[#allocation7 + $0x3618] sm:$0xff]
    %v3952 = vld [vmem:[#allocation7 + $0x3620] sm:$0xff]
    %v3953 = vld [vmem:[#allocation7 + $0x3628] sm:$0xff]
    %v3954 = vld [vmem:[#allocation7 + $0x3630] sm:$0xff]
    %v3955 = vld [vmem:[#allocation7 + $0x3638] sm:$0xff]
    %v3956 = vld [vmem:[#allocation7 + $0x3640] sm:$0xff]
    %v3957 = vld [vmem:[#allocation7 + $0x3648] sm:$0xff]
    %v3958 = vld [vmem:[#allocation7 + $0x3650] sm:$0xff]
    %v3959 = vld [vmem:[#allocation7 + $0x3658] sm:$0xff]
    %v3960 = vld [vmem:[#allocation7 + $0x3660] sm:$0xff]
    %v3961 = vld [vmem:[#allocation7 + $0x3668] sm:$0xff]
    %v3962 = vld [vmem:[#allocation7 + $0x3670] sm:$0xff]
    %v3963 = vld [vmem:[#allocation7 + $0x3678] sm:$0xff]
    %v3964 = vld [vmem:[#allocation7 + $0x3680] sm:$0xff]
    %v3965 = vld [vmem:[#allocation7 + $0x3688] sm:$0xff]
    %v3966 = vld [vmem:[#allocation7 + $0x3690] sm:$0xff]
    %v3967 = vld [vmem:[#allocation7 + $0x3698] sm:$0xff]
    %v3968 = vld [vmem:[#allocation7 + $0x36a0] sm:$0xff]
    %v3969 = vld [vmem:[#allocation7 + $0x36a8] sm:$0xff]
    %v3970 = vld [vmem:[#allocation7 + $0x36b0] sm:$0xff]
    %v3971 = vld [vmem:[#allocation7 + $0x36b8] sm:$0xff]
    %v3972 = vld [vmem:[#allocation7 + $0x36c0] sm:$0xff]
    %v3973 = vld [vmem:[#allocation7 + $0x36c8] sm:$0xff]
    %v3974 = vld [vmem:[#allocation7 + $0x36d0] sm:$0xff]
    %v3975 = vld [vmem:[#allocation7 + $0x36d8] sm:$0xff]
    %v3976 = vld [vmem:[#allocation7 + $0x36e0] sm:$0xff]
    %v3977 = vld [vmem:[#allocation7 + $0x36e8] sm:$0xff]
    %v3978 = vld [vmem:[#allocation7 + $0x36f0] sm:$0xff]
    %v3979 = vld [vmem:[#allocation7 + $0x36f8] sm:$0xff]
    %v3980 = vld [vmem:[#allocation7 + $0x3700] sm:$0xff]
    %v3981 = vld [vmem:[#allocation7 + $0x3708] sm:$0xff]
    %v3982 = vld [vmem:[#allocation7 + $0x3710] sm:$0xff]
    %v3983 = vld [vmem:[#allocation7 + $0x3718] sm:$0xff]
    %v3984 = vld [vmem:[#allocation7 + $0x3720] sm:$0xff]
    %v3985 = vld [vmem:[#allocation7 + $0x3728] sm:$0xff]
    %v3986 = vld [vmem:[#allocation7 + $0x3730] sm:$0xff]
    %v3987 = vld [vmem:[#allocation7 + $0x3738] sm:$0xff]
    %v3988 = vld [vmem:[#allocation7 + $0x3740] sm:$0xff]
    %v3989 = vld [vmem:[#allocation7 + $0x3748] sm:$0xff]
    %v3990 = vld [vmem:[#allocation7 + $0x3750] sm:$0xff]
    %v3991 = vld [vmem:[#allocation7 + $0x3758] sm:$0xff]
    %v3992 = vld [vmem:[#allocation7 + $0x3760] sm:$0xff]
    %v3993 = vld [vmem:[#allocation7 + $0x3768] sm:$0xff]
    %v3994 = vld [vmem:[#allocation7 + $0x3770] sm:$0xff]
    %v3995 = vld [vmem:[#allocation7 + $0x3778] sm:$0xff]
    %v3996 = vld [vmem:[#allocation7 + $0x3780] sm:$0xff]
    %v3997 = vld [vmem:[#allocation7 + $0x3788] sm:$0xff]
    %v3998 = vld [vmem:[#allocation7 + $0x3790] sm:$0xff]
    %v3999 = vld [vmem:[#allocation7 + $0x3798] sm:$0xff]
    %v4000 = vld [vmem:[#allocation7 + $0x37a0] sm:$0xff]
    %v4001 = vld [vmem:[#allocation7 + $0x37a8] sm:$0xff]
    %v4002 = vld [vmem:[#allocation7 + $0x37b0] sm:$0xff]
    %v4003 = vld [vmem:[#allocation7 + $0x37b8] sm:$0xff]
    %v4004 = vld [vmem:[#allocation7 + $0x37c0] sm:$0xff]
    %v4005 = vld [vmem:[#allocation7 + $0x37c8] sm:$0xff]
    %v4006 = vld [vmem:[#allocation7 + $0x37d0] sm:$0xff]
    %v4007 = vld [vmem:[#allocation7 + $0x37d8] sm:$0xff]
    %v4008 = vld [vmem:[#allocation7 + $0x37e0] sm:$0xff]
    %v4009 = vld [vmem:[#allocation7 + $0x37e8] sm:$0xff]
    %v4010 = vld [vmem:[#allocation7 + $0x37f0] sm:$0xff]
    %v4011 = vld [vmem:[#allocation7 + $0x37f8] sm:$0xff]
    %v4012 = vld [vmem:[#allocation7 + $0x3800] sm:$0xff]
    %v4013 = vld [vmem:[#allocation7 + $0x3808] sm:$0xff]
    %v4014 = vld [vmem:[#allocation7 + $0x3810] sm:$0xff]
    %v4015 = vld [vmem:[#allocation7 + $0x3818] sm:$0xff]
    %v4016 = vld [vmem:[#allocation7 + $0x3820] sm:$0xff]
    %v4017 = vld [vmem:[#allocation7 + $0x3828] sm:$0xff]
    %v4018 = vld [vmem:[#allocation7 + $0x3830] sm:$0xff]
    %v4019 = vld [vmem:[#allocation7 + $0x3838] sm:$0xff]
    %v4020 = vld [vmem:[#allocation7 + $0x3840] sm:$0xff]
    %v4021 = vld [vmem:[#allocation7 + $0x3848] sm:$0xff]
    %v4022 = vld [vmem:[#allocation7 + $0x3850] sm:$0xff]
    %v4023 = vld [vmem:[#allocation7 + $0x3858] sm:$0xff]
    %v4024 = vld [vmem:[#allocation7 + $0x3860] sm:$0xff]
    %v4025 = vld [vmem:[#allocation7 + $0x3868] sm:$0xff]
    %v4026 = vld [vmem:[#allocation7 + $0x3870] sm:$0xff]
    %v4027 = vld [vmem:[#allocation7 + $0x3878] sm:$0xff]
    %v4028 = vld [vmem:[#allocation7 + $0x3880] sm:$0xff]
    %v4029 = vld [vmem:[#allocation7 + $0x3888] sm:$0xff]
    %v4030 = vld [vmem:[#allocation7 + $0x3890] sm:$0xff]
    %v4031 = vld [vmem:[#allocation7 + $0x3898] sm:$0xff]
    %v4032 = vld [vmem:[#allocation7 + $0x38a0] sm:$0xff]
    %v4033 = vld [vmem:[#allocation7 + $0x38a8] sm:$0xff]
    %v4034 = vld [vmem:[#allocation7 + $0x38b0] sm:$0xff]
    %v4035 = vld [vmem:[#allocation7 + $0x38b8] sm:$0xff]
    %v4036 = vld [vmem:[#allocation7 + $0x38c0] sm:$0xff]
    %v4037 = vld [vmem:[#allocation7 + $0x38c8] sm:$0xff]
    %v4038 = vld [vmem:[#allocation7 + $0x38d0] sm:$0xff]
    %v4039 = vld [vmem:[#allocation7 + $0x38d8] sm:$0xff]
    %v4040 = vld [vmem:[#allocation7 + $0x38e0] sm:$0xff]
    %v4041 = vld [vmem:[#allocation7 + $0x38e8] sm:$0xff]
    %v4042 = vld [vmem:[#allocation7 + $0x38f0] sm:$0xff]
    %v4043 = vld [vmem:[#allocation7 + $0x38f8] sm:$0xff]
    %v4044 = vld [vmem:[#allocation7 + $0x3900] sm:$0xff]
    %v4045 = vld [vmem:[#allocation7 + $0x3908] sm:$0xff]
    %v4046 = vld [vmem:[#allocation7 + $0x3910] sm:$0xff]
    %v4047 = vld [vmem:[#allocation7 + $0x3918] sm:$0xff]
    %v4048 = vld [vmem:[#allocation7 + $0x3920] sm:$0xff]
    %v4049 = vld [vmem:[#allocation7 + $0x3928] sm:$0xff]
    %v4050 = vld [vmem:[#allocation7 + $0x3930] sm:$0xff]
    %v4051 = vld [vmem:[#allocation7 + $0x3938] sm:$0xff]
    %v4052 = vld [vmem:[#allocation7 + $0x3940] sm:$0xff]
    %v4053 = vld [vmem:[#allocation7 + $0x3948] sm:$0xff]
    %v4054 = vld [vmem:[#allocation7 + $0x3950] sm:$0xff]
    %v4055 = vld [vmem:[#allocation7 + $0x3958] sm:$0xff]
    %v4056 = vld [vmem:[#allocation7 + $0x3960] sm:$0xff]
    %v4057 = vld [vmem:[#allocation7 + $0x3968] sm:$0xff]
    %v4058 = vld [vmem:[#allocation7 + $0x3970] sm:$0xff]
    %v4059 = vld [vmem:[#allocation7 + $0x3978] sm:$0xff]
    %v4060 = vld [vmem:[#allocation7 + $0x3980] sm:$0xff]
    %v4061 = vld [vmem:[#allocation7 + $0x3988] sm:$0xff]
    %v4062 = vld [vmem:[#allocation7 + $0x3990] sm:$0xff]
    %v4063 = vld [vmem:[#allocation7 + $0x3998] sm:$0xff]
    %v4064 = vld [vmem:[#allocation7 + $0x39a0] sm:$0xff]
    %v4065 = vld [vmem:[#allocation7 + $0x39a8] sm:$0xff]
    %v4066 = vld [vmem:[#allocation7 + $0x39b0] sm:$0xff]
    %v4067 = vld [vmem:[#allocation7 + $0x39b8] sm:$0xff]
    %v4068 = vld [vmem:[#allocation7 + $0x39c0] sm:$0xff]
    %v4069 = vld [vmem:[#allocation7 + $0x39c8] sm:$0xff]
    %v4070 = vld [vmem:[#allocation7 + $0x39d0] sm:$0xff]
    %v4071 = vld [vmem:[#allocation7 + $0x39d8] sm:$0xff]
    %v4072 = vld [vmem:[#allocation7 + $0x39e0] sm:$0xff]
    %v4073 = vld [vmem:[#allocation7 + $0x39e8] sm:$0xff]
    %v4074 = vld [vmem:[#allocation7 + $0x39f0] sm:$0xff]
    %v4075 = vld [vmem:[#allocation7 + $0x39f8] sm:$0xff]
    %v4076 = vld [vmem:[#allocation7 + $0x3a00] sm:$0xff]
    %v4077 = vld [vmem:[#allocation7 + $0x3a08] sm:$0xff]
    %v4078 = vld [vmem:[#allocation7 + $0x3a10] sm:$0xff]
    %v4079 = vld [vmem:[#allocation7 + $0x3a18] sm:$0xff]
    %v4080 = vld [vmem:[#allocation7 + $0x3a20] sm:$0xff]
    %v4081 = vld [vmem:[#allocation7 + $0x3a28] sm:$0xff]
    %v4082 = vld [vmem:[#allocation7 + $0x3a30] sm:$0xff]
    %v4083 = vld [vmem:[#allocation7 + $0x3a38] sm:$0xff]
    %v4084 = vld [vmem:[#allocation7 + $0x3a40] sm:$0xff]
    %v4085 = vld [vmem:[#allocation7 + $0x3a48] sm:$0xff]
    %v4086 = vld [vmem:[#allocation7 + $0x3a50] sm:$0xff]
    %v4087 = vld [vmem:[#allocation7 + $0x3a58] sm:$0xff]
    %v4088 = vld [vmem:[#allocation7 + $0x3a60] sm:$0xff]
    %v4089 = vld [vmem:[#allocation7 + $0x3a68] sm:$0xff]
    %v4090 = vld [vmem:[#allocation7 + $0x3a70] sm:$0xff]
    %v4091 = vld [vmem:[#allocation7 + $0x3a78] sm:$0xff]
    %v4092 = vld [vmem:[#allocation7 + $0x3a80] sm:$0xff]
    %v4093 = vld [vmem:[#allocation7 + $0x3a88] sm:$0xff]
    %v4094 = vld [vmem:[#allocation7 + $0x3a90] sm:$0xff]
    %v4095 = vld [vmem:[#allocation7 + $0x3a98] sm:$0xff]
    %v4096 = vld [vmem:[#allocation7 + $0x3aa0] sm:$0xff]
    %v4097 = vld [vmem:[#allocation7 + $0x3aa8] sm:$0xff]
    %v4098 = vld [vmem:[#allocation7 + $0x3ab0] sm:$0xff]
    %v4099 = vld [vmem:[#allocation7 + $0x3ab8] sm:$0xff]
    %v4100 = vld [vmem:[#allocation7 + $0x3ac0] sm:$0xff]
    %v4101 = vld [vmem:[#allocation7 + $0x3ac8] sm:$0xff]
    %v4102 = vld [vmem:[#allocation7 + $0x3ad0] sm:$0xff]
    %v4103 = vld [vmem:[#allocation7 + $0x3ad8] sm:$0xff]
    %v4104 = vld [vmem:[#allocation7 + $0x3ae0] sm:$0xff]
    %v4105 = vld [vmem:[#allocation7 + $0x3ae8] sm:$0xff]
    %v4106 = vld [vmem:[#allocation7 + $0x3af0] sm:$0xff]
    %v4107 = vld [vmem:[#allocation7 + $0x3af8] sm:$0xff]
    %v4108 = vld [vmem:[#allocation7 + $0x3b00] sm:$0xff]
    %v4109 = vld [vmem:[#allocation7 + $0x3b08] sm:$0xff]
    %v4110 = vld [vmem:[#allocation7 + $0x3b10] sm:$0xff]
    %v4111 = vld [vmem:[#allocation7 + $0x3b18] sm:$0xff]
    %v4112 = vld [vmem:[#allocation7 + $0x3b20] sm:$0xff]
    %v4113 = vld [vmem:[#allocation7 + $0x3b28] sm:$0xff]
    %v4114 = vld [vmem:[#allocation7 + $0x3b30] sm:$0xff]
    %v4115 = vld [vmem:[#allocation7 + $0x3b38] sm:$0xff]
    %v4116 = vld [vmem:[#allocation7 + $0x3b40] sm:$0xff]
    %v4117 = vld [vmem:[#allocation7 + $0x3b48] sm:$0xff]
    %v4118 = vld [vmem:[#allocation7 + $0x3b50] sm:$0xff]
    %v4119 = vld [vmem:[#allocation7 + $0x3b58] sm:$0xff]
    %v4120 = vld [vmem:[#allocation7 + $0x3b60] sm:$0xff]
    %v4121 = vld [vmem:[#allocation7 + $0x3b68] sm:$0xff]
    %v4122 = vld [vmem:[#allocation7 + $0x3b70] sm:$0xff]
    %v4123 = vld [vmem:[#allocation7 + $0x3b78] sm:$0xff]
    %v4124 = vld [vmem:[#allocation7 + $0x3b80] sm:$0xff]
    %v4125 = vld [vmem:[#allocation7 + $0x3b88] sm:$0xff]
    %v4126 = vld [vmem:[#allocation7 + $0x3b90] sm:$0xff]
    %v4127 = vld [vmem:[#allocation7 + $0x3b98] sm:$0xff]
    %v4128 = vld [vmem:[#allocation7 + $0x3ba0] sm:$0xff]
    %v4129 = vld [vmem:[#allocation7 + $0x3ba8] sm:$0xff]
    %v4130 = vld [vmem:[#allocation7 + $0x3bb0] sm:$0xff]
    %v4131 = vld [vmem:[#allocation7 + $0x3bb8] sm:$0xff]
    %v4132 = vld [vmem:[#allocation7 + $0x3bc0] sm:$0xff]
    %v4133 = vld [vmem:[#allocation7 + $0x3bc8] sm:$0xff]
    %v4134 = vld [vmem:[#allocation7 + $0x3bd0] sm:$0xff]
    %v4135 = vld [vmem:[#allocation7 + $0x3bd8] sm:$0xff]
    %v4136 = vld [vmem:[#allocation7 + $0x3be0] sm:$0xff]
    %v4137 = vld [vmem:[#allocation7 + $0x3be8] sm:$0xff]
    %v4138 = vld [vmem:[#allocation7 + $0x3bf0] sm:$0xff]
    %v4139 = vld [vmem:[#allocation7 + $0x3bf8] sm:$0xff]
    %v4140 = vld [vmem:[#allocation7 + $0x3c00] sm:$0xff]
    %v4141 = vld [vmem:[#allocation7 + $0x3c08] sm:$0xff]
    %v4142 = vld [vmem:[#allocation7 + $0x3c10] sm:$0xff]
    %v4143 = vld [vmem:[#allocation7 + $0x3c18] sm:$0xff]
    %v4144 = vld [vmem:[#allocation7 + $0x3c20] sm:$0xff]
    %v4145 = vld [vmem:[#allocation7 + $0x3c28] sm:$0xff]
    %v4146 = vld [vmem:[#allocation7 + $0x3c30] sm:$0xff]
    %v4147 = vld [vmem:[#allocation7 + $0x3c38] sm:$0xff]
    %v4148 = vld [vmem:[#allocation7 + $0x3c40] sm:$0xff]
    %v4149 = vld [vmem:[#allocation7 + $0x3c48] sm:$0xff]
    %v4150 = vld [vmem:[#allocation7 + $0x3c50] sm:$0xff]
    %v4151 = vld [vmem:[#allocation7 + $0x3c58] sm:$0xff]
    %v4152 = vld [vmem:[#allocation7 + $0x3c60] sm:$0xff]
    %v4153 = vld [vmem:[#allocation7 + $0x3c68] sm:$0xff]
    %v4154 = vld [vmem:[#allocation7 + $0x3c70] sm:$0xff]
    %v4155 = vld [vmem:[#allocation7 + $0x3c78] sm:$0xff]
    %v4156 = vld [vmem:[#allocation7 + $0x3c80] sm:$0xff]
    %v4157 = vld [vmem:[#allocation7 + $0x3c88] sm:$0xff]
    %v4158 = vld [vmem:[#allocation7 + $0x3c90] sm:$0xff]
    %v4159 = vld [vmem:[#allocation7 + $0x3c98] sm:$0xff]
    %v4160 = vld [vmem:[#allocation7 + $0x3ca0] sm:$0xff]
    %v4161 = vld [vmem:[#allocation7 + $0x3ca8] sm:$0xff]
    %v4162 = vld [vmem:[#allocation7 + $0x3cb0] sm:$0xff]
    %v4163 = vld [vmem:[#allocation7 + $0x3cb8] sm:$0xff]
    %v4164 = vld [vmem:[#allocation7 + $0x3cc0] sm:$0xff]
    %v4165 = vld [vmem:[#allocation7 + $0x3cc8] sm:$0xff]
    %v4166 = vld [vmem:[#allocation7 + $0x3cd0] sm:$0xff]
    %v4167 = vld [vmem:[#allocation7 + $0x3cd8] sm:$0xff]
    %v4168 = vld [vmem:[#allocation7 + $0x3ce0] sm:$0xff]
    %v4169 = vld [vmem:[#allocation7 + $0x3ce8] sm:$0xff]
    %v4170 = vld [vmem:[#allocation7 + $0x3cf0] sm:$0xff]
    %v4171 = vld [vmem:[#allocation7 + $0x3cf8] sm:$0xff]
    %v4172 = vld [vmem:[#allocation7 + $0x3d00] sm:$0xff]
    %v4173 = vld [vmem:[#allocation7 + $0x3d08] sm:$0xff]
    %v4174 = vld [vmem:[#allocation7 + $0x3d10] sm:$0xff]
    %v4175 = vld [vmem:[#allocation7 + $0x3d18] sm:$0xff]
    %v4176 = vld [vmem:[#allocation7 + $0x3d20] sm:$0xff]
    %v4177 = vld [vmem:[#allocation7 + $0x3d28] sm:$0xff]
    %v4178 = vld [vmem:[#allocation7 + $0x3d30] sm:$0xff]
    %v4179 = vld [vmem:[#allocation7 + $0x3d38] sm:$0xff]
    %v4180 = vld [vmem:[#allocation7 + $0x3d40] sm:$0xff]
    %v4181 = vld [vmem:[#allocation7 + $0x3d48] sm:$0xff]
    %v4182 = vld [vmem:[#allocation7 + $0x3d50] sm:$0xff]
    %v4183 = vld [vmem:[#allocation7 + $0x3d58] sm:$0xff]
    %v4184 = vld [vmem:[#allocation7 + $0x3d60] sm:$0xff]
    %v4185 = vld [vmem:[#allocation7 + $0x3d68] sm:$0xff]
    %v4186 = vld [vmem:[#allocation7 + $0x3d70] sm:$0xff]
    %v4187 = vld [vmem:[#allocation7 + $0x3d78] sm:$0xff]
    %v4188 = vld [vmem:[#allocation7 + $0x3d80] sm:$0xff]
    %v4189 = vld [vmem:[#allocation7 + $0x3d88] sm:$0xff]
    %v4190 = vld [vmem:[#allocation7 + $0x3d90] sm:$0xff]
    %v4191 = vld [vmem:[#allocation7 + $0x3d98] sm:$0xff]
    %v4192 = vld [vmem:[#allocation7 + $0x3da0] sm:$0xff]
    %v4193 = vld [vmem:[#allocation7 + $0x3da8] sm:$0xff]
    %v4194 = vld [vmem:[#allocation7 + $0x3db0] sm:$0xff]
    %v4195 = vld [vmem:[#allocation7 + $0x3db8] sm:$0xff]
    %v4196 = vld [vmem:[#allocation7 + $0x3dc0] sm:$0xff]
    %v4197 = vld [vmem:[#allocation7 + $0x3dc8] sm:$0xff]
    %v4198 = vld [vmem:[#allocation7 + $0x3dd0] sm:$0xff]
    %v4199 = vld [vmem:[#allocation7 + $0x3dd8] sm:$0xff]
    %v4200 = vld [vmem:[#allocation7 + $0x3de0] sm:$0xff]
    %v4201 = vld [vmem:[#allocation7 + $0x3de8] sm:$0xff]
    %v4202 = vld [vmem:[#allocation7 + $0x3df0] sm:$0xff]
    %v4203 = vld [vmem:[#allocation7 + $0x3df8] sm:$0xff]
    %v4204 = vld [vmem:[#allocation7 + $0x3e00] sm:$0xff]
    %v4205 = vld [vmem:[#allocation7 + $0x3e08] sm:$0xff]
    %v4206 = vld [vmem:[#allocation7 + $0x3e10] sm:$0xff]
    %v4207 = vld [vmem:[#allocation7 + $0x3e18] sm:$0xff]
    %v4208 = vld [vmem:[#allocation7 + $0x3e20] sm:$0xff]
    %v4209 = vld [vmem:[#allocation7 + $0x3e28] sm:$0xff]
    %v4210 = vld [vmem:[#allocation7 + $0x3e30] sm:$0xff]
    %v4211 = vld [vmem:[#allocation7 + $0x3e38] sm:$0xff]
    %v4212 = vld [vmem:[#allocation7 + $0x3e40] sm:$0xff]
    %v4213 = vld [vmem:[#allocation7 + $0x3e48] sm:$0xff]
    %v4214 = vld [vmem:[#allocation7 + $0x3e50] sm:$0xff]
    %v4215 = vld [vmem:[#allocation7 + $0x3e58] sm:$0xff]
    %v4216 = vld [vmem:[#allocation7 + $0x3e60] sm:$0xff]
    %v4217 = vld [vmem:[#allocation7 + $0x3e68] sm:$0xff]
    %v4218 = vld [vmem:[#allocation7 + $0x3e70] sm:$0xff]
    %v4219 = vld [vmem:[#allocation7 + $0x3e78] sm:$0xff]
    %v4220 = vld [vmem:[#allocation7 + $0x3e80] sm:$0xff]
    %v4221 = vld [vmem:[#allocation7 + $0x3e88] sm:$0xff]
    %v4222 = vld [vmem:[#allocation7 + $0x3e90] sm:$0xff]
    %v4223 = vld [vmem:[#allocation7 + $0x3e98] sm:$0xff]
    %v4224 = vld [vmem:[#allocation7 + $0x3ea0] sm:$0xff]
    %v4225 = vld [vmem:[#allocation7 + $0x3ea8] sm:$0xff]
    %v4226 = vld [vmem:[#allocation7 + $0x3eb0] sm:$0xff]
    %v4227 = vld [vmem:[#allocation7 + $0x3eb8] sm:$0xff]
    %v4228 = vld [vmem:[#allocation7 + $0x3ec0] sm:$0xff]
    %v4229 = vld [vmem:[#allocation7 + $0x3ec8] sm:$0xff]
    %v4230 = vld [vmem:[#allocation7 + $0x3ed0] sm:$0xff]
    %v4231 = vld [vmem:[#allocation7 + $0x3ed8] sm:$0xff]
    %v4232 = vld [vmem:[#allocation7 + $0x3ee0] sm:$0xff]
    %v4233 = vld [vmem:[#allocation7 + $0x3ee8] sm:$0xff]
    %v4234 = vld [vmem:[#allocation7 + $0x3ef0] sm:$0xff]
    %v4235 = vld [vmem:[#allocation7 + $0x3ef8] sm:$0xff]
    %v4236 = vld [vmem:[#allocation7 + $0x3f00] sm:$0xff]
    %v4237 = vld [vmem:[#allocation7 + $0x3f08] sm:$0xff]
    %v4238 = vld [vmem:[#allocation7 + $0x3f10] sm:$0xff]
    %v4239 = vld [vmem:[#allocation7 + $0x3f18] sm:$0xff]
    %v4240 = vld [vmem:[#allocation7 + $0x3f20] sm:$0xff]
    %v4241 = vld [vmem:[#allocation7 + $0x3f28] sm:$0xff]
    %v4242 = vld [vmem:[#allocation7 + $0x3f30] sm:$0xff]
    %v4243 = vld [vmem:[#allocation7 + $0x3f38] sm:$0xff]
    %v4244 = vld [vmem:[#allocation7 + $0x3f40] sm:$0xff]
    %v4245 = vld [vmem:[#allocation7 + $0x3f48] sm:$0xff]
    %v4246 = vld [vmem:[#allocation7 + $0x3f50] sm:$0xff]
    %v4247 = vld [vmem:[#allocation7 + $0x3f58] sm:$0xff]
    %v4248 = vld [vmem:[#allocation7 + $0x3f60] sm:$0xff]
    %v4249 = vld [vmem:[#allocation7 + $0x3f68] sm:$0xff]
    %v4250 = vld [vmem:[#allocation7 + $0x3f70] sm:$0xff]
    %v4251 = vld [vmem:[#allocation7 + $0x3f78] sm:$0xff]
    %v4252 = vld [vmem:[#allocation7 + $0x3f80] sm:$0xff]
    %v4253 = vld [vmem:[#allocation7 + $0x3f88] sm:$0xff]
    %v4254 = vld [vmem:[#allocation7 + $0x3f90] sm:$0xff]
    %v4255 = vld [vmem:[#allocation7 + $0x3f98] sm:$0xff]
    %v4256 = vld [vmem:[#allocation7 + $0x3fa0] sm:$0xff]
    %v4257 = vld [vmem:[#allocation7 + $0x3fa8] sm:$0xff]
    %v4258 = vld [vmem:[#allocation7 + $0x3fb0] sm:$0xff]
    %v4259 = vld [vmem:[#allocation7 + $0x3fb8] sm:$0xff]
    %v4260 = vld [vmem:[#allocation7 + $0x3fc0] sm:$0xff]
    %v4261 = vld [vmem:[#allocation7 + $0x3fc8] sm:$0xff]
    %v4262 = vld [vmem:[#allocation7 + $0x3fd0] sm:$0xff]
    %v4263 = vld [vmem:[#allocation7 + $0x3fd8] sm:$0xff]
    %v4264 = vld [vmem:[#allocation7 + $0x3fe0] sm:$0xff]
    %v4265 = vld [vmem:[#allocation7 + $0x3fe8] sm:$0xff]
    %v4266 = vld [vmem:[#allocation7 + $0x3ff0] sm:$0xff]
    %v4267 = vld [vmem:[#allocation7 + $0x3ff8] sm:$0xff]
    %v4268 = vld [vmem:[#allocation7 + $0x4000] sm:$0xff]
    %v4269 = vld [vmem:[#allocation7 + $0x4008] sm:$0xff]
    %v4270 = vld [vmem:[#allocation7 + $0x4010] sm:$0xff]
    %v4271 = vld [vmem:[#allocation7 + $0x4018] sm:$0xff]
    %v4272 = vld [vmem:[#allocation7 + $0x4020] sm:$0xff]
    %v4273 = vld [vmem:[#allocation7 + $0x4028] sm:$0xff]
    %v4274 = vld [vmem:[#allocation7 + $0x4030] sm:$0xff]
    %v4275 = vld [vmem:[#allocation7 + $0x4038] sm:$0xff]
    %v4276 = vld [vmem:[#allocation7 + $0x4040] sm:$0xff]
    %v4277 = vld [vmem:[#allocation7 + $0x4048] sm:$0xff]
    %v4278 = vld [vmem:[#allocation7 + $0x4050] sm:$0xff]
    %v4279 = vld [vmem:[#allocation7 + $0x4058] sm:$0xff]
    %v4280 = vld [vmem:[#allocation7 + $0x4060] sm:$0xff]
    %v4281 = vld [vmem:[#allocation7 + $0x4068] sm:$0xff]
    %v4282 = vld [vmem:[#allocation7 + $0x4070] sm:$0xff]
    %v4283 = vld [vmem:[#allocation7 + $0x4078] sm:$0xff]
    %v4284 = vld [vmem:[#allocation7 + $0x4080] sm:$0xff]
    %v4285 = vld [vmem:[#allocation7 + $0x4088] sm:$0xff]
    %v4286 = vld [vmem:[#allocation7 + $0x4090] sm:$0xff]
    %v4287 = vld [vmem:[#allocation7 + $0x4098] sm:$0xff]
    %v4288 = vld [vmem:[#allocation7 + $0x40a0] sm:$0xff]
    %v4289 = vld [vmem:[#allocation7 + $0x40a8] sm:$0xff]
    %v4290 = vld [vmem:[#allocation7 + $0x40b0] sm:$0xff]
    %v4291 = vld [vmem:[#allocation7 + $0x40b8] sm:$0xff]
    %v4292 = vld [vmem:[#allocation7 + $0x40c0] sm:$0xff]
    %v4293 = vld [vmem:[#allocation7 + $0x40c8] sm:$0xff]
    %v4294 = vld [vmem:[#allocation7 + $0x40d0] sm:$0xff]
    %v4295 = vld [vmem:[#allocation7 + $0x40d8] sm:$0xff]
    %v4296 = vld [vmem:[#allocation7 + $0x40e0] sm:$0xff]
    %v4297 = vld [vmem:[#allocation7 + $0x40e8] sm:$0xff]
    %v4298 = vld [vmem:[#allocation7 + $0x40f0] sm:$0xff]
    %v4299 = vld [vmem:[#allocation7 + $0x40f8] sm:$0xff]
    %v4300 = vld [vmem:[#allocation7 + $0x4100] sm:$0xff]
    %v4301 = vld [vmem:[#allocation7 + $0x4108] sm:$0xff]
    %v4302 = vld [vmem:[#allocation7 + $0x4110] sm:$0xff]
    %v4303 = vld [vmem:[#allocation7 + $0x4118] sm:$0xff]
    %v4304 = vld [vmem:[#allocation7 + $0x4120] sm:$0xff]
    %v4305 = vld [vmem:[#allocation7 + $0x4128] sm:$0xff]
    %v4306 = vld [vmem:[#allocation7 + $0x4130] sm:$0xff]
    %v4307 = vld [vmem:[#allocation7 + $0x4138] sm:$0xff]
    %v4308 = vld [vmem:[#allocation7 + $0x4140] sm:$0xff]
    %v4309 = vld [vmem:[#allocation7 + $0x4148] sm:$0xff]
    %v4310 = vld [vmem:[#allocation7 + $0x4150] sm:$0xff]
    %v4311 = vld [vmem:[#allocation7 + $0x4158] sm:$0xff]
    %v4312 = vld [vmem:[#allocation7 + $0x4160] sm:$0xff]
    %v4313 = vld [vmem:[#allocation7 + $0x4168] sm:$0xff]
    %v4314 = vld [vmem:[#allocation7 + $0x4170] sm:$0xff]
    %v4315 = vld [vmem:[#allocation7 + $0x4178] sm:$0xff]
    %v4316 = vld [vmem:[#allocation7 + $0x4180] sm:$0xff]
    %v4317 = vld [vmem:[#allocation7 + $0x4188] sm:$0xff]
    %v4318 = vld [vmem:[#allocation7 + $0x4190] sm:$0xff]
    %v4319 = vld [vmem:[#allocation7 + $0x4198] sm:$0xff]
    %v4320 = vld [vmem:[#allocation7 + $0x41a0] sm:$0xff]
    %v4321 = vld [vmem:[#allocation7 + $0x41a8] sm:$0xff]
    %v4322 = vld [vmem:[#allocation7 + $0x41b0] sm:$0xff]
    %v4323 = vld [vmem:[#allocation7 + $0x41b8] sm:$0xff]
    %v4324 = vld [vmem:[#allocation7 + $0x41c0] sm:$0xff]
    %v4325 = vld [vmem:[#allocation7 + $0x41c8] sm:$0xff]
    %v4326 = vld [vmem:[#allocation7 + $0x41d0] sm:$0xff]
    %v4327 = vld [vmem:[#allocation7 + $0x41d8] sm:$0xff]
    %v4328 = vld [vmem:[#allocation7 + $0x41e0] sm:$0xff]
    %v4329 = vld [vmem:[#allocation7 + $0x41e8] sm:$0xff]
    %v4330 = vld [vmem:[#allocation7 + $0x41f0] sm:$0xff]
    %v4331 = vld [vmem:[#allocation7 + $0x41f8] sm:$0xff]
    %v4332 = vld [vmem:[#allocation7 + $0x4200] sm:$0xff]
    %v4333 = vld [vmem:[#allocation7 + $0x4208] sm:$0xff]
    %v4334 = vld [vmem:[#allocation7 + $0x4210] sm:$0xff]
    %v4335 = vld [vmem:[#allocation7 + $0x4218] sm:$0xff]
    %v4336 = vld [vmem:[#allocation7 + $0x4220] sm:$0xff]
    %v4337 = vld [vmem:[#allocation7 + $0x4228] sm:$0xff]
    %v4338 = vld [vmem:[#allocation7 + $0x4230] sm:$0xff]
    %v4339 = vld [vmem:[#allocation7 + $0x4238] sm:$0xff]
    %v4340 = vld [vmem:[#allocation7 + $0x4240] sm:$0xff]
    %v4341 = vld [vmem:[#allocation7 + $0x4248] sm:$0xff]
    %v4342 = vld [vmem:[#allocation7 + $0x4250] sm:$0xff]
    %v4343 = vld [vmem:[#allocation7 + $0x4258] sm:$0xff]
    %v4344 = vld [vmem:[#allocation7 + $0x4260] sm:$0xff]
    %v4345 = vld [vmem:[#allocation7 + $0x4268] sm:$0xff]
    %v4346 = vld [vmem:[#allocation7 + $0x4270] sm:$0xff]
    %v4347 = vld [vmem:[#allocation7 + $0x4278] sm:$0xff]
    %v4348 = vld [vmem:[#allocation7 + $0x4280] sm:$0xff]
    %v4349 = vld [vmem:[#allocation7 + $0x4288] sm:$0xff]
    %v4350 = vld [vmem:[#allocation7 + $0x4290] sm:$0xff]
    %v4351 = vld [vmem:[#allocation7 + $0x4298] sm:$0xff]
    %v4352 = vld [vmem:[#allocation7 + $0x42a0] sm:$0xff]
    %v4353 = vld [vmem:[#allocation7 + $0x42a8] sm:$0xff]
    %v4354 = vld [vmem:[#allocation7 + $0x42b0] sm:$0xff]
    %v4355 = vld [vmem:[#allocation7 + $0x42b8] sm:$0xff]
    %v4356 = vld [vmem:[#allocation7 + $0x42c0] sm:$0xff]
    %v4357 = vld [vmem:[#allocation7 + $0x42c8] sm:$0xff]
    %v4358 = vld [vmem:[#allocation7 + $0x42d0] sm:$0xff]
    %v4359 = vld [vmem:[#allocation7 + $0x42d8] sm:$0xff]
    %v4360 = vld [vmem:[#allocation7 + $0x42e0] sm:$0xff]
    %v4361 = vld [vmem:[#allocation7 + $0x42e8] sm:$0xff]
    %v4362 = vld [vmem:[#allocation7 + $0x42f0] sm:$0xff]
    %v4363 = vld [vmem:[#allocation7 + $0x42f8] sm:$0xff]
    %v4364 = vld [vmem:[#allocation7 + $0x4300] sm:$0xff]
    %v4365 = vld [vmem:[#allocation7 + $0x4308] sm:$0xff]
    %v4366 = vld [vmem:[#allocation7 + $0x4310] sm:$0xff]
    %v4367 = vld [vmem:[#allocation7 + $0x4318] sm:$0xff]
    %v4368 = vld [vmem:[#allocation7 + $0x4320] sm:$0xff]
    %v4369 = vld [vmem:[#allocation7 + $0x4328] sm:$0xff]
    %v4370 = vld [vmem:[#allocation7 + $0x4330] sm:$0xff]
    %v4371 = vld [vmem:[#allocation7 + $0x4338] sm:$0xff]
    %v4372 = vld [vmem:[#allocation7 + $0x4340] sm:$0xff]
    %v4373 = vld [vmem:[#allocation7 + $0x4348] sm:$0xff]
    %v4374 = vld [vmem:[#allocation7 + $0x4350] sm:$0xff]
    %v4375 = vld [vmem:[#allocation7 + $0x4358] sm:$0xff]
    %v4376 = vld [vmem:[#allocation7 + $0x4360] sm:$0xff]
    %v4377 = vld [vmem:[#allocation7 + $0x4368] sm:$0xff]
    %v4378 = vld [vmem:[#allocation7 + $0x4370] sm:$0xff]
    %v4379 = vld [vmem:[#allocation7 + $0x4378] sm:$0xff]
    %v4380 = vld [vmem:[#allocation7 + $0x4380] sm:$0xff]
    %v4381 = vld [vmem:[#allocation7 + $0x4388] sm:$0xff]
    %v4382 = vld [vmem:[#allocation7 + $0x4390] sm:$0xff]
    %v4383 = vld [vmem:[#allocation7 + $0x4398] sm:$0xff]
    %v4384 = vld [vmem:[#allocation7 + $0x43a0] sm:$0xff]
    %v4385 = vld [vmem:[#allocation7 + $0x43a8] sm:$0xff]
    %v4386 = vld [vmem:[#allocation7 + $0x43b0] sm:$0xff]
    %v4387 = vld [vmem:[#allocation7 + $0x43b8] sm:$0xff]
    %v4388 = vld [vmem:[#allocation7 + $0x43c0] sm:$0xff]
    %v4389 = vld [vmem:[#allocation7 + $0x43c8] sm:$0xff]
    %v4390 = vld [vmem:[#allocation7 + $0x43d0] sm:$0xff]
    %v4391 = vld [vmem:[#allocation7 + $0x43d8] sm:$0xff]
    %v4392 = vld [vmem:[#allocation7 + $0x43e0] sm:$0xff]
    %v4393 = vld [vmem:[#allocation7 + $0x43e8] sm:$0xff]
    %v4394 = vld [vmem:[#allocation7 + $0x43f0] sm:$0xff]
    %v4395 = vld [vmem:[#allocation7 + $0x43f8] sm:$0xff]
    %v4396 = vld [vmem:[#allocation7 + $0x4400] sm:$0xff]
    %v4397 = vld [vmem:[#allocation7 + $0x4408] sm:$0xff]
    %v4398 = vld [vmem:[#allocation7 + $0x4410] sm:$0xff]
    %v4399 = vld [vmem:[#allocation7 + $0x4418] sm:$0xff]
    %v4400 = vld [vmem:[#allocation7 + $0x4420] sm:$0xff]
    %v4401 = vld [vmem:[#allocation7 + $0x4428] sm:$0xff]
    %v4402 = vld [vmem:[#allocation7 + $0x4430] sm:$0xff]
    %v4403 = vld [vmem:[#allocation7 + $0x4438] sm:$0xff]
    %v4404 = vld [vmem:[#allocation7 + $0x4440] sm:$0xff]
    %v4405 = vld [vmem:[#allocation7 + $0x4448] sm:$0xff]
    %v4406 = vld [vmem:[#allocation7 + $0x4450] sm:$0xff]
    %v4407 = vld [vmem:[#allocation7 + $0x4458] sm:$0xff]
    %v4408 = vld [vmem:[#allocation7 + $0x4460] sm:$0xff]
    %v4409 = vld [vmem:[#allocation7 + $0x4468] sm:$0xff]
    %v4410 = vld [vmem:[#allocation7 + $0x4470] sm:$0xff]
    %v4411 = vld [vmem:[#allocation7 + $0x4478] sm:$0xff]
    %v4412 = vld [vmem:[#allocation7 + $0x4480] sm:$0xff]
    %v4413 = vld [vmem:[#allocation7 + $0x4488] sm:$0xff]
    %v4414 = vld [vmem:[#allocation7 + $0x4490] sm:$0xff]
    %v4415 = vld [vmem:[#allocation7 + $0x4498] sm:$0xff]
    %v4416 = vld [vmem:[#allocation7 + $0x44a0] sm:$0xff]
    %v4417 = vld [vmem:[#allocation7 + $0x44a8] sm:$0xff]
    %v4418 = vld [vmem:[#allocation7 + $0x44b0] sm:$0xff]
    %v4419 = vld [vmem:[#allocation7 + $0x44b8] sm:$0xff]
    %v4420 = vld [vmem:[#allocation7 + $0x44c0] sm:$0xff]
    %v4421 = vld [vmem:[#allocation7 + $0x44c8] sm:$0xff]
    %v4422 = vld [vmem:[#allocation7 + $0x44d0] sm:$0xff]
    %v4423 = vld [vmem:[#allocation7 + $0x44d8] sm:$0xff]
    %v4424 = vld [vmem:[#allocation7 + $0x44e0] sm:$0xff]
    %v4425 = vld [vmem:[#allocation7 + $0x44e8] sm:$0xff]
    %v4426 = vld [vmem:[#allocation7 + $0x44f0] sm:$0xff]
    %v4427 = vld [vmem:[#allocation7 + $0x44f8] sm:$0xff]
    %v4428 = vld [vmem:[#allocation7 + $0x4500] sm:$0xff]
    %v4429 = vld [vmem:[#allocation7 + $0x4508] sm:$0xff]
    %v4430 = vld [vmem:[#allocation7 + $0x4510] sm:$0xff]
    %v4431 = vld [vmem:[#allocation7 + $0x4518] sm:$0xff]
    %v4432 = vld [vmem:[#allocation7 + $0x4520] sm:$0xff]
    %v4433 = vld [vmem:[#allocation7 + $0x4528] sm:$0xff]
    %v4434 = vld [vmem:[#allocation7 + $0x4530] sm:$0xff]
    %v4435 = vld [vmem:[#allocation7 + $0x4538] sm:$0xff]
    %v4436 = vld [vmem:[#allocation7 + $0x4540] sm:$0xff]
    %v4437 = vld [vmem:[#allocation7 + $0x4548] sm:$0xff]
    %v4438 = vld [vmem:[#allocation7 + $0x4550] sm:$0xff]
    %v4439 = vld [vmem:[#allocation7 + $0x4558] sm:$0xff]
    %v4440 = vld [vmem:[#allocation7 + $0x4560] sm:$0xff]
    %v4441 = vld [vmem:[#allocation7 + $0x4568] sm:$0xff]
    %v4442 = vld [vmem:[#allocation7 + $0x4570] sm:$0xff]
    %v4443 = vld [vmem:[#allocation7 + $0x4578] sm:$0xff]
    %v4444 = vld [vmem:[#allocation7 + $0x4580] sm:$0xff]
    %v4445 = vld [vmem:[#allocation7 + $0x4588] sm:$0xff]
    %v4446 = vld [vmem:[#allocation7 + $0x4590] sm:$0xff]
    %v4447 = vld [vmem:[#allocation7 + $0x4598] sm:$0xff]
    %v4448 = vld [vmem:[#allocation7 + $0x45a0] sm:$0xff]
    %v4449 = vld [vmem:[#allocation7 + $0x45a8] sm:$0xff]
    %v4450 = vld [vmem:[#allocation7 + $0x45b0] sm:$0xff]
    %v4451 = vld [vmem:[#allocation7 + $0x45b8] sm:$0xff]
    %v4452 = vld [vmem:[#allocation7 + $0x45c0] sm:$0xff]
    %v4453 = vld [vmem:[#allocation7 + $0x45c8] sm:$0xff]
    %v4454 = vld [vmem:[#allocation7 + $0x45d0] sm:$0xff]
    %v4455 = vld [vmem:[#allocation7 + $0x45d8] sm:$0xff]
    %v4456 = vld [vmem:[#allocation7 + $0x45e0] sm:$0xff]
    %v4457 = vld [vmem:[#allocation7 + $0x45e8] sm:$0xff]
    %v4458 = vld [vmem:[#allocation7 + $0x45f0] sm:$0xff]
    %v4459 = vld [vmem:[#allocation7 + $0x45f8] sm:$0xff]
    %v4460 = vld [vmem:[#allocation7 + $0x4600] sm:$0xff]
    %v4461 = vld [vmem:[#allocation7 + $0x4608] sm:$0xff]
    %v4462 = vld [vmem:[#allocation7 + $0x4610] sm:$0xff]
    %v4463 = vld [vmem:[#allocation7 + $0x4618] sm:$0xff]
    %v4464 = vld [vmem:[#allocation7 + $0x4620] sm:$0xff]
    %v4465 = vld [vmem:[#allocation7 + $0x4628] sm:$0xff]
    %v4466 = vld [vmem:[#allocation7 + $0x4630] sm:$0xff]
    %v4467 = vld [vmem:[#allocation7 + $0x4638] sm:$0xff]
    %v4468 = vld [vmem:[#allocation7 + $0x4640] sm:$0xff]
    %v4469 = vld [vmem:[#allocation7 + $0x4648] sm:$0xff]
    %v4470 = vld [vmem:[#allocation7 + $0x4650] sm:$0xff]
    %v4471 = vld [vmem:[#allocation7 + $0x4658] sm:$0xff]
    %v4472 = vld [vmem:[#allocation7 + $0x4660] sm:$0xff]
    %v4473 = vld [vmem:[#allocation7 + $0x4668] sm:$0xff]
    %v4474 = vld [vmem:[#allocation7 + $0x4670] sm:$0xff]
    %v4475 = vld [vmem:[#allocation7 + $0x4678] sm:$0xff]
    %v4476 = vld [vmem:[#allocation7 + $0x4680] sm:$0xff]
    %v4477 = vld [vmem:[#allocation7 + $0x4688] sm:$0xff]
    %v4478 = vld [vmem:[#allocation7 + $0x4690] sm:$0xff]
    %v4479 = vld [vmem:[#allocation7 + $0x4698] sm:$0xff]
    %v4480 = vld [vmem:[#allocation7 + $0x46a0] sm:$0xff]
    %v4481 = vld [vmem:[#allocation7 + $0x46a8] sm:$0xff]
    %v4482 = vld [vmem:[#allocation7 + $0x46b0] sm:$0xff]
    %v4483 = vld [vmem:[#allocation7 + $0x46b8] sm:$0xff]
    %v4484 = vld [vmem:[#allocation7 + $0x46c0] sm:$0xff]
    %v4485 = vld [vmem:[#allocation7 + $0x46c8] sm:$0xff]
    %v4486 = vld [vmem:[#allocation7 + $0x46d0] sm:$0xff]
    %v4487 = vld [vmem:[#allocation7 + $0x46d8] sm:$0xff]
    %v4488 = vld [vmem:[#allocation7 + $0x46e0] sm:$0xff]
    %v4489 = vld [vmem:[#allocation7 + $0x46e8] sm:$0xff]
    %v4490 = vld [vmem:[#allocation7 + $0x46f0] sm:$0xff]
    %v4491 = vld [vmem:[#allocation7 + $0x46f8] sm:$0xff]
    %v4492 = vld [vmem:[#allocation7 + $0x4700] sm:$0xff]
    %v4493 = vld [vmem:[#allocation7 + $0x4708] sm:$0xff]
    %v4494 = vld [vmem:[#allocation7 + $0x4710] sm:$0xff]
    %v4495 = vld [vmem:[#allocation7 + $0x4718] sm:$0xff]
    %v4496 = vld [vmem:[#allocation7 + $0x4720] sm:$0xff]
    %v4497 = vld [vmem:[#allocation7 + $0x4728] sm:$0xff]
    %v4498 = vld [vmem:[#allocation7 + $0x4730] sm:$0xff]
    %v4499 = vld [vmem:[#allocation7 + $0x4738] sm:$0xff]
    %v4500 = vld [vmem:[#allocation7 + $0x4740] sm:$0xff]
    %v4501 = vld [vmem:[#allocation7 + $0x4748] sm:$0xff]
    %v4502 = vld [vmem:[#allocation7 + $0x4750] sm:$0xff]
    %v4503 = vld [vmem:[#allocation7 + $0x4758] sm:$0xff]
    %v4504 = vld [vmem:[#allocation7 + $0x4760] sm:$0xff]
    %v4505 = vld [vmem:[#allocation7 + $0x4768] sm:$0xff]
    %v4506 = vld [vmem:[#allocation7 + $0x4770] sm:$0xff]
    %v4507 = vld [vmem:[#allocation7 + $0x4778] sm:$0xff]
    %v4508 = vld [vmem:[#allocation7 + $0x4780] sm:$0xff]
    %v4509 = vld [vmem:[#allocation7 + $0x4788] sm:$0xff]
    %v4510 = vld [vmem:[#allocation7 + $0x4790] sm:$0xff]
    %v4511 = vld [vmem:[#allocation7 + $0x4798] sm:$0xff]
    %v4512 = vld [vmem:[#allocation7 + $0x47a0] sm:$0xff]
    %v4513 = vld [vmem:[#allocation7 + $0x47a8] sm:$0xff]
    %v4514 = vld [vmem:[#allocation7 + $0x47b0] sm:$0xff]
    %v4515 = vld [vmem:[#allocation7 + $0x47b8] sm:$0xff]
    %v4516 = vld [vmem:[#allocation7 + $0x47c0] sm:$0xff]
    %v4517 = vld [vmem:[#allocation7 + $0x47c8] sm:$0xff]
    %v4518 = vld [vmem:[#allocation7 + $0x47d0] sm:$0xff]
    %v4519 = vld [vmem:[#allocation7 + $0x47d8] sm:$0xff]
    %v4520 = vld [vmem:[#allocation7 + $0x47e0] sm:$0xff]
    %v4521 = vld [vmem:[#allocation7 + $0x47e8] sm:$0xff]
    %v4522 = vld [vmem:[#allocation7 + $0x47f0] sm:$0xff]
    %v4523 = vld [vmem:[#allocation7 + $0x47f8] sm:$0xff]
    %v4524 = vld [vmem:[#allocation8] sm:$0xff]
    %v4525 = vld [vmem:[#allocation8 + $0x8] sm:$0x1]
    %v4528 = vlaneseq
    %v4529 = vshrl.u32 %v4528, 7
    %v4530 = vsub.s32 0, %v4529
    %v4531 = vrot.slane %v4524, %v4530
    %v4532 = vlaneseq
    %v4533 = vshrl.u32 %v4532, 7
    %v4534 = vsub.s32 1, %v4533
    %v4535 = vrot.slane %v4524, %v4534
    %v4536 = vlaneseq
    %v4537 = vshrl.u32 %v4536, 7
    %v4538 = vsub.s32 2, %v4537
    %v4539 = vrot.slane %v4524, %v4538
    %v4540 = vlaneseq
    %v4541 = vshrl.u32 %v4540, 7
    %v4542 = vsub.s32 3, %v4541
    %v4543 = vrot.slane %v4524, %v4542
    %v4544 = vlaneseq
    %v4545 = vshrl.u32 %v4544, 7
    %v4546 = vsub.s32 4, %v4545
    %v4547 = vrot.slane %v4524, %v4546
    %v4548 = vlaneseq
    %v4549 = vshrl.u32 %v4548, 7
    %v4550 = vsub.s32 5, %v4549
    %v4551 = vrot.slane %v4524, %v4550
    %v4552 = vlaneseq
    %v4553 = vshrl.u32 %v4552, 7
    %v4554 = vsub.s32 6, %v4553
    %v4555 = vrot.slane %v4524, %v4554
    %v4556 = vlaneseq
    %v4557 = vshrl.u32 %v4556, 7
    %v4558 = vsub.s32 7, %v4557
    %v4559 = vrot.slane %v4524, %v4558
    %v4560 = vlaneseq
    %v4561 = vshrl.u32 %v4560, 7
    %v4562 = vsub.s32 0, %v4561
    %v4563 = vrot.slane %v4525, %v4562
    %4573 = vmatprep.subr.mxu0 %v2221
    %4574 = vmatpush1.msra.mxu0 %v2220
    %4575 = vmatprep.subr.mxu0 %v2230
    %4576 = vmatpush1.msra.mxu0 %v2229
    %4577 = vmatprep.subr.mxu0 %v2239
    %4578 = vmatpush1.msra.mxu0 %v2238
    %4579 = vmatprep.subr.mxu0 %v2248
    %4580 = vmatpush1.msra.mxu0 %v2247
    %4581 = vmatprep.subr.mxu0 %v2257
    %4582 = vmatpush1.msra.mxu0 %v2256
    %4583 = vmatprep.subr.mxu0 %v2266
    %4584 = vmatpush1.msra.mxu0 %v2265
    %4585 = vmatprep.subr.mxu0 %v2275
    %4586 = vmatpush1.msra.mxu0 %v2274
    %4587 = vmatprep.subr.mxu0 %v2284
    %4588 = vmatpush1.msra.mxu0 %v2283
    %4589 = vmatprep.subr.mxu0 %v2293
    %4590 = vmatpush1.msra.mxu0 %v2292
    %4591 = vmatprep.subr.mxu0 %v2302
    %4592 = vmatpush1.msra.mxu0 %v2301
    %4593 = vmatprep.subr.mxu0 %v2311
    %4594 = vmatpush1.msra.mxu0 %v2310
    %4595 = vmatprep.subr.mxu0 %v2320
    %4596 = vmatpush1.msra.mxu0 %v2319
    %4597 = vmatprep.subr.mxu0 %v2329
    %4598 = vmatpush1.msra.mxu0 %v2328
    %4599 = vmatprep.subr.mxu0 %v2338
    %4600 = vmatpush1.msra.mxu0 %v2337
    %4601 = vmatprep.subr.mxu0 %v2347
    %4602 = vmatpush1.msra.mxu0 %v2346
    %4603 = vmatprep.subr.mxu0 %v2356
    %4604 = vmatpush1.msra.mxu0 %v2355
    %4605 = vmatprep.subr.mxu0 %v2365
    %4606 = vmatpush1.msra.mxu0 %v2364
    %4607 = vmatprep.subr.mxu0 %v2374
    %4608 = vmatpush1.msra.mxu0 %v2373
    %4609 = vmatprep.subr.mxu0 %v2383
    %4610 = vmatpush1.msra.mxu0 %v2382
    %4611 = vmatprep.subr.mxu0 %v2392
    %4612 = vmatpush1.msra.mxu0 %v2391
    %4613 = vmatprep.subr.mxu0 %v2401
    %4614 = vmatpush1.msra.mxu0 %v2400
    %4615 = vmatprep.subr.mxu0 %v2410
    %4616 = vmatpush1.msra.mxu0 %v2409
    %4617 = vmatprep.subr.mxu0 %v2419
    %4618 = vmatpush1.msra.mxu0 %v2418
    %4619 = vmatprep.subr.mxu0 %v2428
    %4620 = vmatpush1.msra.mxu0 %v2427
    %4621 = vmatprep.subr.mxu0 %v2437
    %4622 = vmatpush1.msra.mxu0 %v2436
    %4623 = vmatprep.subr.mxu0 %v2446
    %4624 = vmatpush1.msra.mxu0 %v2445
    %4625 = vmatprep.subr.mxu0 %v2455
    %4626 = vmatpush1.msra.mxu0 %v2454
    %4627 = vmatprep.subr.mxu0 %v2464
    %4628 = vmatpush1.msra.mxu0 %v2463
    %4629 = vmatprep.subr.mxu0 %v2473
    %4630 = vmatpush1.msra.mxu0 %v2472
    %4631 = vmatprep.subr.mxu0 %v2482
    %4632 = vmatpush1.msra.mxu0 %v2481
    %4633 = vmatprep.subr.mxu0 %v2491
    %4634 = vmatpush1.msra.mxu0 %v2490
    %4635 = vmatprep.subr.mxu0 %v2500
    %4636 = vmatpush1.msra.mxu0 %v2499
    %4637 = vmatprep.mubr.f32.mxu0 %v1224
    %4638 = vmatmul.mubr.f32.gmra.mrb[0].mxu0 %v1222
    %v4639 = vpop.f32.mrb[0].mxu0
    %v4640 = vadd.f32 %v4531, %v4639
    %v4641 = vpop.f32.mrb[0].mxu0
    %v4642 = vadd.f32 %v4535, %v4641
    %4643 = vdwg.mxu0
    %4644 = vmatprep.subr.mxu0 %v2509
    %4645 = vmatpush1.msra.mxu0 %v2508
    %4646 = vmatprep.subr.mxu0 %v2518
    %4647 = vmatpush1.msra.mxu0 %v2517
    %4648 = vmatprep.subr.mxu0 %v2527
    %4649 = vmatpush1.msra.mxu0 %v2526
    %4650 = vmatprep.subr.mxu0 %v2536
    %4651 = vmatpush1.msra.mxu0 %v2535
    %4652 = vmatprep.subr.mxu0 %v2545
    %4653 = vmatpush1.msra.mxu0 %v2544
    %4654 = vmatprep.subr.mxu0 %v2554
    %4655 = vmatpush1.msra.mxu0 %v2553
    %4656 = vmatprep.subr.mxu0 %v2563
    %4657 = vmatpush1.msra.mxu0 %v2562
    %4658 = vmatprep.subr.mxu0 %v2572
    %4659 = vmatpush1.msra.mxu0 %v2571
    %4660 = vmatprep.subr.mxu0 %v2581
    %4661 = vmatpush1.msra.mxu0 %v2580
    %4662 = vmatprep.subr.mxu0 %v2590
    %4663 = vmatpush1.msra.mxu0 %v2589
    %4664 = vmatprep.subr.mxu0 %v2599
    %4665 = vmatpush1.msra.mxu0 %v2598
    %4666 = vmatprep.subr.mxu0 %v2608
    %4667 = vmatpush1.msra.mxu0 %v2607
    %4668 = vmatprep.subr.mxu0 %v2617
    %4669 = vmatpush1.msra.mxu0 %v2616
    %4670 = vmatprep.subr.mxu0 %v2626
    %4671 = vmatpush1.msra.mxu0 %v2625
    %4672 = vmatprep.subr.mxu0 %v2635
    %4673 = vmatpush1.msra.mxu0 %v2634
    %4674 = vmatprep.subr.mxu0 %v2644
    %4675 = vmatpush1.msra.mxu0 %v2643
    %4676 = vmatprep.subr.mxu0 %v2653
    %4677 = vmatpush1.msra.mxu0 %v2652
    %4678 = vmatprep.subr.mxu0 %v2662
    %4679 = vmatpush1.msra.mxu0 %v2661
    %4680 = vmatprep.subr.mxu0 %v2671
    %4681 = vmatpush1.msra.mxu0 %v2670
    %4682 = vmatprep.subr.mxu0 %v2680
    %4683 = vmatpush1.msra.mxu0 %v2679
    %4684 = vmatprep.subr.mxu0 %v2689
    %4685 = vmatpush1.msra.mxu0 %v2688
    %4686 = vmatprep.subr.mxu0 %v2698
    %4687 = vmatpush1.msra.mxu0 %v2697
    %4688 = vmatprep.subr.mxu0 %v2707
    %4689 = vmatpush1.msra.mxu0 %v2706
    %4690 = vmatprep.subr.mxu0 %v2716
    %4691 = vmatpush1.msra.mxu0 %v2715
    %4692 = vmatprep.subr.mxu0 %v2725
    %4693 = vmatpush1.msra.mxu0 %v2724
    %4694 = vmatprep.subr.mxu0 %v2734
    %4695 = vmatpush1.msra.mxu0 %v2733
    %4696 = vmatprep.subr.mxu0 %v2743
    %4697 = vmatpush1.msra.mxu0 %v2742
    %4698 = vmatprep.subr.mxu0 %v2752
    %4699 = vmatpush1.msra.mxu0 %v2751
    %4700 = vmatprep.subr.mxu0 %v2761
    %4701 = vmatpush1.msra.mxu0 %v2760
    %4702 = vmatprep.subr.mxu0 %v2770
    %4703 = vmatpush1.msra.mxu0 %v2769
    %4704 = vmatprep.subr.mxu0 %v2779
    %4705 = vmatpush1.msra.mxu0 %v2778
    %4706 = vmatprep.subr.mxu0 %v2788
    %4707 = vmatpush1.msra.mxu0 %v2787
    %4708 = vmatprep.mubr.f32.mxu0 %v1366
    %4709 = vmatmul.mubr.f32.gmra.mrb[0].mxu0 %v1364
    %v4710 = vpop.f32.mrb[0].mxu0
    %v4711 = vadd.f32 %v4640, %v4710
    %v4712 = vpop.f32.mrb[0].mxu0
    %v4713 = vadd.f32 %v4642, %v4712
    %4714 = vdwg.mxu0
    %4715 = vmatprep.subr.mxu0 %v2797
    %4716 = vmatpush1.msra.mxu0 %v2796
    %4717 = vmatprep.subr.mxu0 %v2806
    %4718 = vmatpush1.msra.mxu0 %v2805
    %4719 = vmatprep.subr.mxu0 %v2815
    %4720 = vmatpush1.msra.mxu0 %v2814
    %4721 = vmatprep.subr.mxu0 %v2824
    %4722 = vmatpush1.msra.mxu0 %v2823
    %4723 = vmatprep.subr.mxu0 %v2833
    %4724 = vmatpush1.msra.mxu0 %v2832
    %4725 = vmatprep.subr.mxu0 %v2842
    %4726 = vmatpush1.msra.mxu0 %v2841
    %4727 = vmatprep.subr.mxu0 %v2851
    %4728 = vmatpush1.msra.mxu0 %v2850
    %4729 = vmatprep.subr.mxu0 %v2860
    %4730 = vmatpush1.msra.mxu0 %v2859
    %4731 = vmatprep.subr.mxu0 %v2869
    %4732 = vmatpush1.msra.mxu0 %v2868
    %4733 = vmatprep.subr.mxu0 %v2878
    %4734 = vmatpush1.msra.mxu0 %v2877
    %4735 = vmatprep.subr.mxu0 %v2887
    %4736 = vmatpush1.msra.mxu0 %v2886
    %4737 = vmatprep.subr.mxu0 %v2896
    %4738 = vmatpush1.msra.mxu0 %v2895
    %4739 = vmatprep.subr.mxu0 %v2905
    %4740 = vmatpush1.msra.mxu0 %v2904
    %4741 = vmatprep.subr.mxu0 %v2914
    %4742 = vmatpush1.msra.mxu0 %v2913
    %4743 = vmatprep.subr.mxu0 %v2923
    %4744 = vmatpush1.msra.mxu0 %v2922
    %4745 = vmatprep.subr.mxu0 %v2932
    %4746 = vmatpush1.msra.mxu0 %v2931
    %4747 = vmatprep.subr.mxu0 %v2941
    %4748 = vmatpush1.msra.mxu0 %v2940
    %4749 = vmatprep.subr.mxu0 %v2950
    %4750 = vmatpush1.msra.mxu0 %v2949
    %4751 = vmatprep.subr.mxu0 %v2959
    %4752 = vmatpush1.msra.mxu0 %v2958
    %4753 = vmatprep.subr.mxu0 %v2968
    %4754 = vmatpush1.msra.mxu0 %v2967
    %4755 = vmatprep.subr.mxu0 %v2977
    %4756 = vmatpush1.msra.mxu0 %v2976
    %4757 = vmatprep.subr.mxu0 %v2986
    %4758 = vmatpush1.msra.mxu0 %v2985
    %4759 = vmatprep.subr.mxu0 %v2995
    %4760 = vmatpush1.msra.mxu0 %v2994
    %4761 = vmatprep.subr.mxu0 %v3004
    %4762 = vmatpush1.msra.mxu0 %v3003
    %4763 = vmatprep.subr.mxu0 %v3013
    %4764 = vmatpush1.msra.mxu0 %v3012
    %4765 = vmatprep.subr.mxu0 %v3022
    %4766 = vmatpush1.msra.mxu0 %v3021
    %4767 = vmatprep.subr.mxu0 %v3031
    %4768 = vmatpush1.msra.mxu0 %v3030
    %4769 = vmatprep.subr.mxu0 %v3040
    %4770 = vmatpush1.msra.mxu0 %v3039
    %4771 = vmatprep.subr.mxu0 %v3049
    %4772 = vmatpush1.msra.mxu0 %v3048
    %4773 = vmatprep.subr.mxu0 %v3058
    %4774 = vmatpush1.msra.mxu0 %v3057
    %4775 = vmatprep.subr.mxu0 %v3067
    %4776 = vmatpush1.msra.mxu0 %v3066
    %4777 = vmatprep.subr.mxu0 %v3076
    %4778 = vmatpush1.msra.mxu0 %v3075
    %4779 = vmatprep.mubr.f32.mxu0 %v1508
    %4780 = vmatmul.mubr.f32.gmra.mrb[0].mxu0 %v1506
    %v4781 = vpop.f32.mrb[0].mxu0
    %v4782 = vadd.f32 %v4711, %v4781
    %v4783 = vpop.f32.mrb[0].mxu0
    %v4784 = vadd.f32 %v4713, %v4783
    %4785 = vdwg.mxu0
    %4786 = vmatprep.subr.mxu0 %v3085
    %4787 = vmatpush1.msra.mxu0 %v3084
    %4788 = vmatprep.subr.mxu0 %v3094
    %4789 = vmatpush1.msra.mxu0 %v3093
    %4790 = vmatprep.subr.mxu0 %v3103
    %4791 = vmatpush1.msra.mxu0 %v3102
    %4792 = vmatprep.subr.mxu0 %v3112
    %4793 = vmatpush1.msra.mxu0 %v3111
    %4794 = vmatprep.subr.mxu0 %v3121
    %4795 = vmatpush1.msra.mxu0 %v3120
    %4796 = vmatprep.subr.mxu0 %v3130
    %4797 = vmatpush1.msra.mxu0 %v3129
    %4798 = vmatprep.subr.mxu0 %v3139
    %4799 = vmatpush1.msra.mxu0 %v3138
    %4800 = vmatprep.subr.mxu0 %v3148
    %4801 = vmatpush1.msra.mxu0 %v3147
    %4802 = vmatprep.subr.mxu0 %v3157
    %4803 = vmatpush1.msra.mxu0 %v3156
    %4804 = vmatprep.subr.mxu0 %v3166
    %4805 = vmatpush1.msra.mxu0 %v3165
    %4806 = vmatprep.subr.mxu0 %v3175
    %4807 = vmatpush1.msra.mxu0 %v3174
    %4808 = vmatprep.subr.mxu0 %v3184
    %4809 = vmatpush1.msra.mxu0 %v3183
    %4810 = vmatprep.subr.mxu0 %v3193
    %4811 = vmatpush1.msra.mxu0 %v3192
    %4812 = vmatprep.subr.mxu0 %v3202
    %4813 = vmatpush1.msra.mxu0 %v3201
    %4814 = vmatprep.subr.mxu0 %v3211
    %4815 = vmatpush1.msra.mxu0 %v3210
    %4816 = vmatprep.subr.mxu0 %v3220
    %4817 = vmatpush1.msra.mxu0 %v3219
    %4818 = vmatprep.subr.mxu0 %v3229
    %4819 = vmatpush1.msra.mxu0 %v3228
    %4820 = vmatprep.subr.mxu0 %v3238
    %4821 = vmatpush1.msra.mxu0 %v3237
    %4822 = vmatprep.subr.mxu0 %v3247
    %4823 = vmatpush1.msra.mxu0 %v3246
    %4824 = vmatprep.subr.mxu0 %v3256
    %4825 = vmatpush1.msra.mxu0 %v3255
    %4826 = vmatprep.subr.mxu0 %v3265
    %4827 = vmatpush1.msra.mxu0 %v3264
    %4828 = vmatprep.subr.mxu0 %v3274
    %4829 = vmatpush1.msra.mxu0 %v3273
    %4830 = vmatprep.subr.mxu0 %v3283
    %4831 = vmatpush1.msra.mxu0 %v3282
    %4832 = vmatprep.subr.mxu0 %v3292
    %4833 = vmatpush1.msra.mxu0 %v3291
    %4834 = vmatprep.subr.mxu0 %v3301
    %4835 = vmatpush1.msra.mxu0 %v3300
    %4836 = vmatprep.subr.mxu0 %v3310
    %4837 = vmatpush1.msra.mxu0 %v3309
    %4838 = vmatprep.subr.mxu0 %v3319
    %4839 = vmatpush1.msra.mxu0 %v3318
    %4840 = vmatprep.subr.mxu0 %v3328
    %4841 = vmatpush1.msra.mxu0 %v3327
    %4842 = vmatprep.subr.mxu0 %v3337
    %4843 = vmatpush1.msra.mxu0 %v3336
    %4844 = vmatprep.subr.mxu0 %v3346
    %4845 = vmatpush1.msra.mxu0 %v3345
    %4846 = vmatprep.subr.mxu0 %v3355
    %4847 = vmatpush1.msra.mxu0 %v3354
    %4848 = vmatprep.subr.mxu0 %v3364
    %4849 = vmatpush1.msra.mxu0 %v3363
    %4850 = vmatprep.mubr.f32.mxu0 %v1650
    %4851 = vmatmul.mubr.f32.gmra.mrb[0].mxu0 %v1648
    %v4852 = vpop.f32.mrb[0].mxu0
    %v4853 = vadd.f32 %v4782, %v4852
    %v4854 = vpop.f32.mrb[0].mxu0
    %v4855 = vadd.f32 %v4784, %v4854
    %4856 = vdwg.mxu0
    %4857 = vmatprep.subr.mxu0 %v3373
    %4858 = vmatpush1.msra.mxu0 %v3372
    %4859 = vmatprep.subr.mxu0 %v3382
    %4860 = vmatpush1.msra.mxu0 %v3381
    %4861 = vmatprep.subr.mxu0 %v3391
    %4862 = vmatpush1.msra.mxu0 %v3390
    %4863 = vmatprep.subr.mxu0 %v3400
    %4864 = vmatpush1.msra.mxu0 %v3399
    %4865 = vmatprep.subr.mxu0 %v3409
    %4866 = vmatpush1.msra.mxu0 %v3408
    %4867 = vmatprep.subr.mxu0 %v3418
    %4868 = vmatpush1.msra.mxu0 %v3417
    %4869 = vmatprep.subr.mxu0 %v3427
    %4870 = vmatpush1.msra.mxu0 %v3426
    %4871 = vmatprep.subr.mxu0 %v3436
    %4872 = vmatpush1.msra.mxu0 %v3435
    %4873 = vmatprep.subr.mxu0 %v3445
    %4874 = vmatpush1.msra.mxu0 %v3444
    %4875 = vmatprep.subr.mxu0 %v3454
    %4876 = vmatpush1.msra.mxu0 %v3453
    %4877 = vmatprep.subr.mxu0 %v3463
    %4878 = vmatpush1.msra.mxu0 %v3462
    %4879 = vmatprep.subr.mxu0 %v3472
    %4880 = vmatpush1.msra.mxu0 %v3471
    %4881 = vmatprep.subr.mxu0 %v3481
    %4882 = vmatpush1.msra.mxu0 %v3480
    %4883 = vmatprep.subr.mxu0 %v3490
    %4884 = vmatpush1.msra.mxu0 %v3489
    %4885 = vmatprep.subr.mxu0 %v3499
    %4886 = vmatpush1.msra.mxu0 %v3498
    %4887 = vmatprep.subr.mxu0 %v3508
    %4888 = vmatpush1.msra.mxu0 %v3507
    %4889 = vmatprep.subr.mxu0 %v3517
    %4890 = vmatpush1.msra.mxu0 %v3516
    %4891 = vmatprep.subr.mxu0 %v3526
    %4892 = vmatpush1.msra.mxu0 %v3525
    %4893 = vmatprep.subr.mxu0 %v3535
    %4894 = vmatpush1.msra.mxu0 %v3534
    %4895 = vmatprep.subr.mxu0 %v3544
    %4896 = vmatpush1.msra.mxu0 %v3543
    %4897 = vmatprep.subr.mxu0 %v3553
    %4898 = vmatpush1.msra.mxu0 %v3552
    %4899 = vmatprep.subr.mxu0 %v3562
    %4900 = vmatpush1.msra.mxu0 %v3561
    %4901 = vmatprep.subr.mxu0 %v3571
    %4902 = vmatpush1.msra.mxu0 %v3570
    %4903 = vmatprep.subr.mxu0 %v3580
    %4904 = vmatpush1.msra.mxu0 %v3579
    %4905 = vmatprep.subr.mxu0 %v3589
    %4906 = vmatpush1.msra.mxu0 %v3588
    %4907 = vmatprep.subr.mxu0 %v3598
    %4908 = vmatpush1.msra.mxu0 %v3597
    %4909 = vmatprep.subr.mxu0 %v3607
    %4910 = vmatpush1.msra.mxu0 %v3606
    %4911 = vmatprep.subr.mxu0 %v3616
    %4912 = vmatpush1.msra.mxu0 %v3615
    %4913 = vmatprep.subr.mxu0 %v3625
    %4914 = vmatpush1.msra.mxu0 %v3624
    %4915 = vmatprep.subr.mxu0 %v3634
    %4916 = vmatpush1.msra.mxu0 %v3633
    %4917 = vmatprep.subr.mxu0 %v3643
    %4918 = vmatpush1.msra.mxu0 %v3642
    %4919 = vmatprep.subr.mxu0 %v3652
    %4920 = vmatpush1.msra.mxu0 %v3651
    %4921 = vmatprep.mubr.f32.mxu0 %v1792
    %4922 = vmatmul.mubr.f32.gmra.mrb[0].mxu0 %v1790
    %v4923 = vpop.f32.mrb[0].mxu0
    %v4924 = vadd.f32 %v4853, %v4923
    %v4925 = vpop.f32.mrb[0].mxu0
    %v4926 = vadd.f32 %v4855, %v4925
    %4927 = vdwg.mxu0
    %4928 = vmatprep.subr.mxu0 %v3661
    %4929 = vmatpush1.msra.mxu0 %v3660
    %4930 = vmatprep.subr.mxu0 %v3670
    %4931 = vmatpush1.msra.mxu0 %v3669
    %4932 = vmatprep.subr.mxu0 %v3679
    %4933 = vmatpush1.msra.mxu0 %v3678
    %4934 = vmatprep.subr.mxu0 %v3688
    %4935 = vmatpush1.msra.mxu0 %v3687
    %4936 = vmatprep.subr.mxu0 %v3697
    %4937 = vmatpush1.msra.mxu0 %v3696
    %4938 = vmatprep.subr.mxu0 %v3706
    %4939 = vmatpush1.msra.mxu0 %v3705
    %4940 = vmatprep.subr.mxu0 %v3715
    %4941 = vmatpush1.msra.mxu0 %v3714
    %4942 = vmatprep.subr.mxu0 %v3724
    %4943 = vmatpush1.msra.mxu0 %v3723
    %4944 = vmatprep.subr.mxu0 %v3733
    %4945 = vmatpush1.msra.mxu0 %v3732
    %4946 = vmatprep.subr.mxu0 %v3742
    %4947 = vmatpush1.msra.mxu0 %v3741
    %4948 = vmatprep.subr.mxu0 %v3751
    %4949 = vmatpush1.msra.mxu0 %v3750
    %4950 = vmatprep.subr.mxu0 %v3760
    %4951 = vmatpush1.msra.mxu0 %v3759
    %4952 = vmatprep.subr.mxu0 %v3769
    %4953 = vmatpush1.msra.mxu0 %v3768
    %4954 = vmatprep.subr.mxu0 %v3778
    %4955 = vmatpush1.msra.mxu0 %v3777
    %4956 = vmatprep.subr.mxu0 %v3787
    %4957 = vmatpush1.msra.mxu0 %v3786
    %4958 = vmatprep.subr.mxu0 %v3796
    %4959 = vmatpush1.msra.mxu0 %v3795
    %4960 = vmatprep.subr.mxu0 %v3805
    %4961 = vmatpush1.msra.mxu0 %v3804
    %4962 = vmatprep.subr.mxu0 %v3814
    %4963 = vmatpush1.msra.mxu0 %v3813
    %4964 = vmatprep.subr.mxu0 %v3823
    %4965 = vmatpush1.msra.mxu0 %v3822
    %4966 = vmatprep.subr.mxu0 %v3832
    %4967 = vmatpush1.msra.mxu0 %v3831
    %4968 = vmatprep.subr.mxu0 %v3841
    %4969 = vmatpush1.msra.mxu0 %v3840
    %4970 = vmatprep.subr.mxu0 %v3850
    %4971 = vmatpush1.msra.mxu0 %v3849
    %4972 = vmatprep.subr.mxu0 %v3859
    %4973 = vmatpush1.msra.mxu0 %v3858
    %4974 = vmatprep.subr.mxu0 %v3868
    %4975 = vmatpush1.msra.mxu0 %v3867
    %4976 = vmatprep.subr.mxu0 %v3877
    %4977 = vmatpush1.msra.mxu0 %v3876
    %4978 = vmatprep.subr.mxu0 %v3886
    %4979 = vmatpush1.msra.mxu0 %v3885
    %4980 = vmatprep.subr.mxu0 %v3895
    %4981 = vmatpush1.msra.mxu0 %v3894
    %4982 = vmatprep.subr.mxu0 %v3904
    %4983 = vmatpush1.msra.mxu0 %v3903
    %4984 = vmatprep.subr.mxu0 %v3913
    %4985 = vmatpush1.msra.mxu0 %v3912
    %4986 = vmatprep.subr.mxu0 %v3922
    %4987 = vmatpush1.msra.mxu0 %v3921
    %4988 = vmatprep.subr.mxu0 %v3931
    %4989 = vmatpush1.msra.mxu0 %v3930
    %4990 = vmatprep.subr.mxu0 %v3940
    %4991 = vmatpush1.msra.mxu0 %v3939
    %4992 = vmatprep.mubr.f32.mxu0 %v1934
    %4993 = vmatmul.mubr.f32.gmra.mrb[0].mxu0 %v1932
    %v4994 = vpop.f32.mrb[0].mxu0
    %v4995 = vadd.f32 %v4924, %v4994
    %v4996 = vpop.f32.mrb[0].mxu0
    %v4997 = vadd.f32 %v4926, %v4996
    %4998 = vdwg.mxu0
    %4999 = vmatprep.subr.mxu0 %v3949
    %5000 = vmatpush1.msra.mxu0 %v3948
    %5001 = vmatprep.subr.mxu0 %v3958
    %5002 = vmatpush1.msra.mxu0 %v3957
    %5003 = vmatprep.subr.mxu0 %v3967
    %5004 = vmatpush1.msra.mxu0 %v3966
    %5005 = vmatprep.subr.mxu0 %v3976
    %5006 = vmatpush1.msra.mxu0 %v3975
    %5007 = vmatprep.subr.mxu0 %v3985
    %5008 = vmatpush1.msra.mxu0 %v3984
    %5009 = vmatprep.subr.mxu0 %v3994
    %5010 = vmatpush1.msra.mxu0 %v3993
    %5011 = vmatprep.subr.mxu0 %v4003
    %5012 = vmatpush1.msra.mxu0 %v4002
    %5013 = vmatprep.subr.mxu0 %v4012
    %5014 = vmatpush1.msra.mxu0 %v4011
    %5015 = vmatprep.subr.mxu0 %v4021
    %5016 = vmatpush1.msra.mxu0 %v4020
    %5017 = vmatprep.subr.mxu0 %v4030
    %5018 = vmatpush1.msra.mxu0 %v4029
    %5019 = vmatprep.subr.mxu0 %v4039
    %5020 = vmatpush1.msra.mxu0 %v4038
    %5021 = vmatprep.subr.mxu0 %v4048
    %5022 = vmatpush1.msra.mxu0 %v4047
    %5023 = vmatprep.subr.mxu0 %v4057
    %5024 = vmatpush1.msra.mxu0 %v4056
    %5025 = vmatprep.subr.mxu0 %v4066
    %5026 = vmatpush1.msra.mxu0 %v4065
    %5027 = vmatprep.subr.mxu0 %v4075
    %5028 = vmatpush1.msra.mxu0 %v4074
    %5029 = vmatprep.subr.mxu0 %v4084
    %5030 = vmatpush1.msra.mxu0 %v4083
    %5031 = vmatprep.subr.mxu0 %v4093
    %5032 = vmatpush1.msra.mxu0 %v4092
    %5033 = vmatprep.subr.mxu0 %v4102
    %5034 = vmatpush1.msra.mxu0 %v4101
    %5035 = vmatprep.subr.mxu0 %v4111
    %5036 = vmatpush1.msra.mxu0 %v4110
    %5037 = vmatprep.subr.mxu0 %v4120
    %5038 = vmatpush1.msra.mxu0 %v4119
    %5039 = vmatprep.subr.mxu0 %v4129
    %5040 = vmatpush1.msra.mxu0 %v4128
    %5041 = vmatprep.subr.mxu0 %v4138
    %5042 = vmatpush1.msra.mxu0 %v4137
    %5043 = vmatprep.subr.mxu0 %v4147
    %5044 = vmatpush1.msra.mxu0 %v4146
    %5045 = vmatprep.subr.mxu0 %v4156
    %5046 = vmatpush1.msra.mxu0 %v4155
    %5047 = vmatprep.subr.mxu0 %v4165
    %5048 = vmatpush1.msra.mxu0 %v4164
    %5049 = vmatprep.subr.mxu0 %v4174
    %5050 = vmatpush1.msra.mxu0 %v4173
    %5051 = vmatprep.subr.mxu0 %v4183
    %5052 = vmatpush1.msra.mxu0 %v4182
    %5053 = vmatprep.subr.mxu0 %v4192
    %5054 = vmatpush1.msra.mxu0 %v4191
    %5055 = vmatprep.subr.mxu0 %v4201
    %5056 = vmatpush1.msra.mxu0 %v4200
    %5057 = vmatprep.subr.mxu0 %v4210
    %5058 = vmatpush1.msra.mxu0 %v4209
    %5059 = vmatprep.subr.mxu0 %v4219
    %5060 = vmatpush1.msra.mxu0 %v4218
    %5061 = vmatprep.subr.mxu0 %v4228
    %5062 = vmatpush1.msra.mxu0 %v4227
    %5063 = vmatprep.mubr.f32.mxu0 %v2076
    %5064 = vmatmul.mubr.f32.gmra.mrb[0].mxu0 %v2074
    %v5065 = vpop.f32.mrb[0].mxu0
    %v5066 = vadd.f32 %v4995, %v5065
    %v5067 = vpop.f32.mrb[0].mxu0
    %v5068 = vadd.f32 %v4997, %v5067
    %5069 = vdwg.mxu0
    %5070 = vmatprep.subr.mxu0 %v4237
    %5071 = vmatpush1.msra.mxu0 %v4236
    %5072 = vmatprep.subr.mxu0 %v4246
    %5073 = vmatpush1.msra.mxu0 %v4245
    %5074 = vmatprep.subr.mxu0 %v4255
    %5075 = vmatpush1.msra.mxu0 %v4254
    %5076 = vmatprep.subr.mxu0 %v4264
    %5077 = vmatpush1.msra.mxu0 %v4263
    %5078 = vmatprep.subr.mxu0 %v4273
    %5079 = vmatpush1.msra.mxu0 %v4272
    %5080 = vmatprep.subr.mxu0 %v4282
    %5081 = vmatpush1.msra.mxu0 %v4281
    %5082 = vmatprep.subr.mxu0 %v4291
    %5083 = vmatpush1.msra.mxu0 %v4290
    %5084 = vmatprep.subr.mxu0 %v4300
    %5085 = vmatpush1.msra.mxu0 %v4299
    %5086 = vmatprep.subr.mxu0 %v4309
    %5087 = vmatpush1.msra.mxu0 %v4308
    %5088 = vmatprep.subr.mxu0 %v4318
    %5089 = vmatpush1.msra.mxu0 %v4317
    %5090 = vmatprep.subr.mxu0 %v4327
    %5091 = vmatpush1.msra.mxu0 %v4326
    %5092 = vmatprep.subr.mxu0 %v4336
    %5093 = vmatpush1.msra.mxu0 %v4335
    %5094 = vmatprep.subr.mxu0 %v4345
    %5095 = vmatpush1.msra.mxu0 %v4344
    %5096 = vmatprep.subr.mxu0 %v4354
    %5097 = vmatpush1.msra.mxu0 %v4353
    %5098 = vmatprep.subr.mxu0 %v4363
    %5099 = vmatpush1.msra.mxu0 %v4362
    %5100 = vmatprep.subr.mxu0 %v4372
    %5101 = vmatpush1.msra.mxu0 %v4371
    %5102 = vmatprep.subr.mxu0 %v4381
    %5103 = vmatpush1.msra.mxu0 %v4380
    %5104 = vmatprep.subr.mxu0 %v4390
    %5105 = vmatpush1.msra.mxu0 %v4389
    %5106 = vmatprep.subr.mxu0 %v4399
    %5107 = vmatpush1.msra.mxu0 %v4398
    %5108 = vmatprep.subr.mxu0 %v4408
    %5109 = vmatpush1.msra.mxu0 %v4407
    %5110 = vmatprep.subr.mxu0 %v4417
    %5111 = vmatpush1.msra.mxu0 %v4416
    %5112 = vmatprep.subr.mxu0 %v4426
    %5113 = vmatpush1.msra.mxu0 %v4425
    %5114 = vmatprep.subr.mxu0 %v4435
    %5115 = vmatpush1.msra.mxu0 %v4434
    %5116 = vmatprep.subr.mxu0 %v4444
    %5117 = vmatpush1.msra.mxu0 %v4443
    %5118 = vmatprep.subr.mxu0 %v4453
    %5119 = vmatpush1.msra.mxu0 %v4452
    %5120 = vmatprep.subr.mxu0 %v4462
    %5121 = vmatpush1.msra.mxu0 %v4461
    %5122 = vmatprep.subr.mxu0 %v4471
    %5123 = vmatpush1.msra.mxu0 %v4470
    %5124 = vmatprep.subr.mxu0 %v4480
    %5125 = vmatpush1.msra.mxu0 %v4479
    %5126 = vmatprep.subr.mxu0 %v4489
    %5127 = vmatpush1.msra.mxu0 %v4488
    %5128 = vmatprep.subr.mxu0 %v4498
    %5129 = vmatpush1.msra.mxu0 %v4497
    %5130 = vmatprep.subr.mxu0 %v4507
    %5131 = vmatpush1.msra.mxu0 %v4506
    %5132 = vmatprep.subr.mxu0 %v4516
    %5133 = vmatpush1.msra.mxu0 %v4515
    %5134 = vmatprep.mubr.f32.mxu0 %v2218
    %5135 = vmatmul.mubr.f32.gmra.mrb[0].mxu0 %v2216
    %v5136 = vpop.f32.mrb[0].mxu0
    %v5137 = vadd.f32 %v5066, %v5136
    %v5138 = vpop.f32.mrb[0].mxu0
    %v5139 = vadd.f32 %v5068, %v5138
    %5140 = vdwg.mxu0
    %5141 = vmatprep.subr.mxu0 %v2223
    %5142 = vmatpush1.msra.mxu0 %v2222
    %5143 = vmatprep.subr.mxu0 %v2232
    %5144 = vmatpush1.msra.mxu0 %v2231
    %5145 = vmatprep.subr.mxu0 %v2241
    %5146 = vmatpush1.msra.mxu0 %v2240
    %5147 = vmatprep.subr.mxu0 %v2250
    %5148 = vmatpush1.msra.mxu0 %v2249
    %5149 = vmatprep.subr.mxu0 %v2259
    %5150 = vmatpush1.msra.mxu0 %v2258
    %5151 = vmatprep.subr.mxu0 %v2268
    %5152 = vmatpush1.msra.mxu0 %v2267
    %5153 = vmatprep.subr.mxu0 %v2277
    %5154 = vmatpush1.msra.mxu0 %v2276
    %5155 = vmatprep.subr.mxu0 %v2286
    %5156 = vmatpush1.msra.mxu0 %v2285
    %5157 = vmatprep.subr.mxu0 %v2295
    %5158 = vmatpush1.msra.mxu0 %v2294
    %5159 = vmatprep.subr.mxu0 %v2304
    %5160 = vmatpush1.msra.mxu0 %v2303
    %5161 = vmatprep.subr.mxu0 %v2313
    %5162 = vmatpush1.msra.mxu0 %v2312
    %5163 = vmatprep.subr.mxu0 %v2322
    %5164 = vmatpush1.msra.mxu0 %v2321
    %5165 = vmatprep.subr.mxu0 %v2331
    %5166 = vmatpush1.msra.mxu0 %v2330
    %5167 = vmatprep.subr.mxu0 %v2340
    %5168 = vmatpush1.msra.mxu0 %v2339
    %5169 = vmatprep.subr.mxu0 %v2349
    %5170 = vmatpush1.msra.mxu0 %v2348
    %5171 = vmatprep.subr.mxu0 %v2358
    %5172 = vmatpush1.msra.mxu0 %v2357
    %5173 = vmatprep.subr.mxu0 %v2367
    %5174 = vmatpush1.msra.mxu0 %v2366
    %5175 = vmatprep.subr.mxu0 %v2376
    %5176 = vmatpush1.msra.mxu0 %v2375
    %5177 = vmatprep.subr.mxu0 %v2385
    %5178 = vmatpush1.msra.mxu0 %v2384
    %5179 = vmatprep.subr.mxu0 %v2394
    %5180 = vmatpush1.msra.mxu0 %v2393
    %5181 = vmatprep.subr.mxu0 %v2403
    %5182 = vmatpush1.msra.mxu0 %v2402
    %5183 = vmatprep.subr.mxu0 %v2412
    %5184 = vmatpush1.msra.mxu0 %v2411
    %5185 = vmatprep.subr.mxu0 %v2421
    %5186 = vmatpush1.msra.mxu0 %v2420
    %5187 = vmatprep.subr.mxu0 %v2430
    %5188 = vmatpush1.msra.mxu0 %v2429
    %5189 = vmatprep.subr.mxu0 %v2439
    %5190 = vmatpush1.msra.mxu0 %v2438
    %5191 = vmatprep.subr.mxu0 %v2448
    %5192 = vmatpush1.msra.mxu0 %v2447
    %5193 = vmatprep.subr.mxu0 %v2457
    %5194 = vmatpush1.msra.mxu0 %v2456
    %5195 = vmatprep.subr.mxu0 %v2466
    %5196 = vmatpush1.msra.mxu0 %v2465
    %5197 = vmatprep.subr.mxu0 %v2475
    %5198 = vmatpush1.msra.mxu0 %v2474
    %5199 = vmatprep.subr.mxu0 %v2484
    %5200 = vmatpush1.msra.mxu0 %v2483
    %5201 = vmatprep.subr.mxu0 %v2493
    %5202 = vmatpush1.msra.mxu0 %v2492
    %5203 = vmatprep.subr.mxu0 %v2502
    %5204 = vmatpush1.msra.mxu0 %v2501
    %5205 = vmatprep.mubr.f32.mxu0 %v1224
    %5206 = vmatmul.mubr.f32.gmra.mrb[0].mxu0 %v1222
    %v5207 = vpop.f32.mrb[0].mxu0
    %v5208 = vadd.f32 %v4539, %v5207
    %v5209 = vpop.f32.mrb[0].mxu0
    %v5210 = vadd.f32 %v4543, %v5209
    %5211 = vdwg.mxu0
    %5212 = vmatprep.subr.mxu0 %v2511
    %5213 = vmatpush1.msra.mxu0 %v2510
    %5214 = vmatprep.subr.mxu0 %v2520
    %5215 = vmatpush1.msra.mxu0 %v2519
    %5216 = vmatprep.subr.mxu0 %v2529
    %5217 = vmatpush1.msra.mxu0 %v2528
    %5218 = vmatprep.subr.mxu0 %v2538
    %5219 = vmatpush1.msra.mxu0 %v2537
    %5220 = vmatprep.subr.mxu0 %v2547
    %5221 = vmatpush1.msra.mxu0 %v2546
    %5222 = vmatprep.subr.mxu0 %v2556
    %5223 = vmatpush1.msra.mxu0 %v2555
    %5224 = vmatprep.subr.mxu0 %v2565
    %5225 = vmatpush1.msra.mxu0 %v2564
    %5226 = vmatprep.subr.mxu0 %v2574
    %5227 = vmatpush1.msra.mxu0 %v2573
    %5228 = vmatprep.subr.mxu0 %v2583
    %5229 = vmatpush1.msra.mxu0 %v2582
    %5230 = vmatprep.subr.mxu0 %v2592
    %5231 = vmatpush1.msra.mxu0 %v2591
    %5232 = vmatprep.subr.mxu0 %v2601
    %5233 = vmatpush1.msra.mxu0 %v2600
    %5234 = vmatprep.subr.mxu0 %v2610
    %5235 = vmatpush1.msra.mxu0 %v2609
    %5236 = vmatprep.subr.mxu0 %v2619
    %5237 = vmatpush1.msra.mxu0 %v2618
    %5238 = vmatprep.subr.mxu0 %v2628
    %5239 = vmatpush1.msra.mxu0 %v2627
    %5240 = vmatprep.subr.mxu0 %v2637
    %5241 = vmatpush1.msra.mxu0 %v2636
    %5242 = vmatprep.subr.mxu0 %v2646
    %5243 = vmatpush1.msra.mxu0 %v2645
    %5244 = vmatprep.subr.mxu0 %v2655
    %5245 = vmatpush1.msra.mxu0 %v2654
    %5246 = vmatprep.subr.mxu0 %v2664
    %5247 = vmatpush1.msra.mxu0 %v2663
    %5248 = vmatprep.subr.mxu0 %v2673
    %5249 = vmatpush1.msra.mxu0 %v2672
    %5250 = vmatprep.subr.mxu0 %v2682
    %5251 = vmatpush1.msra.mxu0 %v2681
    %5252 = vmatprep.subr.mxu0 %v2691
    %5253 = vmatpush1.msra.mxu0 %v2690
    %5254 = vmatprep.subr.mxu0 %v2700
    %5255 = vmatpush1.msra.mxu0 %v2699
    %5256 = vmatprep.subr.mxu0 %v2709
    %5257 = vmatpush1.msra.mxu0 %v2708
    %5258 = vmatprep.subr.mxu0 %v2718
    %5259 = vmatpush1.msra.mxu0 %v2717
    %5260 = vmatprep.subr.mxu0 %v2727
    %5261 = vmatpush1.msra.mxu0 %v2726
    %5262 = vmatprep.subr.mxu0 %v2736
    %5263 = vmatpush1.msra.mxu0 %v2735
    %5264 = vmatprep.subr.mxu0 %v2745
    %5265 = vmatpush1.msra.mxu0 %v2744
    %5266 = vmatprep.subr.mxu0 %v2754
    %5267 = vmatpush1.msra.mxu0 %v2753
    %5268 = vmatprep.subr.mxu0 %v2763
    %5269 = vmatpush1.msra.mxu0 %v2762
    %5270 = vmatprep.subr.mxu0 %v2772
    %5271 = vmatpush1.msra.mxu0 %v2771
    %5272 = vmatprep.subr.mxu0 %v2781
    %5273 = vmatpush1.msra.mxu0 %v2780
    %5274 = vmatprep.subr.mxu0 %v2790
    %5275 = vmatpush1.msra.mxu0 %v2789
    %5276 = vmatprep.mubr.f32.mxu0 %v1366
    %5277 = vmatmul.mubr.f32.gmra.mrb[0].mxu0 %v1364
    %v5278 = vpop.f32.mrb[0].mxu0
    %v5279 = vadd.f32 %v5208, %v5278
    %v5280 = vpop.f32.mrb[0].mxu0
    %v5281 = vadd.f32 %v5210, %v5280
    %5282 = vdwg.mxu0
    %5283 = vmatprep.subr.mxu0 %v2799
    %5284 = vmatpush1.msra.mxu0 %v2798
    %5285 = vmatprep.subr.mxu0 %v2808
    %5286 = vmatpush1.msra.mxu0 %v2807
    %5287 = vmatprep.subr.mxu0 %v2817
    %5288 = vmatpush1.msra.mxu0 %v2816
    %5289 = vmatprep.subr.mxu0 %v2826
    %5290 = vmatpush1.msra.mxu0 %v2825
    %5291 = vmatprep.subr.mxu0 %v2835
    %5292 = vmatpush1.msra.mxu0 %v2834
    %5293 = vmatprep.subr.mxu0 %v2844
    %5294 = vmatpush1.msra.mxu0 %v2843
    %5295 = vmatprep.subr.mxu0 %v2853
    %5296 = vmatpush1.msra.mxu0 %v2852
    %5297 = vmatprep.subr.mxu0 %v2862
    %5298 = vmatpush1.msra.mxu0 %v2861
    %5299 = vmatprep.subr.mxu0 %v2871
    %5300 = vmatpush1.msra.mxu0 %v2870
    %5301 = vmatprep.subr.mxu0 %v2880
    %5302 = vmatpush1.msra.mxu0 %v2879
    %5303 = vmatprep.subr.mxu0 %v2889
    %5304 = vmatpush1.msra.mxu0 %v2888
    %5305 = vmatprep.subr.mxu0 %v2898
    %5306 = vmatpush1.msra.mxu0 %v2897
    %5307 = vmatprep.subr.mxu0 %v2907
    %5308 = vmatpush1.msra.mxu0 %v2906
    %5309 = vmatprep.subr.mxu0 %v2916
    %5310 = vmatpush1.msra.mxu0 %v2915
    %5311 = vmatprep.subr.mxu0 %v2925
    %5312 = vmatpush1.msra.mxu0 %v2924
    %5313 = vmatprep.subr.mxu0 %v2934
    %5314 = vmatpush1.msra.mxu0 %v2933
    %5315 = vmatprep.subr.mxu0 %v2943
    %5316 = vmatpush1.msra.mxu0 %v2942
    %5317 = vmatprep.subr.mxu0 %v2952
    %5318 = vmatpush1.msra.mxu0 %v2951
    %5319 = vmatprep.subr.mxu0 %v2961
    %5320 = vmatpush1.msra.mxu0 %v2960
    %5321 = vmatprep.subr.mxu0 %v2970
    %5322 = vmatpush1.msra.mxu0 %v2969
    %5323 = vmatprep.subr.mxu0 %v2979
    %5324 = vmatpush1.msra.mxu0 %v2978
    %5325 = vmatprep.subr.mxu0 %v2988
    %5326 = vmatpush1.msra.mxu0 %v2987
    %5327 = vmatprep.subr.mxu0 %v2997
    %5328 = vmatpush1.msra.mxu0 %v2996
    %5329 = vmatprep.subr.mxu0 %v3006
    %5330 = vmatpush1.msra.mxu0 %v3005
    %5331 = vmatprep.subr.mxu0 %v3015
    %5332 = vmatpush1.msra.mxu0 %v3014
    %5333 = vmatprep.subr.mxu0 %v3024
    %5334 = vmatpush1.msra.mxu0 %v3023
    %5335 = vmatprep.subr.mxu0 %v3033
    %5336 = vmatpush1.msra.mxu0 %v3032
    %5337 = vmatprep.subr.mxu0 %v3042
    %5338 = vmatpush1.msra.mxu0 %v3041
    %5339 = vmatprep.subr.mxu0 %v3051
    %5340 = vmatpush1.msra.mxu0 %v3050
    %5341 = vmatprep.subr.mxu0 %v3060
    %5342 = vmatpush1.msra.mxu0 %v3059
    %5343 = vmatprep.subr.mxu0 %v3069
    %5344 = vmatpush1.msra.mxu0 %v3068
    %5345 = vmatprep.subr.mxu0 %v3078
    %5346 = vmatpush1.msra.mxu0 %v3077
    %5347 = vmatprep.mubr.f32.mxu0 %v1508
    %5348 = vmatmul.mubr.f32.gmra.mrb[0].mxu0 %v1506
    %v5349 = vpop.f32.mrb[0].mxu0
    %v5350 = vadd.f32 %v5279, %v5349
    %v5351 = vpop.f32.mrb[0].mxu0
    %v5352 = vadd.f32 %v5281, %v5351
    %5353 = vdwg.mxu0
    %5354 = vmatprep.subr.mxu0 %v3087
    %5355 = vmatpush1.msra.mxu0 %v3086
    %5356 = vmatprep.subr.mxu0 %v3096
    %5357 = vmatpush1.msra.mxu0 %v3095
    %5358 = vmatprep.subr.mxu0 %v3105
    %5359 = vmatpush1.msra.mxu0 %v3104
    %5360 = vmatprep.subr.mxu0 %v3114
    %5361 = vmatpush1.msra.mxu0 %v3113
    %5362 = vmatprep.subr.mxu0 %v3123
    %5363 = vmatpush1.msra.mxu0 %v3122
    %5364 = vmatprep.subr.mxu0 %v3132
    %5365 = vmatpush1.msra.mxu0 %v3131
    %5366 = vmatprep.subr.mxu0 %v3141
    %5367 = vmatpush1.msra.mxu0 %v3140
    %5368 = vmatprep.subr.mxu0 %v3150
    %5369 = vmatpush1.msra.mxu0 %v3149
    %5370 = vmatprep.subr.mxu0 %v3159
    %5371 = vmatpush1.msra.mxu0 %v3158
    %5372 = vmatprep.subr.mxu0 %v3168
    %5373 = vmatpush1.msra.mxu0 %v3167
    %5374 = vmatprep.subr.mxu0 %v3177
    %5375 = vmatpush1.msra.mxu0 %v3176
    %5376 = vmatprep.subr.mxu0 %v3186
    %5377 = vmatpush1.msra.mxu0 %v3185
    %5378 = vmatprep.subr.mxu0 %v3195
    %5379 = vmatpush1.msra.mxu0 %v3194
    %5380 = vmatprep.subr.mxu0 %v3204
    %5381 = vmatpush1.msra.mxu0 %v3203
    %5382 = vmatprep.subr.mxu0 %v3213
    %5383 = vmatpush1.msra.mxu0 %v3212
    %5384 = vmatprep.subr.mxu0 %v3222
    %5385 = vmatpush1.msra.mxu0 %v3221
    %5386 = vmatprep.subr.mxu0 %v3231
    %5387 = vmatpush1.msra.mxu0 %v3230
    %5388 = vmatprep.subr.mxu0 %v3240
    %5389 = vmatpush1.msra.mxu0 %v3239
    %5390 = vmatprep.subr.mxu0 %v3249
    %5391 = vmatpush1.msra.mxu0 %v3248
    %5392 = vmatprep.subr.mxu0 %v3258
    %5393 = vmatpush1.msra.mxu0 %v3257
    %5394 = vmatprep.subr.mxu0 %v3267
    %5395 = vmatpush1.msra.mxu0 %v3266
    %5396 = vmatprep.subr.mxu0 %v3276
    %5397 = vmatpush1.msra.mxu0 %v3275
    %5398 = vmatprep.subr.mxu0 %v3285
    %5399 = vmatpush1.msra.mxu0 %v3284
    %5400 = vmatprep.subr.mxu0 %v3294
    %5401 = vmatpush1.msra.mxu0 %v3293
    %5402 = vmatprep.subr.mxu0 %v3303
    %5403 = vmatpush1.msra.mxu0 %v3302
    %5404 = vmatprep.subr.mxu0 %v3312
    %5405 = vmatpush1.msra.mxu0 %v3311
    %5406 = vmatprep.subr.mxu0 %v3321
    %5407 = vmatpush1.msra.mxu0 %v3320
    %5408 = vmatprep.subr.mxu0 %v3330
    %5409 = vmatpush1.msra.mxu0 %v3329
    %5410 = vmatprep.subr.mxu0 %v3339
    %5411 = vmatpush1.msra.mxu0 %v3338
    %5412 = vmatprep.subr.mxu0 %v3348
    %5413 = vmatpush1.msra.mxu0 %v3347
    %5414 = vmatprep.subr.mxu0 %v3357
    %5415 = vmatpush1.msra.mxu0 %v3356
    %5416 = vmatprep.subr.mxu0 %v3366
    %5417 = vmatpush1.msra.mxu0 %v3365
    %5418 = vmatprep.mubr.f32.mxu0 %v1650
    %5419 = vmatmul.mubr.f32.gmra.mrb[0].mxu0 %v1648
    %v5420 = vpop.f32.mrb[0].mxu0
    %v5421 = vadd.f32 %v5350, %v5420
    %v5422 = vpop.f32.mrb[0].mxu0
    %v5423 = vadd.f32 %v5352, %v5422
    %5424 = vdwg.mxu0
    %5425 = vmatprep.subr.mxu0 %v3375
    %5426 = vmatpush1.msra.mxu0 %v3374
    %5427 = vmatprep.subr.mxu0 %v3384
    %5428 = vmatpush1.msra.mxu0 %v3383
    %5429 = vmatprep.subr.mxu0 %v3393
    %5430 = vmatpush1.msra.mxu0 %v3392
    %5431 = vmatprep.subr.mxu0 %v3402
    %5432 = vmatpush1.msra.mxu0 %v3401
    %5433 = vmatprep.subr.mxu0 %v3411
    %5434 = vmatpush1.msra.mxu0 %v3410
    %5435 = vmatprep.subr.mxu0 %v3420
    %5436 = vmatpush1.msra.mxu0 %v3419
    %5437 = vmatprep.subr.mxu0 %v3429
    %5438 = vmatpush1.msra.mxu0 %v3428
    %5439 = vmatprep.subr.mxu0 %v3438
    %5440 = vmatpush1.msra.mxu0 %v3437
    %5441 = vmatprep.subr.mxu0 %v3447
    %5442 = vmatpush1.msra.mxu0 %v3446
    %5443 = vmatprep.subr.mxu0 %v3456
    %5444 = vmatpush1.msra.mxu0 %v3455
    %5445 = vmatprep.subr.mxu0 %v3465
    %5446 = vmatpush1.msra.mxu0 %v3464
    %5447 = vmatprep.subr.mxu0 %v3474
    %5448 = vmatpush1.msra.mxu0 %v3473
    %5449 = vmatprep.subr.mxu0 %v3483
    %5450 = vmatpush1.msra.mxu0 %v3482
    %5451 = vmatprep.subr.mxu0 %v3492
    %5452 = vmatpush1.msra.mxu0 %v3491
    %5453 = vmatprep.subr.mxu0 %v3501
    %5454 = vmatpush1.msra.mxu0 %v3500
    %5455 = vmatprep.subr.mxu0 %v3510
    %5456 = vmatpush1.msra.mxu0 %v3509
    %5457 = vmatprep.subr.mxu0 %v3519
    %5458 = vmatpush1.msra.mxu0 %v3518
    %5459 = vmatprep.subr.mxu0 %v3528
    %5460 = vmatpush1.msra.mxu0 %v3527
    %5461 = vmatprep.subr.mxu0 %v3537
    %5462 = vmatpush1.msra.mxu0 %v3536
    %5463 = vmatprep.subr.mxu0 %v3546
    %5464 = vmatpush1.msra.mxu0 %v3545
    %5465 = vmatprep.subr.mxu0 %v3555
    %5466 = vmatpush1.msra.mxu0 %v3554
    %5467 = vmatprep.subr.mxu0 %v3564
    %5468 = vmatpush1.msra.mxu0 %v3563
    %5469 = vmatprep.subr.mxu0 %v3573
    %5470 = vmatpush1.msra.mxu0 %v3572
    %5471 = vmatprep.subr.mxu0 %v3582
    %5472 = vmatpush1.msra.mxu0 %v3581
    %5473 = vmatprep.subr.mxu0 %v3591
    %5474 = vmatpush1.msra.mxu0 %v3590
    %5475 = vmatprep.subr.mxu0 %v3600
    %5476 = vmatpush1.msra.mxu0 %v3599
    %5477 = vmatprep.subr.mxu0 %v3609
    %5478 = vmatpush1.msra.mxu0 %v3608
    %5479 = vmatprep.subr.mxu0 %v3618
    %5480 = vmatpush1.msra.mxu0 %v3617
    %5481 = vmatprep.subr.mxu0 %v3627
    %5482 = vmatpush1.msra.mxu0 %v3626
    %5483 = vmatprep.subr.mxu0 %v3636
    %5484 = vmatpush1.msra.mxu0 %v3635
    %5485 = vmatprep.subr.mxu0 %v3645
    %5486 = vmatpush1.msra.mxu0 %v3644
    %5487 = vmatprep.subr.mxu0 %v3654
    %5488 = vmatpush1.msra.mxu0 %v3653
    %5489 = vmatprep.mubr.f32.mxu0 %v1792
    %5490 = vmatmul.mubr.f32.gmra.mrb[0].mxu0 %v1790
    %v5491 = vpop.f32.mrb[0].mxu0
    %v5492 = vadd.f32 %v5421, %v5491
    %v5493 = vpop.f32.mrb[0].mxu0
    %v5494 = vadd.f32 %v5423, %v5493
    %5495 = vdwg.mxu0
    %5496 = vmatprep.subr.mxu0 %v3663
    %5497 = vmatpush1.msra.mxu0 %v3662
    %5498 = vmatprep.subr.mxu0 %v3672
    %5499 = vmatpush1.msra.mxu0 %v3671
    %5500 = vmatprep.subr.mxu0 %v3681
    %5501 = vmatpush1.msra.mxu0 %v3680
    %5502 = vmatprep.subr.mxu0 %v3690
    %5503 = vmatpush1.msra.mxu0 %v3689
    %5504 = vmatprep.subr.mxu0 %v3699
    %5505 = vmatpush1.msra.mxu0 %v3698
    %5506 = vmatprep.subr.mxu0 %v3708
    %5507 = vmatpush1.msra.mxu0 %v3707
    %5508 = vmatprep.subr.mxu0 %v3717
    %5509 = vmatpush1.msra.mxu0 %v3716
    %5510 = vmatprep.subr.mxu0 %v3726
    %5511 = vmatpush1.msra.mxu0 %v3725
    %5512 = vmatprep.subr.mxu0 %v3735
    %5513 = vmatpush1.msra.mxu0 %v3734
    %5514 = vmatprep.subr.mxu0 %v3744
    %5515 = vmatpush1.msra.mxu0 %v3743
    %5516 = vmatprep.subr.mxu0 %v3753
    %5517 = vmatpush1.msra.mxu0 %v3752
    %5518 = vmatprep.subr.mxu0 %v3762
    %5519 = vmatpush1.msra.mxu0 %v3761
    %5520 = vmatprep.subr.mxu0 %v3771
    %5521 = vmatpush1.msra.mxu0 %v3770
    %5522 = vmatprep.subr.mxu0 %v3780
    %5523 = vmatpush1.msra.mxu0 %v3779
    %5524 = vmatprep.subr.mxu0 %v3789
    %5525 = vmatpush1.msra.mxu0 %v3788
    %5526 = vmatprep.subr.mxu0 %v3798
    %5527 = vmatpush1.msra.mxu0 %v3797
    %5528 = vmatprep.subr.mxu0 %v3807
    %5529 = vmatpush1.msra.mxu0 %v3806
    %5530 = vmatprep.subr.mxu0 %v3816
    %5531 = vmatpush1.msra.mxu0 %v3815
    %5532 = vmatprep.subr.mxu0 %v3825
    %5533 = vmatpush1.msra.mxu0 %v3824
    %5534 = vmatprep.subr.mxu0 %v3834
    %5535 = vmatpush1.msra.mxu0 %v3833
    %5536 = vmatprep.subr.mxu0 %v3843
    %5537 = vmatpush1.msra.mxu0 %v3842
    %5538 = vmatprep.subr.mxu0 %v3852
    %5539 = vmatpush1.msra.mxu0 %v3851
    %5540 = vmatprep.subr.mxu0 %v3861
    %5541 = vmatpush1.msra.mxu0 %v3860
    %5542 = vmatprep.subr.mxu0 %v3870
    %5543 = vmatpush1.msra.mxu0 %v3869
    %5544 = vmatprep.subr.mxu0 %v3879
    %5545 = vmatpush1.msra.mxu0 %v3878
    %5546 = vmatprep.subr.mxu0 %v3888
    %5547 = vmatpush1.msra.mxu0 %v3887
    %5548 = vmatprep.subr.mxu0 %v3897
    %5549 = vmatpush1.msra.mxu0 %v3896
    %5550 = vmatprep.subr.mxu0 %v3906
    %5551 = vmatpush1.msra.mxu0 %v3905
    %5552 = vmatprep.subr.mxu0 %v3915
    %5553 = vmatpush1.msra.mxu0 %v3914
    %5554 = vmatprep.subr.mxu0 %v3924
    %5555 = vmatpush1.msra.mxu0 %v3923
    %5556 = vmatprep.subr.mxu0 %v3933
    %5557 = vmatpush1.msra.mxu0 %v3932
    %5558 = vmatprep.subr.mxu0 %v3942
    %5559 = vmatpush1.msra.mxu0 %v3941
    %5560 = vmatprep.mubr.f32.mxu0 %v1934
    %5561 = vmatmul.mubr.f32.gmra.mrb[0].mxu0 %v1932
    %v5562 = vpop.f32.mrb[0].mxu0
    %v5563 = vadd.f32 %v5492, %v5562
    %v5564 = vpop.f32.mrb[0].mxu0
    %v5565 = vadd.f32 %v5494, %v5564
    %5566 = vdwg.mxu0
    %5567 = vmatprep.subr.mxu0 %v3951
    %5568 = vmatpush1.msra.mxu0 %v3950
    %5569 = vmatprep.subr.mxu0 %v3960
    %5570 = vmatpush1.msra.mxu0 %v3959
    %5571 = vmatprep.subr.mxu0 %v3969
    %5572 = vmatpush1.msra.mxu0 %v3968
    %5573 = vmatprep.subr.mxu0 %v3978
    %5574 = vmatpush1.msra.mxu0 %v3977
    %5575 = vmatprep.subr.mxu0 %v3987
    %5576 = vmatpush1.msra.mxu0 %v3986
    %5577 = vmatprep.subr.mxu0 %v3996
    %5578 = vmatpush1.msra.mxu0 %v3995
    %5579 = vmatprep.subr.mxu0 %v4005
    %5580 = vmatpush1.msra.mxu0 %v4004
    %5581 = vmatprep.subr.mxu0 %v4014
    %5582 = vmatpush1.msra.mxu0 %v4013
    %5583 = vmatprep.subr.mxu0 %v4023
    %5584 = vmatpush1.msra.mxu0 %v4022
    %5585 = vmatprep.subr.mxu0 %v4032
    %5586 = vmatpush1.msra.mxu0 %v4031
    %5587 = vmatprep.subr.mxu0 %v4041
    %5588 = vmatpush1.msra.mxu0 %v4040
    %5589 = vmatprep.subr.mxu0 %v4050
    %5590 = vmatpush1.msra.mxu0 %v4049
    %5591 = vmatprep.subr.mxu0 %v4059
    %5592 = vmatpush1.msra.mxu0 %v4058
    %5593 = vmatprep.subr.mxu0 %v4068
    %5594 = vmatpush1.msra.mxu0 %v4067
    %5595 = vmatprep.subr.mxu0 %v4077
    %5596 = vmatpush1.msra.mxu0 %v4076
    %5597 = vmatprep.subr.mxu0 %v4086
    %5598 = vmatpush1.msra.mxu0 %v4085
    %5599 = vmatprep.subr.mxu0 %v4095
    %5600 = vmatpush1.msra.mxu0 %v4094
    %5601 = vmatprep.subr.mxu0 %v4104
    %5602 = vmatpush1.msra.mxu0 %v4103
    %5603 = vmatprep.subr.mxu0 %v4113
    %5604 = vmatpush1.msra.mxu0 %v4112
    %5605 = vmatprep.subr.mxu0 %v4122
    %5606 = vmatpush1.msra.mxu0 %v4121
    %5607 = vmatprep.subr.mxu0 %v4131
    %5608 = vmatpush1.msra.mxu0 %v4130
    %5609 = vmatprep.subr.mxu0 %v4140
    %5610 = vmatpush1.msra.mxu0 %v4139
    %5611 = vmatprep.subr.mxu0 %v4149
    %5612 = vmatpush1.msra.mxu0 %v4148
    %5613 = vmatprep.subr.mxu0 %v4158
    %5614 = vmatpush1.msra.mxu0 %v4157
    %5615 = vmatprep.subr.mxu0 %v4167
    %5616 = vmatpush1.msra.mxu0 %v4166
    %5617 = vmatprep.subr.mxu0 %v4176
    %5618 = vmatpush1.msra.mxu0 %v4175
    %5619 = vmatprep.subr.mxu0 %v4185
    %5620 = vmatpush1.msra.mxu0 %v4184
    %5621 = vmatprep.subr.mxu0 %v4194
    %5622 = vmatpush1.msra.mxu0 %v4193
    %5623 = vmatprep.subr.mxu0 %v4203
    %5624 = vmatpush1.msra.mxu0 %v4202
    %5625 = vmatprep.subr.mxu0 %v4212
    %5626 = vmatpush1.msra.mxu0 %v4211
    %5627 = vmatprep.subr.mxu0 %v4221
    %5628 = vmatpush1.msra.mxu0 %v4220
    %5629 = vmatprep.subr.mxu0 %v4230
    %5630 = vmatpush1.msra.mxu0 %v4229
    %5631 = vmatprep.mubr.f32.mxu0 %v2076
    %5632 = vmatmul.mubr.f32.gmra.mrb[0].mxu0 %v2074
    %v5633 = vpop.f32.mrb[0].mxu0
    %v5634 = vadd.f32 %v5563, %v5633
    %v5635 = vpop.f32.mrb[0].mxu0
    %v5636 = vadd.f32 %v5565, %v5635
    %5637 = vdwg.mxu0
    %5638 = vmatprep.subr.mxu0 %v4239
    %5639 = vmatpush1.msra.mxu0 %v4238
    %5640 = vmatprep.subr.mxu0 %v4248
    %5641 = vmatpush1.msra.mxu0 %v4247
    %5642 = vmatprep.subr.mxu0 %v4257
    %5643 = vmatpush1.msra.mxu0 %v4256
    %5644 = vmatprep.subr.mxu0 %v4266
    %5645 = vmatpush1.msra.mxu0 %v4265
    %5646 = vmatprep.subr.mxu0 %v4275
    %5647 = vmatpush1.msra.mxu0 %v4274
    %5648 = vmatprep.subr.mxu0 %v4284
    %5649 = vmatpush1.msra.mxu0 %v4283
    %5650 = vmatprep.subr.mxu0 %v4293
    %5651 = vmatpush1.msra.mxu0 %v4292
    %5652 = vmatprep.subr.mxu0 %v4302
    %5653 = vmatpush1.msra.mxu0 %v4301
    %5654 = vmatprep.subr.mxu0 %v4311
    %5655 = vmatpush1.msra.mxu0 %v4310
    %5656 = vmatprep.subr.mxu0 %v4320
    %5657 = vmatpush1.msra.mxu0 %v4319
    %5658 = vmatprep.subr.mxu0 %v4329
    %5659 = vmatpush1.msra.mxu0 %v4328
    %5660 = vmatprep.subr.mxu0 %v4338
    %5661 = vmatpush1.msra.mxu0 %v4337
    %5662 = vmatprep.subr.mxu0 %v4347
    %5663 = vmatpush1.msra.mxu0 %v4346
    %5664 = vmatprep.subr.mxu0 %v4356
    %5665 = vmatpush1.msra.mxu0 %v4355
    %5666 = vmatprep.subr.mxu0 %v4365
    %5667 = vmatpush1.msra.mxu0 %v4364
    %5668 = vmatprep.subr.mxu0 %v4374
    %5669 = vmatpush1.msra.mxu0 %v4373
    %5670 = vmatprep.subr.mxu0 %v4383
    %5671 = vmatpush1.msra.mxu0 %v4382
    %5672 = vmatprep.subr.mxu0 %v4392
    %5673 = vmatpush1.msra.mxu0 %v4391
    %5674 = vmatprep.subr.mxu0 %v4401
    %5675 = vmatpush1.msra.mxu0 %v4400
    %5676 = vmatprep.subr.mxu0 %v4410
    %5677 = vmatpush1.msra.mxu0 %v4409
    %5678 = vmatprep.subr.mxu0 %v4419
    %5679 = vmatpush1.msra.mxu0 %v4418
    %5680 = vmatprep.subr.mxu0 %v4428
    %5681 = vmatpush1.msra.mxu0 %v4427
    %5682 = vmatprep.subr.mxu0 %v4437
    %5683 = vmatpush1.msra.mxu0 %v4436
    %5684 = vmatprep.subr.mxu0 %v4446
    %5685 = vmatpush1.msra.mxu0 %v4445
    %5686 = vmatprep.subr.mxu0 %v4455
    %5687 = vmatpush1.msra.mxu0 %v4454
    %5688 = vmatprep.subr.mxu0 %v4464
    %5689 = vmatpush1.msra.mxu0 %v4463
    %5690 = vmatprep.subr.mxu0 %v4473
    %5691 = vmatpush1.msra.mxu0 %v4472
    %5692 = vmatprep.subr.mxu0 %v4482
    %5693 = vmatpush1.msra.mxu0 %v4481
    %5694 = vmatprep.subr.mxu0 %v4491
    %5695 = vmatpush1.msra.mxu0 %v4490
    %5696 = vmatprep.subr.mxu0 %v4500
    %5697 = vmatpush1.msra.mxu0 %v4499
    %5698 = vmatprep.subr.mxu0 %v4509
    %5699 = vmatpush1.msra.mxu0 %v4508
    %5700 = vmatprep.subr.mxu0 %v4518
    %5701 = vmatpush1.msra.mxu0 %v4517
    %5702 = vmatprep.mubr.f32.mxu0 %v2218
    %5703 = vmatmul.mubr.f32.gmra.mrb[0].mxu0 %v2216
    %v5704 = vpop.f32.mrb[0].mxu0
    %v5705 = vadd.f32 %v5634, %v5704
    %v5706 = vpop.f32.mrb[0].mxu0
    %v5707 = vadd.f32 %v5636, %v5706
    %5708 = vdwg.mxu0
    %5709 = vmatprep.subr.mxu0 %v2225
    %5710 = vmatpush1.msra.mxu0 %v2224
    %5711 = vmatprep.subr.mxu0 %v2234
    %5712 = vmatpush1.msra.mxu0 %v2233
    %5713 = vmatprep.subr.mxu0 %v2243
    %5714 = vmatpush1.msra.mxu0 %v2242
    %5715 = vmatprep.subr.mxu0 %v2252
    %5716 = vmatpush1.msra.mxu0 %v2251
    %5717 = vmatprep.subr.mxu0 %v2261
    %5718 = vmatpush1.msra.mxu0 %v2260
    %5719 = vmatprep.subr.mxu0 %v2270
    %5720 = vmatpush1.msra.mxu0 %v2269
    %5721 = vmatprep.subr.mxu0 %v2279
    %5722 = vmatpush1.msra.mxu0 %v2278
    %5723 = vmatprep.subr.mxu0 %v2288
    %5724 = vmatpush1.msra.mxu0 %v2287
    %5725 = vmatprep.subr.mxu0 %v2297
    %5726 = vmatpush1.msra.mxu0 %v2296
    %5727 = vmatprep.subr.mxu0 %v2306
    %5728 = vmatpush1.msra.mxu0 %v2305
    %5729 = vmatprep.subr.mxu0 %v2315
    %5730 = vmatpush1.msra.mxu0 %v2314
    %5731 = vmatprep.subr.mxu0 %v2324
    %5732 = vmatpush1.msra.mxu0 %v2323
    %5733 = vmatprep.subr.mxu0 %v2333
    %5734 = vmatpush1.msra.mxu0 %v2332
    %5735 = vmatprep.subr.mxu0 %v2342
    %5736 = vmatpush1.msra.mxu0 %v2341
    %5737 = vmatprep.subr.mxu0 %v2351
    %5738 = vmatpush1.msra.mxu0 %v2350
    %5739 = vmatprep.subr.mxu0 %v2360
    %5740 = vmatpush1.msra.mxu0 %v2359
    %5741 = vmatprep.subr.mxu0 %v2369
    %5742 = vmatpush1.msra.mxu0 %v2368
    %5743 = vmatprep.subr.mxu0 %v2378
    %5744 = vmatpush1.msra.mxu0 %v2377
    %5745 = vmatprep.subr.mxu0 %v2387
    %5746 = vmatpush1.msra.mxu0 %v2386
    %5747 = vmatprep.subr.mxu0 %v2396
    %5748 = vmatpush1.msra.mxu0 %v2395
    %5749 = vmatprep.subr.mxu0 %v2405
    %5750 = vmatpush1.msra.mxu0 %v2404
    %5751 = vmatprep.subr.mxu0 %v2414
    %5752 = vmatpush1.msra.mxu0 %v2413
    %5753 = vmatprep.subr.mxu0 %v2423
    %5754 = vmatpush1.msra.mxu0 %v2422
    %5755 = vmatprep.subr.mxu0 %v2432
    %5756 = vmatpush1.msra.mxu0 %v2431
    %5757 = vmatprep.subr.mxu0 %v2441
    %5758 = vmatpush1.msra.mxu0 %v2440
    %5759 = vmatprep.subr.mxu0 %v2450
    %5760 = vmatpush1.msra.mxu0 %v2449
    %5761 = vmatprep.subr.mxu0 %v2459
    %5762 = vmatpush1.msra.mxu0 %v2458
    %5763 = vmatprep.subr.mxu0 %v2468
    %5764 = vmatpush1.msra.mxu0 %v2467
    %5765 = vmatprep.subr.mxu0 %v2477
    %5766 = vmatpush1.msra.mxu0 %v2476
    %5767 = vmatprep.subr.mxu0 %v2486
    %5768 = vmatpush1.msra.mxu0 %v2485
    %5769 = vmatprep.subr.mxu0 %v2495
    %5770 = vmatpush1.msra.mxu0 %v2494
    %5771 = vmatprep.subr.mxu0 %v2504
    %5772 = vmatpush1.msra.mxu0 %v2503
    %5773 = vmatprep.mubr.f32.mxu0 %v1224
    %5774 = vmatmul.mubr.f32.gmra.mrb[0].mxu0 %v1222
    %v5775 = vpop.f32.mrb[0].mxu0
    %v5776 = vadd.f32 %v4547, %v5775
    %v5777 = vpop.f32.mrb[0].mxu0
    %v5778 = vadd.f32 %v4551, %v5777
    %5779 = vdwg.mxu0
    %5780 = vmatprep.subr.mxu0 %v2513
    %5781 = vmatpush1.msra.mxu0 %v2512
    %5782 = vmatprep.subr.mxu0 %v2522
    %5783 = vmatpush1.msra.mxu0 %v2521
    %5784 = vmatprep.subr.mxu0 %v2531
    %5785 = vmatpush1.msra.mxu0 %v2530
    %5786 = vmatprep.subr.mxu0 %v2540
    %5787 = vmatpush1.msra.mxu0 %v2539
    %5788 = vmatprep.subr.mxu0 %v2549
    %5789 = vmatpush1.msra.mxu0 %v2548
    %5790 = vmatprep.subr.mxu0 %v2558
    %5791 = vmatpush1.msra.mxu0 %v2557
    %5792 = vmatprep.subr.mxu0 %v2567
    %5793 = vmatpush1.msra.mxu0 %v2566
    %5794 = vmatprep.subr.mxu0 %v2576
    %5795 = vmatpush1.msra.mxu0 %v2575
    %5796 = vmatprep.subr.mxu0 %v2585
    %5797 = vmatpush1.msra.mxu0 %v2584
    %5798 = vmatprep.subr.mxu0 %v2594
    %5799 = vmatpush1.msra.mxu0 %v2593
    %5800 = vmatprep.subr.mxu0 %v2603
    %5801 = vmatpush1.msra.mxu0 %v2602
    %5802 = vmatprep.subr.mxu0 %v2612
    %5803 = vmatpush1.msra.mxu0 %v2611
    %5804 = vmatprep.subr.mxu0 %v2621
    %5805 = vmatpush1.msra.mxu0 %v2620
    %5806 = vmatprep.subr.mxu0 %v2630
    %5807 = vmatpush1.msra.mxu0 %v2629
    %5808 = vmatprep.subr.mxu0 %v2639
    %5809 = vmatpush1.msra.mxu0 %v2638
    %5810 = vmatprep.subr.mxu0 %v2648
    %5811 = vmatpush1.msra.mxu0 %v2647
    %5812 = vmatprep.subr.mxu0 %v2657
    %5813 = vmatpush1.msra.mxu0 %v2656
    %5814 = vmatprep.subr.mxu0 %v2666
    %5815 = vmatpush1.msra.mxu0 %v2665
    %5816 = vmatprep.subr.mxu0 %v2675
    %5817 = vmatpush1.msra.mxu0 %v2674
    %5818 = vmatprep.subr.mxu0 %v2684
    %5819 = vmatpush1.msra.mxu0 %v2683
    %5820 = vmatprep.subr.mxu0 %v2693
    %5821 = vmatpush1.msra.mxu0 %v2692
    %5822 = vmatprep.subr.mxu0 %v2702
    %5823 = vmatpush1.msra.mxu0 %v2701
    %5824 = vmatprep.subr.mxu0 %v2711
    %5825 = vmatpush1.msra.mxu0 %v2710
    %5826 = vmatprep.subr.mxu0 %v2720
    %5827 = vmatpush1.msra.mxu0 %v2719
    %5828 = vmatprep.subr.mxu0 %v2729
    %5829 = vmatpush1.msra.mxu0 %v2728
    %5830 = vmatprep.subr.mxu0 %v2738
    %5831 = vmatpush1.msra.mxu0 %v2737
    %5832 = vmatprep.subr.mxu0 %v2747
    %5833 = vmatpush1.msra.mxu0 %v2746
    %5834 = vmatprep.subr.mxu0 %v2756
    %5835 = vmatpush1.msra.mxu0 %v2755
    %5836 = vmatprep.subr.mxu0 %v2765
    %5837 = vmatpush1.msra.mxu0 %v2764
    %5838 = vmatprep.subr.mxu0 %v2774
    %5839 = vmatpush1.msra.mxu0 %v2773
    %5840 = vmatprep.subr.mxu0 %v2783
    %5841 = vmatpush1.msra.mxu0 %v2782
    %5842 = vmatprep.subr.mxu0 %v2792
    %5843 = vmatpush1.msra.mxu0 %v2791
    %5844 = vmatprep.mubr.f32.mxu0 %v1366
    %5845 = vmatmul.mubr.f32.gmra.mrb[0].mxu0 %v1364
    %v5846 = vpop.f32.mrb[0].mxu0
    %v5847 = vadd.f32 %v5776, %v5846
    %v5848 = vpop.f32.mrb[0].mxu0
    %v5849 = vadd.f32 %v5778, %v5848
    %5850 = vdwg.mxu0
    %5851 = vmatprep.subr.mxu0 %v2801
    %5852 = vmatpush1.msra.mxu0 %v2800
    %5853 = vmatprep.subr.mxu0 %v2810
    %5854 = vmatpush1.msra.mxu0 %v2809
    %5855 = vmatprep.subr.mxu0 %v2819
    %5856 = vmatpush1.msra.mxu0 %v2818
    %5857 = vmatprep.subr.mxu0 %v2828
    %5858 = vmatpush1.msra.mxu0 %v2827
    %5859 = vmatprep.subr.mxu0 %v2837
    %5860 = vmatpush1.msra.mxu0 %v2836
    %5861 = vmatprep.subr.mxu0 %v2846
    %5862 = vmatpush1.msra.mxu0 %v2845
    %5863 = vmatprep.subr.mxu0 %v2855
    %5864 = vmatpush1.msra.mxu0 %v2854
    %5865 = vmatprep.subr.mxu0 %v2864
    %5866 = vmatpush1.msra.mxu0 %v2863
    %5867 = vmatprep.subr.mxu0 %v2873
    %5868 = vmatpush1.msra.mxu0 %v2872
    %5869 = vmatprep.subr.mxu0 %v2882
    %5870 = vmatpush1.msra.mxu0 %v2881
    %5871 = vmatprep.subr.mxu0 %v2891
    %5872 = vmatpush1.msra.mxu0 %v2890
    %5873 = vmatprep.subr.mxu0 %v2900
    %5874 = vmatpush1.msra.mxu0 %v2899
    %5875 = vmatprep.subr.mxu0 %v2909
    %5876 = vmatpush1.msra.mxu0 %v2908
    %5877 = vmatprep.subr.mxu0 %v2918
    %5878 = vmatpush1.msra.mxu0 %v2917
    %5879 = vmatprep.subr.mxu0 %v2927
    %5880 = vmatpush1.msra.mxu0 %v2926
    %5881 = vmatprep.subr.mxu0 %v2936
    %5882 = vmatpush1.msra.mxu0 %v2935
    %5883 = vmatprep.subr.mxu0 %v2945
    %5884 = vmatpush1.msra.mxu0 %v2944
    %5885 = vmatprep.subr.mxu0 %v2954
    %5886 = vmatpush1.msra.mxu0 %v2953
    %5887 = vmatprep.subr.mxu0 %v2963
    %5888 = vmatpush1.msra.mxu0 %v2962
    %5889 = vmatprep.subr.mxu0 %v2972
    %5890 = vmatpush1.msra.mxu0 %v2971
    %5891 = vmatprep.subr.mxu0 %v2981
    %5892 = vmatpush1.msra.mxu0 %v2980
    %5893 = vmatprep.subr.mxu0 %v2990
    %5894 = vmatpush1.msra.mxu0 %v2989
    %5895 = vmatprep.subr.mxu0 %v2999
    %5896 = vmatpush1.msra.mxu0 %v2998
    %5897 = vmatprep.subr.mxu0 %v3008
    %5898 = vmatpush1.msra.mxu0 %v3007
    %5899 = vmatprep.subr.mxu0 %v3017
    %5900 = vmatpush1.msra.mxu0 %v3016
    %5901 = vmatprep.subr.mxu0 %v3026
    %5902 = vmatpush1.msra.mxu0 %v3025
    %5903 = vmatprep.subr.mxu0 %v3035
    %5904 = vmatpush1.msra.mxu0 %v3034
    %5905 = vmatprep.subr.mxu0 %v3044
    %5906 = vmatpush1.msra.mxu0 %v3043
    %5907 = vmatprep.subr.mxu0 %v3053
    %5908 = vmatpush1.msra.mxu0 %v3052
    %5909 = vmatprep.subr.mxu0 %v3062
    %5910 = vmatpush1.msra.mxu0 %v3061
    %5911 = vmatprep.subr.mxu0 %v3071
    %5912 = vmatpush1.msra.mxu0 %v3070
    %5913 = vmatprep.subr.mxu0 %v3080
    %5914 = vmatpush1.msra.mxu0 %v3079
    %5915 = vmatprep.mubr.f32.mxu0 %v1508
    %5916 = vmatmul.mubr.f32.gmra.mrb[0].mxu0 %v1506
    %v5917 = vpop.f32.mrb[0].mxu0
    %v5918 = vadd.f32 %v5847, %v5917
    %v5919 = vpop.f32.mrb[0].mxu0
    %v5920 = vadd.f32 %v5849, %v5919
    %5921 = vdwg.mxu0
    %5922 = vmatprep.subr.mxu0 %v3089
    %5923 = vmatpush1.msra.mxu0 %v3088
    %5924 = vmatprep.subr.mxu0 %v3098
    %5925 = vmatpush1.msra.mxu0 %v3097
    %5926 = vmatprep.subr.mxu0 %v3107
    %5927 = vmatpush1.msra.mxu0 %v3106
    %5928 = vmatprep.subr.mxu0 %v3116
    %5929 = vmatpush1.msra.mxu0 %v3115
    %5930 = vmatprep.subr.mxu0 %v3125
    %5931 = vmatpush1.msra.mxu0 %v3124
    %5932 = vmatprep.subr.mxu0 %v3134
    %5933 = vmatpush1.msra.mxu0 %v3133
    %5934 = vmatprep.subr.mxu0 %v3143
    %5935 = vmatpush1.msra.mxu0 %v3142
    %5936 = vmatprep.subr.mxu0 %v3152
    %5937 = vmatpush1.msra.mxu0 %v3151
    %5938 = vmatprep.subr.mxu0 %v3161
    %5939 = vmatpush1.msra.mxu0 %v3160
    %5940 = vmatprep.subr.mxu0 %v3170
    %5941 = vmatpush1.msra.mxu0 %v3169
    %5942 = vmatprep.subr.mxu0 %v3179
    %5943 = vmatpush1.msra.mxu0 %v3178
    %5944 = vmatprep.subr.mxu0 %v3188
    %5945 = vmatpush1.msra.mxu0 %v3187
    %5946 = vmatprep.subr.mxu0 %v3197
    %5947 = vmatpush1.msra.mxu0 %v3196
    %5948 = vmatprep.subr.mxu0 %v3206
    %5949 = vmatpush1.msra.mxu0 %v3205
    %5950 = vmatprep.subr.mxu0 %v3215
    %5951 = vmatpush1.msra.mxu0 %v3214
    %5952 = vmatprep.subr.mxu0 %v3224
    %5953 = vmatpush1.msra.mxu0 %v3223
    %5954 = vmatprep.subr.mxu0 %v3233
    %5955 = vmatpush1.msra.mxu0 %v3232
    %5956 = vmatprep.subr.mxu0 %v3242
    %5957 = vmatpush1.msra.mxu0 %v3241
    %5958 = vmatprep.subr.mxu0 %v3251
    %5959 = vmatpush1.msra.mxu0 %v3250
    %5960 = vmatprep.subr.mxu0 %v3260
    %5961 = vmatpush1.msra.mxu0 %v3259
    %5962 = vmatprep.subr.mxu0 %v3269
    %5963 = vmatpush1.msra.mxu0 %v3268
    %5964 = vmatprep.subr.mxu0 %v3278
    %5965 = vmatpush1.msra.mxu0 %v3277
    %5966 = vmatprep.subr.mxu0 %v3287
    %5967 = vmatpush1.msra.mxu0 %v3286
    %5968 = vmatprep.subr.mxu0 %v3296
    %5969 = vmatpush1.msra.mxu0 %v3295
    %5970 = vmatprep.subr.mxu0 %v3305
    %5971 = vmatpush1.msra.mxu0 %v3304
    %5972 = vmatprep.subr.mxu0 %v3314
    %5973 = vmatpush1.msra.mxu0 %v3313
    %5974 = vmatprep.subr.mxu0 %v3323
    %5975 = vmatpush1.msra.mxu0 %v3322
    %5976 = vmatprep.subr.mxu0 %v3332
    %5977 = vmatpush1.msra.mxu0 %v3331
    %5978 = vmatprep.subr.mxu0 %v3341
    %5979 = vmatpush1.msra.mxu0 %v3340
    %5980 = vmatprep.subr.mxu0 %v3350
    %5981 = vmatpush1.msra.mxu0 %v3349
    %5982 = vmatprep.subr.mxu0 %v3359
    %5983 = vmatpush1.msra.mxu0 %v3358
    %5984 = vmatprep.subr.mxu0 %v3368
    %5985 = vmatpush1.msra.mxu0 %v3367
    %5986 = vmatprep.mubr.f32.mxu0 %v1650
    %5987 = vmatmul.mubr.f32.gmra.mrb[0].mxu0 %v1648
    %v5988 = vpop.f32.mrb[0].mxu0
    %v5989 = vadd.f32 %v5918, %v5988
    %v5990 = vpop.f32.mrb[0].mxu0
    %v5991 = vadd.f32 %v5920, %v5990
    %5992 = vdwg.mxu0
    %5993 = vmatprep.subr.mxu0 %v3377
    %5994 = vmatpush1.msra.mxu0 %v3376
    %5995 = vmatprep.subr.mxu0 %v3386
    %5996 = vmatpush1.msra.mxu0 %v3385
    %5997 = vmatprep.subr.mxu0 %v3395
    %5998 = vmatpush1.msra.mxu0 %v3394
    %5999 = vmatprep.subr.mxu0 %v3404
    %6000 = vmatpush1.msra.mxu0 %v3403
    %6001 = vmatprep.subr.mxu0 %v3413
    %6002 = vmatpush1.msra.mxu0 %v3412
    %6003 = vmatprep.subr.mxu0 %v3422
    %6004 = vmatpush1.msra.mxu0 %v3421
    %6005 = vmatprep.subr.mxu0 %v3431
    %6006 = vmatpush1.msra.mxu0 %v3430
    %6007 = vmatprep.subr.mxu0 %v3440
    %6008 = vmatpush1.msra.mxu0 %v3439
    %6009 = vmatprep.subr.mxu0 %v3449
    %6010 = vmatpush1.msra.mxu0 %v3448
    %6011 = vmatprep.subr.mxu0 %v3458
    %6012 = vmatpush1.msra.mxu0 %v3457
    %6013 = vmatprep.subr.mxu0 %v3467
    %6014 = vmatpush1.msra.mxu0 %v3466
    %6015 = vmatprep.subr.mxu0 %v3476
    %6016 = vmatpush1.msra.mxu0 %v3475
    %6017 = vmatprep.subr.mxu0 %v3485
    %6018 = vmatpush1.msra.mxu0 %v3484
    %6019 = vmatprep.subr.mxu0 %v3494
    %6020 = vmatpush1.msra.mxu0 %v3493
    %6021 = vmatprep.subr.mxu0 %v3503
    %6022 = vmatpush1.msra.mxu0 %v3502
    %6023 = vmatprep.subr.mxu0 %v3512
    %6024 = vmatpush1.msra.mxu0 %v3511
    %6025 = vmatprep.subr.mxu0 %v3521
    %6026 = vmatpush1.msra.mxu0 %v3520
    %6027 = vmatprep.subr.mxu0 %v3530
    %6028 = vmatpush1.msra.mxu0 %v3529
    %6029 = vmatprep.subr.mxu0 %v3539
    %6030 = vmatpush1.msra.mxu0 %v3538
    %6031 = vmatprep.subr.mxu0 %v3548
    %6032 = vmatpush1.msra.mxu0 %v3547
    %6033 = vmatprep.subr.mxu0 %v3557
    %6034 = vmatpush1.msra.mxu0 %v3556
    %6035 = vmatprep.subr.mxu0 %v3566
    %6036 = vmatpush1.msra.mxu0 %v3565
    %6037 = vmatprep.subr.mxu0 %v3575
    %6038 = vmatpush1.msra.mxu0 %v3574
    %6039 = vmatprep.subr.mxu0 %v3584
    %6040 = vmatpush1.msra.mxu0 %v3583
    %6041 = vmatprep.subr.mxu0 %v3593
    %6042 = vmatpush1.msra.mxu0 %v3592
    %6043 = vmatprep.subr.mxu0 %v3602
    %6044 = vmatpush1.msra.mxu0 %v3601
    %6045 = vmatprep.subr.mxu0 %v3611
    %6046 = vmatpush1.msra.mxu0 %v3610
    %6047 = vmatprep.subr.mxu0 %v3620
    %6048 = vmatpush1.msra.mxu0 %v3619
    %6049 = vmatprep.subr.mxu0 %v3629
    %6050 = vmatpush1.msra.mxu0 %v3628
    %6051 = vmatprep.subr.mxu0 %v3638
    %6052 = vmatpush1.msra.mxu0 %v3637
    %6053 = vmatprep.subr.mxu0 %v3647
    %6054 = vmatpush1.msra.mxu0 %v3646
    %6055 = vmatprep.subr.mxu0 %v3656
    %6056 = vmatpush1.msra.mxu0 %v3655
    %6057 = vmatprep.mubr.f32.mxu0 %v1792
    %6058 = vmatmul.mubr.f32.gmra.mrb[0].mxu0 %v1790
    %v6059 = vpop.f32.mrb[0].mxu0
    %v6060 = vadd.f32 %v5989, %v6059
    %v6061 = vpop.f32.mrb[0].mxu0
    %v6062 = vadd.f32 %v5991, %v6061
    %6063 = vdwg.mxu0
    %6064 = vmatprep.subr.mxu0 %v3665
    %6065 = vmatpush1.msra.mxu0 %v3664
    %6066 = vmatprep.subr.mxu0 %v3674
    %6067 = vmatpush1.msra.mxu0 %v3673
    %6068 = vmatprep.subr.mxu0 %v3683
    %6069 = vmatpush1.msra.mxu0 %v3682
    %6070 = vmatprep.subr.mxu0 %v3692
    %6071 = vmatpush1.msra.mxu0 %v3691
    %6072 = vmatprep.subr.mxu0 %v3701
    %6073 = vmatpush1.msra.mxu0 %v3700
    %6074 = vmatprep.subr.mxu0 %v3710
    %6075 = vmatpush1.msra.mxu0 %v3709
    %6076 = vmatprep.subr.mxu0 %v3719
    %6077 = vmatpush1.msra.mxu0 %v3718
    %6078 = vmatprep.subr.mxu0 %v3728
    %6079 = vmatpush1.msra.mxu0 %v3727
    %6080 = vmatprep.subr.mxu0 %v3737
    %6081 = vmatpush1.msra.mxu0 %v3736
    %6082 = vmatprep.subr.mxu0 %v3746
    %6083 = vmatpush1.msra.mxu0 %v3745
    %6084 = vmatprep.subr.mxu0 %v3755
    %6085 = vmatpush1.msra.mxu0 %v3754
    %6086 = vmatprep.subr.mxu0 %v3764
    %6087 = vmatpush1.msra.mxu0 %v3763
    %6088 = vmatprep.subr.mxu0 %v3773
    %6089 = vmatpush1.msra.mxu0 %v3772
    %6090 = vmatprep.subr.mxu0 %v3782
    %6091 = vmatpush1.msra.mxu0 %v3781
    %6092 = vmatprep.subr.mxu0 %v3791
    %6093 = vmatpush1.msra.mxu0 %v3790
    %6094 = vmatprep.subr.mxu0 %v3800
    %6095 = vmatpush1.msra.mxu0 %v3799
    %6096 = vmatprep.subr.mxu0 %v3809
    %6097 = vmatpush1.msra.mxu0 %v3808
    %6098 = vmatprep.subr.mxu0 %v3818
    %6099 = vmatpush1.msra.mxu0 %v3817
    %6100 = vmatprep.subr.mxu0 %v3827
    %6101 = vmatpush1.msra.mxu0 %v3826
    %6102 = vmatprep.subr.mxu0 %v3836
    %6103 = vmatpush1.msra.mxu0 %v3835
    %6104 = vmatprep.subr.mxu0 %v3845
    %6105 = vmatpush1.msra.mxu0 %v3844
    %6106 = vmatprep.subr.mxu0 %v3854
    %6107 = vmatpush1.msra.mxu0 %v3853
    %6108 = vmatprep.subr.mxu0 %v3863
    %6109 = vmatpush1.msra.mxu0 %v3862
    %6110 = vmatprep.subr.mxu0 %v3872
    %6111 = vmatpush1.msra.mxu0 %v3871
    %6112 = vmatprep.subr.mxu0 %v3881
    %6113 = vmatpush1.msra.mxu0 %v3880
    %6114 = vmatprep.subr.mxu0 %v3890
    %6115 = vmatpush1.msra.mxu0 %v3889
    %6116 = vmatprep.subr.mxu0 %v3899
    %6117 = vmatpush1.msra.mxu0 %v3898
    %6118 = vmatprep.subr.mxu0 %v3908
    %6119 = vmatpush1.msra.mxu0 %v3907
    %6120 = vmatprep.subr.mxu0 %v3917
    %6121 = vmatpush1.msra.mxu0 %v3916
    %6122 = vmatprep.subr.mxu0 %v3926
    %6123 = vmatpush1.msra.mxu0 %v3925
    %6124 = vmatprep.subr.mxu0 %v3935
    %6125 = vmatpush1.msra.mxu0 %v3934
    %6126 = vmatprep.subr.mxu0 %v3944
    %6127 = vmatpush1.msra.mxu0 %v3943
    %6128 = vmatprep.mubr.f32.mxu0 %v1934
    %6129 = vmatmul.mubr.f32.gmra.mrb[0].mxu0 %v1932
    %v6130 = vpop.f32.mrb[0].mxu0
    %v6131 = vadd.f32 %v6060, %v6130
    %v6132 = vpop.f32.mrb[0].mxu0
    %v6133 = vadd.f32 %v6062, %v6132
    %6134 = vdwg.mxu0
    %6135 = vmatprep.subr.mxu0 %v3953
    %6136 = vmatpush1.msra.mxu0 %v3952
    %6137 = vmatprep.subr.mxu0 %v3962
    %6138 = vmatpush1.msra.mxu0 %v3961
    %6139 = vmatprep.subr.mxu0 %v3971
    %6140 = vmatpush1.msra.mxu0 %v3970
    %6141 = vmatprep.subr.mxu0 %v3980
    %6142 = vmatpush1.msra.mxu0 %v3979
    %6143 = vmatprep.subr.mxu0 %v3989
    %6144 = vmatpush1.msra.mxu0 %v3988
    %6145 = vmatprep.subr.mxu0 %v3998
    %6146 = vmatpush1.msra.mxu0 %v3997
    %6147 = vmatprep.subr.mxu0 %v4007
    %6148 = vmatpush1.msra.mxu0 %v4006
    %6149 = vmatprep.subr.mxu0 %v4016
    %6150 = vmatpush1.msra.mxu0 %v4015
    %6151 = vmatprep.subr.mxu0 %v4025
    %6152 = vmatpush1.msra.mxu0 %v4024
    %6153 = vmatprep.subr.mxu0 %v4034
    %6154 = vmatpush1.msra.mxu0 %v4033
    %6155 = vmatprep.subr.mxu0 %v4043
    %6156 = vmatpush1.msra.mxu0 %v4042
    %6157 = vmatprep.subr.mxu0 %v4052
    %6158 = vmatpush1.msra.mxu0 %v4051
    %6159 = vmatprep.subr.mxu0 %v4061
    %6160 = vmatpush1.msra.mxu0 %v4060
    %6161 = vmatprep.subr.mxu0 %v4070
    %6162 = vmatpush1.msra.mxu0 %v4069
    %6163 = vmatprep.subr.mxu0 %v4079
    %6164 = vmatpush1.msra.mxu0 %v4078
    %6165 = vmatprep.subr.mxu0 %v4088
    %6166 = vmatpush1.msra.mxu0 %v4087
    %6167 = vmatprep.subr.mxu0 %v4097
    %6168 = vmatpush1.msra.mxu0 %v4096
    %6169 = vmatprep.subr.mxu0 %v4106
    %6170 = vmatpush1.msra.mxu0 %v4105
    %6171 = vmatprep.subr.mxu0 %v4115
    %6172 = vmatpush1.msra.mxu0 %v4114
    %6173 = vmatprep.subr.mxu0 %v4124
    %6174 = vmatpush1.msra.mxu0 %v4123
    %6175 = vmatprep.subr.mxu0 %v4133
    %6176 = vmatpush1.msra.mxu0 %v4132
    %6177 = vmatprep.subr.mxu0 %v4142
    %6178 = vmatpush1.msra.mxu0 %v4141
    %6179 = vmatprep.subr.mxu0 %v4151
    %6180 = vmatpush1.msra.mxu0 %v4150
    %6181 = vmatprep.subr.mxu0 %v4160
    %6182 = vmatpush1.msra.mxu0 %v4159
    %6183 = vmatprep.subr.mxu0 %v4169
    %6184 = vmatpush1.msra.mxu0 %v4168
    %6185 = vmatprep.subr.mxu0 %v4178
    %6186 = vmatpush1.msra.mxu0 %v4177
    %6187 = vmatprep.subr.mxu0 %v4187
    %6188 = vmatpush1.msra.mxu0 %v4186
    %6189 = vmatprep.subr.mxu0 %v4196
    %6190 = vmatpush1.msra.mxu0 %v4195
    %6191 = vmatprep.subr.mxu0 %v4205
    %6192 = vmatpush1.msra.mxu0 %v4204
    %6193 = vmatprep.subr.mxu0 %v4214
    %6194 = vmatpush1.msra.mxu0 %v4213
    %6195 = vmatprep.subr.mxu0 %v4223
    %6196 = vmatpush1.msra.mxu0 %v4222
    %6197 = vmatprep.subr.mxu0 %v4232
    %6198 = vmatpush1.msra.mxu0 %v4231
    %6199 = vmatprep.mubr.f32.mxu0 %v2076
    %6200 = vmatmul.mubr.f32.gmra.mrb[0].mxu0 %v2074
    %v6201 = vpop.f32.mrb[0].mxu0
    %v6202 = vadd.f32 %v6131, %v6201
    %v6203 = vpop.f32.mrb[0].mxu0
    %v6204 = vadd.f32 %v6133, %v6203
    %6205 = vdwg.mxu0
    %6206 = vmatprep.subr.mxu0 %v4241
    %6207 = vmatpush1.msra.mxu0 %v4240
    %6208 = vmatprep.subr.mxu0 %v4250
    %6209 = vmatpush1.msra.mxu0 %v4249
    %6210 = vmatprep.subr.mxu0 %v4259
    %6211 = vmatpush1.msra.mxu0 %v4258
    %6212 = vmatprep.subr.mxu0 %v4268
    %6213 = vmatpush1.msra.mxu0 %v4267
    %6214 = vmatprep.subr.mxu0 %v4277
    %6215 = vmatpush1.msra.mxu0 %v4276
    %6216 = vmatprep.subr.mxu0 %v4286
    %6217 = vmatpush1.msra.mxu0 %v4285
    %6218 = vmatprep.subr.mxu0 %v4295
    %6219 = vmatpush1.msra.mxu0 %v4294
    %6220 = vmatprep.subr.mxu0 %v4304
    %6221 = vmatpush1.msra.mxu0 %v4303
    %6222 = vmatprep.subr.mxu0 %v4313
    %6223 = vmatpush1.msra.mxu0 %v4312
    %6224 = vmatprep.subr.mxu0 %v4322
    %6225 = vmatpush1.msra.mxu0 %v4321
    %6226 = vmatprep.subr.mxu0 %v4331
    %6227 = vmatpush1.msra.mxu0 %v4330
    %6228 = vmatprep.subr.mxu0 %v4340
    %6229 = vmatpush1.msra.mxu0 %v4339
    %6230 = vmatprep.subr.mxu0 %v4349
    %6231 = vmatpush1.msra.mxu0 %v4348
    %6232 = vmatprep.subr.mxu0 %v4358
    %6233 = vmatpush1.msra.mxu0 %v4357
    %6234 = vmatprep.subr.mxu0 %v4367
    %6235 = vmatpush1.msra.mxu0 %v4366
    %6236 = vmatprep.subr.mxu0 %v4376
    %6237 = vmatpush1.msra.mxu0 %v4375
    %6238 = vmatprep.subr.mxu0 %v4385
    %6239 = vmatpush1.msra.mxu0 %v4384
    %6240 = vmatprep.subr.mxu0 %v4394
    %6241 = vmatpush1.msra.mxu0 %v4393
    %6242 = vmatprep.subr.mxu0 %v4403
    %6243 = vmatpush1.msra.mxu0 %v4402
    %6244 = vmatprep.subr.mxu0 %v4412
    %6245 = vmatpush1.msra.mxu0 %v4411
    %6246 = vmatprep.subr.mxu0 %v4421
    %6247 = vmatpush1.msra.mxu0 %v4420
    %6248 = vmatprep.subr.mxu0 %v4430
    %6249 = vmatpush1.msra.mxu0 %v4429
    %6250 = vmatprep.subr.mxu0 %v4439
    %6251 = vmatpush1.msra.mxu0 %v4438
    %6252 = vmatprep.subr.mxu0 %v4448
    %6253 = vmatpush1.msra.mxu0 %v4447
    %6254 = vmatprep.subr.mxu0 %v4457
    %6255 = vmatpush1.msra.mxu0 %v4456
    %6256 = vmatprep.subr.mxu0 %v4466
    %6257 = vmatpush1.msra.mxu0 %v4465
    %6258 = vmatprep.subr.mxu0 %v4475
    %6259 = vmatpush1.msra.mxu0 %v4474
    %6260 = vmatprep.subr.mxu0 %v4484
    %6261 = vmatpush1.msra.mxu0 %v4483
    %6262 = vmatprep.subr.mxu0 %v4493
    %6263 = vmatpush1.msra.mxu0 %v4492
    %6264 = vmatprep.subr.mxu0 %v4502
    %6265 = vmatpush1.msra.mxu0 %v4501
    %6266 = vmatprep.subr.mxu0 %v4511
    %6267 = vmatpush1.msra.mxu0 %v4510
    %6268 = vmatprep.subr.mxu0 %v4520
    %6269 = vmatpush1.msra.mxu0 %v4519
    %6270 = vmatprep.mubr.f32.mxu0 %v2218
    %6271 = vmatmul.mubr.f32.gmra.mrb[0].mxu0 %v2216
    %v6272 = vpop.f32.mrb[0].mxu0
    %v6273 = vadd.f32 %v6202, %v6272
    %v6274 = vpop.f32.mrb[0].mxu0
    %v6275 = vadd.f32 %v6204, %v6274
    %6276 = vdwg.mxu0
    %6277 = vmatprep.subr.mxu0 %v2227
    %6278 = vmatpush1.msra.mxu0 %v2226
    %6279 = vmatprep.subr.mxu0 %v2236
    %6280 = vmatpush1.msra.mxu0 %v2235
    %6281 = vmatprep.subr.mxu0 %v2245
    %6282 = vmatpush1.msra.mxu0 %v2244
    %6283 = vmatprep.subr.mxu0 %v2254
    %6284 = vmatpush1.msra.mxu0 %v2253
    %6285 = vmatprep.subr.mxu0 %v2263
    %6286 = vmatpush1.msra.mxu0 %v2262
    %6287 = vmatprep.subr.mxu0 %v2272
    %6288 = vmatpush1.msra.mxu0 %v2271
    %6289 = vmatprep.subr.mxu0 %v2281
    %6290 = vmatpush1.msra.mxu0 %v2280
    %6291 = vmatprep.subr.mxu0 %v2290
    %6292 = vmatpush1.msra.mxu0 %v2289
    %6293 = vmatprep.subr.mxu0 %v2299
    %6294 = vmatpush1.msra.mxu0 %v2298
    %6295 = vmatprep.subr.mxu0 %v2308
    %6296 = vmatpush1.msra.mxu0 %v2307
    %6297 = vmatprep.subr.mxu0 %v2317
    %6298 = vmatpush1.msra.mxu0 %v2316
    %6299 = vmatprep.subr.mxu0 %v2326
    %6300 = vmatpush1.msra.mxu0 %v2325
    %6301 = vmatprep.subr.mxu0 %v2335
    %6302 = vmatpush1.msra.mxu0 %v2334
    %6303 = vmatprep.subr.mxu0 %v2344
    %6304 = vmatpush1.msra.mxu0 %v2343
    %6305 = vmatprep.subr.mxu0 %v2353
    %6306 = vmatpush1.msra.mxu0 %v2352
    %6307 = vmatprep.subr.mxu0 %v2362
    %6308 = vmatpush1.msra.mxu0 %v2361
    %6309 = vmatprep.subr.mxu0 %v2371
    %6310 = vmatpush1.msra.mxu0 %v2370
    %6311 = vmatprep.subr.mxu0 %v2380
    %6312 = vmatpush1.msra.mxu0 %v2379
    %6313 = vmatprep.subr.mxu0 %v2389
    %6314 = vmatpush1.msra.mxu0 %v2388
    %6315 = vmatprep.subr.mxu0 %v2398
    %6316 = vmatpush1.msra.mxu0 %v2397
    %6317 = vmatprep.subr.mxu0 %v2407
    %6318 = vmatpush1.msra.mxu0 %v2406
    %6319 = vmatprep.subr.mxu0 %v2416
    %6320 = vmatpush1.msra.mxu0 %v2415
    %6321 = vmatprep.subr.mxu0 %v2425
    %6322 = vmatpush1.msra.mxu0 %v2424
    %6323 = vmatprep.subr.mxu0 %v2434
    %6324 = vmatpush1.msra.mxu0 %v2433
    %6325 = vmatprep.subr.mxu0 %v2443
    %6326 = vmatpush1.msra.mxu0 %v2442
    %6327 = vmatprep.subr.mxu0 %v2452
    %6328 = vmatpush1.msra.mxu0 %v2451
    %6329 = vmatprep.subr.mxu0 %v2461
    %6330 = vmatpush1.msra.mxu0 %v2460
    %6331 = vmatprep.subr.mxu0 %v2470
    %6332 = vmatpush1.msra.mxu0 %v2469
    %6333 = vmatprep.subr.mxu0 %v2479
    %6334 = vmatpush1.msra.mxu0 %v2478
    %6335 = vmatprep.subr.mxu0 %v2488
    %6336 = vmatpush1.msra.mxu0 %v2487
    %6337 = vmatprep.subr.mxu0 %v2497
    %6338 = vmatpush1.msra.mxu0 %v2496
    %6339 = vmatprep.subr.mxu0 %v2506
    %6340 = vmatpush1.msra.mxu0 %v2505
    %6341 = vmatprep.mubr.f32.mxu0 %v1224
    %6342 = vmatmul.mubr.f32.gmra.mrb[0].mxu0 %v1222
    %v6343 = vpop.f32.mrb[0].mxu0
    %v6344 = vadd.f32 %v4555, %v6343
    %v6345 = vpop.f32.mrb[0].mxu0
    %v6346 = vadd.f32 %v4559, %v6345
    %6347 = vdwg.mxu0
    %6348 = vmatprep.subr.mxu0 %v2515
    %6349 = vmatpush1.msra.mxu0 %v2514
    %6350 = vmatprep.subr.mxu0 %v2524
    %6351 = vmatpush1.msra.mxu0 %v2523
    %6352 = vmatprep.subr.mxu0 %v2533
    %6353 = vmatpush1.msra.mxu0 %v2532
    %6354 = vmatprep.subr.mxu0 %v2542
    %6355 = vmatpush1.msra.mxu0 %v2541
    %6356 = vmatprep.subr.mxu0 %v2551
    %6357 = vmatpush1.msra.mxu0 %v2550
    %6358 = vmatprep.subr.mxu0 %v2560
    %6359 = vmatpush1.msra.mxu0 %v2559
    %6360 = vmatprep.subr.mxu0 %v2569
    %6361 = vmatpush1.msra.mxu0 %v2568
    %6362 = vmatprep.subr.mxu0 %v2578
    %6363 = vmatpush1.msra.mxu0 %v2577
    %6364 = vmatprep.subr.mxu0 %v2587
    %6365 = vmatpush1.msra.mxu0 %v2586
    %6366 = vmatprep.subr.mxu0 %v2596
    %6367 = vmatpush1.msra.mxu0 %v2595
    %6368 = vmatprep.subr.mxu0 %v2605
    %6369 = vmatpush1.msra.mxu0 %v2604
    %6370 = vmatprep.subr.mxu0 %v2614
    %6371 = vmatpush1.msra.mxu0 %v2613
    %6372 = vmatprep.subr.mxu0 %v2623
    %6373 = vmatpush1.msra.mxu0 %v2622
    %6374 = vmatprep.subr.mxu0 %v2632
    %6375 = vmatpush1.msra.mxu0 %v2631
    %6376 = vmatprep.subr.mxu0 %v2641
    %6377 = vmatpush1.msra.mxu0 %v2640
    %6378 = vmatprep.subr.mxu0 %v2650
    %6379 = vmatpush1.msra.mxu0 %v2649
    %6380 = vmatprep.subr.mxu0 %v2659
    %6381 = vmatpush1.msra.mxu0 %v2658
    %6382 = vmatprep.subr.mxu0 %v2668
    %6383 = vmatpush1.msra.mxu0 %v2667
    %6384 = vmatprep.subr.mxu0 %v2677
    %6385 = vmatpush1.msra.mxu0 %v2676
    %6386 = vmatprep.subr.mxu0 %v2686
    %6387 = vmatpush1.msra.mxu0 %v2685
    %6388 = vmatprep.subr.mxu0 %v2695
    %6389 = vmatpush1.msra.mxu0 %v2694
    %6390 = vmatprep.subr.mxu0 %v2704
    %6391 = vmatpush1.msra.mxu0 %v2703
    %6392 = vmatprep.subr.mxu0 %v2713
    %6393 = vmatpush1.msra.mxu0 %v2712
    %6394 = vmatprep.subr.mxu0 %v2722
    %6395 = vmatpush1.msra.mxu0 %v2721
    %6396 = vmatprep.subr.mxu0 %v2731
    %6397 = vmatpush1.msra.mxu0 %v2730
    %6398 = vmatprep.subr.mxu0 %v2740
    %6399 = vmatpush1.msra.mxu0 %v2739
    %6400 = vmatprep.subr.mxu0 %v2749
    %6401 = vmatpush1.msra.mxu0 %v2748
    %6402 = vmatprep.subr.mxu0 %v2758
    %6403 = vmatpush1.msra.mxu0 %v2757
    %6404 = vmatprep.subr.mxu0 %v2767
    %6405 = vmatpush1.msra.mxu0 %v2766
    %6406 = vmatprep.subr.mxu0 %v2776
    %6407 = vmatpush1.msra.mxu0 %v2775
    %6408 = vmatprep.subr.mxu0 %v2785
    %6409 = vmatpush1.msra.mxu0 %v2784
    %6410 = vmatprep.subr.mxu0 %v2794
    %6411 = vmatpush1.msra.mxu0 %v2793
    %6412 = vmatprep.mubr.f32.mxu0 %v1366
    %6413 = vmatmul.mubr.f32.gmra.mrb[0].mxu0 %v1364
    %v6414 = vpop.f32.mrb[0].mxu0
    %v6415 = vadd.f32 %v6344, %v6414
    %v6416 = vpop.f32.mrb[0].mxu0
    %v6417 = vadd.f32 %v6346, %v6416
    %6418 = vdwg.mxu0
    %6419 = vmatprep.subr.mxu0 %v2803
    %6420 = vmatpush1.msra.mxu0 %v2802
    %6421 = vmatprep.subr.mxu0 %v2812
    %6422 = vmatpush1.msra.mxu0 %v2811
    %6423 = vmatprep.subr.mxu0 %v2821
    %6424 = vmatpush1.msra.mxu0 %v2820
    %6425 = vmatprep.subr.mxu0 %v2830
    %6426 = vmatpush1.msra.mxu0 %v2829
    %6427 = vmatprep.subr.mxu0 %v2839
    %6428 = vmatpush1.msra.mxu0 %v2838
    %6429 = vmatprep.subr.mxu0 %v2848
    %6430 = vmatpush1.msra.mxu0 %v2847
    %6431 = vmatprep.subr.mxu0 %v2857
    %6432 = vmatpush1.msra.mxu0 %v2856
    %6433 = vmatprep.subr.mxu0 %v2866
    %6434 = vmatpush1.msra.mxu0 %v2865
    %6435 = vmatprep.subr.mxu0 %v2875
    %6436 = vmatpush1.msra.mxu0 %v2874
    %6437 = vmatprep.subr.mxu0 %v2884
    %6438 = vmatpush1.msra.mxu0 %v2883
    %6439 = vmatprep.subr.mxu0 %v2893
    %6440 = vmatpush1.msra.mxu0 %v2892
    %6441 = vmatprep.subr.mxu0 %v2902
    %6442 = vmatpush1.msra.mxu0 %v2901
    %6443 = vmatprep.subr.mxu0 %v2911
    %6444 = vmatpush1.msra.mxu0 %v2910
    %6445 = vmatprep.subr.mxu0 %v2920
    %6446 = vmatpush1.msra.mxu0 %v2919
    %6447 = vmatprep.subr.mxu0 %v2929
    %6448 = vmatpush1.msra.mxu0 %v2928
    %6449 = vmatprep.subr.mxu0 %v2938
    %6450 = vmatpush1.msra.mxu0 %v2937
    %6451 = vmatprep.subr.mxu0 %v2947
    %6452 = vmatpush1.msra.mxu0 %v2946
    %6453 = vmatprep.subr.mxu0 %v2956
    %6454 = vmatpush1.msra.mxu0 %v2955
    %6455 = vmatprep.subr.mxu0 %v2965
    %6456 = vmatpush1.msra.mxu0 %v2964
    %6457 = vmatprep.subr.mxu0 %v2974
    %6458 = vmatpush1.msra.mxu0 %v2973
    %6459 = vmatprep.subr.mxu0 %v2983
    %6460 = vmatpush1.msra.mxu0 %v2982
    %6461 = vmatprep.subr.mxu0 %v2992
    %6462 = vmatpush1.msra.mxu0 %v2991
    %6463 = vmatprep.subr.mxu0 %v3001
    %6464 = vmatpush1.msra.mxu0 %v3000
    %6465 = vmatprep.subr.mxu0 %v3010
    %6466 = vmatpush1.msra.mxu0 %v3009
    %6467 = vmatprep.subr.mxu0 %v3019
    %6468 = vmatpush1.msra.mxu0 %v3018
    %6469 = vmatprep.subr.mxu0 %v3028
    %6470 = vmatpush1.msra.mxu0 %v3027
    %6471 = vmatprep.subr.mxu0 %v3037
    %6472 = vmatpush1.msra.mxu0 %v3036
    %6473 = vmatprep.subr.mxu0 %v3046
    %6474 = vmatpush1.msra.mxu0 %v3045
    %6475 = vmatprep.subr.mxu0 %v3055
    %6476 = vmatpush1.msra.mxu0 %v3054
    %6477 = vmatprep.subr.mxu0 %v3064
    %6478 = vmatpush1.msra.mxu0 %v3063
    %6479 = vmatprep.subr.mxu0 %v3073
    %6480 = vmatpush1.msra.mxu0 %v3072
    %6481 = vmatprep.subr.mxu0 %v3082
    %6482 = vmatpush1.msra.mxu0 %v3081
    %6483 = vmatprep.mubr.f32.mxu0 %v1508
    %6484 = vmatmul.mubr.f32.gmra.mrb[0].mxu0 %v1506
    %v6485 = vpop.f32.mrb[0].mxu0
    %v6486 = vadd.f32 %v6415, %v6485
    %v6487 = vpop.f32.mrb[0].mxu0
    %v6488 = vadd.f32 %v6417, %v6487
    %6489 = vdwg.mxu0
    %6490 = vmatprep.subr.mxu0 %v3091
    %6491 = vmatpush1.msra.mxu0 %v3090
    %6492 = vmatprep.subr.mxu0 %v3100
    %6493 = vmatpush1.msra.mxu0 %v3099
    %6494 = vmatprep.subr.mxu0 %v3109
    %6495 = vmatpush1.msra.mxu0 %v3108
    %6496 = vmatprep.subr.mxu0 %v3118
    %6497 = vmatpush1.msra.mxu0 %v3117
    %6498 = vmatprep.subr.mxu0 %v3127
    %6499 = vmatpush1.msra.mxu0 %v3126
    %6500 = vmatprep.subr.mxu0 %v3136
    %6501 = vmatpush1.msra.mxu0 %v3135
    %6502 = vmatprep.subr.mxu0 %v3145
    %6503 = vmatpush1.msra.mxu0 %v3144
    %6504 = vmatprep.subr.mxu0 %v3154
    %6505 = vmatpush1.msra.mxu0 %v3153
    %6506 = vmatprep.subr.mxu0 %v3163
    %6507 = vmatpush1.msra.mxu0 %v3162
    %6508 = vmatprep.subr.mxu0 %v3172
    %6509 = vmatpush1.msra.mxu0 %v3171
    %6510 = vmatprep.subr.mxu0 %v3181
    %6511 = vmatpush1.msra.mxu0 %v3180
    %6512 = vmatprep.subr.mxu0 %v3190
    %6513 = vmatpush1.msra.mxu0 %v3189
    %6514 = vmatprep.subr.mxu0 %v3199
    %6515 = vmatpush1.msra.mxu0 %v3198
    %6516 = vmatprep.subr.mxu0 %v3208
    %6517 = vmatpush1.msra.mxu0 %v3207
    %6518 = vmatprep.subr.mxu0 %v3217
    %6519 = vmatpush1.msra.mxu0 %v3216
    %6520 = vmatprep.subr.mxu0 %v3226
    %6521 = vmatpush1.msra.mxu0 %v3225
    %6522 = vmatprep.subr.mxu0 %v3235
    %6523 = vmatpush1.msra.mxu0 %v3234
    %6524 = vmatprep.subr.mxu0 %v3244
    %6525 = vmatpush1.msra.mxu0 %v3243
    %6526 = vmatprep.subr.mxu0 %v3253
    %6527 = vmatpush1.msra.mxu0 %v3252
    %6528 = vmatprep.subr.mxu0 %v3262
    %6529 = vmatpush1.msra.mxu0 %v3261
    %6530 = vmatprep.subr.mxu0 %v3271
    %6531 = vmatpush1.msra.mxu0 %v3270
    %6532 = vmatprep.subr.mxu0 %v3280
    %6533 = vmatpush1.msra.mxu0 %v3279
    %6534 = vmatprep.subr.mxu0 %v3289
    %6535 = vmatpush1.msra.mxu0 %v3288
    %6536 = vmatprep.subr.mxu0 %v3298
    %6537 = vmatpush1.msra.mxu0 %v3297
    %6538 = vmatprep.subr.mxu0 %v3307
    %6539 = vmatpush1.msra.mxu0 %v3306
    %6540 = vmatprep.subr.mxu0 %v3316
    %6541 = vmatpush1.msra.mxu0 %v3315
    %6542 = vmatprep.subr.mxu0 %v3325
    %6543 = vmatpush1.msra.mxu0 %v3324
    %6544 = vmatprep.subr.mxu0 %v3334
    %6545 = vmatpush1.msra.mxu0 %v3333
    %6546 = vmatprep.subr.mxu0 %v3343
    %6547 = vmatpush1.msra.mxu0 %v3342
    %6548 = vmatprep.subr.mxu0 %v3352
    %6549 = vmatpush1.msra.mxu0 %v3351
    %6550 = vmatprep.subr.mxu0 %v3361
    %6551 = vmatpush1.msra.mxu0 %v3360
    %6552 = vmatprep.subr.mxu0 %v3370
    %6553 = vmatpush1.msra.mxu0 %v3369
    %6554 = vmatprep.mubr.f32.mxu0 %v1650
    %6555 = vmatmul.mubr.f32.gmra.mrb[0].mxu0 %v1648
    %v6556 = vpop.f32.mrb[0].mxu0
    %v6557 = vadd.f32 %v6486, %v6556
    %v6558 = vpop.f32.mrb[0].mxu0
    %v6559 = vadd.f32 %v6488, %v6558
    %6560 = vdwg.mxu0
    %6561 = vmatprep.subr.mxu0 %v3379
    %6562 = vmatpush1.msra.mxu0 %v3378
    %6563 = vmatprep.subr.mxu0 %v3388
    %6564 = vmatpush1.msra.mxu0 %v3387
    %6565 = vmatprep.subr.mxu0 %v3397
    %6566 = vmatpush1.msra.mxu0 %v3396
    %6567 = vmatprep.subr.mxu0 %v3406
    %6568 = vmatpush1.msra.mxu0 %v3405
    %6569 = vmatprep.subr.mxu0 %v3415
    %6570 = vmatpush1.msra.mxu0 %v3414
    %6571 = vmatprep.subr.mxu0 %v3424
    %6572 = vmatpush1.msra.mxu0 %v3423
    %6573 = vmatprep.subr.mxu0 %v3433
    %6574 = vmatpush1.msra.mxu0 %v3432
    %6575 = vmatprep.subr.mxu0 %v3442
    %6576 = vmatpush1.msra.mxu0 %v3441
    %6577 = vmatprep.subr.mxu0 %v3451
    %6578 = vmatpush1.msra.mxu0 %v3450
    %6579 = vmatprep.subr.mxu0 %v3460
    %6580 = vmatpush1.msra.mxu0 %v3459
    %6581 = vmatprep.subr.mxu0 %v3469
    %6582 = vmatpush1.msra.mxu0 %v3468
    %6583 = vmatprep.subr.mxu0 %v3478
    %6584 = vmatpush1.msra.mxu0 %v3477
    %6585 = vmatprep.subr.mxu0 %v3487
    %6586 = vmatpush1.msra.mxu0 %v3486
    %6587 = vmatprep.subr.mxu0 %v3496
    %6588 = vmatpush1.msra.mxu0 %v3495
    %6589 = vmatprep.subr.mxu0 %v3505
    %6590 = vmatpush1.msra.mxu0 %v3504
    %6591 = vmatprep.subr.mxu0 %v3514
    %6592 = vmatpush1.msra.mxu0 %v3513
    %6593 = vmatprep.subr.mxu0 %v3523
    %6594 = vmatpush1.msra.mxu0 %v3522
    %6595 = vmatprep.subr.mxu0 %v3532
    %6596 = vmatpush1.msra.mxu0 %v3531
    %6597 = vmatprep.subr.mxu0 %v3541
    %6598 = vmatpush1.msra.mxu0 %v3540
    %6599 = vmatprep.subr.mxu0 %v3550
    %6600 = vmatpush1.msra.mxu0 %v3549
    %6601 = vmatprep.subr.mxu0 %v3559
    %6602 = vmatpush1.msra.mxu0 %v3558
    %6603 = vmatprep.subr.mxu0 %v3568
    %6604 = vmatpush1.msra.mxu0 %v3567
    %6605 = vmatprep.subr.mxu0 %v3577
    %6606 = vmatpush1.msra.mxu0 %v3576
    %6607 = vmatprep.subr.mxu0 %v3586
    %6608 = vmatpush1.msra.mxu0 %v3585
    %6609 = vmatprep.subr.mxu0 %v3595
    %6610 = vmatpush1.msra.mxu0 %v3594
    %6611 = vmatprep.subr.mxu0 %v3604
    %6612 = vmatpush1.msra.mxu0 %v3603
    %6613 = vmatprep.subr.mxu0 %v3613
    %6614 = vmatpush1.msra.mxu0 %v3612
    %6615 = vmatprep.subr.mxu0 %v3622
    %6616 = vmatpush1.msra.mxu0 %v3621
    %6617 = vmatprep.subr.mxu0 %v3631
    %6618 = vmatpush1.msra.mxu0 %v3630
    %6619 = vmatprep.subr.mxu0 %v3640
    %6620 = vmatpush1.msra.mxu0 %v3639
    %6621 = vmatprep.subr.mxu0 %v3649
    %6622 = vmatpush1.msra.mxu0 %v3648
    %6623 = vmatprep.subr.mxu0 %v3658
    %6624 = vmatpush1.msra.mxu0 %v3657
    %6625 = vmatprep.mubr.f32.mxu0 %v1792
    %6626 = vmatmul.mubr.f32.gmra.mrb[0].mxu0 %v1790
    %v6627 = vpop.f32.mrb[0].mxu0
    %v6628 = vadd.f32 %v6557, %v6627
    %v6629 = vpop.f32.mrb[0].mxu0
    %v6630 = vadd.f32 %v6559, %v6629
    %6631 = vdwg.mxu0
    %6632 = vmatprep.subr.mxu0 %v3667
    %6633 = vmatpush1.msra.mxu0 %v3666
    %6634 = vmatprep.subr.mxu0 %v3676
    %6635 = vmatpush1.msra.mxu0 %v3675
    %6636 = vmatprep.subr.mxu0 %v3685
    %6637 = vmatpush1.msra.mxu0 %v3684
    %6638 = vmatprep.subr.mxu0 %v3694
    %6639 = vmatpush1.msra.mxu0 %v3693
    %6640 = vmatprep.subr.mxu0 %v3703
    %6641 = vmatpush1.msra.mxu0 %v3702
    %6642 = vmatprep.subr.mxu0 %v3712
    %6643 = vmatpush1.msra.mxu0 %v3711
    %6644 = vmatprep.subr.mxu0 %v3721
    %6645 = vmatpush1.msra.mxu0 %v3720
    %6646 = vmatprep.subr.mxu0 %v3730
    %6647 = vmatpush1.msra.mxu0 %v3729
    %6648 = vmatprep.subr.mxu0 %v3739
    %6649 = vmatpush1.msra.mxu0 %v3738
    %6650 = vmatprep.subr.mxu0 %v3748
    %6651 = vmatpush1.msra.mxu0 %v3747
    %6652 = vmatprep.subr.mxu0 %v3757
    %6653 = vmatpush1.msra.mxu0 %v3756
    %6654 = vmatprep.subr.mxu0 %v3766
    %6655 = vmatpush1.msra.mxu0 %v3765
    %6656 = vmatprep.subr.mxu0 %v3775
    %6657 = vmatpush1.msra.mxu0 %v3774
    %6658 = vmatprep.subr.mxu0 %v3784
    %6659 = vmatpush1.msra.mxu0 %v3783
    %6660 = vmatprep.subr.mxu0 %v3793
    %6661 = vmatpush1.msra.mxu0 %v3792
    %6662 = vmatprep.subr.mxu0 %v3802
    %6663 = vmatpush1.msra.mxu0 %v3801
    %6664 = vmatprep.subr.mxu0 %v3811
    %6665 = vmatpush1.msra.mxu0 %v3810
    %6666 = vmatprep.subr.mxu0 %v3820
    %6667 = vmatpush1.msra.mxu0 %v3819
    %6668 = vmatprep.subr.mxu0 %v3829
    %6669 = vmatpush1.msra.mxu0 %v3828
    %6670 = vmatprep.subr.mxu0 %v3838
    %6671 = vmatpush1.msra.mxu0 %v3837
    %6672 = vmatprep.subr.mxu0 %v3847
    %6673 = vmatpush1.msra.mxu0 %v3846
    %6674 = vmatprep.subr.mxu0 %v3856
    %6675 = vmatpush1.msra.mxu0 %v3855
    %6676 = vmatprep.subr.mxu0 %v3865
    %6677 = vmatpush1.msra.mxu0 %v3864
    %6678 = vmatprep.subr.mxu0 %v3874
    %6679 = vmatpush1.msra.mxu0 %v3873
    %6680 = vmatprep.subr.mxu0 %v3883
    %6681 = vmatpush1.msra.mxu0 %v3882
    %6682 = vmatprep.subr.mxu0 %v3892
    %6683 = vmatpush1.msra.mxu0 %v3891
    %6684 = vmatprep.subr.mxu0 %v3901
    %6685 = vmatpush1.msra.mxu0 %v3900
    %6686 = vmatprep.subr.mxu0 %v3910
    %6687 = vmatpush1.msra.mxu0 %v3909
    %6688 = vmatprep.subr.mxu0 %v3919
    %6689 = vmatpush1.msra.mxu0 %v3918
    %6690 = vmatprep.subr.mxu0 %v3928
    %6691 = vmatpush1.msra.mxu0 %v3927
    %6692 = vmatprep.subr.mxu0 %v3937
    %6693 = vmatpush1.msra.mxu0 %v3936
    %6694 = vmatprep.subr.mxu0 %v3946
    %6695 = vmatpush1.msra.mxu0 %v3945
    %6696 = vmatprep.mubr.f32.mxu0 %v1934
    %6697 = vmatmul.mubr.f32.gmra.mrb[0].mxu0 %v1932
    %v6698 = vpop.f32.mrb[0].mxu0
    %v6699 = vadd.f32 %v6628, %v6698
    %v6700 = vpop.f32.mrb[0].mxu0
    %v6701 = vadd.f32 %v6630, %v6700
    %6702 = vdwg.mxu0
    %6703 = vmatprep.subr.mxu0 %v3955
    %6704 = vmatpush1.msra.mxu0 %v3954
    %6705 = vmatprep.subr.mxu0 %v3964
    %6706 = vmatpush1.msra.mxu0 %v3963
    %6707 = vmatprep.subr.mxu0 %v3973
    %6708 = vmatpush1.msra.mxu0 %v3972
    %6709 = vmatprep.subr.mxu0 %v3982
    %6710 = vmatpush1.msra.mxu0 %v3981
    %6711 = vmatprep.subr.mxu0 %v3991
    %6712 = vmatpush1.msra.mxu0 %v3990
    %6713 = vmatprep.subr.mxu0 %v4000
    %6714 = vmatpush1.msra.mxu0 %v3999
    %6715 = vmatprep.subr.mxu0 %v4009
    %6716 = vmatpush1.msra.mxu0 %v4008
    %6717 = vmatprep.subr.mxu0 %v4018
    %6718 = vmatpush1.msra.mxu0 %v4017
    %6719 = vmatprep.subr.mxu0 %v4027
    %6720 = vmatpush1.msra.mxu0 %v4026
    %6721 = vmatprep.subr.mxu0 %v4036
    %6722 = vmatpush1.msra.mxu0 %v4035
    %6723 = vmatprep.subr.mxu0 %v4045
    %6724 = vmatpush1.msra.mxu0 %v4044
    %6725 = vmatprep.subr.mxu0 %v4054
    %6726 = vmatpush1.msra.mxu0 %v4053
    %6727 = vmatprep.subr.mxu0 %v4063
    %6728 = vmatpush1.msra.mxu0 %v4062
    %6729 = vmatprep.subr.mxu0 %v4072
    %6730 = vmatpush1.msra.mxu0 %v4071
    %6731 = vmatprep.subr.mxu0 %v4081
    %6732 = vmatpush1.msra.mxu0 %v4080
    %6733 = vmatprep.subr.mxu0 %v4090
    %6734 = vmatpush1.msra.mxu0 %v4089
    %6735 = vmatprep.subr.mxu0 %v4099
    %6736 = vmatpush1.msra.mxu0 %v4098
    %6737 = vmatprep.subr.mxu0 %v4108
    %6738 = vmatpush1.msra.mxu0 %v4107
    %6739 = vmatprep.subr.mxu0 %v4117
    %6740 = vmatpush1.msra.mxu0 %v4116
    %6741 = vmatprep.subr.mxu0 %v4126
    %6742 = vmatpush1.msra.mxu0 %v4125
    %6743 = vmatprep.subr.mxu0 %v4135
    %6744 = vmatpush1.msra.mxu0 %v4134
    %6745 = vmatprep.subr.mxu0 %v4144
    %6746 = vmatpush1.msra.mxu0 %v4143
    %6747 = vmatprep.subr.mxu0 %v4153
    %6748 = vmatpush1.msra.mxu0 %v4152
    %6749 = vmatprep.subr.mxu0 %v4162
    %6750 = vmatpush1.msra.mxu0 %v4161
    %6751 = vmatprep.subr.mxu0 %v4171
    %6752 = vmatpush1.msra.mxu0 %v4170
    %6753 = vmatprep.subr.mxu0 %v4180
    %6754 = vmatpush1.msra.mxu0 %v4179
    %6755 = vmatprep.subr.mxu0 %v4189
    %6756 = vmatpush1.msra.mxu0 %v4188
    %6757 = vmatprep.subr.mxu0 %v4198
    %6758 = vmatpush1.msra.mxu0 %v4197
    %6759 = vmatprep.subr.mxu0 %v4207
    %6760 = vmatpush1.msra.mxu0 %v4206
    %6761 = vmatprep.subr.mxu0 %v4216
    %6762 = vmatpush1.msra.mxu0 %v4215
    %6763 = vmatprep.subr.mxu0 %v4225
    %6764 = vmatpush1.msra.mxu0 %v4224
    %6765 = vmatprep.subr.mxu0 %v4234
    %6766 = vmatpush1.msra.mxu0 %v4233
    %6767 = vmatprep.mubr.f32.mxu0 %v2076
    %6768 = vmatmul.mubr.f32.gmra.mrb[0].mxu0 %v2074
    %v6769 = vpop.f32.mrb[0].mxu0
    %v6770 = vadd.f32 %v6699, %v6769
    %v6771 = vpop.f32.mrb[0].mxu0
    %v6772 = vadd.f32 %v6701, %v6771
    %6773 = vdwg.mxu0
    %6774 = vmatprep.subr.mxu0 %v4243
    %6775 = vmatpush1.msra.mxu0 %v4242
    %6776 = vmatprep.subr.mxu0 %v4252
    %6777 = vmatpush1.msra.mxu0 %v4251
    %6778 = vmatprep.subr.mxu0 %v4261
    %6779 = vmatpush1.msra.mxu0 %v4260
    %6780 = vmatprep.subr.mxu0 %v4270
    %6781 = vmatpush1.msra.mxu0 %v4269
    %6782 = vmatprep.subr.mxu0 %v4279
    %6783 = vmatpush1.msra.mxu0 %v4278
    %6784 = vmatprep.subr.mxu0 %v4288
    %6785 = vmatpush1.msra.mxu0 %v4287
    %6786 = vmatprep.subr.mxu0 %v4297
    %6787 = vmatpush1.msra.mxu0 %v4296
    %6788 = vmatprep.subr.mxu0 %v4306
    %6789 = vmatpush1.msra.mxu0 %v4305
    %6790 = vmatprep.subr.mxu0 %v4315
    %6791 = vmatpush1.msra.mxu0 %v4314
    %6792 = vmatprep.subr.mxu0 %v4324
    %6793 = vmatpush1.msra.mxu0 %v4323
    %6794 = vmatprep.subr.mxu0 %v4333
    %6795 = vmatpush1.msra.mxu0 %v4332
    %6796 = vmatprep.subr.mxu0 %v4342
    %6797 = vmatpush1.msra.mxu0 %v4341
    %6798 = vmatprep.subr.mxu0 %v4351
    %6799 = vmatpush1.msra.mxu0 %v4350
    %6800 = vmatprep.subr.mxu0 %v4360
    %6801 = vmatpush1.msra.mxu0 %v4359
    %6802 = vmatprep.subr.mxu0 %v4369
    %6803 = vmatpush1.msra.mxu0 %v4368
    %6804 = vmatprep.subr.mxu0 %v4378
    %6805 = vmatpush1.msra.mxu0 %v4377
    %6806 = vmatprep.subr.mxu0 %v4387
    %6807 = vmatpush1.msra.mxu0 %v4386
    %6808 = vmatprep.subr.mxu0 %v4396
    %6809 = vmatpush1.msra.mxu0 %v4395
    %6810 = vmatprep.subr.mxu0 %v4405
    %6811 = vmatpush1.msra.mxu0 %v4404
    %6812 = vmatprep.subr.mxu0 %v4414
    %6813 = vmatpush1.msra.mxu0 %v4413
    %6814 = vmatprep.subr.mxu0 %v4423
    %6815 = vmatpush1.msra.mxu0 %v4422
    %6816 = vmatprep.subr.mxu0 %v4432
    %6817 = vmatpush1.msra.mxu0 %v4431
    %6818 = vmatprep.subr.mxu0 %v4441
    %6819 = vmatpush1.msra.mxu0 %v4440
    %6820 = vmatprep.subr.mxu0 %v4450
    %6821 = vmatpush1.msra.mxu0 %v4449
    %6822 = vmatprep.subr.mxu0 %v4459
    %6823 = vmatpush1.msra.mxu0 %v4458
    %6824 = vmatprep.subr.mxu0 %v4468
    %6825 = vmatpush1.msra.mxu0 %v4467
    %6826 = vmatprep.subr.mxu0 %v4477
    %6827 = vmatpush1.msra.mxu0 %v4476
    %6828 = vmatprep.subr.mxu0 %v4486
    %6829 = vmatpush1.msra.mxu0 %v4485
    %6830 = vmatprep.subr.mxu0 %v4495
    %6831 = vmatpush1.msra.mxu0 %v4494
    %6832 = vmatprep.subr.mxu0 %v4504
    %6833 = vmatpush1.msra.mxu0 %v4503
    %6834 = vmatprep.subr.mxu0 %v4513
    %6835 = vmatpush1.msra.mxu0 %v4512
    %6836 = vmatprep.subr.mxu0 %v4522
    %6837 = vmatpush1.msra.mxu0 %v4521
    %6838 = vmatprep.mubr.f32.mxu0 %v2218
    %6839 = vmatmul.mubr.f32.gmra.mrb[0].mxu0 %v2216
    %v6840 = vpop.f32.mrb[0].mxu0
    %v6841 = vadd.f32 %v6770, %v6840
    %v6842 = vpop.f32.mrb[0].mxu0
    %v6843 = vadd.f32 %v6772, %v6842
    %6844 = vdwg.mxu0
    %6845 = vmatprep.subr.mxu0 0.0
    %6846 = vmatpush1.msra.mxu0 %v2228
    %6847 = vmatprep.subr.mxu0 0.0
    %6848 = vmatpush1.msra.mxu0 %v2237
    %6849 = vmatprep.subr.mxu0 0.0
    %6850 = vmatpush1.msra.mxu0 %v2246
    %6851 = vmatprep.subr.mxu0 0.0
    %6852 = vmatpush1.msra.mxu0 %v2255
    %6853 = vmatprep.subr.mxu0 0.0
    %6854 = vmatpush1.msra.mxu0 %v2264
    %6855 = vmatprep.subr.mxu0 0.0
    %6856 = vmatpush1.msra.mxu0 %v2273
    %6857 = vmatprep.subr.mxu0 0.0
    %6858 = vmatpush1.msra.mxu0 %v2282
    %6859 = vmatprep.subr.mxu0 0.0
    %6860 = vmatpush1.msra.mxu0 %v2291
    %6861 = vmatprep.subr.mxu0 0.0
    %6862 = vmatpush1.msra.mxu0 %v2300
    %6863 = vmatprep.subr.mxu0 0.0
    %6864 = vmatpush1.msra.mxu0 %v2309
    %6865 = vmatprep.subr.mxu0 0.0
    %6866 = vmatpush1.msra.mxu0 %v2318
    %6867 = vmatprep.subr.mxu0 0.0
    %6868 = vmatpush1.msra.mxu0 %v2327
    %6869 = vmatprep.subr.mxu0 0.0
    %6870 = vmatpush1.msra.mxu0 %v2336
    %6871 = vmatprep.subr.mxu0 0.0
    %6872 = vmatpush1.msra.mxu0 %v2345
    %6873 = vmatprep.subr.mxu0 0.0
    %6874 = vmatpush1.msra.mxu0 %v2354
    %6875 = vmatprep.subr.mxu0 0.0
    %6876 = vmatpush1.msra.mxu0 %v2363
    %6877 = vmatprep.subr.mxu0 0.0
    %6878 = vmatpush1.msra.mxu0 %v2372
    %6879 = vmatprep.subr.mxu0 0.0
    %6880 = vmatpush1.msra.mxu0 %v2381
    %6881 = vmatprep.subr.mxu0 0.0
    %6882 = vmatpush1.msra.mxu0 %v2390
    %6883 = vmatprep.subr.mxu0 0.0
    %6884 = vmatpush1.msra.mxu0 %v2399
    %6885 = vmatprep.subr.mxu0 0.0
    %6886 = vmatpush1.msra.mxu0 %v2408
    %6887 = vmatprep.subr.mxu0 0.0
    %6888 = vmatpush1.msra.mxu0 %v2417
    %6889 = vmatprep.subr.mxu0 0.0
    %6890 = vmatpush1.msra.mxu0 %v2426
    %6891 = vmatprep.subr.mxu0 0.0
    %6892 = vmatpush1.msra.mxu0 %v2435
    %6893 = vmatprep.subr.mxu0 0.0
    %6894 = vmatpush1.msra.mxu0 %v2444
    %6895 = vmatprep.subr.mxu0 0.0
    %6896 = vmatpush1.msra.mxu0 %v2453
    %6897 = vmatprep.subr.mxu0 0.0
    %6898 = vmatpush1.msra.mxu0 %v2462
    %6899 = vmatprep.subr.mxu0 0.0
    %6900 = vmatpush1.msra.mxu0 %v2471
    %6901 = vmatprep.subr.mxu0 0.0
    %6902 = vmatpush1.msra.mxu0 %v2480
    %6903 = vmatprep.subr.mxu0 0.0
    %6904 = vmatpush1.msra.mxu0 %v2489
    %6905 = vmatprep.subr.mxu0 0.0
    %6906 = vmatpush1.msra.mxu0 %v2498
    %6907 = vmatprep.subr.mxu0 0.0
    %6908 = vmatpush1.msra.mxu0 %v2507
    %6909 = vmatprep.mubr.f32.mxu0 %v1224
    %6910 = vmatmul.mubr.f32.gmra.mrb[0].mxu0 %v1222
    %v6911 = vpop.f32.mrb[0].mxu0
    %v6912 = vadd.f32 %v4563, %v6911
    %v6913 = vpop.f32.mrb[0].mxu0
    %6914 = vdwg.mxu0
    %6915 = vmatprep.subr.mxu0 0.0
    %6916 = vmatpush1.msra.mxu0 %v2516
    %6917 = vmatprep.subr.mxu0 0.0
    %6918 = vmatpush1.msra.mxu0 %v2525
    %6919 = vmatprep.subr.mxu0 0.0
    %6920 = vmatpush1.msra.mxu0 %v2534
    %6921 = vmatprep.subr.mxu0 0.0
    %6922 = vmatpush1.msra.mxu0 %v2543
    %6923 = vmatprep.subr.mxu0 0.0
    %6924 = vmatpush1.msra.mxu0 %v2552
    %6925 = vmatprep.subr.mxu0 0.0
    %6926 = vmatpush1.msra.mxu0 %v2561
    %6927 = vmatprep.subr.mxu0 0.0
    %6928 = vmatpush1.msra.mxu0 %v2570
    %6929 = vmatprep.subr.mxu0 0.0
    %6930 = vmatpush1.msra.mxu0 %v2579
    %6931 = vmatprep.subr.mxu0 0.0
    %6932 = vmatpush1.msra.mxu0 %v2588
    %6933 = vmatprep.subr.mxu0 0.0
    %6934 = vmatpush1.msra.mxu0 %v2597
    %6935 = vmatprep.subr.mxu0 0.0
    %6936 = vmatpush1.msra.mxu0 %v2606
    %6937 = vmatprep.subr.mxu0 0.0
    %6938 = vmatpush1.msra.mxu0 %v2615
    %6939 = vmatprep.subr.mxu0 0.0
    %6940 = vmatpush1.msra.mxu0 %v2624
    %6941 = vmatprep.subr.mxu0 0.0
    %6942 = vmatpush1.msra.mxu0 %v2633
    %6943 = vmatprep.subr.mxu0 0.0
    %6944 = vmatpush1.msra.mxu0 %v2642
    %6945 = vmatprep.subr.mxu0 0.0
    %6946 = vmatpush1.msra.mxu0 %v2651
    %6947 = vmatprep.subr.mxu0 0.0
    %6948 = vmatpush1.msra.mxu0 %v2660
    %6949 = vmatprep.subr.mxu0 0.0
    %6950 = vmatpush1.msra.mxu0 %v2669
    %6951 = vmatprep.subr.mxu0 0.0
    %6952 = vmatpush1.msra.mxu0 %v2678
    %6953 = vmatprep.subr.mxu0 0.0
    %6954 = vmatpush1.msra.mxu0 %v2687
    %6955 = vmatprep.subr.mxu0 0.0
    %6956 = vmatpush1.msra.mxu0 %v2696
    %6957 = vmatprep.subr.mxu0 0.0
    %6958 = vmatpush1.msra.mxu0 %v2705
    %6959 = vmatprep.subr.mxu0 0.0
    %6960 = vmatpush1.msra.mxu0 %v2714
    %6961 = vmatprep.subr.mxu0 0.0
    %6962 = vmatpush1.msra.mxu0 %v2723
    %6963 = vmatprep.subr.mxu0 0.0
    %6964 = vmatpush1.msra.mxu0 %v2732
    %6965 = vmatprep.subr.mxu0 0.0
    %6966 = vmatpush1.msra.mxu0 %v2741
    %6967 = vmatprep.subr.mxu0 0.0
    %6968 = vmatpush1.msra.mxu0 %v2750
    %6969 = vmatprep.subr.mxu0 0.0
    %6970 = vmatpush1.msra.mxu0 %v2759
    %6971 = vmatprep.subr.mxu0 0.0
    %6972 = vmatpush1.msra.mxu0 %v2768
    %6973 = vmatprep.subr.mxu0 0.0
    %6974 = vmatpush1.msra.mxu0 %v2777
    %6975 = vmatprep.subr.mxu0 0.0
    %6976 = vmatpush1.msra.mxu0 %v2786
    %6977 = vmatprep.subr.mxu0 0.0
    %6978 = vmatpush1.msra.mxu0 %v2795
    %6979 = vmatprep.mubr.f32.mxu0 %v1366
    %6980 = vmatmul.mubr.f32.gmra.mrb[0].mxu0 %v1364
    %v6981 = vpop.f32.mrb[0].mxu0
    %v6982 = vadd.f32 %v6912, %v6981
    %v6983 = vpop.f32.mrb[0].mxu0
    %6984 = vdwg.mxu0
    %6985 = vmatprep.subr.mxu0 0.0
    %6986 = vmatpush1.msra.mxu0 %v2804
    %6987 = vmatprep.subr.mxu0 0.0
    %6988 = vmatpush1.msra.mxu0 %v2813
    %6989 = vmatprep.subr.mxu0 0.0
    %6990 = vmatpush1.msra.mxu0 %v2822
    %6991 = vmatprep.subr.mxu0 0.0
    %6992 = vmatpush1.msra.mxu0 %v2831
    %6993 = vmatprep.subr.mxu0 0.0
    %6994 = vmatpush1.msra.mxu0 %v2840
    %6995 = vmatprep.subr.mxu0 0.0
    %6996 = vmatpush1.msra.mxu0 %v2849
    %6997 = vmatprep.subr.mxu0 0.0
    %6998 = vmatpush1.msra.mxu0 %v2858
    %6999 = vmatprep.subr.mxu0 0.0
    %7000 = vmatpush1.msra.mxu0 %v2867
    %7001 = vmatprep.subr.mxu0 0.0
    %7002 = vmatpush1.msra.mxu0 %v2876
    %7003 = vmatprep.subr.mxu0 0.0
    %7004 = vmatpush1.msra.mxu0 %v2885
    %7005 = vmatprep.subr.mxu0 0.0
    %7006 = vmatpush1.msra.mxu0 %v2894
    %7007 = vmatprep.subr.mxu0 0.0
    %7008 = vmatpush1.msra.mxu0 %v2903
    %7009 = vmatprep.subr.mxu0 0.0
    %7010 = vmatpush1.msra.mxu0 %v2912
    %7011 = vmatprep.subr.mxu0 0.0
    %7012 = vmatpush1.msra.mxu0 %v2921
    %7013 = vmatprep.subr.mxu0 0.0
    %7014 = vmatpush1.msra.mxu0 %v2930
    %7015 = vmatprep.subr.mxu0 0.0
    %7016 = vmatpush1.msra.mxu0 %v2939
    %7017 = vmatprep.subr.mxu0 0.0
    %7018 = vmatpush1.msra.mxu0 %v2948
    %7019 = vmatprep.subr.mxu0 0.0
    %7020 = vmatpush1.msra.mxu0 %v2957
    %7021 = vmatprep.subr.mxu0 0.0
    %7022 = vmatpush1.msra.mxu0 %v2966
    %7023 = vmatprep.subr.mxu0 0.0
    %7024 = vmatpush1.msra.mxu0 %v2975
    %7025 = vmatprep.subr.mxu0 0.0
    %7026 = vmatpush1.msra.mxu0 %v2984
    %7027 = vmatprep.subr.mxu0 0.0
    %7028 = vmatpush1.msra.mxu0 %v2993
    %7029 = vmatprep.subr.mxu0 0.0
    %7030 = vmatpush1.msra.mxu0 %v3002
    %7031 = vmatprep.subr.mxu0 0.0
    %7032 = vmatpush1.msra.mxu0 %v3011
    %7033 = vmatprep.subr.mxu0 0.0
    %7034 = vmatpush1.msra.mxu0 %v3020
    %7035 = vmatprep.subr.mxu0 0.0
    %7036 = vmatpush1.msra.mxu0 %v3029
    %7037 = vmatprep.subr.mxu0 0.0
    %7038 = vmatpush1.msra.mxu0 %v3038
    %7039 = vmatprep.subr.mxu0 0.0
    %7040 = vmatpush1.msra.mxu0 %v3047
    %7041 = vmatprep.subr.mxu0 0.0
    %7042 = vmatpush1.msra.mxu0 %v3056
    %7043 = vmatprep.subr.mxu0 0.0
    %7044 = vmatpush1.msra.mxu0 %v3065
    %7045 = vmatprep.subr.mxu0 0.0
    %7046 = vmatpush1.msra.mxu0 %v3074
    %7047 = vmatprep.subr.mxu0 0.0
    %7048 = vmatpush1.msra.mxu0 %v3083
    %7049 = vmatprep.mubr.f32.mxu0 %v1508
    %7050 = vmatmul.mubr.f32.gmra.mrb[0].mxu0 %v1506
    %v7051 = vpop.f32.mrb[0].mxu0
    %v7052 = vadd.f32 %v6982, %v7051
    %v7053 = vpop.f32.mrb[0].mxu0
    %7054 = vdwg.mxu0
    %7055 = vmatprep.subr.mxu0 0.0
    %7056 = vmatpush1.msra.mxu0 %v3092
    %7057 = vmatprep.subr.mxu0 0.0
    %7058 = vmatpush1.msra.mxu0 %v3101
    %7059 = vmatprep.subr.mxu0 0.0
    %7060 = vmatpush1.msra.mxu0 %v3110
    %7061 = vmatprep.subr.mxu0 0.0
    %7062 = vmatpush1.msra.mxu0 %v3119
    %7063 = vmatprep.subr.mxu0 0.0
    %7064 = vmatpush1.msra.mxu0 %v3128
    %7065 = vmatprep.subr.mxu0 0.0
    %7066 = vmatpush1.msra.mxu0 %v3137
    %7067 = vmatprep.subr.mxu0 0.0
    %7068 = vmatpush1.msra.mxu0 %v3146
    %7069 = vmatprep.subr.mxu0 0.0
    %7070 = vmatpush1.msra.mxu0 %v3155
    %7071 = vmatprep.subr.mxu0 0.0
    %7072 = vmatpush1.msra.mxu0 %v3164
    %7073 = vmatprep.subr.mxu0 0.0
    %7074 = vmatpush1.msra.mxu0 %v3173
    %7075 = vmatprep.subr.mxu0 0.0
    %7076 = vmatpush1.msra.mxu0 %v3182
    %7077 = vmatprep.subr.mxu0 0.0
    %7078 = vmatpush1.msra.mxu0 %v3191
    %7079 = vmatprep.subr.mxu0 0.0
    %7080 = vmatpush1.msra.mxu0 %v3200
    %7081 = vmatprep.subr.mxu0 0.0
    %7082 = vmatpush1.msra.mxu0 %v3209
    %7083 = vmatprep.subr.mxu0 0.0
    %7084 = vmatpush1.msra.mxu0 %v3218
    %7085 = vmatprep.subr.mxu0 0.0
    %7086 = vmatpush1.msra.mxu0 %v3227
    %7087 = vmatprep.subr.mxu0 0.0
    %7088 = vmatpush1.msra.mxu0 %v3236
    %7089 = vmatprep.subr.mxu0 0.0
    %7090 = vmatpush1.msra.mxu0 %v3245
    %7091 = vmatprep.subr.mxu0 0.0
    %7092 = vmatpush1.msra.mxu0 %v3254
    %7093 = vmatprep.subr.mxu0 0.0
    %7094 = vmatpush1.msra.mxu0 %v3263
    %7095 = vmatprep.subr.mxu0 0.0
    %7096 = vmatpush1.msra.mxu0 %v3272
    %7097 = vmatprep.subr.mxu0 0.0
    %7098 = vmatpush1.msra.mxu0 %v3281
    %7099 = vmatprep.subr.mxu0 0.0
    %7100 = vmatpush1.msra.mxu0 %v3290
    %7101 = vmatprep.subr.mxu0 0.0
    %7102 = vmatpush1.msra.mxu0 %v3299
    %7103 = vmatprep.subr.mxu0 0.0
    %7104 = vmatpush1.msra.mxu0 %v3308
    %7105 = vmatprep.subr.mxu0 0.0
    %7106 = vmatpush1.msra.mxu0 %v3317
    %7107 = vmatprep.subr.mxu0 0.0
    %7108 = vmatpush1.msra.mxu0 %v3326
    %7109 = vmatprep.subr.mxu0 0.0
    %7110 = vmatpush1.msra.mxu0 %v3335
    %7111 = vmatprep.subr.mxu0 0.0
    %7112 = vmatpush1.msra.mxu0 %v3344
    %7113 = vmatprep.subr.mxu0 0.0
    %7114 = vmatpush1.msra.mxu0 %v3353
    %7115 = vmatprep.subr.mxu0 0.0
    %7116 = vmatpush1.msra.mxu0 %v3362
    %7117 = vmatprep.subr.mxu0 0.0
    %7118 = vmatpush1.msra.mxu0 %v3371
    %7119 = vmatprep.mubr.f32.mxu0 %v1650
    %7120 = vmatmul.mubr.f32.gmra.mrb[0].mxu0 %v1648
    %v7121 = vpop.f32.mrb[0].mxu0
    %v7122 = vadd.f32 %v7052, %v7121
    %v7123 = vpop.f32.mrb[0].mxu0
    %7124 = vdwg.mxu0
    %7125 = vmatprep.subr.mxu0 0.0
    %7126 = vmatpush1.msra.mxu0 %v3380
    %7127 = vmatprep.subr.mxu0 0.0
    %7128 = vmatpush1.msra.mxu0 %v3389
    %7129 = vmatprep.subr.mxu0 0.0
    %7130 = vmatpush1.msra.mxu0 %v3398
    %7131 = vmatprep.subr.mxu0 0.0
    %7132 = vmatpush1.msra.mxu0 %v3407
    %7133 = vmatprep.subr.mxu0 0.0
    %7134 = vmatpush1.msra.mxu0 %v3416
    %7135 = vmatprep.subr.mxu0 0.0
    %7136 = vmatpush1.msra.mxu0 %v3425
    %7137 = vmatprep.subr.mxu0 0.0
    %7138 = vmatpush1.msra.mxu0 %v3434
    %7139 = vmatprep.subr.mxu0 0.0
    %7140 = vmatpush1.msra.mxu0 %v3443
    %7141 = vmatprep.subr.mxu0 0.0
    %7142 = vmatpush1.msra.mxu0 %v3452
    %7143 = vmatprep.subr.mxu0 0.0
    %7144 = vmatpush1.msra.mxu0 %v3461
    %7145 = vmatprep.subr.mxu0 0.0
    %7146 = vmatpush1.msra.mxu0 %v3470
    %7147 = vmatprep.subr.mxu0 0.0
    %7148 = vmatpush1.msra.mxu0 %v3479
    %7149 = vmatprep.subr.mxu0 0.0
    %7150 = vmatpush1.msra.mxu0 %v3488
    %7151 = vmatprep.subr.mxu0 0.0
    %7152 = vmatpush1.msra.mxu0 %v3497
    %7153 = vmatprep.subr.mxu0 0.0
    %7154 = vmatpush1.msra.mxu0 %v3506
    %7155 = vmatprep.subr.mxu0 0.0
    %7156 = vmatpush1.msra.mxu0 %v3515
    %7157 = vmatprep.subr.mxu0 0.0
    %7158 = vmatpush1.msra.mxu0 %v3524
    %7159 = vmatprep.subr.mxu0 0.0
    %7160 = vmatpush1.msra.mxu0 %v3533
    %7161 = vmatprep.subr.mxu0 0.0
    %7162 = vmatpush1.msra.mxu0 %v3542
    %7163 = vmatprep.subr.mxu0 0.0
    %7164 = vmatpush1.msra.mxu0 %v3551
    %7165 = vmatprep.subr.mxu0 0.0
    %7166 = vmatpush1.msra.mxu0 %v3560
    %7167 = vmatprep.subr.mxu0 0.0
    %7168 = vmatpush1.msra.mxu0 %v3569
    %7169 = vmatprep.subr.mxu0 0.0
    %7170 = vmatpush1.msra.mxu0 %v3578
    %7171 = vmatprep.subr.mxu0 0.0
    %7172 = vmatpush1.msra.mxu0 %v3587
    %7173 = vmatprep.subr.mxu0 0.0
    %7174 = vmatpush1.msra.mxu0 %v3596
    %7175 = vmatprep.subr.mxu0 0.0
    %7176 = vmatpush1.msra.mxu0 %v3605
    %7177 = vmatprep.subr.mxu0 0.0
    %7178 = vmatpush1.msra.mxu0 %v3614
    %7179 = vmatprep.subr.mxu0 0.0
    %7180 = vmatpush1.msra.mxu0 %v3623
    %7181 = vmatprep.subr.mxu0 0.0
    %7182 = vmatpush1.msra.mxu0 %v3632
    %7183 = vmatprep.subr.mxu0 0.0
    %7184 = vmatpush1.msra.mxu0 %v3641
    %7185 = vmatprep.subr.mxu0 0.0
    %7186 = vmatpush1.msra.mxu0 %v3650
    %7187 = vmatprep.subr.mxu0 0.0
    %7188 = vmatpush1.msra.mxu0 %v3659
    %7189 = vmatprep.mubr.f32.mxu0 %v1792
    %7190 = vmatmul.mubr.f32.gmra.mrb[0].mxu0 %v1790
    %v7191 = vpop.f32.mrb[0].mxu0
    %v7192 = vadd.f32 %v7122, %v7191
    %v7193 = vpop.f32.mrb[0].mxu0
    %7194 = vdwg.mxu0
    %7195 = vmatprep.subr.mxu0 0.0
    %7196 = vmatpush1.msra.mxu0 %v3668
    %7197 = vmatprep.subr.mxu0 0.0
    %7198 = vmatpush1.msra.mxu0 %v3677
    %7199 = vmatprep.subr.mxu0 0.0
    %7200 = vmatpush1.msra.mxu0 %v3686
    %7201 = vmatprep.subr.mxu0 0.0
    %7202 = vmatpush1.msra.mxu0 %v3695
    %7203 = vmatprep.subr.mxu0 0.0
    %7204 = vmatpush1.msra.mxu0 %v3704
    %7205 = vmatprep.subr.mxu0 0.0
    %7206 = vmatpush1.msra.mxu0 %v3713
    %7207 = vmatprep.subr.mxu0 0.0
    %7208 = vmatpush1.msra.mxu0 %v3722
    %7209 = vmatprep.subr.mxu0 0.0
    %7210 = vmatpush1.msra.mxu0 %v3731
    %7211 = vmatprep.subr.mxu0 0.0
    %7212 = vmatpush1.msra.mxu0 %v3740
    %7213 = vmatprep.subr.mxu0 0.0
    %7214 = vmatpush1.msra.mxu0 %v3749
    %7215 = vmatprep.subr.mxu0 0.0
    %7216 = vmatpush1.msra.mxu0 %v3758
    %7217 = vmatprep.subr.mxu0 0.0
    %7218 = vmatpush1.msra.mxu0 %v3767
    %7219 = vmatprep.subr.mxu0 0.0
    %7220 = vmatpush1.msra.mxu0 %v3776
    %7221 = vmatprep.subr.mxu0 0.0
    %7222 = vmatpush1.msra.mxu0 %v3785
    %7223 = vmatprep.subr.mxu0 0.0
    %7224 = vmatpush1.msra.mxu0 %v3794
    %7225 = vmatprep.subr.mxu0 0.0
    %7226 = vmatpush1.msra.mxu0 %v3803
    %7227 = vmatprep.subr.mxu0 0.0
    %7228 = vmatpush1.msra.mxu0 %v3812
    %7229 = vmatprep.subr.mxu0 0.0
    %7230 = vmatpush1.msra.mxu0 %v3821
    %7231 = vmatprep.subr.mxu0 0.0
    %7232 = vmatpush1.msra.mxu0 %v3830
    %7233 = vmatprep.subr.mxu0 0.0
    %7234 = vmatpush1.msra.mxu0 %v3839
    %7235 = vmatprep.subr.mxu0 0.0
    %7236 = vmatpush1.msra.mxu0 %v3848
    %7237 = vmatprep.subr.mxu0 0.0
    %7238 = vmatpush1.msra.mxu0 %v3857
    %7239 = vmatprep.subr.mxu0 0.0
    %7240 = vmatpush1.msra.mxu0 %v3866
    %7241 = vmatprep.subr.mxu0 0.0
    %7242 = vmatpush1.msra.mxu0 %v3875
    %7243 = vmatprep.subr.mxu0 0.0
    %7244 = vmatpush1.msra.mxu0 %v3884
    %7245 = vmatprep.subr.mxu0 0.0
    %7246 = vmatpush1.msra.mxu0 %v3893
    %7247 = vmatprep.subr.mxu0 0.0
    %7248 = vmatpush1.msra.mxu0 %v3902
    %7249 = vmatprep.subr.mxu0 0.0
    %7250 = vmatpush1.msra.mxu0 %v3911
    %7251 = vmatprep.subr.mxu0 0.0
    %7252 = vmatpush1.msra.mxu0 %v3920
    %7253 = vmatprep.subr.mxu0 0.0
    %7254 = vmatpush1.msra.mxu0 %v3929
    %7255 = vmatprep.subr.mxu0 0.0
    %7256 = vmatpush1.msra.mxu0 %v3938
    %7257 = vmatprep.subr.mxu0 0.0
    %7258 = vmatpush1.msra.mxu0 %v3947
    %7259 = vmatprep.mubr.f32.mxu0 %v1934
    %7260 = vmatmul.mubr.f32.gmra.mrb[0].mxu0 %v1932
    %v7261 = vpop.f32.mrb[0].mxu0
    %v7262 = vadd.f32 %v7192, %v7261
    %v7263 = vpop.f32.mrb[0].mxu0
    %7264 = vdwg.mxu0
    %7265 = vmatprep.subr.mxu0 0.0
    %7266 = vmatpush1.msra.mxu0 %v3956
    %7267 = vmatprep.subr.mxu0 0.0
    %7268 = vmatpush1.msra.mxu0 %v3965
    %7269 = vmatprep.subr.mxu0 0.0
    %7270 = vmatpush1.msra.mxu0 %v3974
    %7271 = vmatprep.subr.mxu0 0.0
    %7272 = vmatpush1.msra.mxu0 %v3983
    %7273 = vmatprep.subr.mxu0 0.0
    %7274 = vmatpush1.msra.mxu0 %v3992
    %7275 = vmatprep.subr.mxu0 0.0
    %7276 = vmatpush1.msra.mxu0 %v4001
    %7277 = vmatprep.subr.mxu0 0.0
    %7278 = vmatpush1.msra.mxu0 %v4010
    %7279 = vmatprep.subr.mxu0 0.0
    %7280 = vmatpush1.msra.mxu0 %v4019
    %7281 = vmatprep.subr.mxu0 0.0
    %7282 = vmatpush1.msra.mxu0 %v4028
    %7283 = vmatprep.subr.mxu0 0.0
    %7284 = vmatpush1.msra.mxu0 %v4037
    %7285 = vmatprep.subr.mxu0 0.0
    %7286 = vmatpush1.msra.mxu0 %v4046
    %7287 = vmatprep.subr.mxu0 0.0
    %7288 = vmatpush1.msra.mxu0 %v4055
    %7289 = vmatprep.subr.mxu0 0.0
    %7290 = vmatpush1.msra.mxu0 %v4064
    %7291 = vmatprep.subr.mxu0 0.0
    %7292 = vmatpush1.msra.mxu0 %v4073
    %7293 = vmatprep.subr.mxu0 0.0
    %7294 = vmatpush1.msra.mxu0 %v4082
    %7295 = vmatprep.subr.mxu0 0.0
    %7296 = vmatpush1.msra.mxu0 %v4091
    %7297 = vmatprep.subr.mxu0 0.0
    %7298 = vmatpush1.msra.mxu0 %v4100
    %7299 = vmatprep.subr.mxu0 0.0
    %7300 = vmatpush1.msra.mxu0 %v4109
    %7301 = vmatprep.subr.mxu0 0.0
    %7302 = vmatpush1.msra.mxu0 %v4118
    %7303 = vmatprep.subr.mxu0 0.0
    %7304 = vmatpush1.msra.mxu0 %v4127
    %7305 = vmatprep.subr.mxu0 0.0
    %7306 = vmatpush1.msra.mxu0 %v4136
    %7307 = vmatprep.subr.mxu0 0.0
    %7308 = vmatpush1.msra.mxu0 %v4145
    %7309 = vmatprep.subr.mxu0 0.0
    %7310 = vmatpush1.msra.mxu0 %v4154
    %7311 = vmatprep.subr.mxu0 0.0
    %7312 = vmatpush1.msra.mxu0 %v4163
    %7313 = vmatprep.subr.mxu0 0.0
    %7314 = vmatpush1.msra.mxu0 %v4172
    %7315 = vmatprep.subr.mxu0 0.0
    %7316 = vmatpush1.msra.mxu0 %v4181
    %7317 = vmatprep.subr.mxu0 0.0
    %7318 = vmatpush1.msra.mxu0 %v4190
    %7319 = vmatprep.subr.mxu0 0.0
    %7320 = vmatpush1.msra.mxu0 %v4199
    %7321 = vmatprep.subr.mxu0 0.0
    %7322 = vmatpush1.msra.mxu0 %v4208
    %7323 = vmatprep.subr.mxu0 0.0
    %7324 = vmatpush1.msra.mxu0 %v4217
    %7325 = vmatprep.subr.mxu0 0.0
    %7326 = vmatpush1.msra.mxu0 %v4226
    %7327 = vmatprep.subr.mxu0 0.0
    %7328 = vmatpush1.msra.mxu0 %v4235
    %7329 = vmatprep.mubr.f32.mxu0 %v2076
    %7330 = vmatmul.mubr.f32.gmra.mrb[0].mxu0 %v2074
    %v7331 = vpop.f32.mrb[0].mxu0
    %v7332 = vadd.f32 %v7262, %v7331
    %v7333 = vpop.f32.mrb[0].mxu0
    %7334 = vdwg.mxu0
    %7335 = vmatprep.subr.mxu0 0.0
    %7336 = vmatpush1.msra.mxu0 %v4244
    %7337 = vmatprep.subr.mxu0 0.0
    %7338 = vmatpush1.msra.mxu0 %v4253
    %7339 = vmatprep.subr.mxu0 0.0
    %7340 = vmatpush1.msra.mxu0 %v4262
    %7341 = vmatprep.subr.mxu0 0.0
    %7342 = vmatpush1.msra.mxu0 %v4271
    %7343 = vmatprep.subr.mxu0 0.0
    %7344 = vmatpush1.msra.mxu0 %v4280
    %7345 = vmatprep.subr.mxu0 0.0
    %7346 = vmatpush1.msra.mxu0 %v4289
    %7347 = vmatprep.subr.mxu0 0.0
    %7348 = vmatpush1.msra.mxu0 %v4298
    %7349 = vmatprep.subr.mxu0 0.0
    %7350 = vmatpush1.msra.mxu0 %v4307
    %7351 = vmatprep.subr.mxu0 0.0
    %7352 = vmatpush1.msra.mxu0 %v4316
    %7353 = vmatprep.subr.mxu0 0.0
    %7354 = vmatpush1.msra.mxu0 %v4325
    %7355 = vmatprep.subr.mxu0 0.0
    %7356 = vmatpush1.msra.mxu0 %v4334
    %7357 = vmatprep.subr.mxu0 0.0
    %7358 = vmatpush1.msra.mxu0 %v4343
    %7359 = vmatprep.subr.mxu0 0.0
    %7360 = vmatpush1.msra.mxu0 %v4352
    %7361 = vmatprep.subr.mxu0 0.0
    %7362 = vmatpush1.msra.mxu0 %v4361
    %7363 = vmatprep.subr.mxu0 0.0
    %7364 = vmatpush1.msra.mxu0 %v4370
    %7365 = vmatprep.subr.mxu0 0.0
    %7366 = vmatpush1.msra.mxu0 %v4379
    %7367 = vmatprep.subr.mxu0 0.0
    %7368 = vmatpush1.msra.mxu0 %v4388
    %7369 = vmatprep.subr.mxu0 0.0
    %7370 = vmatpush1.msra.mxu0 %v4397
    %7371 = vmatprep.subr.mxu0 0.0
    %7372 = vmatpush1.msra.mxu0 %v4406
    %7373 = vmatprep.subr.mxu0 0.0
    %7374 = vmatpush1.msra.mxu0 %v4415
    %7375 = vmatprep.subr.mxu0 0.0
    %7376 = vmatpush1.msra.mxu0 %v4424
    %7377 = vmatprep.subr.mxu0 0.0
    %7378 = vmatpush1.msra.mxu0 %v4433
    %7379 = vmatprep.subr.mxu0 0.0
    %7380 = vmatpush1.msra.mxu0 %v4442
    %7381 = vmatprep.subr.mxu0 0.0
    %7382 = vmatpush1.msra.mxu0 %v4451
    %7383 = vmatprep.subr.mxu0 0.0
    %7384 = vmatpush1.msra.mxu0 %v4460
    %7385 = vmatprep.subr.mxu0 0.0
    %7386 = vmatpush1.msra.mxu0 %v4469
    %7387 = vmatprep.subr.mxu0 0.0
    %7388 = vmatpush1.msra.mxu0 %v4478
    %7389 = vmatprep.subr.mxu0 0.0
    %7390 = vmatpush1.msra.mxu0 %v4487
    %7391 = vmatprep.subr.mxu0 0.0
    %7392 = vmatpush1.msra.mxu0 %v4496
    %7393 = vmatprep.subr.mxu0 0.0
    %7394 = vmatpush1.msra.mxu0 %v4505
    %7395 = vmatprep.subr.mxu0 0.0
    %7396 = vmatpush1.msra.mxu0 %v4514
    %7397 = vmatprep.subr.mxu0 0.0
    %7398 = vmatpush1.msra.mxu0 %v4523
    %7399 = vmatprep.mubr.f32.mxu0 %v2218
    %7400 = vmatmul.mubr.f32.gmra.mrb[0].mxu0 %v2216
    %v7401 = vpop.f32.mrb[0].mxu0
    %v7402 = vadd.f32 %v7332, %v7401
    %v7403 = vpop.f32.mrb[0].mxu0
    %7404 = vdwg.mxu0
    %v7405 = vmax.f32 %v5137, 0.0
    %v7406 = vmax.f32 %v5139, 0.0
    %v7407 = vmax.f32 %v5705, 0.0
    %v7408 = vmax.f32 %v5707, 0.0
    %v7409 = vmax.f32 %v6273, 0.0
    %v7410 = vmax.f32 %v6275, 0.0
    %v7411 = vmax.f32 %v6841, 0.0
    %v7412 = vmax.f32 %v6843, 0.0
    %v7413 = vmax.f32 %v7402, 0.0
    %v7414 = vld [vmem:[%s5] sm:$0xff]
    %v7415 = vld [vmem:[%s5 + $0x8] sm:$0xff]
    %v7416 = vld [vmem:[%s5 + $0x10] sm:$0xff]
    %v7417 = vld [vmem:[%s5 + $0x18] sm:$0xff]
    %v7418 = vld [vmem:[%s5 + $0x20] sm:$0xff]
    %v7419 = vld [vmem:[%s5 + $0x28] sm:$0xff]
    %v7420 = vld [vmem:[%s5 + $0x30] sm:$0xff]
    %v7421 = vld [vmem:[%s5 + $0x38] sm:$0xff]
    %v7422 = vld [vmem:[%s5 + $0x40] sm:$0xff]
    %v7423 = vld [vmem:[%s5 + $0x48] sm:$0xff]
    %v7424 = vld [vmem:[%s5 + $0x50] sm:$0xff]
    %v7425 = vld [vmem:[%s5 + $0x58] sm:$0xff]
    %v7426 = vld [vmem:[%s5 + $0x60] sm:$0xff]
    %v7427 = vld [vmem:[%s5 + $0x68] sm:$0xff]
    %v7428 = vld [vmem:[%s5 + $0x70] sm:$0xff]
    %v7429 = vld [vmem:[%s5 + $0x78] sm:$0xff]
    %v7430 = vld [vmem:[%s5 + $0x80] sm:$0xff]
    %v7431 = vld [vmem:[%s5 + $0x88] sm:$0xff]
    %v7432 = vld [vmem:[%s5 + $0x90] sm:$0xff]
    %v7433 = vld [vmem:[%s5 + $0x98] sm:$0xff]
    %v7434 = vld [vmem:[%s5 + $0xa0] sm:$0xff]
    %v7435 = vld [vmem:[%s5 + $0xa8] sm:$0xff]
    %v7436 = vld [vmem:[%s5 + $0xb0] sm:$0xff]
    %v7437 = vld [vmem:[%s5 + $0xb8] sm:$0xff]
    %v7438 = vld [vmem:[%s5 + $0xc0] sm:$0xff]
    %v7439 = vld [vmem:[%s5 + $0xc8] sm:$0xff]
    %v7440 = vld [vmem:[%s5 + $0xd0] sm:$0xff]
    %v7441 = vld [vmem:[%s5 + $0xd8] sm:$0xff]
    %v7442 = vld [vmem:[%s5 + $0xe0] sm:$0xff]
    %v7443 = vld [vmem:[%s5 + $0xe8] sm:$0xff]
    %v7444 = vld [vmem:[%s5 + $0xf0] sm:$0xff]
    %v7445 = vld [vmem:[%s5 + $0xf8] sm:$0xff]
    %v7446 = vld [vmem:[%s5 + $0x100] sm:$0xff]
    %v7447 = vld [vmem:[%s5 + $0x108] sm:$0xff]
    %v7448 = vld [vmem:[%s5 + $0x110] sm:$0xff]
    %v7449 = vld [vmem:[%s5 + $0x118] sm:$0xff]
    %v7450 = vld [vmem:[%s5 + $0x120] sm:$0xff]
    %v7451 = vld [vmem:[%s5 + $0x128] sm:$0xff]
    %v7452 = vld [vmem:[%s5 + $0x130] sm:$0xff]
    %v7453 = vld [vmem:[%s5 + $0x138] sm:$0xff]
    %v7454 = vld [vmem:[%s5 + $0x140] sm:$0xff]
    %v7455 = vld [vmem:[%s5 + $0x148] sm:$0xff]
    %v7456 = vld [vmem:[%s5 + $0x150] sm:$0xff]
    %v7457 = vld [vmem:[%s5 + $0x158] sm:$0xff]
    %v7458 = vld [vmem:[%s5 + $0x160] sm:$0xff]
    %v7459 = vld [vmem:[%s5 + $0x168] sm:$0xff]
    %v7460 = vld [vmem:[%s5 + $0x170] sm:$0xff]
    %v7461 = vld [vmem:[%s5 + $0x178] sm:$0xff]
    %v7462 = vld [vmem:[%s5 + $0x180] sm:$0xff]
    %v7463 = vld [vmem:[%s5 + $0x188] sm:$0xff]
    %v7464 = vld [vmem:[%s5 + $0x190] sm:$0xff]
    %v7465 = vld [vmem:[%s5 + $0x198] sm:$0xff]
    %v7466 = vld [vmem:[%s5 + $0x1a0] sm:$0xff]
    %v7467 = vld [vmem:[%s5 + $0x1a8] sm:$0xff]
    %v7468 = vld [vmem:[%s5 + $0x1b0] sm:$0xff]
    %v7469 = vld [vmem:[%s5 + $0x1b8] sm:$0xff]
    %v7470 = vld [vmem:[%s5 + $0x1c0] sm:$0xff]
    %v7471 = vld [vmem:[%s5 + $0x1c8] sm:$0xff]
    %v7472 = vld [vmem:[%s5 + $0x1d0] sm:$0xff]
    %v7473 = vld [vmem:[%s5 + $0x1d8] sm:$0xff]
    %v7474 = vld [vmem:[%s5 + $0x1e0] sm:$0xff]
    %v7475 = vld [vmem:[%s5 + $0x1e8] sm:$0xff]
    %v7476 = vld [vmem:[%s5 + $0x1f0] sm:$0xff]
    %v7477 = vld [vmem:[%s5 + $0x1f8] sm:$0xff]
    %v7478 = vld [vmem:[%s5 + $0x200] sm:$0xff]
    %v7479 = vld [vmem:[%s5 + $0x208] sm:$0xff]
    %v7480 = vld [vmem:[%s5 + $0x210] sm:$0xff]
    %v7481 = vld [vmem:[%s5 + $0x218] sm:$0xff]
    %v7482 = vld [vmem:[%s5 + $0x220] sm:$0xff]
    %v7483 = vld [vmem:[%s5 + $0x228] sm:$0xff]
    %v7484 = vld [vmem:[%s5 + $0x230] sm:$0xff]
    %v7485 = vld [vmem:[%s5 + $0x238] sm:$0xff]
    %v7486 = vld [vmem:[%s5 + $0x240] sm:$0xff]
    %v7487 = vld [vmem:[%s5 + $0x248] sm:$0xff]
    %v7488 = vld [vmem:[%s5 + $0x250] sm:$0xff]
    %v7489 = vld [vmem:[%s5 + $0x258] sm:$0xff]
    %v7490 = vld [vmem:[%s5 + $0x260] sm:$0xff]
    %v7491 = vld [vmem:[%s5 + $0x268] sm:$0xff]
    %v7492 = vld [vmem:[%s5 + $0x270] sm:$0xff]
    %v7493 = vld [vmem:[%s5 + $0x278] sm:$0xff]
    %v7494 = vld [vmem:[%s5 + $0x280] sm:$0xff]
    %v7495 = vld [vmem:[%s5 + $0x288] sm:$0xff]
    %v7496 = vld [vmem:[%s5 + $0x290] sm:$0xff]
    %v7497 = vld [vmem:[%s5 + $0x298] sm:$0xff]
    %v7498 = vld [vmem:[%s5 + $0x2a0] sm:$0xff]
    %v7499 = vld [vmem:[%s5 + $0x2a8] sm:$0xff]
    %v7500 = vld [vmem:[%s5 + $0x2b0] sm:$0xff]
    %v7501 = vld [vmem:[%s5 + $0x2b8] sm:$0xff]
    %v7502 = vld [vmem:[%s5 + $0x2c0] sm:$0xff]
    %v7503 = vld [vmem:[%s5 + $0x2c8] sm:$0xff]
    %v7504 = vld [vmem:[%s5 + $0x2d0] sm:$0xff]
    %v7505 = vld [vmem:[%s5 + $0x2d8] sm:$0xff]
    %v7506 = vld [vmem:[%s5 + $0x2e0] sm:$0xff]
    %v7507 = vld [vmem:[%s5 + $0x2e8] sm:$0xff]
    %v7508 = vld [vmem:[%s5 + $0x2f0] sm:$0xff]
    %v7509 = vld [vmem:[%s5 + $0x2f8] sm:$0xff]
    %v7510 = vld [vmem:[%s5 + $0x300] sm:$0xff]
    %v7511 = vld [vmem:[%s5 + $0x308] sm:$0xff]
    %v7512 = vld [vmem:[%s5 + $0x310] sm:$0xff]
    %v7513 = vld [vmem:[%s5 + $0x318] sm:$0xff]
    %v7514 = vld [vmem:[%s5 + $0x320] sm:$0xff]
    %v7515 = vld [vmem:[%s5 + $0x328] sm:$0xff]
    %v7516 = vld [vmem:[%s5 + $0x330] sm:$0xff]
    %v7517 = vld [vmem:[%s5 + $0x338] sm:$0xff]
    %v7518 = vld [vmem:[%s5 + $0x340] sm:$0xff]
    %v7519 = vld [vmem:[%s5 + $0x348] sm:$0xff]
    %v7520 = vld [vmem:[%s5 + $0x350] sm:$0xff]
    %v7521 = vld [vmem:[%s5 + $0x358] sm:$0xff]
    %v7522 = vld [vmem:[%s5 + $0x360] sm:$0xff]
    %v7523 = vld [vmem:[%s5 + $0x368] sm:$0xff]
    %v7524 = vld [vmem:[%s5 + $0x370] sm:$0xff]
    %v7525 = vld [vmem:[%s5 + $0x378] sm:$0xff]
    %v7526 = vld [vmem:[%s5 + $0x380] sm:$0xff]
    %v7527 = vld [vmem:[%s5 + $0x388] sm:$0xff]
    %v7528 = vld [vmem:[%s5 + $0x390] sm:$0xff]
    %v7529 = vld [vmem:[%s5 + $0x398] sm:$0xff]
    %v7530 = vld [vmem:[%s5 + $0x3a0] sm:$0xff]
    %v7531 = vld [vmem:[%s5 + $0x3a8] sm:$0xff]
    %v7532 = vld [vmem:[%s5 + $0x3b0] sm:$0xff]
    %v7533 = vld [vmem:[%s5 + $0x3b8] sm:$0xff]
    %v7534 = vld [vmem:[%s5 + $0x3c0] sm:$0xff]
    %v7535 = vld [vmem:[%s5 + $0x3c8] sm:$0xff]
    %v7536 = vld [vmem:[%s5 + $0x3d0] sm:$0xff]
    %v7537 = vld [vmem:[%s5 + $0x3d8] sm:$0xff]
    %v7538 = vld [vmem:[%s5 + $0x3e0] sm:$0xff]
    %v7539 = vld [vmem:[%s5 + $0x3e8] sm:$0xff]
    %v7540 = vld [vmem:[%s5 + $0x3f0] sm:$0xff]
    %v7541 = vld [vmem:[%s5 + $0x3f8] sm:$0xff]
    %v7542 = vld [vmem:[%s5 + $0x400] sm:$0xff]
    %v7543 = vld [vmem:[%s5 + $0x408] sm:$0xff]
    %v7544 = vld [vmem:[%s5 + $0x410] sm:$0xff]
    %v7545 = vld [vmem:[%s5 + $0x418] sm:$0xff]
    %v7546 = vld [vmem:[%s5 + $0x420] sm:$0xff]
    %v7547 = vld [vmem:[%s5 + $0x428] sm:$0xff]
    %v7548 = vld [vmem:[%s5 + $0x430] sm:$0xff]
    %v7549 = vld [vmem:[%s5 + $0x438] sm:$0xff]
    %v7550 = vld [vmem:[%s5 + $0x440] sm:$0xff]
    %v7551 = vld [vmem:[%s5 + $0x448] sm:$0xff]
    %v7552 = vld [vmem:[%s5 + $0x450] sm:$0xff]
    %v7553 = vld [vmem:[%s5 + $0x458] sm:$0xff]
    %v7554 = vld [vmem:[%s5 + $0x460] sm:$0xff]
    %v7555 = vld [vmem:[%s5 + $0x468] sm:$0xff]
    %v7556 = vld [vmem:[%s5 + $0x470] sm:$0xff]
    %v7557 = vld [vmem:[%s5 + $0x478] sm:$0xff]
    %v7558 = vld [vmem:[#allocation10] sm:$0x1]
    %v7560 = vlaneseq
    %v7561 = vshrl.u32 %v7560, 7
    %v7562 = vsub.s32 0, %v7561
    %v7563 = vrot.slane %v7558, %v7562
    %7565 = vmatprep.subr.mxu0 0.0
    %7566 = vmatpush1.msra.mxu0 %v7414
    %7567 = vmatprep.subr.mxu0 0.0
    %7568 = vmatpush1.msra.mxu0 %v7415
    %7569 = vmatprep.subr.mxu0 0.0
    %7570 = vmatpush1.msra.mxu0 %v7416
    %7571 = vmatprep.subr.mxu0 0.0
    %7572 = vmatpush1.msra.mxu0 %v7417
    %7573 = vmatprep.subr.mxu0 0.0
    %7574 = vmatpush1.msra.mxu0 %v7418
    %7575 = vmatprep.subr.mxu0 0.0
    %7576 = vmatpush1.msra.mxu0 %v7419
    %7577 = vmatprep.subr.mxu0 0.0
    %7578 = vmatpush1.msra.mxu0 %v7420
    %7579 = vmatprep.subr.mxu0 0.0
    %7580 = vmatpush1.msra.mxu0 %v7421
    %7581 = vmatprep.subr.mxu0 0.0
    %7582 = vmatpush1.msra.mxu0 %v7422
    %7583 = vmatprep.subr.mxu0 0.0
    %7584 = vmatpush1.msra.mxu0 %v7423
    %7585 = vmatprep.subr.mxu0 0.0
    %7586 = vmatpush1.msra.mxu0 %v7424
    %7587 = vmatprep.subr.mxu0 0.0
    %7588 = vmatpush1.msra.mxu0 %v7425
    %7589 = vmatprep.subr.mxu0 0.0
    %7590 = vmatpush1.msra.mxu0 %v7426
    %7591 = vmatprep.subr.mxu0 0.0
    %7592 = vmatpush1.msra.mxu0 %v7427
    %7593 = vmatprep.subr.mxu0 0.0
    %7594 = vmatpush1.msra.mxu0 %v7428
    %7595 = vmatprep.subr.mxu0 0.0
    %7596 = vmatpush1.msra.mxu0 %v7429
    %7597 = vmatprep.subr.mxu0 0.0
    %7598 = vmatpush1.msra.mxu0 %v7430
    %7599 = vmatprep.subr.mxu0 0.0
    %7600 = vmatpush1.msra.mxu0 %v7431
    %7601 = vmatprep.subr.mxu0 0.0
    %7602 = vmatpush1.msra.mxu0 %v7432
    %7603 = vmatprep.subr.mxu0 0.0
    %7604 = vmatpush1.msra.mxu0 %v7433
    %7605 = vmatprep.subr.mxu0 0.0
    %7606 = vmatpush1.msra.mxu0 %v7434
    %7607 = vmatprep.subr.mxu0 0.0
    %7608 = vmatpush1.msra.mxu0 %v7435
    %7609 = vmatprep.subr.mxu0 0.0
    %7610 = vmatpush1.msra.mxu0 %v7436
    %7611 = vmatprep.subr.mxu0 0.0
    %7612 = vmatpush1.msra.mxu0 %v7437
    %7613 = vmatprep.subr.mxu0 0.0
    %7614 = vmatpush1.msra.mxu0 %v7438
    %7615 = vmatprep.subr.mxu0 0.0
    %7616 = vmatpush1.msra.mxu0 %v7439
    %7617 = vmatprep.subr.mxu0 0.0
    %7618 = vmatpush1.msra.mxu0 %v7440
    %7619 = vmatprep.subr.mxu0 0.0
    %7620 = vmatpush1.msra.mxu0 %v7441
    %7621 = vmatprep.subr.mxu0 0.0
    %7622 = vmatpush1.msra.mxu0 %v7442
    %7623 = vmatprep.subr.mxu0 0.0
    %7624 = vmatpush1.msra.mxu0 %v7443
    %7625 = vmatprep.subr.mxu0 0.0
    %7626 = vmatpush1.msra.mxu0 %v7444
    %7627 = vmatprep.subr.mxu0 0.0
    %7628 = vmatpush1.msra.mxu0 %v7445
    %7629 = vmatprep.mubr.f32.mxu0 %v7406
    %7630 = vmatmul.mubr.f32.gmra.mrb[0].mxu0 %v7405
    %v7631 = vpop.f32.mrb[0].mxu0
    %v7632 = vadd.f32 %v7563, %v7631
    %v7633 = vpop.f32.mrb[0].mxu0
    %7634 = vdwg.mxu0
    %7635 = vmatprep.subr.mxu0 0.0
    %7636 = vmatpush1.msra.mxu0 %v7446
    %7637 = vmatprep.subr.mxu0 0.0
    %7638 = vmatpush1.msra.mxu0 %v7447
    %7639 = vmatprep.subr.mxu0 0.0
    %7640 = vmatpush1.msra.mxu0 %v7448
    %7641 = vmatprep.subr.mxu0 0.0
    %7642 = vmatpush1.msra.mxu0 %v7449
    %7643 = vmatprep.subr.mxu0 0.0
    %7644 = vmatpush1.msra.mxu0 %v7450
    %7645 = vmatprep.subr.mxu0 0.0
    %7646 = vmatpush1.msra.mxu0 %v7451
    %7647 = vmatprep.subr.mxu0 0.0
    %7648 = vmatpush1.msra.mxu0 %v7452
    %7649 = vmatprep.subr.mxu0 0.0
    %7650 = vmatpush1.msra.mxu0 %v7453
    %7651 = vmatprep.subr.mxu0 0.0
    %7652 = vmatpush1.msra.mxu0 %v7454
    %7653 = vmatprep.subr.mxu0 0.0
    %7654 = vmatpush1.msra.mxu0 %v7455
    %7655 = vmatprep.subr.mxu0 0.0
    %7656 = vmatpush1.msra.mxu0 %v7456
    %7657 = vmatprep.subr.mxu0 0.0
    %7658 = vmatpush1.msra.mxu0 %v7457
    %7659 = vmatprep.subr.mxu0 0.0
    %7660 = vmatpush1.msra.mxu0 %v7458
    %7661 = vmatprep.subr.mxu0 0.0
    %7662 = vmatpush1.msra.mxu0 %v7459
    %7663 = vmatprep.subr.mxu0 0.0
    %7664 = vmatpush1.msra.mxu0 %v7460
    %7665 = vmatprep.subr.mxu0 0.0
    %7666 = vmatpush1.msra.mxu0 %v7461
    %7667 = vmatprep.subr.mxu0 0.0
    %7668 = vmatpush1.msra.mxu0 %v7462
    %7669 = vmatprep.subr.mxu0 0.0
    %7670 = vmatpush1.msra.mxu0 %v7463
    %7671 = vmatprep.subr.mxu0 0.0
    %7672 = vmatpush1.msra.mxu0 %v7464
    %7673 = vmatprep.subr.mxu0 0.0
    %7674 = vmatpush1.msra.mxu0 %v7465
    %7675 = vmatprep.subr.mxu0 0.0
    %7676 = vmatpush1.msra.mxu0 %v7466
    %7677 = vmatprep.subr.mxu0 0.0
    %7678 = vmatpush1.msra.mxu0 %v7467
    %7679 = vmatprep.subr.mxu0 0.0
    %7680 = vmatpush1.msra.mxu0 %v7468
    %7681 = vmatprep.subr.mxu0 0.0
    %7682 = vmatpush1.msra.mxu0 %v7469
    %7683 = vmatprep.subr.mxu0 0.0
    %7684 = vmatpush1.msra.mxu0 %v7470
    %7685 = vmatprep.subr.mxu0 0.0
    %7686 = vmatpush1.msra.mxu0 %v7471
    %7687 = vmatprep.subr.mxu0 0.0
    %7688 = vmatpush1.msra.mxu0 %v7472
    %7689 = vmatprep.subr.mxu0 0.0
    %7690 = vmatpush1.msra.mxu0 %v7473
    %7691 = vmatprep.subr.mxu0 0.0
    %7692 = vmatpush1.msra.mxu0 %v7474
    %7693 = vmatprep.subr.mxu0 0.0
    %7694 = vmatpush1.msra.mxu0 %v7475
    %7695 = vmatprep.subr.mxu0 0.0
    %7696 = vmatpush1.msra.mxu0 %v7476
    %7697 = vmatprep.subr.mxu0 0.0
    %7698 = vmatpush1.msra.mxu0 %v7477
    %7699 = vmatprep.mubr.f32.mxu0 %v7408
    %7700 = vmatmul.mubr.f32.gmra.mrb[0].mxu0 %v7407
    %v7701 = vpop.f32.mrb[0].mxu0
    %v7702 = vadd.f32 %v7632, %v7701
    %v7703 = vpop.f32.mrb[0].mxu0
    %7704 = vdwg.mxu0
    %7705 = vmatprep.subr.mxu0 0.0
    %7706 = vmatpush1.msra.mxu0 %v7478
    %7707 = vmatprep.subr.mxu0 0.0
    %7708 = vmatpush1.msra.mxu0 %v7479
    %7709 = vmatprep.subr.mxu0 0.0
    %7710 = vmatpush1.msra.mxu0 %v7480
    %7711 = vmatprep.subr.mxu0 0.0
    %7712 = vmatpush1.msra.mxu0 %v7481
    %7713 = vmatprep.subr.mxu0 0.0
    %7714 = vmatpush1.msra.mxu0 %v7482
    %7715 = vmatprep.subr.mxu0 0.0
    %7716 = vmatpush1.msra.mxu0 %v7483
    %7717 = vmatprep.subr.mxu0 0.0
    %7718 = vmatpush1.msra.mxu0 %v7484
    %7719 = vmatprep.subr.mxu0 0.0
    %7720 = vmatpush1.msra.mxu0 %v7485
    %7721 = vmatprep.subr.mxu0 0.0
    %7722 = vmatpush1.msra.mxu0 %v7486
    %7723 = vmatprep.subr.mxu0 0.0
    %7724 = vmatpush1.msra.mxu0 %v7487
    %7725 = vmatprep.subr.mxu0 0.0
    %7726 = vmatpush1.msra.mxu0 %v7488
    %7727 = vmatprep.subr.mxu0 0.0
    %7728 = vmatpush1.msra.mxu0 %v7489
    %7729 = vmatprep.subr.mxu0 0.0
    %7730 = vmatpush1.msra.mxu0 %v7490
    %7731 = vmatprep.subr.mxu0 0.0
    %7732 = vmatpush1.msra.mxu0 %v7491
    %7733 = vmatprep.subr.mxu0 0.0
    %7734 = vmatpush1.msra.mxu0 %v7492
    %7735 = vmatprep.subr.mxu0 0.0
    %7736 = vmatpush1.msra.mxu0 %v7493
    %7737 = vmatprep.subr.mxu0 0.0
    %7738 = vmatpush1.msra.mxu0 %v7494
    %7739 = vmatprep.subr.mxu0 0.0
    %7740 = vmatpush1.msra.mxu0 %v7495
    %7741 = vmatprep.subr.mxu0 0.0
    %7742 = vmatpush1.msra.mxu0 %v7496
    %7743 = vmatprep.subr.mxu0 0.0
    %7744 = vmatpush1.msra.mxu0 %v7497
    %7745 = vmatprep.subr.mxu0 0.0
    %7746 = vmatpush1.msra.mxu0 %v7498
    %7747 = vmatprep.subr.mxu0 0.0
    %7748 = vmatpush1.msra.mxu0 %v7499
    %7749 = vmatprep.subr.mxu0 0.0
    %7750 = vmatpush1.msra.mxu0 %v7500
    %7751 = vmatprep.subr.mxu0 0.0
    %7752 = vmatpush1.msra.mxu0 %v7501
    %7753 = vmatprep.subr.mxu0 0.0
    %7754 = vmatpush1.msra.mxu0 %v7502
    %7755 = vmatprep.subr.mxu0 0.0
    %7756 = vmatpush1.msra.mxu0 %v7503
    %7757 = vmatprep.subr.mxu0 0.0
    %7758 = vmatpush1.msra.mxu0 %v7504
    %7759 = vmatprep.subr.mxu0 0.0
    %7760 = vmatpush1.msra.mxu0 %v7505
    %7761 = vmatprep.subr.mxu0 0.0
    %7762 = vmatpush1.msra.mxu0 %v7506
    %7763 = vmatprep.subr.mxu0 0.0
    %7764 = vmatpush1.msra.mxu0 %v7507
    %7765 = vmatprep.subr.mxu0 0.0
    %7766 = vmatpush1.msra.mxu0 %v7508
    %7767 = vmatprep.subr.mxu0 0.0
    %7768 = vmatpush1.msra.mxu0 %v7509
    %7769 = vmatprep.mubr.f32.mxu0 %v7410
    %7770 = vmatmul.mubr.f32.gmra.mrb[0].mxu0 %v7409
    %v7771 = vpop.f32.mrb[0].mxu0
    %v7772 = vadd.f32 %v7702, %v7771
    %v7773 = vpop.f32.mrb[0].mxu0
    %7774 = vdwg.mxu0
    %7775 = vmatprep.subr.mxu0 0.0
    %7776 = vmatpush1.msra.mxu0 %v7510
    %7777 = vmatprep.subr.mxu0 0.0
    %7778 = vmatpush1.msra.mxu0 %v7511
    %7779 = vmatprep.subr.mxu0 0.0
    %7780 = vmatpush1.msra.mxu0 %v7512
    %7781 = vmatprep.subr.mxu0 0.0
    %7782 = vmatpush1.msra.mxu0 %v7513
    %7783 = vmatprep.subr.mxu0 0.0
    %7784 = vmatpush1.msra.mxu0 %v7514
    %7785 = vmatprep.subr.mxu0 0.0
    %7786 = vmatpush1.msra.mxu0 %v7515
    %7787 = vmatprep.subr.mxu0 0.0
    %7788 = vmatpush1.msra.mxu0 %v7516
    %7789 = vmatprep.subr.mxu0 0.0
    %7790 = vmatpush1.msra.mxu0 %v7517
    %7791 = vmatprep.subr.mxu0 0.0
    %7792 = vmatpush1.msra.mxu0 %v7518
    %7793 = vmatprep.subr.mxu0 0.0
    %7794 = vmatpush1.msra.mxu0 %v7519
    %7795 = vmatprep.subr.mxu0 0.0
    %7796 = vmatpush1.msra.mxu0 %v7520
    %7797 = vmatprep.subr.mxu0 0.0
    %7798 = vmatpush1.msra.mxu0 %v7521
    %7799 = vmatprep.subr.mxu0 0.0
    %7800 = vmatpush1.msra.mxu0 %v7522
    %7801 = vmatprep.subr.mxu0 0.0
    %7802 = vmatpush1.msra.mxu0 %v7523
    %7803 = vmatprep.subr.mxu0 0.0
    %7804 = vmatpush1.msra.mxu0 %v7524
    %7805 = vmatprep.subr.mxu0 0.0
    %7806 = vmatpush1.msra.mxu0 %v7525
    %7807 = vmatprep.subr.mxu0 0.0
    %7808 = vmatpush1.msra.mxu0 %v7526
    %7809 = vmatprep.subr.mxu0 0.0
    %7810 = vmatpush1.msra.mxu0 %v7527
    %7811 = vmatprep.subr.mxu0 0.0
    %7812 = vmatpush1.msra.mxu0 %v7528
    %7813 = vmatprep.subr.mxu0 0.0
    %7814 = vmatpush1.msra.mxu0 %v7529
    %7815 = vmatprep.subr.mxu0 0.0
    %7816 = vmatpush1.msra.mxu0 %v7530
    %7817 = vmatprep.subr.mxu0 0.0
    %7818 = vmatpush1.msra.mxu0 %v7531
    %7819 = vmatprep.subr.mxu0 0.0
    %7820 = vmatpush1.msra.mxu0 %v7532
    %7821 = vmatprep.subr.mxu0 0.0
    %7822 = vmatpush1.msra.mxu0 %v7533
    %7823 = vmatprep.subr.mxu0 0.0
    %7824 = vmatpush1.msra.mxu0 %v7534
    %7825 = vmatprep.subr.mxu0 0.0
    %7826 = vmatpush1.msra.mxu0 %v7535
    %7827 = vmatprep.subr.mxu0 0.0
    %7828 = vmatpush1.msra.mxu0 %v7536
    %7829 = vmatprep.subr.mxu0 0.0
    %7830 = vmatpush1.msra.mxu0 %v7537
    %7831 = vmatprep.subr.mxu0 0.0
    %7832 = vmatpush1.msra.mxu0 %v7538
    %7833 = vmatprep.subr.mxu0 0.0
    %7834 = vmatpush1.msra.mxu0 %v7539
    %7835 = vmatprep.subr.mxu0 0.0
    %7836 = vmatpush1.msra.mxu0 %v7540
    %7837 = vmatprep.subr.mxu0 0.0
    %7838 = vmatpush1.msra.mxu0 %v7541
    %7839 = vmatprep.mubr.f32.mxu0 %v7412
    %7840 = vmatmul.mubr.f32.gmra.mrb[0].mxu0 %v7411
    %v7841 = vpop.f32.mrb[0].mxu0
    %v7842 = vadd.f32 %v7772, %v7841
    %v7843 = vpop.f32.mrb[0].mxu0
    %7844 = vdwg.mxu0
    %7845 = vmatprep.subr.mxu0 0.0
    %7846 = vmatpush1.msra.mxu0 %v7542
    %7847 = vmatprep.subr.mxu0 0.0
    %7848 = vmatpush1.msra.mxu0 %v7543
    %7849 = vmatprep.subr.mxu0 0.0
    %7850 = vmatpush1.msra.mxu0 %v7544
    %7851 = vmatprep.subr.mxu0 0.0
    %7852 = vmatpush1.msra.mxu0 %v7545
    %7853 = vmatprep.subr.mxu0 0.0
    %7854 = vmatpush1.msra.mxu0 %v7546
    %7855 = vmatprep.subr.mxu0 0.0
    %7856 = vmatpush1.msra.mxu0 %v7547
    %7857 = vmatprep.subr.mxu0 0.0
    %7858 = vmatpush1.msra.mxu0 %v7548
    %7859 = vmatprep.subr.mxu0 0.0
    %7860 = vmatpush1.msra.mxu0 %v7549
    %7861 = vmatprep.subr.mxu0 0.0
    %7862 = vmatpush1.msra.mxu0 %v7550
    %7863 = vmatprep.subr.mxu0 0.0
    %7864 = vmatpush1.msra.mxu0 %v7551
    %7865 = vmatprep.subr.mxu0 0.0
    %7866 = vmatpush1.msra.mxu0 %v7552
    %7867 = vmatprep.subr.mxu0 0.0
    %7868 = vmatpush1.msra.mxu0 %v7553
    %7869 = vmatprep.subr.mxu0 0.0
    %7870 = vmatpush1.msra.mxu0 %v7554
    %7871 = vmatprep.subr.mxu0 0.0
    %7872 = vmatpush1.msra.mxu0 %v7555
    %7873 = vmatprep.subr.mxu0 0.0
    %7874 = vmatpush1.msra.mxu0 %v7556
    %7875 = vmatprep.subr.mxu0 0.0
    %7876 = vmatpush1.msra.mxu0 %v7557
    %7877 = vmatprep.subr.mxu0 0.0
    %7878 = vmatpush1.msra.mxu0 0.0
    %7879 = vmatprep.subr.mxu0 0.0
    %7880 = vmatpush1.msra.mxu0 0.0
    %7881 = vmatprep.subr.mxu0 0.0
    %7882 = vmatpush1.msra.mxu0 0.0
    %7883 = vmatprep.subr.mxu0 0.0
    %7884 = vmatpush1.msra.mxu0 0.0
    %7885 = vmatprep.subr.mxu0 0.0
    %7886 = vmatpush1.msra.mxu0 0.0
    %7887 = vmatprep.subr.mxu0 0.0
    %7888 = vmatpush1.msra.mxu0 0.0
    %7889 = vmatprep.subr.mxu0 0.0
    %7890 = vmatpush1.msra.mxu0 0.0
    %7891 = vmatprep.subr.mxu0 0.0
    %7892 = vmatpush1.msra.mxu0 0.0
    %7893 = vmatprep.subr.mxu0 0.0
    %7894 = vmatpush1.msra.mxu0 0.0
    %7895 = vmatprep.subr.mxu0 0.0
    %7896 = vmatpush1.msra.mxu0 0.0
    %7897 = vmatprep.subr.mxu0 0.0
    %7898 = vmatpush1.msra.mxu0 0.0
    %7899 = vmatprep.subr.mxu0 0.0
    %7900 = vmatpush1.msra.mxu0 0.0
    %7901 = vmatprep.subr.mxu0 0.0
    %7902 = vmatpush1.msra.mxu0 0.0
    %7903 = vmatprep.subr.mxu0 0.0
    %7904 = vmatpush1.msra.mxu0 0.0
    %7905 = vmatprep.subr.mxu0 0.0
    %7906 = vmatpush1.msra.mxu0 0.0
    %7907 = vmatprep.subr.mxu0 0.0
    %7908 = vmatpush1.msra.mxu0 0.0
    %7909 = vmatprep.mubr.f32.mxu0 0.0
    %7910 = vmatmul.mubr.f32.gmra.mrb[0].mxu0 %v7413
    %v7911 = vpop.f32.mrb[0].mxu0
    %v7912 = vadd.f32 %v7842, %v7911
    %v7913 = vpop.f32.mrb[0].mxu0
    %7914 = vdwg.mxu0
    %v7915 = vmax.f32 %v7912, 0.0
    %v7916 = vld [vmem:[%s7] sm:$0xff]
    %v7917 = vld [vmem:[%s7 + $0x8] sm:$0xff]
    %v7918 = vld [vmem:[%s7 + $0x10] sm:$0xff]
    %v7919 = vld [vmem:[%s7 + $0x18] sm:$0xff]
    %v7920 = vld [vmem:[%s7 + $0x20] sm:$0xff]
    %v7921 = vld [vmem:[%s7 + $0x28] sm:$0xff]
    %v7922 = vld [vmem:[%s7 + $0x30] sm:$0xff]
    %v7923 = vld [vmem:[%s7 + $0x38] sm:$0xff]
    %v7924 = vld [vmem:[#allocation2] sm:$0x1]
    %v7926 = vlaneseq
    %v7927 = vshrl.u32 %v7926, 7
    %v7928 = vsub.s32 0, %v7927
    %v7929 = vrot.slane %v7924, %v7928
    %v7932 = vsel %vm1080, %v7915, 0
    %7934 = vmatprep.subr.mxu0 0.0
    %7935 = vmatpush1.msra.mxu0 %v7916
    %7936 = vmatprep.subr.mxu0 0.0
    %7937 = vmatpush1.msra.mxu0 %v7917
    %7938 = vmatprep.subr.mxu0 0.0
    %7939 = vmatpush1.msra.mxu0 %v7918
    %7940 = vmatprep.subr.mxu0 0.0
    %7941 = vmatpush1.msra.mxu0 %v7919
    %7942 = vmatprep.subr.mxu0 0.0
    %7943 = vmatpush1.msra.mxu0 %v7920
    %7944 = vmatprep.subr.mxu0 0.0
    %7945 = vmatpush1.msra.mxu0 %v7921
    %7946 = vmatprep.subr.mxu0 0.0
    %7947 = vmatpush1.msra.mxu0 %v7922
    %7948 = vmatprep.subr.mxu0 0.0
    %7949 = vmatpush1.msra.mxu0 %v7923
    %7950 = vmatprep.subr.mxu0 0.0
    %7951 = vmatpush1.msra.mxu0 0.0
    %7952 = vmatprep.subr.mxu0 0.0
    %7953 = vmatpush1.msra.mxu0 0.0
    %7954 = vmatprep.subr.mxu0 0.0
    %7955 = vmatpush1.msra.mxu0 0.0
    %7956 = vmatprep.subr.mxu0 0.0
    %7957 = vmatpush1.msra.mxu0 0.0
    %7958 = vmatprep.subr.mxu0 0.0
    %7959 = vmatpush1.msra.mxu0 0.0
    %7960 = vmatprep.subr.mxu0 0.0
    %7961 = vmatpush1.msra.mxu0 0.0
    %7962 = vmatprep.subr.mxu0 0.0
    %7963 = vmatpush1.msra.mxu0 0.0
    %7964 = vmatprep.subr.mxu0 0.0
    %7965 = vmatpush1.msra.mxu0 0.0
    %7966 = vmatprep.subr.mxu0 0.0
    %7967 = vmatpush1.msra.mxu0 0.0
    %7968 = vmatprep.subr.mxu0 0.0
    %7969 = vmatpush1.msra.mxu0 0.0
    %7970 = vmatprep.subr.mxu0 0.0
    %7971 = vmatpush1.msra.mxu0 0.0
    %7972 = vmatprep.subr.mxu0 0.0
    %7973 = vmatpush1.msra.mxu0 0.0
    %7974 = vmatprep.subr.mxu0 0.0
    %7975 = vmatpush1.msra.mxu0 0.0
    %7976 = vmatprep.subr.mxu0 0.0
    %7977 = vmatpush1.msra.mxu0 0.0
    %7978 = vmatprep.subr.mxu0 0.0
    %7979 = vmatpush1.msra.mxu0 0.0
    %7980 = vmatprep.subr.mxu0 0.0
    %7981 = vmatpush1.msra.mxu0 0.0
    %7982 = vmatprep.subr.mxu0 0.0
    %7983 = vmatpush1.msra.mxu0 0.0
    %7984 = vmatprep.subr.mxu0 0.0
    %7985 = vmatpush1.msra.mxu0 0.0
    %7986 = vmatprep.subr.mxu0 0.0
    %7987 = vmatpush1.msra.mxu0 0.0
    %7988 = vmatprep.subr.mxu0 0.0
    %7989 = vmatpush1.msra.mxu0 0.0
    %7990 = vmatprep.subr.mxu0 0.0
    %7991 = vmatpush1.msra.mxu0 0.0
    %7992 = vmatprep.subr.mxu0 0.0
    %7993 = vmatpush1.msra.mxu0 0.0
    %7994 = vmatprep.subr.mxu0 0.0
    %7995 = vmatpush1.msra.mxu0 0.0
    %7996 = vmatprep.subr.mxu0 0.0
    %7997 = vmatpush1.msra.mxu0 0.0
    %7998 = vmatprep.mubr.f32.mxu0 0.0
    %7999 = vmatmul.mubr.f32.gmra.mrb[0].mxu0 %v7932
    %v8000 = vpop.f32.mrb[0].mxu0
    %v8001 = vadd.f32 %v7929, %v8000
    %v8002 = vpop.f32.mrb[0].mxu0
    %8003 = vdwg.mxu0
    %v8004 = vsub.f32 0.0, %v8001
    %v8005 = vmul.f32 %v8004, 1.442695
    %v8006 = vpow.pop %v8005
    %v8007 = vadd.f32 %v8006, 1.0
    %v8008 = vrcp.pop %v8007
    %vm8009 = vcmask 7168
    %8010 = vst.msk [vmem:[%s9] sm:$0xff] %vm8009, %v8008
    // Predicated region
    $region58: #{forward.1} parent=1 // pred_check
      _
    $region59: #{forward.1} parent=1 // pred_check_branch
      %8012 = sbr.rel (0) target = $region61
    $region60: #{forward.1} parent=1 // pred_region
      _
    $region61: #{forward.1} parent=1 // pred_fallthru
      _
    // Predicated region
    $region62: #{forward.1} parent=1 // pred_check
      _
    $region63: #{forward.1} parent=1 // pred_check_branch
      %8014 = sbr.rel (0) target = $region65
    $region64: #{forward.1} parent=1 // pred_region
      _
    $region65: #{forward.1} parent=1 // pred_fallthru
      _
    %8015 = vsyncpa [#allocation4], 1
    %8016 = vsyncpa [#allocation6], 1
    %8017 = vsyncpa [#allocation9], 1

</llo_original>
